<compile_context>
chip_gen: v7x
topology: tpu7x:2x2x1
jax: 0.10.0
libtpu: 0.0.40
codegen_flags: <defaults>
</compile_context>

<pallas_src>
import jax
import jax.numpy as jnp
from jax.experimental import pallas as pl
from jax.experimental.pallas import tpu as pltpu

L = 30        # sequence length implied by 3840 = 128 * L
LP = L + 2    # zero-padded sequence length (k=3, pad=1)
C1 = 128      # conv channel width
H1 = 256      # FC1 width
EPS = 1e-5    # BatchNorm eps
MAX_BT = 64   # max sequences per grid step


# ----------------------------- fused Pallas kernel ------------------------- #

def temporal_block_kernel(x_ref, w1_ref, t1_ref, w2_ref, t2_ref,
                          fc1w_ref, fc1b_ref, fc2w_ref, fc2b_ref,
                          o_ref, sh_ref, y2_ref):
    """Full TemporalBlock forward for one batch tile of BT sequences.

    Row layout is t-major: row r = t * BT + b.

    x_ref:   (LP*BT, Cin)   zero-time-padded input, bf16
    w1_ref:  (3, Cin, 128)  conv1 taps (K, I, O), BN1 scale folded, bf16
    t1_ref:  (1, 128)       folded BN1 shift (f32)
    w2_ref:  (3, 128, 128)  conv2 taps, BN2 scale folded, bf16
    t2_ref:  (1, 128)       folded BN2 shift (f32)
    fc1w_ref:(L, 128, 256)  FC1 weight in (t, c, n) order, bf16
    fc1b_ref:(1, 256)       FC1 bias (f32)
    fc2w_ref:(256, Fpad)    FC2 weight, lane-padded to 128, bf16
    fc2b_ref:(1, Fpad)      FC2 bias, lane-padded (f32)
    o_ref:   (BT, Fpad)     output (f32)
    sh_ref:  VMEM (LP*BT, 128) bf16 scratch: conv1 output staged at offset BT
    y2_ref:  VMEM (L*BT, 128)  bf16 scratch: conv2 output (FC1 input)
    """
    f32, bf16 = jnp.float32, jnp.bfloat16
    l = fc1w_ref.shape[0]                      # L
    bt = x_ref.shape[0] // (l + 2)             # batch tile
    rows = l * bt                              # valid t-major rows
    h1 = fc1w_ref.shape[-1]

    # conv2 zero-padding blocks (re-written every step: scratch is per-core
    # under a "parallel" grid axis, so a one-time init would be unsafe).
    sh_ref[0:bt, :] = jnp.zeros((bt, C1), bf16)
    sh_ref[bt + rows:, :] = jnp.zeros((bt, C1), bf16)

    # ---- conv1 (k=3, pad=1) + BN1 + ReLU: three tile-aligned tap matmuls -----
    x = x_ref[...]                                          # (LP*BT, Cin) bf16
    y1 = jnp.dot(x[0:rows], w1_ref[0], preferred_element_type=f32)
    y1 = y1 + jnp.dot(x[bt:bt + rows], w1_ref[1], preferred_element_type=f32)
    y1 = y1 + jnp.dot(x[2 * bt:2 * bt + rows], w1_ref[2],
                      preferred_element_type=f32)
    y1 = jnp.maximum(y1 + t1_ref[...], 0.0)
    sh_ref[bt:bt + rows, :] = y1.astype(bf16)               # stage at offset BT

    # ---- conv2 (k=3, pad=1) + BN2 + ReLU: taps are whole-BT-block offsets ----
    y2 = jnp.dot(sh_ref[0:rows, :], w2_ref[0], preferred_element_type=f32)
    y2 = y2 + jnp.dot(sh_ref[bt:bt + rows, :], w2_ref[1],
                      preferred_element_type=f32)
    y2 = y2 + jnp.dot(sh_ref[2 * bt:2 * bt + rows, :], w2_ref[2],
                      preferred_element_type=f32)
    y2_ref[...] = jnp.maximum(y2 + t2_ref[...], 0.0).astype(bf16)

    # ---- FC1 (128*L -> 256) + ReLU: contiguous (BT,128) per-t tiles, two
    # parallel accumulators to shorten the dependent-add chain -----------------
    h_even = jnp.zeros((bt, h1), f32)
    h_odd = jnp.zeros((bt, h1), f32)
    for t in range(l):
        d = jnp.dot(y2_ref[t * bt:(t + 1) * bt, :], fc1w_ref[t],
                    preferred_element_type=f32)
        if t % 2 == 0:
            h_even = h_even + d
        else:
            h_odd = h_odd + d
    h = jnp.maximum(h_even + h_odd + fc1b_ref[...], 0.0)    # (BT, 256)

    # ---- FC2 (256 -> Fpad): lane-dense (128-padded) output store -------------
    o_ref[...] = (jnp.dot(h.astype(jnp.bfloat16), fc2w_ref[...],
                          preferred_element_type=f32) + fc2b_ref[...])


# ------------------------------ host wrapper ------------------------------- #

def temporal_block_forward(x_ncl, p):
    """x_ncl: (B, input_size, L) in PyTorch NCL layout. Returns (B, feature_dim)."""
    B, cin, lx = x_ncl.shape
    assert lx == L, f"sequence length must be {L} (3840 = {C1}*{L})"
    fdim = p["feature_dim"]
    fpad = p["fc2_w"].shape[1]
    h1 = p["fc1_w"].shape[-1]

    # adaptive batch tile: multiple of 16 (bf16 packing / aligned tap shifts),
    # capped at MAX_BT, and split so large batches get >=2 grid steps (v7x TCs)
    rup = lambda n, m: ((n + m - 1) // m) * m
    bt = min(MAX_BT, max(16, rup(B, 16)))
    if -(-B // bt) == 1 and bt > 16:
        bt = max(16, rup(-(-B // 2), 16))
    nb = -(-B // bt)
    b_pad = nb * bt

    # host-side glue: NCL -> t-major (time, batch, chan), zero time-padding,
    # batch padding, per-tile row flattening, bf16 cast (kernel uses bf16 MXU).
    x = jnp.transpose(x_ncl.astype(jnp.float32), (2, 0, 1))       # (L, B, Cin)
    x = jnp.pad(x, ((1, 1), (0, b_pad - B), (0, 0)))              # (LP, b_pad, Cin)
    x = x.reshape(LP, nb, bt, cin).transpose(1, 0, 2, 3)          # (nb, LP, BT, Cin)
    x = x.reshape(nb * LP * bt, cin).astype(jnp.bfloat16)         # t-major rows

    # explicit VMEM budget: double-buffered input/weights/output + scratches
    weight_bytes = (2 * (p["w1"].size + p["w2"].size + p["fc1_w"].size
                         + p["fc2_w"].size)
                    + 4 * (p["t1"].size + p["t2"].size + p["fc1_b"].size
                           + p["fc2_b"].size))
    vmem_bytes = (2 * (LP * bt * cin * 2)        # x tile (bf16), double buffered
                  + 2 * weight_bytes             # resident weights, double buffered
                  + LP * bt * C1 * 2             # sh scratch (bf16)
                  + L * bt * C1 * 2              # y2 scratch (bf16)
                  + 2 * (bt * fpad * 4))         # out tile (f32), double buffered
    vmem_limit = int(vmem_bytes + (16 << 20))    # headroom for f32 temporaries

    out = pl.pallas_call(
        temporal_block_kernel,
        grid=(nb,),
        in_specs=[
            pl.BlockSpec((LP * bt, cin), lambda b: (b, 0)),
            pl.BlockSpec((3, cin, C1),   lambda b: (0, 0, 0)),
            pl.BlockSpec((1, C1),        lambda b: (0, 0)),
            pl.BlockSpec((3, C1, C1),    lambda b: (0, 0, 0)),
            pl.BlockSpec((1, C1),        lambda b: (0, 0)),
            pl.BlockSpec((L, C1, h1),    lambda b: (0, 0, 0)),
            pl.BlockSpec((1, h1),        lambda b: (0, 0)),
            pl.BlockSpec((h1, fpad),     lambda b: (0, 0)),
            pl.BlockSpec((1, fpad),      lambda b: (0, 0)),
        ],
        out_specs=pl.BlockSpec((bt, fpad), lambda b: (b, 0)),
        out_shape=jax.ShapeDtypeStruct((b_pad, fpad), jnp.float32),
        scratch_shapes=[
            pltpu.VMEM((LP * bt, C1), jnp.bfloat16),
            pltpu.VMEM((L * bt, C1), jnp.bfloat16),
        ],
        compiler_params=pltpu.CompilerParams(
            dimension_semantics=("parallel",),
            vmem_limit_bytes=vmem_limit),
    )(x, p["w1"], p["t1"], p["w2"], p["t2"],
      p["fc1_w"], p["fc1_b"], p["fc2_w"], p["fc2_b"])

    return out[:B, :fdim]


# ------------------------- deterministic parameters ------------------------ #

def init_params_pt(key, input_size, feature_dim):
    """PyTorch-convention parameters, deterministic from `key`."""
    ks = jax.random.split(key, 20)
    n = lambda i, shape, s: s * jax.random.normal(ks[i], shape, jnp.float32)
    return {
        "conv1_w": n(0, (C1, input_size, 3), 0.10),
        "conv1_b": n(1, (C1,), 0.10),
        "bn1_g": 1.0 + n(2, (C1,), 0.10),
        "bn1_b": n(3, (C1,), 0.10),
        "bn1_m": n(4, (C1,), 0.10),
        "bn1_v": jnp.abs(n(5, (C1,), 1.0)) + 0.5,
        "conv2_w": n(6, (C1, C1, 3), 0.05),
        "conv2_b": n(7, (C1,), 0.10),
        "bn2_g": 1.0 + n(8, (C1,), 0.10),
        "bn2_b": n(9, (C1,), 0.10),
        "bn2_m": n(10, (C1,), 0.10),
        "bn2_v": jnp.abs(n(11, (C1,), 1.0)) + 0.5,
        "fc1_w": n(12, (H1, C1 * L), 0.02),
        "fc1_b": n(13, (H1,), 0.05),
        "fc2_w": n(14, (feature_dim, H1), 0.05),
        "fc2_b": n(15, (feature_dim,), 0.05),
    }


def to_kernel_params(pt, feature_dim):
    """Convert PyTorch-convention params to the fused kernel's layout."""
    s1 = pt["bn1_g"] / jnp.sqrt(pt["bn1_v"] + EPS)
    t1 = pt["bn1_b"] + (pt["conv1_b"] - pt["bn1_m"]) * s1
    s2 = pt["bn2_g"] / jnp.sqrt(pt["bn2_v"] + EPS)
    t2 = pt["bn2_b"] + (pt["conv2_b"] - pt["bn2_m"]) * s2

    # conv weights (O, I, K) -> (K, I, O) with the BN scale folded into O
    w1 = jnp.transpose(pt["conv1_w"], (2, 1, 0)) * s1[None, None, :]  # (3,Cin,128)
    w2 = jnp.transpose(pt["conv2_w"], (2, 1, 0)) * s2[None, None, :]  # (3,128,128)

    # fc1: torch input index is c*L + t; kernel wants (t, c, n)
    fc1_w = pt["fc1_w"].reshape(H1, C1, L).transpose(2, 1, 0)         # (L,128,256)

    # fc2: transpose and zero-pad the output lanes up to a multiple of 128
    fpad = max(128, ((feature_dim + 127) // 128) * 128)
    fc2_w = jnp.zeros((H1, fpad), jnp.float32).at[:, :feature_dim].set(pt["fc2_w"].T)
    fc2_b = jnp.zeros((1, fpad), jnp.float32).at[0, :feature_dim].set(pt["fc2_b"])

    bf16 = jnp.bfloat16
    return {
        "w1": w1.astype(bf16),
        "t1": t1.reshape(1, C1),
        "w2": w2.astype(bf16),
        "t2": t2.reshape(1, C1),
        "fc1_w": fc1_w.astype(bf16),
        "fc1_b": pt["fc1_b"].reshape(1, H1),
        "fc2_w": fc2_w.astype(bf16),
        "fc2_b": fc2_b,
        "feature_dim": feature_dim,
    }


# ------------------------------- plain-JAX ref ------------------------------ #

def reference_forward(x_ncl, pt):
    hp = jax.lax.Precision.HIGHEST
    x = x_ncl.astype(jnp.float32)                                  # (B, Cin, L)

    def conv_bn_relu(x, w, b, g, beta, m, v):
        xp = jnp.pad(x, ((0, 0), (0, 0), (1, 1)))
        y = sum(jnp.einsum("bil,oi->bol", xp[:, :, k:k + L], w[:, :, k],
                           precision=hp) for k in range(3))
        y = y + b[None, :, None]
        y = (g[None, :, None] * (y - m[None, :, None])
             / jnp.sqrt(v[None, :, None] + EPS) + beta[None, :, None])
        return jnp.maximum(y, 0.0)

    y1 = conv_bn_relu(x, pt["conv1_w"], pt["conv1_b"], pt["bn1_g"],
                      pt["bn1_b"], pt["bn1_m"], pt["bn1_v"])
    y2 = conv_bn_relu(y1, pt["conv2_w"], pt["conv2_b"], pt["bn2_g"],
                      pt["bn2_b"], pt["bn2_m"], pt["bn2_v"])
    f = y2.reshape(y2.shape[0], -1)                                # (B, 3840) (c,t)
    h = jnp.maximum(jnp.dot(f, pt["fc1_w"].T, precision=hp) + pt["fc1_b"], 0.0)
    return jnp.dot(h, pt["fc2_w"].T, precision=hp) + pt["fc2_b"]


# ----------------------------------- main ----------------------------------- #

if __name__ == "__main__":
    B, input_size, feature_dim = 2, 8, 32

    key = jax.random.PRNGKey(0)
    kp, kx = jax.random.split(key)
    pt_params = init_params_pt(kp, input_size, feature_dim)
    k_params = to_kernel_params(pt_params, feature_dim)

    x = jax.random.normal(kx, (B, input_size, L), jnp.float32)     # (B, C, L)

    out = jax.block_until_ready(temporal_block_forward(x, k_params))
    ref = reference_forward(x, pt_params)

    assert out.shape == (B, feature_dim), out.shape
    # bf16 MXU inputs (f32 accumulation) vs the f32-HIGHEST reference:
    # expected max abs deviation is ~1e-2 for these parameter scales.
    if not jnp.allclose(out, ref, rtol=3e-2, atol=3e-2):
        max_err = float(jnp.max(jnp.abs(out - ref)))
        raise AssertionError(f"kernel mismatch vs reference, max abs err={max_err}")

    print("KERNEL_OK")
</pallas_src>

<mosaic_0001>
module attributes {stable_mosaic.version = 11 : i64} {
  func.func @temporal_block_kernel(%arg0: i32, %arg1: memref<512x8xbf16, #tpu.memory_space<vmem>>, %arg2: memref<3x8x128xbf16, #tpu.memory_space<vmem>>, %arg3: memref<1x128xf32, #tpu.memory_space<vmem>>, %arg4: memref<3x128x128xbf16, #tpu.memory_space<vmem>>, %arg5: memref<1x128xf32, #tpu.memory_space<vmem>>, %arg6: memref<30x128x256xbf16, #tpu.memory_space<vmem>>, %arg7: memref<1x256xf32, #tpu.memory_space<vmem>>, %arg8: memref<256x128xbf16, #tpu.memory_space<vmem>>, %arg9: memref<1x128xf32, #tpu.memory_space<vmem>>, %arg10: memref<16x128xf32, #tpu.memory_space<vmem>>, %arg11: memref<512x128xbf16, #tpu.memory_space<vmem>>, %arg12: memref<480x128xbf16, #tpu.memory_space<vmem>>) attributes {dimension_semantics = [#tpu.dimension_semantics<parallel>], iteration_bounds = array<i64: 1>, scalar_prefetch = 0 : i64, scratch_operands = 2 : i64, tpu.core_type = #tpu.core_type<tc>, window_params = [{transform_indices = @transform_0, window_bounds = array<i64: 512, 8>}, {pipeline_mode = #tpu.pipeline_mode<synchronous>, transform_indices = @transform_1, window_bounds = array<i64: 3, 8, 128>}, {pipeline_mode = #tpu.pipeline_mode<synchronous>, transform_indices = @transform_2, window_bounds = array<i64: 1, 128>}, {pipeline_mode = #tpu.pipeline_mode<synchronous>, transform_indices = @transform_3, window_bounds = array<i64: 3, 128, 128>}, {pipeline_mode = #tpu.pipeline_mode<synchronous>, transform_indices = @transform_4, window_bounds = array<i64: 1, 128>}, {pipeline_mode = #tpu.pipeline_mode<synchronous>, transform_indices = @transform_5, window_bounds = array<i64: 30, 128, 256>}, {pipeline_mode = #tpu.pipeline_mode<synchronous>, transform_indices = @transform_6, window_bounds = array<i64: 1, 256>}, {pipeline_mode = #tpu.pipeline_mode<synchronous>, transform_indices = @transform_7, window_bounds = array<i64: 256, 128>}, {pipeline_mode = #tpu.pipeline_mode<synchronous>, transform_indices = @transform_8, window_bounds = array<i64: 1, 128>}, {transform_indices = @transform_9, window_bounds = array<i64: 16, 128>}]} {
    %cst = arith.constant 0.000000e+00 : bf16
    %0 = vector.broadcast %cst : bf16 to vector<16x128xbf16>
    %c0 = arith.constant 0 : index
    %c0_0 = arith.constant 0 : index
    %1 = vector.load %arg11[%c0, %c0_0] : memref<512x128xbf16, #tpu.memory_space<vmem>>, vector<16x128xbf16>
    tpu.vector_store %arg11[%c0, %c0_0], %0 {strides = array<i32>} : memref<512x128xbf16, #tpu.memory_space<vmem>>, vector<16x128xbf16>,
    %cst_1 = arith.constant 0.000000e+00 : bf16
    %2 = vector.broadcast %cst_1 : bf16 to vector<16x128xbf16>
    %c496 = arith.constant 496 : index
    %c0_2 = arith.constant 0 : index
    %3 = vector.load %arg11[%c496, %c0_2] : memref<512x128xbf16, #tpu.memory_space<vmem>>, vector<16x128xbf16>
    tpu.vector_store %arg11[%c496, %c0_2], %2 {strides = array<i32>} : memref<512x128xbf16, #tpu.memory_space<vmem>>, vector<16x128xbf16>,
    %c0_3 = arith.constant 0 : index
    %c0_4 = arith.constant 0 : index
    %4 = vector.load %arg1[%c0_3, %c0_4] : memref<512x8xbf16, #tpu.memory_space<vmem>>, vector<512x8xbf16>
    %5 = vector.extract_strided_slice %4 {offsets = [0, 0], sizes = [480, 8], strides = [1, 1]} : vector<512x8xbf16> to vector<480x8xbf16>
    %c0_5 = arith.constant 0 : index
    %c0_6 = arith.constant 0 : index
    %c0_7 = arith.constant 0 : index
    %6 = vector.load %arg2[%c0_5, %c0_6, %c0_7] : memref<3x8x128xbf16, #tpu.memory_space<vmem>>, vector<1x8x128xbf16>
    %7 = vector.shape_cast %6 : vector<1x8x128xbf16> to vector<8x128xbf16>
    %cst_8 = arith.constant dense<0.000000e+00> : vector<480x128xf32>
    %8 = tpu.matmul %5, %7, %cst_8 {dimension_numbers = #tpu.dot_dimension_numbers<[1], [0], [0], [1], [0, 0, 1, 1], [], []>} : vector<480x8xbf16>, vector<8x128xbf16>, vector<480x128xf32> -> vector<480x128xf32>
    %9 = vector.extract_strided_slice %4 {offsets = [16, 0], sizes = [480, 8], strides = [1, 1]} : vector<512x8xbf16> to vector<480x8xbf16>
    %c1 = arith.constant 1 : index
    %c0_9 = arith.constant 0 : index
    %c0_10 = arith.constant 0 : index
    %10 = vector.load %arg2[%c1, %c0_9, %c0_10] : memref<3x8x128xbf16, #tpu.memory_space<vmem>>, vector<1x8x128xbf16>
    %11 = vector.shape_cast %10 : vector<1x8x128xbf16> to vector<8x128xbf16>
    %cst_11 = arith.constant dense<0.000000e+00> : vector<480x128xf32>
    %12 = tpu.matmul %9, %11, %cst_11 {dimension_numbers = #tpu.dot_dimension_numbers<[1], [0], [0], [1], [0, 0, 1, 1], [], []>} : vector<480x8xbf16>, vector<8x128xbf16>, vector<480x128xf32> -> vector<480x128xf32>
    %13 = arith.addf %8, %12 : vector<480x128xf32>
    %14 = vector.extract_strided_slice %4 {offsets = [32, 0], sizes = [480, 8], strides = [1, 1]} : vector<512x8xbf16> to vector<480x8xbf16>
    %c2 = arith.constant 2 : index
    %c0_12 = arith.constant 0 : index
    %c0_13 = arith.constant 0 : index
    %15 = vector.load %arg2[%c2, %c0_12, %c0_13] : memref<3x8x128xbf16, #tpu.memory_space<vmem>>, vector<1x8x128xbf16>
    %16 = vector.shape_cast %15 : vector<1x8x128xbf16> to vector<8x128xbf16>
    %cst_14 = arith.constant dense<0.000000e+00> : vector<480x128xf32>
    %17 = tpu.matmul %14, %16, %cst_14 {dimension_numbers = #tpu.dot_dimension_numbers<[1], [0], [0], [1], [0, 0, 1, 1], [], []>} : vector<480x8xbf16>, vector<8x128xbf16>, vector<480x128xf32> -> vector<480x128xf32>
    %18 = arith.addf %13, %17 : vector<480x128xf32>
    %c0_15 = arith.constant 0 : index
    %c0_16 = arith.constant 0 : index
    %19 = vector.load %arg3[%c0_15, %c0_16] : memref<1x128xf32, #tpu.memory_space<vmem>>, vector<1x128xf32>
    %20 = vector.broadcast %19 : vector<1x128xf32> to vector<480x128xf32>
    %21 = arith.addf %18, %20 : vector<480x128xf32>
    %cst_17 = arith.constant 0.000000e+00 : f32
    %22 = vector.broadcast %cst_17 : f32 to vector<480x128xf32>
    %23 = arith.maximumf %21, %22 : vector<480x128xf32>
    %24 = arith.truncf %23 : vector<480x128xf32> to vector<480x128xbf16>
    %c16 = arith.constant 16 : index
    %c0_18 = arith.constant 0 : index
    %25 = vector.load %arg11[%c16, %c0_18] : memref<512x128xbf16, #tpu.memory_space<vmem>>, vector<480x128xbf16>
    tpu.vector_store %arg11[%c16, %c0_18], %24 {strides = array<i32>} : memref<512x128xbf16, #tpu.memory_space<vmem>>, vector<480x128xbf16>,
    %c0_19 = arith.constant 0 : index
    %c0_20 = arith.constant 0 : index
    %26 = vector.load %arg11[%c0_19, %c0_20] : memref<512x128xbf16, #tpu.memory_space<vmem>>, vector<480x128xbf16>
    %c0_21 = arith.constant 0 : index
    %c0_22 = arith.constant 0 : index
    %c0_23 = arith.constant 0 : index
    %27 = vector.load %arg4[%c0_21, %c0_22, %c0_23] : memref<3x128x128xbf16, #tpu.memory_space<vmem>>, vector<1x128x128xbf16>
    %28 = vector.shape_cast %27 : vector<1x128x128xbf16> to vector<128x128xbf16>
    %cst_24 = arith.constant dense<0.000000e+00> : vector<480x128xf32>
    %29 = tpu.matmul %26, %28, %cst_24 {dimension_numbers = #tpu.dot_dimension_numbers<[1], [0], [0], [1], [0, 0, 1, 1], [], []>} : vector<480x128xbf16>, vector<128x128xbf16>, vector<480x128xf32> -> vector<480x128xf32>
    %c16_25 = arith.constant 16 : index
    %c0_26 = arith.constant 0 : index
    %30 = vector.load %arg11[%c16_25, %c0_26] : memref<512x128xbf16, #tpu.memory_space<vmem>>, vector<480x128xbf16>
    %c1_27 = arith.constant 1 : index
    %c0_28 = arith.constant 0 : index
    %c0_29 = arith.constant 0 : index
    %31 = vector.load %arg4[%c1_27, %c0_28, %c0_29] : memref<3x128x128xbf16, #tpu.memory_space<vmem>>, vector<1x128x128xbf16>
    %32 = vector.shape_cast %31 : vector<1x128x128xbf16> to vector<128x128xbf16>
    %cst_30 = arith.constant dense<0.000000e+00> : vector<480x128xf32>
    %33 = tpu.matmul %30, %32, %cst_30 {dimension_numbers = #tpu.dot_dimension_numbers<[1], [0], [0], [1], [0, 0, 1, 1], [], []>} : vector<480x128xbf16>, vector<128x128xbf16>, vector<480x128xf32> -> vector<480x128xf32>
    %34 = arith.addf %29, %33 : vector<480x128xf32>
    %c32 = arith.constant 32 : index
    %c0_31 = arith.constant 0 : index
    %35 = vector.load %arg11[%c32, %c0_31] : memref<512x128xbf16, #tpu.memory_space<vmem>>, vector<480x128xbf16>
    %c2_32 = arith.constant 2 : index
    %c0_33 = arith.constant 0 : index
    %c0_34 = arith.constant 0 : index
    %36 = vector.load %arg4[%c2_32, %c0_33, %c0_34] : memref<3x128x128xbf16, #tpu.memory_space<vmem>>, vector<1x128x128xbf16>
    %37 = vector.shape_cast %36 : vector<1x128x128xbf16> to vector<128x128xbf16>
    %cst_35 = arith.constant dense<0.000000e+00> : vector<480x128xf32>
    %38 = tpu.matmul %35, %37, %cst_35 {dimension_numbers = #tpu.dot_dimension_numbers<[1], [0], [0], [1], [0, 0, 1, 1], [], []>} : vector<480x128xbf16>, vector<128x128xbf16>, vector<480x128xf32> -> vector<480x128xf32>
    %39 = arith.addf %34, %38 : vector<480x128xf32>
    %c0_36 = arith.constant 0 : index
    %c0_37 = arith.constant 0 : index
    %40 = vector.load %arg5[%c0_36, %c0_37] : memref<1x128xf32, #tpu.memory_space<vmem>>, vector<1x128xf32>
    %41 = vector.broadcast %40 : vector<1x128xf32> to vector<480x128xf32>
    %42 = arith.addf %39, %41 : vector<480x128xf32>
    %cst_38 = arith.constant 0.000000e+00 : f32
    %43 = vector.broadcast %cst_38 : f32 to vector<480x128xf32>
    %44 = arith.maximumf %42, %43 : vector<480x128xf32>
    %45 = arith.truncf %44 : vector<480x128xf32> to vector<480x128xbf16>
    %c0_39 = arith.constant 0 : index
    %c0_40 = arith.constant 0 : index
    %46 = vector.load %arg12[%c0_39, %c0_40] : memref<480x128xbf16, #tpu.memory_space<vmem>>, vector<480x128xbf16>
    tpu.vector_store %arg12[%c0_39, %c0_40], %45 {strides = array<i32>} : memref<480x128xbf16, #tpu.memory_space<vmem>>, vector<480x128xbf16>,
    %cst_41 = arith.constant 0.000000e+00 : f32
    %47 = vector.broadcast %cst_41 : f32 to vector<16x256xf32>
    %cst_42 = arith.constant 0.000000e+00 : f32
    %48 = vector.broadcast %cst_42 : f32 to vector<16x256xf32>
    %c0_43 = arith.constant 0 : index
    %c0_44 = arith.constant 0 : index
    %49 = vector.load %arg12[%c0_43, %c0_44] : memref<480x128xbf16, #tpu.memory_space<vmem>>, vector<16x128xbf16>
    %c0_45 = arith.constant 0 : index
    %c0_46 = arith.constant 0 : index
    %c0_47 = arith.constant 0 : index
    %50 = vector.load %arg6[%c0_45, %c0_46, %c0_47] : memref<30x128x256xbf16, #tpu.memory_space<vmem>>, vector<1x128x256xbf16>
    %51 = vector.shape_cast %50 : vector<1x128x256xbf16> to vector<128x256xbf16>
    %cst_48 = arith.constant dense<0.000000e+00> : vector<16x256xf32>
    %52 = tpu.matmul %49, %51, %cst_48 {dimension_numbers = #tpu.dot_dimension_numbers<[1], [0], [0], [1], [0, 0, 1, 1], [], []>} : vector<16x128xbf16>, vector<128x256xbf16>, vector<16x256xf32> -> vector<16x256xf32>
    %53 = arith.addf %47, %52 : vector<16x256xf32>
    %c16_49 = arith.constant 16 : index
    %c0_50 = arith.constant 0 : index
    %54 = vector.load %arg12[%c16_49, %c0_50] : memref<480x128xbf16, #tpu.memory_space<vmem>>, vector<16x128xbf16>
    %c1_51 = arith.constant 1 : index
    %c0_52 = arith.constant 0 : index
    %c0_53 = arith.constant 0 : index
    %55 = vector.load %arg6[%c1_51, %c0_52, %c0_53] : memref<30x128x256xbf16, #tpu.memory_space<vmem>>, vector<1x128x256xbf16>
    %56 = vector.shape_cast %55 : vector<1x128x256xbf16> to vector<128x256xbf16>
    %cst_54 = arith.constant dense<0.000000e+00> : vector<16x256xf32>
    %57 = tpu.matmul %54, %56, %cst_54 {dimension_numbers = #tpu.dot_dimension_numbers<[1], [0], [0], [1], [0, 0, 1, 1], [], []>} : vector<16x128xbf16>, vector<128x256xbf16>, vector<16x256xf32> -> vector<16x256xf32>
    %58 = arith.addf %48, %57 : vector<16x256xf32>
    %c32_55 = arith.constant 32 : index
    %c0_56 = arith.constant 0 : index
    %59 = vector.load %arg12[%c32_55, %c0_56] : memref<480x128xbf16, #tpu.memory_space<vmem>>, vector<16x128xbf16>
    %c2_57 = arith.constant 2 : index
    %c0_58 = arith.constant 0 : index
    %c0_59 = arith.constant 0 : index
    %60 = vector.load %arg6[%c2_57, %c0_58, %c0_59] : memref<30x128x256xbf16, #tpu.memory_space<vmem>>, vector<1x128x256xbf16>
    %61 = vector.shape_cast %60 : vector<1x128x256xbf16> to vector<128x256xbf16>
    %cst_60 = arith.constant dense<0.000000e+00> : vector<16x256xf32>
    %62 = tpu.matmul %59, %61, %cst_60 {dimension_numbers = #tpu.dot_dimension_numbers<[1], [0], [0], [1], [0, 0, 1, 1], [], []>} : vector<16x128xbf16>, vector<128x256xbf16>, vector<16x256xf32> -> vector<16x256xf32>
    %63 = arith.addf %53, %62 : vector<16x256xf32>
    %c48 = arith.constant 48 : index
    %c0_61 = arith.constant 0 : index
    %64 = vector.load %arg12[%c48, %c0_61] : memref<480x128xbf16, #tpu.memory_space<vmem>>, vector<16x128xbf16>
    %c3 = arith.constant 3 : index
    %c0_62 = arith.constant 0 : index
    %c0_63 = arith.constant 0 : index
    %65 = vector.load %arg6[%c3, %c0_62, %c0_63] : memref<30x128x256xbf16, #tpu.memory_space<vmem>>, vector<1x128x256xbf16>
    %66 = vector.shape_cast %65 : vector<1x128x256xbf16> to vector<128x256xbf16>
    %cst_64 = arith.constant dense<0.000000e+00> : vector<16x256xf32>
    %67 = tpu.matmul %64, %66, %cst_64 {dimension_numbers = #tpu.dot_dimension_numbers<[1], [0], [0], [1], [0, 0, 1, 1], [], []>} : vector<16x128xbf16>, vector<128x256xbf16>, vector<16x256xf32> -> vector<16x256xf32>
    %68 = arith.addf %58, %67 : vector<16x256xf32>
    %c64 = arith.constant 64 : index
    %c0_65 = arith.constant 0 : index
    %69 = vector.load %arg12[%c64, %c0_65] : memref<480x128xbf16, #tpu.memory_space<vmem>>, vector<16x128xbf16>
    %c4 = arith.constant 4 : index
    %c0_66 = arith.constant 0 : index
    %c0_67 = arith.constant 0 : index
    %70 = vector.load %arg6[%c4, %c0_66, %c0_67] : memref<30x128x256xbf16, #tpu.memory_space<vmem>>, vector<1x128x256xbf16>
    %71 = vector.shape_cast %70 : vector<1x128x256xbf16> to vector<128x256xbf16>
    %cst_68 = arith.constant dense<0.000000e+00> : vector<16x256xf32>
    %72 = tpu.matmul %69, %71, %cst_68 {dimension_numbers = #tpu.dot_dimension_numbers<[1], [0], [0], [1], [0, 0, 1, 1], [], []>} : vector<16x128xbf16>, vector<128x256xbf16>, vector<16x256xf32> -> vector<16x256xf32>
    %73 = arith.addf %63, %72 : vector<16x256xf32>
    %c80 = arith.constant 80 : index
    %c0_69 = arith.constant 0 : index
    %74 = vector.load %arg12[%c80, %c0_69] : memref<480x128xbf16, #tpu.memory_space<vmem>>, vector<16x128xbf16>
    %c5 = arith.constant 5 : index
    %c0_70 = arith.constant 0 : index
    %c0_71 = arith.constant 0 : index
    %75 = vector.load %arg6[%c5, %c0_70, %c0_71] : memref<30x128x256xbf16, #tpu.memory_space<vmem>>, vector<1x128x256xbf16>
    %76 = vector.shape_cast %75 : vector<1x128x256xbf16> to vector<128x256xbf16>
    %cst_72 = arith.constant dense<0.000000e+00> : vector<16x256xf32>
    %77 = tpu.matmul %74, %76, %cst_72 {dimension_numbers = #tpu.dot_dimension_numbers<[1], [0], [0], [1], [0, 0, 1, 1], [], []>} : vector<16x128xbf16>, vector<128x256xbf16>, vector<16x256xf32> -> vector<16x256xf32>
    %78 = arith.addf %68, %77 : vector<16x256xf32>
    %c96 = arith.constant 96 : index
    %c0_73 = arith.constant 0 : index
    %79 = vector.load %arg12[%c96, %c0_73] : memref<480x128xbf16, #tpu.memory_space<vmem>>, vector<16x128xbf16>
    %c6 = arith.constant 6 : index
    %c0_74 = arith.constant 0 : index
    %c0_75 = arith.constant 0 : index
    %80 = vector.load %arg6[%c6, %c0_74, %c0_75] : memref<30x128x256xbf16, #tpu.memory_space<vmem>>, vector<1x128x256xbf16>
    %81 = vector.shape_cast %80 : vector<1x128x256xbf16> to vector<128x256xbf16>
    %cst_76 = arith.constant dense<0.000000e+00> : vector<16x256xf32>
    %82 = tpu.matmul %79, %81, %cst_76 {dimension_numbers = #tpu.dot_dimension_numbers<[1], [0], [0], [1], [0, 0, 1, 1], [], []>} : vector<16x128xbf16>, vector<128x256xbf16>, vector<16x256xf32> -> vector<16x256xf32>
    %83 = arith.addf %73, %82 : vector<16x256xf32>
    %c112 = arith.constant 112 : index
    %c0_77 = arith.constant 0 : index
    %84 = vector.load %arg12[%c112, %c0_77] : memref<480x128xbf16, #tpu.memory_space<vmem>>, vector<16x128xbf16>
    %c7 = arith.constant 7 : index
    %c0_78 = arith.constant 0 : index
    %c0_79 = arith.constant 0 : index
    %85 = vector.load %arg6[%c7, %c0_78, %c0_79] : memref<30x128x256xbf16, #tpu.memory_space<vmem>>, vector<1x128x256xbf16>
    %86 = vector.shape_cast %85 : vector<1x128x256xbf16> to vector<128x256xbf16>
    %cst_80 = arith.constant dense<0.000000e+00> : vector<16x256xf32>
    %87 = tpu.matmul %84, %86, %cst_80 {dimension_numbers = #tpu.dot_dimension_numbers<[1], [0], [0], [1], [0, 0, 1, 1], [], []>} : vector<16x128xbf16>, vector<128x256xbf16>, vector<16x256xf32> -> vector<16x256xf32>
    %88 = arith.addf %78, %87 : vector<16x256xf32>
    %c128 = arith.constant 128 : index
    %c0_81 = arith.constant 0 : index
    %89 = vector.load %arg12[%c128, %c0_81] : memref<480x128xbf16, #tpu.memory_space<vmem>>, vector<16x128xbf16>
    %c8 = arith.constant 8 : index
    %c0_82 = arith.constant 0 : index
    %c0_83 = arith.constant 0 : index
    %90 = vector.load %arg6[%c8, %c0_82, %c0_83] : memref<30x128x256xbf16, #tpu.memory_space<vmem>>, vector<1x128x256xbf16>
    %91 = vector.shape_cast %90 : vector<1x128x256xbf16> to vector<128x256xbf16>
    %cst_84 = arith.constant dense<0.000000e+00> : vector<16x256xf32>
    %92 = tpu.matmul %89, %91, %cst_84 {dimension_numbers = #tpu.dot_dimension_numbers<[1], [0], [0], [1], [0, 0, 1, 1], [], []>} : vector<16x128xbf16>, vector<128x256xbf16>, vector<16x256xf32> -> vector<16x256xf32>
    %93 = arith.addf %83, %92 : vector<16x256xf32>
    %c144 = arith.constant 144 : index
    %c0_85 = arith.constant 0 : index
    %94 = vector.load %arg12[%c144, %c0_85] : memref<480x128xbf16, #tpu.memory_space<vmem>>, vector<16x128xbf16>
    %c9 = arith.constant 9 : index
    %c0_86 = arith.constant 0 : index
    %c0_87 = arith.constant 0 : index
    %95 = vector.load %arg6[%c9, %c0_86, %c0_87] : memref<30x128x256xbf16, #tpu.memory_space<vmem>>, vector<1x128x256xbf16>
    %96 = vector.shape_cast %95 : vector<1x128x256xbf16> to vector<128x256xbf16>
    %cst_88 = arith.constant dense<0.000000e+00> : vector<16x256xf32>
    %97 = tpu.matmul %94, %96, %cst_88 {dimension_numbers = #tpu.dot_dimension_numbers<[1], [0], [0], [1], [0, 0, 1, 1], [], []>} : vector<16x128xbf16>, vector<128x256xbf16>, vector<16x256xf32> -> vector<16x256xf32>
    %98 = arith.addf %88, %97 : vector<16x256xf32>
    %c160 = arith.constant 160 : index
    %c0_89 = arith.constant 0 : index
    %99 = vector.load %arg12[%c160, %c0_89] : memref<480x128xbf16, #tpu.memory_space<vmem>>, vector<16x128xbf16>
    %c10 = arith.constant 10 : index
    %c0_90 = arith.constant 0 : index
    %c0_91 = arith.constant 0 : index
    %100 = vector.load %arg6[%c10, %c0_90, %c0_91] : memref<30x128x256xbf16, #tpu.memory_space<vmem>>, vector<1x128x256xbf16>
    %101 = vector.shape_cast %100 : vector<1x128x256xbf16> to vector<128x256xbf16>
    %cst_92 = arith.constant dense<0.000000e+00> : vector<16x256xf32>
    %102 = tpu.matmul %99, %101, %cst_92 {dimension_numbers = #tpu.dot_dimension_numbers<[1], [0], [0], [1], [0, 0, 1, 1], [], []>} : vector<16x128xbf16>, vector<128x256xbf16>, vector<16x256xf32> -> vector<16x256xf32>
    %103 = arith.addf %93, %102 : vector<16x256xf32>
    %c176 = arith.constant 176 : index
    %c0_93 = arith.constant 0 : index
    %104 = vector.load %arg12[%c176, %c0_93] : memref<480x128xbf16, #tpu.memory_space<vmem>>, vector<16x128xbf16>
    %c11 = arith.constant 11 : index
    %c0_94 = arith.constant 0 : index
    %c0_95 = arith.constant 0 : index
    %105 = vector.load %arg6[%c11, %c0_94, %c0_95] : memref<30x128x256xbf16, #tpu.memory_space<vmem>>, vector<1x128x256xbf16>
    %106 = vector.shape_cast %105 : vector<1x128x256xbf16> to vector<128x256xbf16>
    %cst_96 = arith.constant dense<0.000000e+00> : vector<16x256xf32>
    %107 = tpu.matmul %104, %106, %cst_96 {dimension_numbers = #tpu.dot_dimension_numbers<[1], [0], [0], [1], [0, 0, 1, 1], [], []>} : vector<16x128xbf16>, vector<128x256xbf16>, vector<16x256xf32> -> vector<16x256xf32>
    %108 = arith.addf %98, %107 : vector<16x256xf32>
    %c192 = arith.constant 192 : index
    %c0_97 = arith.constant 0 : index
    %109 = vector.load %arg12[%c192, %c0_97] : memref<480x128xbf16, #tpu.memory_space<vmem>>, vector<16x128xbf16>
    %c12 = arith.constant 12 : index
    %c0_98 = arith.constant 0 : index
    %c0_99 = arith.constant 0 : index
    %110 = vector.load %arg6[%c12, %c0_98, %c0_99] : memref<30x128x256xbf16, #tpu.memory_space<vmem>>, vector<1x128x256xbf16>
    %111 = vector.shape_cast %110 : vector<1x128x256xbf16> to vector<128x256xbf16>
    %cst_100 = arith.constant dense<0.000000e+00> : vector<16x256xf32>
    %112 = tpu.matmul %109, %111, %cst_100 {dimension_numbers = #tpu.dot_dimension_numbers<[1], [0], [0], [1], [0, 0, 1, 1], [], []>} : vector<16x128xbf16>, vector<128x256xbf16>, vector<16x256xf32> -> vector<16x256xf32>
    %113 = arith.addf %103, %112 : vector<16x256xf32>
    %c208 = arith.constant 208 : index
    %c0_101 = arith.constant 0 : index
    %114 = vector.load %arg12[%c208, %c0_101] : memref<480x128xbf16, #tpu.memory_space<vmem>>, vector<16x128xbf16>
    %c13 = arith.constant 13 : index
    %c0_102 = arith.constant 0 : index
    %c0_103 = arith.constant 0 : index
    %115 = vector.load %arg6[%c13, %c0_102, %c0_103] : memref<30x128x256xbf16, #tpu.memory_space<vmem>>, vector<1x128x256xbf16>
    %116 = vector.shape_cast %115 : vector<1x128x256xbf16> to vector<128x256xbf16>
    %cst_104 = arith.constant dense<0.000000e+00> : vector<16x256xf32>
    %117 = tpu.matmul %114, %116, %cst_104 {dimension_numbers = #tpu.dot_dimension_numbers<[1], [0], [0], [1], [0, 0, 1, 1], [], []>} : vector<16x128xbf16>, vector<128x256xbf16>, vector<16x256xf32> -> vector<16x256xf32>
    %118 = arith.addf %108, %117 : vector<16x256xf32>
    %c224 = arith.constant 224 : index
    %c0_105 = arith.constant 0 : index
    %119 = vector.load %arg12[%c224, %c0_105] : memref<480x128xbf16, #tpu.memory_space<vmem>>, vector<16x128xbf16>
    %c14 = arith.constant 14 : index
    %c0_106 = arith.constant 0 : index
    %c0_107 = arith.constant 0 : index
    %120 = vector.load %arg6[%c14, %c0_106, %c0_107] : memref<30x128x256xbf16, #tpu.memory_space<vmem>>, vector<1x128x256xbf16>
    %121 = vector.shape_cast %120 : vector<1x128x256xbf16> to vector<128x256xbf16>
    %cst_108 = arith.constant dense<0.000000e+00> : vector<16x256xf32>
    %122 = tpu.matmul %119, %121, %cst_108 {dimension_numbers = #tpu.dot_dimension_numbers<[1], [0], [0], [1], [0, 0, 1, 1], [], []>} : vector<16x128xbf16>, vector<128x256xbf16>, vector<16x256xf32> -> vector<16x256xf32>
    %123 = arith.addf %113, %122 : vector<16x256xf32>
    %c240 = arith.constant 240 : index
    %c0_109 = arith.constant 0 : index
    %124 = vector.load %arg12[%c240, %c0_109] : memref<480x128xbf16, #tpu.memory_space<vmem>>, vector<16x128xbf16>
    %c15 = arith.constant 15 : index
    %c0_110 = arith.constant 0 : index
    %c0_111 = arith.constant 0 : index
    %125 = vector.load %arg6[%c15, %c0_110, %c0_111] : memref<30x128x256xbf16, #tpu.memory_space<vmem>>, vector<1x128x256xbf16>
    %126 = vector.shape_cast %125 : vector<1x128x256xbf16> to vector<128x256xbf16>
    %cst_112 = arith.constant dense<0.000000e+00> : vector<16x256xf32>
    %127 = tpu.matmul %124, %126, %cst_112 {dimension_numbers = #tpu.dot_dimension_numbers<[1], [0], [0], [1], [0, 0, 1, 1], [], []>} : vector<16x128xbf16>, vector<128x256xbf16>, vector<16x256xf32> -> vector<16x256xf32>
    %128 = arith.addf %118, %127 : vector<16x256xf32>
    %c256 = arith.constant 256 : index
    %c0_113 = arith.constant 0 : index
    %129 = vector.load %arg12[%c256, %c0_113] : memref<480x128xbf16, #tpu.memory_space<vmem>>, vector<16x128xbf16>
    %c16_114 = arith.constant 16 : index
    %c0_115 = arith.constant 0 : index
    %c0_116 = arith.constant 0 : index
    %130 = vector.load %arg6[%c16_114, %c0_115, %c0_116] : memref<30x128x256xbf16, #tpu.memory_space<vmem>>, vector<1x128x256xbf16>
    %131 = vector.shape_cast %130 : vector<1x128x256xbf16> to vector<128x256xbf16>
    %cst_117 = arith.constant dense<0.000000e+00> : vector<16x256xf32>
    %132 = tpu.matmul %129, %131, %cst_117 {dimension_numbers = #tpu.dot_dimension_numbers<[1], [0], [0], [1], [0, 0, 1, 1], [], []>} : vector<16x128xbf16>, vector<128x256xbf16>, vector<16x256xf32> -> vector<16x256xf32>
    %133 = arith.addf %123, %132 : vector<16x256xf32>
    %c272 = arith.constant 272 : index
    %c0_118 = arith.constant 0 : index
    %134 = vector.load %arg12[%c272, %c0_118] : memref<480x128xbf16, #tpu.memory_space<vmem>>, vector<16x128xbf16>
    %c17 = arith.constant 17 : index
    %c0_119 = arith.constant 0 : index
    %c0_120 = arith.constant 0 : index
    %135 = vector.load %arg6[%c17, %c0_119, %c0_120] : memref<30x128x256xbf16, #tpu.memory_space<vmem>>, vector<1x128x256xbf16>
    %136 = vector.shape_cast %135 : vector<1x128x256xbf16> to vector<128x256xbf16>
    %cst_121 = arith.constant dense<0.000000e+00> : vector<16x256xf32>
    %137 = tpu.matmul %134, %136, %cst_121 {dimension_numbers = #tpu.dot_dimension_numbers<[1], [0], [0], [1], [0, 0, 1, 1], [], []>} : vector<16x128xbf16>, vector<128x256xbf16>, vector<16x256xf32> -> vector<16x256xf32>
    %138 = arith.addf %128, %137 : vector<16x256xf32>
    %c288 = arith.constant 288 : index
    %c0_122 = arith.constant 0 : index
    %139 = vector.load %arg12[%c288, %c0_122] : memref<480x128xbf16, #tpu.memory_space<vmem>>, vector<16x128xbf16>
    %c18 = arith.constant 18 : index
    %c0_123 = arith.constant 0 : index
    %c0_124 = arith.constant 0 : index
    %140 = vector.load %arg6[%c18, %c0_123, %c0_124] : memref<30x128x256xbf16, #tpu.memory_space<vmem>>, vector<1x128x256xbf16>
    %141 = vector.shape_cast %140 : vector<1x128x256xbf16> to vector<128x256xbf16>
    %cst_125 = arith.constant dense<0.000000e+00> : vector<16x256xf32>
    %142 = tpu.matmul %139, %141, %cst_125 {dimension_numbers = #tpu.dot_dimension_numbers<[1], [0], [0], [1], [0, 0, 1, 1], [], []>} : vector<16x128xbf16>, vector<128x256xbf16>, vector<16x256xf32> -> vector<16x256xf32>
    %143 = arith.addf %133, %142 : vector<16x256xf32>
    %c304 = arith.constant 304 : index
    %c0_126 = arith.constant 0 : index
    %144 = vector.load %arg12[%c304, %c0_126] : memref<480x128xbf16, #tpu.memory_space<vmem>>, vector<16x128xbf16>
    %c19 = arith.constant 19 : index
    %c0_127 = arith.constant 0 : index
    %c0_128 = arith.constant 0 : index
    %145 = vector.load %arg6[%c19, %c0_127, %c0_128] : memref<30x128x256xbf16, #tpu.memory_space<vmem>>, vector<1x128x256xbf16>
    %146 = vector.shape_cast %145 : vector<1x128x256xbf16> to vector<128x256xbf16>
    %cst_129 = arith.constant dense<0.000000e+00> : vector<16x256xf32>
    %147 = tpu.matmul %144, %146, %cst_129 {dimension_numbers = #tpu.dot_dimension_numbers<[1], [0], [0], [1], [0, 0, 1, 1], [], []>} : vector<16x128xbf16>, vector<128x256xbf16>, vector<16x256xf32> -> vector<16x256xf32>
    %148 = arith.addf %138, %147 : vector<16x256xf32>
    %c320 = arith.constant 320 : index
    %c0_130 = arith.constant 0 : index
    %149 = vector.load %arg12[%c320, %c0_130] : memref<480x128xbf16, #tpu.memory_space<vmem>>, vector<16x128xbf16>
    %c20 = arith.constant 20 : index
    %c0_131 = arith.constant 0 : index
    %c0_132 = arith.constant 0 : index
    %150 = vector.load %arg6[%c20, %c0_131, %c0_132] : memref<30x128x256xbf16, #tpu.memory_space<vmem>>, vector<1x128x256xbf16>
    %151 = vector.shape_cast %150 : vector<1x128x256xbf16> to vector<128x256xbf16>
    %cst_133 = arith.constant dense<0.000000e+00> : vector<16x256xf32>
    %152 = tpu.matmul %149, %151, %cst_133 {dimension_numbers = #tpu.dot_dimension_numbers<[1], [0], [0], [1], [0, 0, 1, 1], [], []>} : vector<16x128xbf16>, vector<128x256xbf16>, vector<16x256xf32> -> vector<16x256xf32>
    %153 = arith.addf %143, %152 : vector<16x256xf32>
    %c336 = arith.constant 336 : index
    %c0_134 = arith.constant 0 : index
    %154 = vector.load %arg12[%c336, %c0_134] : memref<480x128xbf16, #tpu.memory_space<vmem>>, vector<16x128xbf16>
    %c21 = arith.constant 21 : index
    %c0_135 = arith.constant 0 : index
    %c0_136 = arith.constant 0 : index
    %155 = vector.load %arg6[%c21, %c0_135, %c0_136] : memref<30x128x256xbf16, #tpu.memory_space<vmem>>, vector<1x128x256xbf16>
    %156 = vector.shape_cast %155 : vector<1x128x256xbf16> to vector<128x256xbf16>
    %cst_137 = arith.constant dense<0.000000e+00> : vector<16x256xf32>
    %157 = tpu.matmul %154, %156, %cst_137 {dimension_numbers = #tpu.dot_dimension_numbers<[1], [0], [0], [1], [0, 0, 1, 1], [], []>} : vector<16x128xbf16>, vector<128x256xbf16>, vector<16x256xf32> -> vector<16x256xf32>
    %158 = arith.addf %148, %157 : vector<16x256xf32>
    %c352 = arith.constant 352 : index
    %c0_138 = arith.constant 0 : index
    %159 = vector.load %arg12[%c352, %c0_138] : memref<480x128xbf16, #tpu.memory_space<vmem>>, vector<16x128xbf16>
    %c22 = arith.constant 22 : index
    %c0_139 = arith.constant 0 : index
    %c0_140 = arith.constant 0 : index
    %160 = vector.load %arg6[%c22, %c0_139, %c0_140] : memref<30x128x256xbf16, #tpu.memory_space<vmem>>, vector<1x128x256xbf16>
    %161 = vector.shape_cast %160 : vector<1x128x256xbf16> to vector<128x256xbf16>
    %cst_141 = arith.constant dense<0.000000e+00> : vector<16x256xf32>
    %162 = tpu.matmul %159, %161, %cst_141 {dimension_numbers = #tpu.dot_dimension_numbers<[1], [0], [0], [1], [0, 0, 1, 1], [], []>} : vector<16x128xbf16>, vector<128x256xbf16>, vector<16x256xf32> -> vector<16x256xf32>
    %163 = arith.addf %153, %162 : vector<16x256xf32>
    %c368 = arith.constant 368 : index
    %c0_142 = arith.constant 0 : index
    %164 = vector.load %arg12[%c368, %c0_142] : memref<480x128xbf16, #tpu.memory_space<vmem>>, vector<16x128xbf16>
    %c23 = arith.constant 23 : index
    %c0_143 = arith.constant 0 : index
    %c0_144 = arith.constant 0 : index
    %165 = vector.load %arg6[%c23, %c0_143, %c0_144] : memref<30x128x256xbf16, #tpu.memory_space<vmem>>, vector<1x128x256xbf16>
    %166 = vector.shape_cast %165 : vector<1x128x256xbf16> to vector<128x256xbf16>
    %cst_145 = arith.constant dense<0.000000e+00> : vector<16x256xf32>
    %167 = tpu.matmul %164, %166, %cst_145 {dimension_numbers = #tpu.dot_dimension_numbers<[1], [0], [0], [1], [0, 0, 1, 1], [], []>} : vector<16x128xbf16>, vector<128x256xbf16>, vector<16x256xf32> -> vector<16x256xf32>
    %168 = arith.addf %158, %167 : vector<16x256xf32>
    %c384 = arith.constant 384 : index
    %c0_146 = arith.constant 0 : index
    %169 = vector.load %arg12[%c384, %c0_146] : memref<480x128xbf16, #tpu.memory_space<vmem>>, vector<16x128xbf16>
    %c24 = arith.constant 24 : index
    %c0_147 = arith.constant 0 : index
    %c0_148 = arith.constant 0 : index
    %170 = vector.load %arg6[%c24, %c0_147, %c0_148] : memref<30x128x256xbf16, #tpu.memory_space<vmem>>, vector<1x128x256xbf16>
    %171 = vector.shape_cast %170 : vector<1x128x256xbf16> to vector<128x256xbf16>
    %cst_149 = arith.constant dense<0.000000e+00> : vector<16x256xf32>
    %172 = tpu.matmul %169, %171, %cst_149 {dimension_numbers = #tpu.dot_dimension_numbers<[1], [0], [0], [1], [0, 0, 1, 1], [], []>} : vector<16x128xbf16>, vector<128x256xbf16>, vector<16x256xf32> -> vector<16x256xf32>
    %173 = arith.addf %163, %172 : vector<16x256xf32>
    %c400 = arith.constant 400 : index
    %c0_150 = arith.constant 0 : index
    %174 = vector.load %arg12[%c400, %c0_150] : memref<480x128xbf16, #tpu.memory_space<vmem>>, vector<16x128xbf16>
    %c25 = arith.constant 25 : index
    %c0_151 = arith.constant 0 : index
    %c0_152 = arith.constant 0 : index
    %175 = vector.load %arg6[%c25, %c0_151, %c0_152] : memref<30x128x256xbf16, #tpu.memory_space<vmem>>, vector<1x128x256xbf16>
    %176 = vector.shape_cast %175 : vector<1x128x256xbf16> to vector<128x256xbf16>
    %cst_153 = arith.constant dense<0.000000e+00> : vector<16x256xf32>
    %177 = tpu.matmul %174, %176, %cst_153 {dimension_numbers = #tpu.dot_dimension_numbers<[1], [0], [0], [1], [0, 0, 1, 1], [], []>} : vector<16x128xbf16>, vector<128x256xbf16>, vector<16x256xf32> -> vector<16x256xf32>
    %178 = arith.addf %168, %177 : vector<16x256xf32>
    %c416 = arith.constant 416 : index
    %c0_154 = arith.constant 0 : index
    %179 = vector.load %arg12[%c416, %c0_154] : memref<480x128xbf16, #tpu.memory_space<vmem>>, vector<16x128xbf16>
    %c26 = arith.constant 26 : index
    %c0_155 = arith.constant 0 : index
    %c0_156 = arith.constant 0 : index
    %180 = vector.load %arg6[%c26, %c0_155, %c0_156] : memref<30x128x256xbf16, #tpu.memory_space<vmem>>, vector<1x128x256xbf16>
    %181 = vector.shape_cast %180 : vector<1x128x256xbf16> to vector<128x256xbf16>
    %cst_157 = arith.constant dense<0.000000e+00> : vector<16x256xf32>
    %182 = tpu.matmul %179, %181, %cst_157 {dimension_numbers = #tpu.dot_dimension_numbers<[1], [0], [0], [1], [0, 0, 1, 1], [], []>} : vector<16x128xbf16>, vector<128x256xbf16>, vector<16x256xf32> -> vector<16x256xf32>
    %183 = arith.addf %173, %182 : vector<16x256xf32>
    %c432 = arith.constant 432 : index
    %c0_158 = arith.constant 0 : index
    %184 = vector.load %arg12[%c432, %c0_158] : memref<480x128xbf16, #tpu.memory_space<vmem>>, vector<16x128xbf16>
    %c27 = arith.constant 27 : index
    %c0_159 = arith.constant 0 : index
    %c0_160 = arith.constant 0 : index
    %185 = vector.load %arg6[%c27, %c0_159, %c0_160] : memref<30x128x256xbf16, #tpu.memory_space<vmem>>, vector<1x128x256xbf16>
    %186 = vector.shape_cast %185 : vector<1x128x256xbf16> to vector<128x256xbf16>
    %cst_161 = arith.constant dense<0.000000e+00> : vector<16x256xf32>
    %187 = tpu.matmul %184, %186, %cst_161 {dimension_numbers = #tpu.dot_dimension_numbers<[1], [0], [0], [1], [0, 0, 1, 1], [], []>} : vector<16x128xbf16>, vector<128x256xbf16>, vector<16x256xf32> -> vector<16x256xf32>
    %188 = arith.addf %178, %187 : vector<16x256xf32>
    %c448 = arith.constant 448 : index
    %c0_162 = arith.constant 0 : index
    %189 = vector.load %arg12[%c448, %c0_162] : memref<480x128xbf16, #tpu.memory_space<vmem>>, vector<16x128xbf16>
    %c28 = arith.constant 28 : index
    %c0_163 = arith.constant 0 : index
    %c0_164 = arith.constant 0 : index
    %190 = vector.load %arg6[%c28, %c0_163, %c0_164] : memref<30x128x256xbf16, #tpu.memory_space<vmem>>, vector<1x128x256xbf16>
    %191 = vector.shape_cast %190 : vector<1x128x256xbf16> to vector<128x256xbf16>
    %cst_165 = arith.constant dense<0.000000e+00> : vector<16x256xf32>
    %192 = tpu.matmul %189, %191, %cst_165 {dimension_numbers = #tpu.dot_dimension_numbers<[1], [0], [0], [1], [0, 0, 1, 1], [], []>} : vector<16x128xbf16>, vector<128x256xbf16>, vector<16x256xf32> -> vector<16x256xf32>
    %193 = arith.addf %183, %192 : vector<16x256xf32>
    %c464 = arith.constant 464 : index
    %c0_166 = arith.constant 0 : index
    %194 = vector.load %arg12[%c464, %c0_166] : memref<480x128xbf16, #tpu.memory_space<vmem>>, vector<16x128xbf16>
    %c29 = arith.constant 29 : index
    %c0_167 = arith.constant 0 : index
    %c0_168 = arith.constant 0 : index
    %195 = vector.load %arg6[%c29, %c0_167, %c0_168] : memref<30x128x256xbf16, #tpu.memory_space<vmem>>, vector<1x128x256xbf16>
    %196 = vector.shape_cast %195 : vector<1x128x256xbf16> to vector<128x256xbf16>
    %cst_169 = arith.constant dense<0.000000e+00> : vector<16x256xf32>
    %197 = tpu.matmul %194, %196, %cst_169 {dimension_numbers = #tpu.dot_dimension_numbers<[1], [0], [0], [1], [0, 0, 1, 1], [], []>} : vector<16x128xbf16>, vector<128x256xbf16>, vector<16x256xf32> -> vector<16x256xf32>
    %198 = arith.addf %188, %197 : vector<16x256xf32>
    %199 = arith.addf %193, %198 : vector<16x256xf32>
    %c0_170 = arith.constant 0 : index
    %c0_171 = arith.constant 0 : index
    %200 = vector.load %arg7[%c0_170, %c0_171] : memref<1x256xf32, #tpu.memory_space<vmem>>, vector<1x256xf32>
    %201 = vector.broadcast %200 : vector<1x256xf32> to vector<16x256xf32>
    %202 = arith.addf %199, %201 : vector<16x256xf32>
    %cst_172 = arith.constant 0.000000e+00 : f32
    %203 = vector.broadcast %cst_172 : f32 to vector<16x256xf32>
    %204 = arith.maximumf %202, %203 : vector<16x256xf32>
    %205 = arith.truncf %204 : vector<16x256xf32> to vector<16x256xbf16>
    %c0_173 = arith.constant 0 : index
    %c0_174 = arith.constant 0 : index
    %206 = vector.load %arg8[%c0_173, %c0_174] : memref<256x128xbf16, #tpu.memory_space<vmem>>, vector<256x128xbf16>
    %cst_175 = arith.constant dense<0.000000e+00> : vector<16x128xf32>
    %207 = tpu.matmul %205, %206, %cst_175 {dimension_numbers = #tpu.dot_dimension_numbers<[1], [0], [0], [1], [0, 0, 1, 1], [], []>} : vector<16x256xbf16>, vector<256x128xbf16>, vector<16x128xf32> -> vector<16x128xf32>
    %c0_176 = arith.constant 0 : index
    %c0_177 = arith.constant 0 : index
    %208 = vector.load %arg9[%c0_176, %c0_177] : memref<1x128xf32, #tpu.memory_space<vmem>>, vector<1x128xf32>
    %209 = vector.broadcast %208 : vector<1x128xf32> to vector<16x128xf32>
    %210 = arith.addf %207, %209 : vector<16x128xf32>
    %c0_178 = arith.constant 0 : index
    %c0_179 = arith.constant 0 : index
    %211 = vector.load %arg10[%c0_178, %c0_179] : memref<16x128xf32, #tpu.memory_space<vmem>>, vector<16x128xf32>
    tpu.vector_store %arg10[%c0_178, %c0_179], %210 {strides = array<i32>} : memref<16x128xf32, #tpu.memory_space<vmem>>, vector<16x128xf32>,
    return
  }
  func.func @transform_0(%arg0: i32) -> (i32, i32) {
    %c0_i32 = arith.constant 0 : i32
    %c0_i32_0 = arith.constant 0 : i32
    return %arg0, %c0_i32 : i32, i32
  }
  func.func @transform_1(%arg0: i32) -> (i32, i32, i32) {
    %c0_i32 = arith.constant 0 : i32
    %c0_i32_0 = arith.constant 0 : i32
    %c0_i32_1 = arith.constant 0 : i32
    %c0_i32_2 = arith.constant 0 : i32
    return %c0_i32, %c0_i32_0, %c0_i32_1 : i32, i32, i32
  }
  func.func @transform_2(%arg0: i32) -> (i32, i32) {
    %c0_i32 = arith.constant 0 : i32
    %c0_i32_0 = arith.constant 0 : i32
    %c0_i32_1 = arith.constant 0 : i32
    return %c0_i32, %c0_i32_0 : i32, i32
  }
  func.func @transform_3(%arg0: i32) -> (i32, i32, i32) {
    %c0_i32 = arith.constant 0 : i32
    %c0_i32_0 = arith.constant 0 : i32
    %c0_i32_1 = arith.constant 0 : i32
    %c0_i32_2 = arith.constant 0 : i32
    return %c0_i32, %c0_i32_0, %c0_i32_1 : i32, i32, i32
  }
  func.func @transform_4(%arg0: i32) -> (i32, i32) {
    %c0_i32 = arith.constant 0 : i32
    %c0_i32_0 = arith.constant 0 : i32
    %c0_i32_1 = arith.constant 0 : i32
    return %c0_i32, %c0_i32_0 : i32, i32
  }
  func.func @transform_5(%arg0: i32) -> (i32, i32, i32) {
    %c0_i32 = arith.constant 0 : i32
    %c0_i32_0 = arith.constant 0 : i32
    %c0_i32_1 = arith.constant 0 : i32
    %c0_i32_2 = arith.constant 0 : i32
    return %c0_i32, %c0_i32_0, %c0_i32_1 : i32, i32, i32
  }
  func.func @transform_6(%arg0: i32) -> (i32, i32) {
    %c0_i32 = arith.constant 0 : i32
    %c0_i32_0 = arith.constant 0 : i32
    %c0_i32_1 = arith.constant 0 : i32
    return %c0_i32, %c0_i32_0 : i32, i32
  }
  func.func @transform_7(%arg0: i32) -> (i32, i32) {
    %c0_i32 = arith.constant 0 : i32
    %c0_i32_0 = arith.constant 0 : i32
    %c0_i32_1 = arith.constant 0 : i32
    return %c0_i32, %c0_i32_0 : i32, i32
  }
  func.func @transform_8(%arg0: i32) -> (i32, i32) {
    %c0_i32 = arith.constant 0 : i32
    %c0_i32_0 = arith.constant 0 : i32
    %c0_i32_1 = arith.constant 0 : i32
    return %c0_i32, %c0_i32_0 : i32, i32
  }
  func.func @transform_9(%arg0: i32) -> (i32, i32) {
    %c0_i32 = arith.constant 0 : i32
    %c0_i32_0 = arith.constant 0 : i32
    return %arg0, %c0_i32 : i32, i32
  }
}

</mosaic_0001>

<llo_original>
// kernel: tpu_custom_call.1
$region0: #{tpu_custom_call.1}
  #allocation0 [shape = 'u32[]', space=smem, size = 0x4, offset = 0x4, fixed_abs, tag = 'smem constant byte address 0x4 - core index']
  #allocation1 [shape = 'u32[144,128]{1,0:T(1,128)}', space=vmem, size = 0x12000, scoped, tag = 'internal scratch']
  #allocation2 [shape = 'bf16[512,128]{1,0:T(16,128)(2,1)}', space=vmem, size = 0x20000, scoped, tag = 'scratch operand']
  #allocation3 [shape = 'bf16[480,128]{1,0:T(16,128)(2,1)}', space=vmem, size = 0x1e000, scoped, tag = 'scratch operand']
  %s0 = inlined_call_operand.vmem [shape: bf16[512,8], index: 0, kind: input, shape index: {}]
  %s1 = inlined_call_operand.hbm [shape: bf16[3,8,128], index: 1, kind: input, shape index: {}]
  %s2 = inlined_call_operand.hbm [shape: f32[1,128], index: 2, kind: input, shape index: {}]
  %s3 = inlined_call_operand.hbm [shape: bf16[3,128,128], index: 3, kind: input, shape index: {}]
  %s4 = inlined_call_operand.hbm [shape: f32[1,128], index: 4, kind: input, shape index: {}]
  %s5 = inlined_call_operand.hbm [shape: bf16[30,128,256], index: 5, kind: input, shape index: {}]
  %s6 = inlined_call_operand.hbm [shape: f32[1,256], index: 6, kind: input, shape index: {}]
  %s7 = inlined_call_operand.hbm [shape: bf16[256,128], index: 7, kind: input, shape index: {}]
  %s8 = inlined_call_operand.hbm [shape: f32[1,128], index: 8, kind: input, shape index: {}]
  %s9 = inlined_call_operand.hbm [shape: f32[16,128], index: 9, kind: output, shape index: {}]
  %s10 = sld [smem:[#allocation0]]
  $region78: #{tpu_custom_call.1} parent=0
    _
  %s12 = ssub.s32 1, %s10
  %s13 = scalar_select 0, %s12, %s10
  $region1: #{tpu_custom_call.1} parent=0
    #allocation4 [shape = 'u8[6144]{0}', space=vmem, size = 0x1800, scoped, tag = 'input window, operand 1, single buffered']
    #allocation5 [shape = 's32[1]{0}', space=sflag, size = 0x4, scoped, tag = 'scoped memory for tpu_custom_call.1']
    #allocation6 [shape = 's32[1]{0}', space=sflag, size = 0x4, scoped, tag = 'scoped memory for tpu_custom_call.1']
    #allocation7 [shape = 'u8[512]{0}', space=vmem, size = 0x400, scoped, tag = 'input window, operand 2, single buffered']
    #allocation8 [shape = 's32[1]{0}', space=sflag, size = 0x4, scoped, tag = 'scoped memory for tpu_custom_call.1']
    #allocation9 [shape = 'u8[98304]{0}', space=vmem, size = 0x18000, scoped, tag = 'input window, operand 3, single buffered']
    #allocation10 [shape = 'u8[512]{0}', space=vmem, size = 0x400, scoped, tag = 'input window, operand 4, single buffered']
    #allocation11 [shape = 's32[1]{0}', space=sflag, size = 0x4, scoped, tag = 'scoped memory for tpu_custom_call.1']
    #allocation12 [shape = 'u8[1966080]{0}', space=vmem, size = 0x1e0000, scoped, tag = 'input window, operand 5, single buffered']
    #allocation13 [shape = 'u8[1024]{0}', space=vmem, size = 0x400, scoped, tag = 'input window, operand 6, single buffered']
    #allocation14 [shape = 's32[1]{0}', space=sflag, size = 0x4, scoped, tag = 'scoped memory for tpu_custom_call.1']
    #allocation15 [shape = 'u8[65536]{0}', space=vmem, size = 0x10000, scoped, tag = 'input window, operand 7, single buffered']
    #allocation16 [shape = 'u8[512]{0}', space=vmem, size = 0x400, scoped, tag = 'input window, operand 8, single buffered']
    #allocation17 [shape = 's32[1]{0}', space=sflag, size = 0x4, scoped, tag = 'scoped memory for tpu_custom_call.1']
    #allocation18 [shape = 'u8[8192]{0}', space=vmem, size = 0x2000, scoped, tag = 'output window, operand 0, single buffered']
    %14 = vsyncpa [#allocation5], 0
    %15 = vsyncpa [#allocation8], 0
    %16 = vsyncpa [#allocation11], 0
    %17 = vsyncpa [#allocation14], 0
    %18 = vsyncpa [#allocation17], 0
    %19 = vsyncpa [#allocation6], 0
    // Predicated region
    $region2: #{tpu_custom_call.1} parent=1 // pred_check
      _
    $region3: #{tpu_custom_call.1} parent=1 // pred_check_branch
      %21 = sbr.rel (0) target = $region5
    $region4: #{tpu_custom_call.1} parent=1 // pred_region
      _
    $region5: #{tpu_custom_call.1} parent=1 // pred_fallthru
      _
    // Predicated region
    $region6: #{tpu_custom_call.1} parent=1 // pred_check
      _
    $region7: #{tpu_custom_call.1} parent=1 // pred_check_branch
      %23 = sbr.rel (0) target = $region9
    $region8: #{tpu_custom_call.1} parent=1 // pred_region
      %s25 = ssub.s32 192, 192
      %26 = vsyncadd [#allocation5], %s25
      %s27 = sshll.u32 [#allocation4], 4
      %s28 = int_to_ptr.vmem [resolvable:$true] %s27
      %33 = dma.hbm_to_vmem [thread:$0]  %s1, 192, %s28, [#allocation5], 64, 64, 4
    $region9: #{tpu_custom_call.1} parent=1 // pred_fallthru
      _
    // Predicated region
    $region10: #{tpu_custom_call.1} parent=1 // pred_check
      _
    $region11: #{tpu_custom_call.1} parent=1 // pred_check_branch
      %35 = sbr.rel (0) target = $region13
    $region12: #{tpu_custom_call.1} parent=1 // pred_region
      %s37 = ssub.s32 16, 16
      %38 = vsyncadd [#allocation8], %s37
      %s40 = sshll.u32 [#allocation7], 4
      %s41 = int_to_ptr.vmem [resolvable:$true] %s40
      %43 = dma.hbm_to_vmem [thread:$0]  %s2, 16, %s41, [#allocation8]
    $region13: #{tpu_custom_call.1} parent=1 // pred_fallthru
      _
    // Predicated region
    $region14: #{tpu_custom_call.1} parent=1 // pred_check
      _
    $region15: #{tpu_custom_call.1} parent=1 // pred_check_branch
      %45 = sbr.rel (0) target = $region17
    $region16: #{tpu_custom_call.1} parent=1 // pred_region
      %s47 = ssub.s32 3072, 3072
      %48 = vsyncadd [#allocation8], %s47
      %s49 = sshll.u32 [#allocation9], 4
      %s50 = int_to_ptr.vmem [resolvable:$true] %s49
      %55 = dma.hbm_to_vmem [thread:$0]  %s3, 3072, %s50, [#allocation8], 64, 64, 4
    $region17: #{tpu_custom_call.1} parent=1 // pred_fallthru
      _
    // Predicated region
    $region18: #{tpu_custom_call.1} parent=1 // pred_check
      _
    $region19: #{tpu_custom_call.1} parent=1 // pred_check_branch
      %57 = sbr.rel (0) target = $region21
    $region20: #{tpu_custom_call.1} parent=1 // pred_region
      %s59 = ssub.s32 16, 16
      %60 = vsyncadd [#allocation11], %s59
      %s62 = sshll.u32 [#allocation10], 4
      %s63 = int_to_ptr.vmem [resolvable:$true] %s62
      %65 = dma.hbm_to_vmem [thread:$0]  %s4, 16, %s63, [#allocation11]
    $region21: #{tpu_custom_call.1} parent=1 // pred_fallthru
      _
    // Predicated region
    $region22: #{tpu_custom_call.1} parent=1 // pred_check
      _
    $region23: #{tpu_custom_call.1} parent=1 // pred_check_branch
      %67 = sbr.rel (0) target = $region25
    $region24: #{tpu_custom_call.1} parent=1 // pred_region
      %s69 = ssub.s32 61440, 61440
      %70 = vsyncadd [#allocation11], %s69
      %s71 = sshll.u32 [#allocation12], 4
      %s72 = int_to_ptr.vmem [resolvable:$true] %s71
      %77 = dma.hbm_to_vmem [thread:$0]  %s5, 61440, %s72, [#allocation11], 128, 128, 8
    $region25: #{tpu_custom_call.1} parent=1 // pred_fallthru
      _
    // Predicated region
    $region26: #{tpu_custom_call.1} parent=1 // pred_check
      _
    $region27: #{tpu_custom_call.1} parent=1 // pred_check_branch
      %79 = sbr.rel (0) target = $region29
    $region28: #{tpu_custom_call.1} parent=1 // pred_region
      %s81 = ssub.s32 32, 32
      %82 = vsyncadd [#allocation14], %s81
      %s84 = sshll.u32 [#allocation13], 4
      %s85 = int_to_ptr.vmem [resolvable:$true] %s84
      %87 = dma.hbm_to_vmem [thread:$0]  %s6, 32, %s85, [#allocation14]
    $region29: #{tpu_custom_call.1} parent=1 // pred_fallthru
      _
    // Predicated region
    $region30: #{tpu_custom_call.1} parent=1 // pred_check
      _
    $region31: #{tpu_custom_call.1} parent=1 // pred_check_branch
      %89 = sbr.rel (0) target = $region33
    $region32: #{tpu_custom_call.1} parent=1 // pred_region
      %s91 = ssub.s32 2048, 2048
      %92 = vsyncadd [#allocation14], %s91
      %s93 = sshll.u32 [#allocation15], 4
      %s94 = int_to_ptr.vmem [resolvable:$true] %s93
      %99 = dma.hbm_to_vmem [thread:$0]  %s7, 2048, %s94, [#allocation14], 64, 64, 4
    $region33: #{tpu_custom_call.1} parent=1 // pred_fallthru
      _
    // Predicated region
    $region34: #{tpu_custom_call.1} parent=1 // pred_check
      _
    $region35: #{tpu_custom_call.1} parent=1 // pred_check_branch
      %101 = sbr.rel (0) target = $region37
    $region36: #{tpu_custom_call.1} parent=1 // pred_region
      %s103 = ssub.s32 16, 16
      %104 = vsyncadd [#allocation17], %s103
      %s106 = sshll.u32 [#allocation16], 4
      %s107 = int_to_ptr.vmem [resolvable:$true] %s106
      %109 = dma.hbm_to_vmem [thread:$0]  %s8, 16, %s107, [#allocation17]
    $region37: #{tpu_custom_call.1} parent=1 // pred_fallthru
      _
    // Predicated region
    $region38: #{tpu_custom_call.1} parent=1 // pred_check
      _
    $region39: #{tpu_custom_call.1} parent=1 // pred_check_branch
      %111 = sbr.rel (0) target = $region41
    $region40: #{tpu_custom_call.1} parent=1 // pred_region
      %112 = dma.done [#allocation5], 192
    $region41: #{tpu_custom_call.1} parent=1 // pred_fallthru
      _
    // Predicated region
    $region42: #{tpu_custom_call.1} parent=1 // pred_check
      _
    $region43: #{tpu_custom_call.1} parent=1 // pred_check_branch
      %114 = sbr.rel (0) target = $region45
    $region44: #{tpu_custom_call.1} parent=1 // pred_region
      %115 = dma.done [#allocation8], 16
    $region45: #{tpu_custom_call.1} parent=1 // pred_fallthru
      _
    // Predicated region
    $region46: #{tpu_custom_call.1} parent=1 // pred_check
      _
    $region47: #{tpu_custom_call.1} parent=1 // pred_check_branch
      %117 = sbr.rel (0) target = $region49
    $region48: #{tpu_custom_call.1} parent=1 // pred_region
      %118 = dma.done [#allocation8], 3072
    $region49: #{tpu_custom_call.1} parent=1 // pred_fallthru
      _
    // Predicated region
    $region50: #{tpu_custom_call.1} parent=1 // pred_check
      _
    $region51: #{tpu_custom_call.1} parent=1 // pred_check_branch
      %120 = sbr.rel (0) target = $region53
    $region52: #{tpu_custom_call.1} parent=1 // pred_region
      %121 = dma.done [#allocation11], 16
    $region53: #{tpu_custom_call.1} parent=1 // pred_fallthru
      _
    // Predicated region
    $region54: #{tpu_custom_call.1} parent=1 // pred_check
      _
    $region55: #{tpu_custom_call.1} parent=1 // pred_check_branch
      %123 = sbr.rel (0) target = $region57
    $region56: #{tpu_custom_call.1} parent=1 // pred_region
      %124 = dma.done [#allocation11], 61440
    $region57: #{tpu_custom_call.1} parent=1 // pred_fallthru
      _
    // Predicated region
    $region58: #{tpu_custom_call.1} parent=1 // pred_check
      _
    $region59: #{tpu_custom_call.1} parent=1 // pred_check_branch
      %126 = sbr.rel (0) target = $region61
    $region60: #{tpu_custom_call.1} parent=1 // pred_region
      %127 = dma.done [#allocation14], 32
    $region61: #{tpu_custom_call.1} parent=1 // pred_fallthru
      _
    // Predicated region
    $region62: #{tpu_custom_call.1} parent=1 // pred_check
      _
    $region63: #{tpu_custom_call.1} parent=1 // pred_check_branch
      %129 = sbr.rel (0) target = $region65
    $region64: #{tpu_custom_call.1} parent=1 // pred_region
      %130 = dma.done [#allocation14], 2048
    $region65: #{tpu_custom_call.1} parent=1 // pred_fallthru
      _
    // Predicated region
    $region66: #{tpu_custom_call.1} parent=1 // pred_check
      _
    $region67: #{tpu_custom_call.1} parent=1 // pred_check_branch
      %132 = sbr.rel (0) target = $region69
    $region68: #{tpu_custom_call.1} parent=1 // pred_region
      %133 = dma.done [#allocation17], 16
    $region69: #{tpu_custom_call.1} parent=1 // pred_fallthru
      _
    %135 = vst [vmem:[#allocation2] sm:$0xff] 0
    %136 = vst [vmem:[#allocation2 + $0xf8] sm:$0xff] 0
    %v137 = vld [vmem:[%s0] sm:$0xf]
    %v138 = vld [vmem:[%s0 + $0x4] sm:$0xf]
    %v139 = vld [vmem:[%s0 + $0x8] sm:$0xf]
    %v140 = vld [vmem:[%s0 + $0xc] sm:$0xf]
    %v141 = vld [vmem:[%s0 + $0x10] sm:$0xf]
    %v142 = vld [vmem:[%s0 + $0x14] sm:$0xf]
    %v143 = vld [vmem:[%s0 + $0x18] sm:$0xf]
    %v144 = vld [vmem:[%s0 + $0x1c] sm:$0xf]
    %v145 = vld [vmem:[%s0 + $0x20] sm:$0xf]
    %v146 = vld [vmem:[%s0 + $0x24] sm:$0xf]
    %v147 = vld [vmem:[%s0 + $0x28] sm:$0xf]
    %v148 = vld [vmem:[%s0 + $0x2c] sm:$0xf]
    %v149 = vld [vmem:[%s0 + $0x30] sm:$0xf]
    %v150 = vld [vmem:[%s0 + $0x34] sm:$0xf]
    %v151 = vld [vmem:[%s0 + $0x38] sm:$0xf]
    %v152 = vld [vmem:[%s0 + $0x3c] sm:$0xf]
    %v153 = vld [vmem:[%s0 + $0x40] sm:$0xf]
    %v154 = vld [vmem:[%s0 + $0x44] sm:$0xf]
    %v155 = vld [vmem:[%s0 + $0x48] sm:$0xf]
    %v156 = vld [vmem:[%s0 + $0x4c] sm:$0xf]
    %v157 = vld [vmem:[%s0 + $0x50] sm:$0xf]
    %v158 = vld [vmem:[%s0 + $0x54] sm:$0xf]
    %v159 = vld [vmem:[%s0 + $0x58] sm:$0xf]
    %v160 = vld [vmem:[%s0 + $0x5c] sm:$0xf]
    %v161 = vld [vmem:[%s0 + $0x60] sm:$0xf]
    %v162 = vld [vmem:[%s0 + $0x64] sm:$0xf]
    %v163 = vld [vmem:[%s0 + $0x68] sm:$0xf]
    %v164 = vld [vmem:[%s0 + $0x6c] sm:$0xf]
    %v165 = vld [vmem:[%s0 + $0x70] sm:$0xf]
    %v166 = vld [vmem:[%s0 + $0x74] sm:$0xf]
    %v167 = vld [vmem:[%s0 + $0x78] sm:$0xf]
    %v168 = vld [vmem:[%s0 + $0x7c] sm:$0xf]
    %v169 = vld [vmem:[%s0 + $0x80] sm:$0xf]
    %v170 = vld [vmem:[%s0 + $0x84] sm:$0xf]
    %v171 = vld [vmem:[%s0 + $0x88] sm:$0xf]
    %v172 = vld [vmem:[%s0 + $0x8c] sm:$0xf]
    %v173 = vld [vmem:[%s0 + $0x90] sm:$0xf]
    %v174 = vld [vmem:[%s0 + $0x94] sm:$0xf]
    %v175 = vld [vmem:[%s0 + $0x98] sm:$0xf]
    %v176 = vld [vmem:[%s0 + $0x9c] sm:$0xf]
    %v177 = vld [vmem:[%s0 + $0xa0] sm:$0xf]
    %v178 = vld [vmem:[%s0 + $0xa4] sm:$0xf]
    %v179 = vld [vmem:[%s0 + $0xa8] sm:$0xf]
    %v180 = vld [vmem:[%s0 + $0xac] sm:$0xf]
    %v181 = vld [vmem:[%s0 + $0xb0] sm:$0xf]
    %v182 = vld [vmem:[%s0 + $0xb4] sm:$0xf]
    %v183 = vld [vmem:[%s0 + $0xb8] sm:$0xf]
    %v184 = vld [vmem:[%s0 + $0xbc] sm:$0xf]
    %v185 = vld [vmem:[%s0 + $0xc0] sm:$0xf]
    %v186 = vld [vmem:[%s0 + $0xc4] sm:$0xf]
    %v187 = vld [vmem:[%s0 + $0xc8] sm:$0xf]
    %v188 = vld [vmem:[%s0 + $0xcc] sm:$0xf]
    %v189 = vld [vmem:[%s0 + $0xd0] sm:$0xf]
    %v190 = vld [vmem:[%s0 + $0xd4] sm:$0xf]
    %v191 = vld [vmem:[%s0 + $0xd8] sm:$0xf]
    %v192 = vld [vmem:[%s0 + $0xdc] sm:$0xf]
    %v193 = vld [vmem:[%s0 + $0xe0] sm:$0xf]
    %v194 = vld [vmem:[%s0 + $0xe4] sm:$0xf]
    %v195 = vld [vmem:[%s0 + $0xe8] sm:$0xf]
    %v196 = vld [vmem:[%s0 + $0xec] sm:$0xf]
    %v197 = vld [vmem:[%s0 + $0xf0] sm:$0xf]
    %v198 = vld [vmem:[%s0 + $0xf4] sm:$0xf]
    %v199 = vld [vmem:[%s0 + $0xf8] sm:$0xf]
    %v200 = vld [vmem:[%s0 + $0xfc] sm:$0xf]
    %v201 = vld [vmem:[#allocation4] sm:$0xf]
    %s202 = scalar_lea.vmem [#allocation4], 4
    %v203 = vld [vmem:[%s202] sm:$0xf]
    %v264 = vunpack.c.l.b16 %v139
    %v265 = vunpack.c.l.b16 %v140
    %v266 = vunpack.c.l.b16 %v141
    %v267 = vunpack.c.l.b16 %v142
    %v268 = vunpack.c.l.b16 %v143
    %v269 = vunpack.c.l.b16 %v144
    %v270 = vunpack.c.l.b16 %v145
    %v271 = vunpack.c.l.b16 %v146
    %v272 = vunpack.c.l.b16 %v147
    %v273 = vunpack.c.l.b16 %v148
    %v274 = vunpack.c.l.b16 %v149
    %v275 = vunpack.c.l.b16 %v150
    %v276 = vunpack.c.l.b16 %v151
    %v277 = vunpack.c.l.b16 %v152
    %v278 = vunpack.c.l.b16 %v153
    %v279 = vunpack.c.l.b16 %v154
    %v280 = vunpack.c.l.b16 %v155
    %v281 = vunpack.c.l.b16 %v156
    %v282 = vunpack.c.l.b16 %v157
    %v283 = vunpack.c.l.b16 %v158
    %v284 = vunpack.c.l.b16 %v159
    %v285 = vunpack.c.l.b16 %v160
    %v286 = vunpack.c.l.b16 %v161
    %v287 = vunpack.c.l.b16 %v162
    %v288 = vunpack.c.l.b16 %v163
    %v289 = vunpack.c.l.b16 %v164
    %v290 = vunpack.c.l.b16 %v165
    %v291 = vunpack.c.l.b16 %v166
    %v292 = vunpack.c.l.b16 %v167
    %v293 = vunpack.c.l.b16 %v168
    %v294 = vunpack.c.l.b16 %v169
    %v295 = vunpack.c.l.b16 %v170
    %v296 = vunpack.c.l.b16 %v171
    %v297 = vunpack.c.l.b16 %v172
    %v298 = vunpack.c.l.b16 %v173
    %v299 = vunpack.c.l.b16 %v174
    %v300 = vunpack.c.l.b16 %v175
    %v301 = vunpack.c.l.b16 %v176
    %v302 = vunpack.c.l.b16 %v177
    %v303 = vunpack.c.l.b16 %v178
    %v304 = vunpack.c.l.b16 %v179
    %v305 = vunpack.c.l.b16 %v180
    %v306 = vunpack.c.l.b16 %v181
    %v307 = vunpack.c.l.b16 %v182
    %v308 = vunpack.c.l.b16 %v183
    %v309 = vunpack.c.l.b16 %v184
    %v310 = vunpack.c.l.b16 %v185
    %v311 = vunpack.c.l.b16 %v186
    %v312 = vunpack.c.l.b16 %v187
    %v313 = vunpack.c.l.b16 %v188
    %v314 = vunpack.c.l.b16 %v189
    %v315 = vunpack.c.l.b16 %v190
    %v316 = vunpack.c.l.b16 %v191
    %v317 = vunpack.c.l.b16 %v192
    %v318 = vunpack.c.l.b16 %v193
    %v319 = vunpack.c.l.b16 %v194
    %v320 = vunpack.c.l.b16 %v195
    %v321 = vunpack.c.l.b16 %v196
    %v322 = vunpack.c.l.b16 %v197
    %v323 = vunpack.c.l.b16 %v198
    %v324 = vpack.c.b16 %v265, %v264
    %v325 = vpack.c.b16 %v267, %v266
    %v326 = vpack.c.b16 %v269, %v268
    %v327 = vpack.c.b16 %v271, %v270
    %v328 = vpack.c.b16 %v273, %v272
    %v329 = vpack.c.b16 %v275, %v274
    %v330 = vpack.c.b16 %v277, %v276
    %v331 = vpack.c.b16 %v279, %v278
    %v332 = vpack.c.b16 %v281, %v280
    %v333 = vpack.c.b16 %v283, %v282
    %v334 = vpack.c.b16 %v285, %v284
    %v335 = vpack.c.b16 %v287, %v286
    %v336 = vpack.c.b16 %v289, %v288
    %v337 = vpack.c.b16 %v291, %v290
    %v338 = vpack.c.b16 %v293, %v292
    %v339 = vpack.c.b16 %v295, %v294
    %v340 = vpack.c.b16 %v297, %v296
    %v341 = vpack.c.b16 %v299, %v298
    %v342 = vpack.c.b16 %v301, %v300
    %v343 = vpack.c.b16 %v303, %v302
    %v344 = vpack.c.b16 %v305, %v304
    %v345 = vpack.c.b16 %v307, %v306
    %v346 = vpack.c.b16 %v309, %v308
    %v347 = vpack.c.b16 %v311, %v310
    %v348 = vpack.c.b16 %v313, %v312
    %v349 = vpack.c.b16 %v315, %v314
    %v350 = vpack.c.b16 %v317, %v316
    %v351 = vpack.c.b16 %v319, %v318
    %v352 = vpack.c.b16 %v321, %v320
    %v353 = vpack.c.b16 %v323, %v322
    %vm354 = vcmask 64512
    %v356 = vsel %vm354, %v324, 0
    %v359 = vsel %vm354, %v325, 0
    %v362 = vsel %vm354, %v326, 0
    %v365 = vsel %vm354, %v327, 0
    %v368 = vsel %vm354, %v328, 0
    %v371 = vsel %vm354, %v329, 0
    %v374 = vsel %vm354, %v330, 0
    %v377 = vsel %vm354, %v331, 0
    %v380 = vsel %vm354, %v332, 0
    %v383 = vsel %vm354, %v333, 0
    %v386 = vsel %vm354, %v334, 0
    %v389 = vsel %vm354, %v335, 0
    %v392 = vsel %vm354, %v336, 0
    %v395 = vsel %vm354, %v337, 0
    %v398 = vsel %vm354, %v338, 0
    %v401 = vsel %vm354, %v339, 0
    %v404 = vsel %vm354, %v340, 0
    %v407 = vsel %vm354, %v341, 0
    %v410 = vsel %vm354, %v342, 0
    %v413 = vsel %vm354, %v343, 0
    %v416 = vsel %vm354, %v344, 0
    %v419 = vsel %vm354, %v345, 0
    %v422 = vsel %vm354, %v346, 0
    %v425 = vsel %vm354, %v347, 0
    %v428 = vsel %vm354, %v348, 0
    %v431 = vsel %vm354, %v349, 0
    %v434 = vsel %vm354, %v350, 0
    %v437 = vsel %vm354, %v351, 0
    %v440 = vsel %vm354, %v352, 0
    %v443 = vsel %vm354, %v353, 0
    %vm445 = vcmask 1043456
    %v447 = vsel %vm445, %v203, 0
    %449 = vmatprep.subr.bf16.mxu0 0
    %450 = vmatpush1.bf16.msra.mxu0 %v447
    %451 = vmatprep.subr.bf16.mxu0 0
    %452 = vmatpush1.bf16.msra.mxu0 0
    %453 = vmatprep.subr.bf16.mxu0 0
    %454 = vmatpush1.bf16.msra.mxu0 0
    %455 = vmatprep.subr.bf16.mxu0 0
    %456 = vmatpush1.bf16.msra.mxu0 0
    %457 = vmatprep.subr.bf16.mxu0 0
    %458 = vmatpush1.bf16.msra.mxu0 0
    %459 = vmatprep.subr.bf16.mxu0 0
    %460 = vmatpush1.bf16.msra.mxu0 0
    %461 = vmatprep.subr.bf16.mxu0 0
    %462 = vmatpush1.bf16.msra.mxu0 0
    %463 = vmatprep.subr.bf16.mxu0 0
    %464 = vmatpush1.bf16.msra.mxu0 0
    %465 = vmatprep.subr.bf16.mxu0 0
    %466 = vmatpush1.bf16.msra.mxu0 0
    %467 = vmatprep.subr.bf16.mxu0 0
    %468 = vmatpush1.bf16.msra.mxu0 0
    %469 = vmatprep.subr.bf16.mxu0 0
    %470 = vmatpush1.bf16.msra.mxu0 0
    %471 = vmatprep.subr.bf16.mxu0 0
    %472 = vmatpush1.bf16.msra.mxu0 0
    %473 = vmatprep.subr.bf16.mxu0 0
    %474 = vmatpush1.bf16.msra.mxu0 0
    %475 = vmatprep.subr.bf16.mxu0 0
    %476 = vmatpush1.bf16.msra.mxu0 0
    %477 = vmatprep.subr.bf16.mxu0 0
    %478 = vmatpush1.bf16.msra.mxu0 0
    %479 = vmatprep.subr.bf16.mxu0 0
    %480 = vmatpush1.bf16.msra.mxu0 0
    %481 = vmatprep.mubr.bf16.mxu0 0
    %482 = vmatmul.mubr.bf16.gmra.mrb[0].mxu0 %v356
    %v483 = vpop.f32.mrb[0].mxu0
    %v484 = vadd.f32 0.0, %v483
    %v485 = vpop.f32.mrb[0].mxu0
    %v486 = vpop.f32.mrb[0].mxu0
    %v487 = vadd.f32 0.0, %v486
    %v488 = vpop.f32.mrb[0].mxu0
    %489 = vmatprep.mubr.bf16.mxu0 0
    %490 = vmatmul.mubr.bf16.gmra.mrb[0].mxu0 %v359
    %v491 = vpop.f32.mrb[0].mxu0
    %v492 = vadd.f32 0.0, %v491
    %v493 = vpop.f32.mrb[0].mxu0
    %v494 = vpop.f32.mrb[0].mxu0
    %v495 = vadd.f32 0.0, %v494
    %v496 = vpop.f32.mrb[0].mxu0
    %497 = vmatprep.mubr.bf16.mxu0 0
    %498 = vmatmul.mubr.bf16.gmra.mrb[0].mxu0 %v362
    %v499 = vpop.f32.mrb[0].mxu0
    %v500 = vadd.f32 0.0, %v499
    %v501 = vpop.f32.mrb[0].mxu0
    %v502 = vpop.f32.mrb[0].mxu0
    %v503 = vadd.f32 0.0, %v502
    %v504 = vpop.f32.mrb[0].mxu0
    %505 = vmatprep.mubr.bf16.mxu0 0
    %506 = vmatmul.mubr.bf16.gmra.mrb[0].mxu0 %v365
    %v507 = vpop.f32.mrb[0].mxu0
    %v508 = vadd.f32 0.0, %v507
    %v509 = vpop.f32.mrb[0].mxu0
    %v510 = vpop.f32.mrb[0].mxu0
    %v511 = vadd.f32 0.0, %v510
    %v512 = vpop.f32.mrb[0].mxu0
    %513 = vmatprep.mubr.bf16.mxu0 0
    %514 = vmatmul.mubr.bf16.gmra.mrb[0].mxu0 %v368
    %v515 = vpop.f32.mrb[0].mxu0
    %v516 = vadd.f32 0.0, %v515
    %v517 = vpop.f32.mrb[0].mxu0
    %v518 = vpop.f32.mrb[0].mxu0
    %v519 = vadd.f32 0.0, %v518
    %v520 = vpop.f32.mrb[0].mxu0
    %521 = vmatprep.mubr.bf16.mxu0 0
    %522 = vmatmul.mubr.bf16.gmra.mrb[0].mxu0 %v371
    %v523 = vpop.f32.mrb[0].mxu0
    %v524 = vadd.f32 0.0, %v523
    %v525 = vpop.f32.mrb[0].mxu0
    %v526 = vpop.f32.mrb[0].mxu0
    %v527 = vadd.f32 0.0, %v526
    %v528 = vpop.f32.mrb[0].mxu0
    %529 = vmatprep.mubr.bf16.mxu0 0
    %530 = vmatmul.mubr.bf16.gmra.mrb[0].mxu0 %v374
    %v531 = vpop.f32.mrb[0].mxu0
    %v532 = vadd.f32 0.0, %v531
    %v533 = vpop.f32.mrb[0].mxu0
    %v534 = vpop.f32.mrb[0].mxu0
    %v535 = vadd.f32 0.0, %v534
    %v536 = vpop.f32.mrb[0].mxu0
    %537 = vmatprep.mubr.bf16.mxu0 0
    %538 = vmatmul.mubr.bf16.gmra.mrb[0].mxu0 %v377
    %v539 = vpop.f32.mrb[0].mxu0
    %v540 = vadd.f32 0.0, %v539
    %v541 = vpop.f32.mrb[0].mxu0
    %v542 = vpop.f32.mrb[0].mxu0
    %v543 = vadd.f32 0.0, %v542
    %v544 = vpop.f32.mrb[0].mxu0
    %545 = vmatprep.mubr.bf16.mxu0 0
    %546 = vmatmul.mubr.bf16.gmra.mrb[0].mxu0 %v380
    %v547 = vpop.f32.mrb[0].mxu0
    %v548 = vadd.f32 0.0, %v547
    %v549 = vpop.f32.mrb[0].mxu0
    %v550 = vpop.f32.mrb[0].mxu0
    %v551 = vadd.f32 0.0, %v550
    %v552 = vpop.f32.mrb[0].mxu0
    %553 = vmatprep.mubr.bf16.mxu0 0
    %554 = vmatmul.mubr.bf16.gmra.mrb[0].mxu0 %v383
    %v555 = vpop.f32.mrb[0].mxu0
    %v556 = vadd.f32 0.0, %v555
    %v557 = vpop.f32.mrb[0].mxu0
    %v558 = vpop.f32.mrb[0].mxu0
    %v559 = vadd.f32 0.0, %v558
    %v560 = vpop.f32.mrb[0].mxu0
    %561 = vmatprep.mubr.bf16.mxu0 0
    %562 = vmatmul.mubr.bf16.gmra.mrb[0].mxu0 %v386
    %v563 = vpop.f32.mrb[0].mxu0
    %v564 = vadd.f32 0.0, %v563
    %v565 = vpop.f32.mrb[0].mxu0
    %v566 = vpop.f32.mrb[0].mxu0
    %v567 = vadd.f32 0.0, %v566
    %v568 = vpop.f32.mrb[0].mxu0
    %569 = vmatprep.mubr.bf16.mxu0 0
    %570 = vmatmul.mubr.bf16.gmra.mrb[0].mxu0 %v389
    %v571 = vpop.f32.mrb[0].mxu0
    %v572 = vadd.f32 0.0, %v571
    %v573 = vpop.f32.mrb[0].mxu0
    %v574 = vpop.f32.mrb[0].mxu0
    %v575 = vadd.f32 0.0, %v574
    %v576 = vpop.f32.mrb[0].mxu0
    %577 = vmatprep.mubr.bf16.mxu0 0
    %578 = vmatmul.mubr.bf16.gmra.mrb[0].mxu0 %v392
    %v579 = vpop.f32.mrb[0].mxu0
    %v580 = vadd.f32 0.0, %v579
    %v581 = vpop.f32.mrb[0].mxu0
    %v582 = vpop.f32.mrb[0].mxu0
    %v583 = vadd.f32 0.0, %v582
    %v584 = vpop.f32.mrb[0].mxu0
    %585 = vmatprep.mubr.bf16.mxu0 0
    %586 = vmatmul.mubr.bf16.gmra.mrb[0].mxu0 %v395
    %v587 = vpop.f32.mrb[0].mxu0
    %v588 = vadd.f32 0.0, %v587
    %v589 = vpop.f32.mrb[0].mxu0
    %v590 = vpop.f32.mrb[0].mxu0
    %v591 = vadd.f32 0.0, %v590
    %v592 = vpop.f32.mrb[0].mxu0
    %593 = vmatprep.mubr.bf16.mxu0 0
    %594 = vmatmul.mubr.bf16.gmra.mrb[0].mxu0 %v398
    %v595 = vpop.f32.mrb[0].mxu0
    %v596 = vadd.f32 0.0, %v595
    %v597 = vpop.f32.mrb[0].mxu0
    %v598 = vpop.f32.mrb[0].mxu0
    %v599 = vadd.f32 0.0, %v598
    %v600 = vpop.f32.mrb[0].mxu0
    %601 = vmatprep.mubr.bf16.mxu0 0
    %602 = vmatmul.mubr.bf16.gmra.mrb[0].mxu0 %v401
    %v603 = vpop.f32.mrb[0].mxu0
    %v604 = vadd.f32 0.0, %v603
    %v605 = vpop.f32.mrb[0].mxu0
    %v606 = vpop.f32.mrb[0].mxu0
    %v607 = vadd.f32 0.0, %v606
    %v608 = vpop.f32.mrb[0].mxu0
    %609 = vmatprep.mubr.bf16.mxu0 0
    %610 = vmatmul.mubr.bf16.gmra.mrb[0].mxu0 %v404
    %v611 = vpop.f32.mrb[0].mxu0
    %v612 = vadd.f32 0.0, %v611
    %v613 = vpop.f32.mrb[0].mxu0
    %v614 = vpop.f32.mrb[0].mxu0
    %v615 = vadd.f32 0.0, %v614
    %v616 = vpop.f32.mrb[0].mxu0
    %617 = vmatprep.mubr.bf16.mxu0 0
    %618 = vmatmul.mubr.bf16.gmra.mrb[0].mxu0 %v407
    %v619 = vpop.f32.mrb[0].mxu0
    %v620 = vadd.f32 0.0, %v619
    %v621 = vpop.f32.mrb[0].mxu0
    %v622 = vpop.f32.mrb[0].mxu0
    %v623 = vadd.f32 0.0, %v622
    %v624 = vpop.f32.mrb[0].mxu0
    %625 = vmatprep.mubr.bf16.mxu0 0
    %626 = vmatmul.mubr.bf16.gmra.mrb[0].mxu0 %v410
    %v627 = vpop.f32.mrb[0].mxu0
    %v628 = vadd.f32 0.0, %v627
    %v629 = vpop.f32.mrb[0].mxu0
    %v630 = vpop.f32.mrb[0].mxu0
    %v631 = vadd.f32 0.0, %v630
    %v632 = vpop.f32.mrb[0].mxu0
    %633 = vmatprep.mubr.bf16.mxu0 0
    %634 = vmatmul.mubr.bf16.gmra.mrb[0].mxu0 %v413
    %v635 = vpop.f32.mrb[0].mxu0
    %v636 = vadd.f32 0.0, %v635
    %v637 = vpop.f32.mrb[0].mxu0
    %v638 = vpop.f32.mrb[0].mxu0
    %v639 = vadd.f32 0.0, %v638
    %v640 = vpop.f32.mrb[0].mxu0
    %641 = vmatprep.mubr.bf16.mxu0 0
    %642 = vmatmul.mubr.bf16.gmra.mrb[0].mxu0 %v416
    %v643 = vpop.f32.mrb[0].mxu0
    %v644 = vadd.f32 0.0, %v643
    %v645 = vpop.f32.mrb[0].mxu0
    %v646 = vpop.f32.mrb[0].mxu0
    %v647 = vadd.f32 0.0, %v646
    %v648 = vpop.f32.mrb[0].mxu0
    %649 = vmatprep.mubr.bf16.mxu0 0
    %650 = vmatmul.mubr.bf16.gmra.mrb[0].mxu0 %v419
    %v651 = vpop.f32.mrb[0].mxu0
    %v652 = vadd.f32 0.0, %v651
    %v653 = vpop.f32.mrb[0].mxu0
    %v654 = vpop.f32.mrb[0].mxu0
    %v655 = vadd.f32 0.0, %v654
    %v656 = vpop.f32.mrb[0].mxu0
    %657 = vmatprep.mubr.bf16.mxu0 0
    %658 = vmatmul.mubr.bf16.gmra.mrb[0].mxu0 %v422
    %v659 = vpop.f32.mrb[0].mxu0
    %v660 = vadd.f32 0.0, %v659
    %v661 = vpop.f32.mrb[0].mxu0
    %v662 = vpop.f32.mrb[0].mxu0
    %v663 = vadd.f32 0.0, %v662
    %v664 = vpop.f32.mrb[0].mxu0
    %665 = vmatprep.mubr.bf16.mxu0 0
    %666 = vmatmul.mubr.bf16.gmra.mrb[0].mxu0 %v425
    %v667 = vpop.f32.mrb[0].mxu0
    %v668 = vadd.f32 0.0, %v667
    %v669 = vpop.f32.mrb[0].mxu0
    %v670 = vpop.f32.mrb[0].mxu0
    %v671 = vadd.f32 0.0, %v670
    %v672 = vpop.f32.mrb[0].mxu0
    %673 = vmatprep.mubr.bf16.mxu0 0
    %674 = vmatmul.mubr.bf16.gmra.mrb[0].mxu0 %v428
    %v675 = vpop.f32.mrb[0].mxu0
    %v676 = vadd.f32 0.0, %v675
    %v677 = vpop.f32.mrb[0].mxu0
    %v678 = vpop.f32.mrb[0].mxu0
    %v679 = vadd.f32 0.0, %v678
    %v680 = vpop.f32.mrb[0].mxu0
    %681 = vmatprep.mubr.bf16.mxu0 0
    %682 = vmatmul.mubr.bf16.gmra.mrb[0].mxu0 %v431
    %v683 = vpop.f32.mrb[0].mxu0
    %v684 = vadd.f32 0.0, %v683
    %v685 = vpop.f32.mrb[0].mxu0
    %v686 = vpop.f32.mrb[0].mxu0
    %v687 = vadd.f32 0.0, %v686
    %v688 = vpop.f32.mrb[0].mxu0
    %689 = vmatprep.mubr.bf16.mxu0 0
    %690 = vmatmul.mubr.bf16.gmra.mrb[0].mxu0 %v434
    %v691 = vpop.f32.mrb[0].mxu0
    %v692 = vadd.f32 0.0, %v691
    %v693 = vpop.f32.mrb[0].mxu0
    %v694 = vpop.f32.mrb[0].mxu0
    %v695 = vadd.f32 0.0, %v694
    %v696 = vpop.f32.mrb[0].mxu0
    %697 = vmatprep.mubr.bf16.mxu0 0
    %698 = vmatmul.mubr.bf16.gmra.mrb[0].mxu0 %v437
    %v699 = vpop.f32.mrb[0].mxu0
    %v700 = vadd.f32 0.0, %v699
    %v701 = vpop.f32.mrb[0].mxu0
    %v702 = vpop.f32.mrb[0].mxu0
    %v703 = vadd.f32 0.0, %v702
    %v704 = vpop.f32.mrb[0].mxu0
    %705 = vmatprep.mubr.bf16.mxu0 0
    %706 = vmatmul.mubr.bf16.gmra.mrb[0].mxu0 %v440
    %v707 = vpop.f32.mrb[0].mxu0
    %v708 = vadd.f32 0.0, %v707
    %v709 = vpop.f32.mrb[0].mxu0
    %v710 = vpop.f32.mrb[0].mxu0
    %v711 = vadd.f32 0.0, %v710
    %v712 = vpop.f32.mrb[0].mxu0
    %713 = vmatprep.mubr.bf16.mxu0 0
    %714 = vmatmul.mubr.bf16.gmra.mrb[0].mxu0 %v443
    %v715 = vpop.f32.mrb[0].mxu0
    %v716 = vadd.f32 0.0, %v715
    %v717 = vpop.f32.mrb[0].mxu0
    %v718 = vpop.f32.mrb[0].mxu0
    %v719 = vadd.f32 0.0, %v718
    %v720 = vpop.f32.mrb[0].mxu0
    %721 = vdwg.mxu0
    %v724 = vunpack.c.l.b16 %v137
    %v725 = vunpack.c.l.b16 %v138
    %v726 = vpack.c.b16 %v725, %v724
    %v728 = vsel %vm354, %v726, 0
    %v731 = vsel %vm445, %v201, 0
    %733 = vmatprep.subr.bf16.mxu0 0
    %734 = vmatpush1.bf16.msra.mxu0 %v731
    %735 = vmatprep.subr.bf16.mxu0 0
    %736 = vmatpush1.bf16.msra.mxu0 0
    %737 = vmatprep.subr.bf16.mxu0 0
    %738 = vmatpush1.bf16.msra.mxu0 0
    %739 = vmatprep.subr.bf16.mxu0 0
    %740 = vmatpush1.bf16.msra.mxu0 0
    %741 = vmatprep.subr.bf16.mxu0 0
    %742 = vmatpush1.bf16.msra.mxu0 0
    %743 = vmatprep.subr.bf16.mxu0 0
    %744 = vmatpush1.bf16.msra.mxu0 0
    %745 = vmatprep.subr.bf16.mxu0 0
    %746 = vmatpush1.bf16.msra.mxu0 0
    %747 = vmatprep.subr.bf16.mxu0 0
    %748 = vmatpush1.bf16.msra.mxu0 0
    %749 = vmatprep.subr.bf16.mxu0 0
    %750 = vmatpush1.bf16.msra.mxu0 0
    %751 = vmatprep.subr.bf16.mxu0 0
    %752 = vmatpush1.bf16.msra.mxu0 0
    %753 = vmatprep.subr.bf16.mxu0 0
    %754 = vmatpush1.bf16.msra.mxu0 0
    %755 = vmatprep.subr.bf16.mxu0 0
    %756 = vmatpush1.bf16.msra.mxu0 0
    %757 = vmatprep.subr.bf16.mxu0 0
    %758 = vmatpush1.bf16.msra.mxu0 0
    %759 = vmatprep.subr.bf16.mxu0 0
    %760 = vmatpush1.bf16.msra.mxu0 0
    %761 = vmatprep.subr.bf16.mxu0 0
    %762 = vmatpush1.bf16.msra.mxu0 0
    %763 = vmatprep.subr.bf16.mxu0 0
    %764 = vmatpush1.bf16.msra.mxu0 0
    %765 = vmatprep.mubr.bf16.mxu0 0
    %766 = vmatmul.mubr.bf16.gmra.mrb[0].mxu0 %v728
    %v767 = vpop.f32.mrb[0].mxu0
    %v768 = vadd.f32 %v484, %v767
    %v769 = vpop.f32.mrb[0].mxu0
    %v770 = vpop.f32.mrb[0].mxu0
    %v771 = vadd.f32 %v487, %v770
    %v772 = vpop.f32.mrb[0].mxu0
    %773 = vmatprep.mubr.bf16.mxu0 0
    %774 = vmatmul.mubr.bf16.gmra.mrb[0].mxu0 %v356
    %v775 = vpop.f32.mrb[0].mxu0
    %v776 = vadd.f32 %v492, %v775
    %v777 = vpop.f32.mrb[0].mxu0
    %v778 = vpop.f32.mrb[0].mxu0
    %v779 = vadd.f32 %v495, %v778
    %v780 = vpop.f32.mrb[0].mxu0
    %781 = vmatprep.mubr.bf16.mxu0 0
    %782 = vmatmul.mubr.bf16.gmra.mrb[0].mxu0 %v359
    %v783 = vpop.f32.mrb[0].mxu0
    %v784 = vadd.f32 %v500, %v783
    %v785 = vpop.f32.mrb[0].mxu0
    %v786 = vpop.f32.mrb[0].mxu0
    %v787 = vadd.f32 %v503, %v786
    %v788 = vpop.f32.mrb[0].mxu0
    %789 = vmatprep.mubr.bf16.mxu0 0
    %790 = vmatmul.mubr.bf16.gmra.mrb[0].mxu0 %v362
    %v791 = vpop.f32.mrb[0].mxu0
    %v792 = vadd.f32 %v508, %v791
    %v793 = vpop.f32.mrb[0].mxu0
    %v794 = vpop.f32.mrb[0].mxu0
    %v795 = vadd.f32 %v511, %v794
    %v796 = vpop.f32.mrb[0].mxu0
    %797 = vmatprep.mubr.bf16.mxu0 0
    %798 = vmatmul.mubr.bf16.gmra.mrb[0].mxu0 %v365
    %v799 = vpop.f32.mrb[0].mxu0
    %v800 = vadd.f32 %v516, %v799
    %v801 = vpop.f32.mrb[0].mxu0
    %v802 = vpop.f32.mrb[0].mxu0
    %v803 = vadd.f32 %v519, %v802
    %v804 = vpop.f32.mrb[0].mxu0
    %805 = vmatprep.mubr.bf16.mxu0 0
    %806 = vmatmul.mubr.bf16.gmra.mrb[0].mxu0 %v368
    %v807 = vpop.f32.mrb[0].mxu0
    %v808 = vadd.f32 %v524, %v807
    %v809 = vpop.f32.mrb[0].mxu0
    %v810 = vpop.f32.mrb[0].mxu0
    %v811 = vadd.f32 %v527, %v810
    %v812 = vpop.f32.mrb[0].mxu0
    %813 = vmatprep.mubr.bf16.mxu0 0
    %814 = vmatmul.mubr.bf16.gmra.mrb[0].mxu0 %v371
    %v815 = vpop.f32.mrb[0].mxu0
    %v816 = vadd.f32 %v532, %v815
    %v817 = vpop.f32.mrb[0].mxu0
    %v818 = vpop.f32.mrb[0].mxu0
    %v819 = vadd.f32 %v535, %v818
    %v820 = vpop.f32.mrb[0].mxu0
    %821 = vmatprep.mubr.bf16.mxu0 0
    %822 = vmatmul.mubr.bf16.gmra.mrb[0].mxu0 %v374
    %v823 = vpop.f32.mrb[0].mxu0
    %v824 = vadd.f32 %v540, %v823
    %v825 = vpop.f32.mrb[0].mxu0
    %v826 = vpop.f32.mrb[0].mxu0
    %v827 = vadd.f32 %v543, %v826
    %v828 = vpop.f32.mrb[0].mxu0
    %829 = vmatprep.mubr.bf16.mxu0 0
    %830 = vmatmul.mubr.bf16.gmra.mrb[0].mxu0 %v377
    %v831 = vpop.f32.mrb[0].mxu0
    %v832 = vadd.f32 %v548, %v831
    %v833 = vpop.f32.mrb[0].mxu0
    %v834 = vpop.f32.mrb[0].mxu0
    %v835 = vadd.f32 %v551, %v834
    %v836 = vpop.f32.mrb[0].mxu0
    %837 = vmatprep.mubr.bf16.mxu0 0
    %838 = vmatmul.mubr.bf16.gmra.mrb[0].mxu0 %v380
    %v839 = vpop.f32.mrb[0].mxu0
    %v840 = vadd.f32 %v556, %v839
    %v841 = vpop.f32.mrb[0].mxu0
    %v842 = vpop.f32.mrb[0].mxu0
    %v843 = vadd.f32 %v559, %v842
    %v844 = vpop.f32.mrb[0].mxu0
    %845 = vmatprep.mubr.bf16.mxu0 0
    %846 = vmatmul.mubr.bf16.gmra.mrb[0].mxu0 %v383
    %v847 = vpop.f32.mrb[0].mxu0
    %v848 = vadd.f32 %v564, %v847
    %v849 = vpop.f32.mrb[0].mxu0
    %v850 = vpop.f32.mrb[0].mxu0
    %v851 = vadd.f32 %v567, %v850
    %v852 = vpop.f32.mrb[0].mxu0
    %853 = vmatprep.mubr.bf16.mxu0 0
    %854 = vmatmul.mubr.bf16.gmra.mrb[0].mxu0 %v386
    %v855 = vpop.f32.mrb[0].mxu0
    %v856 = vadd.f32 %v572, %v855
    %v857 = vpop.f32.mrb[0].mxu0
    %v858 = vpop.f32.mrb[0].mxu0
    %v859 = vadd.f32 %v575, %v858
    %v860 = vpop.f32.mrb[0].mxu0
    %861 = vmatprep.mubr.bf16.mxu0 0
    %862 = vmatmul.mubr.bf16.gmra.mrb[0].mxu0 %v389
    %v863 = vpop.f32.mrb[0].mxu0
    %v864 = vadd.f32 %v580, %v863
    %v865 = vpop.f32.mrb[0].mxu0
    %v866 = vpop.f32.mrb[0].mxu0
    %v867 = vadd.f32 %v583, %v866
    %v868 = vpop.f32.mrb[0].mxu0
    %869 = vmatprep.mubr.bf16.mxu0 0
    %870 = vmatmul.mubr.bf16.gmra.mrb[0].mxu0 %v392
    %v871 = vpop.f32.mrb[0].mxu0
    %v872 = vadd.f32 %v588, %v871
    %v873 = vpop.f32.mrb[0].mxu0
    %v874 = vpop.f32.mrb[0].mxu0
    %v875 = vadd.f32 %v591, %v874
    %v876 = vpop.f32.mrb[0].mxu0
    %877 = vmatprep.mubr.bf16.mxu0 0
    %878 = vmatmul.mubr.bf16.gmra.mrb[0].mxu0 %v395
    %v879 = vpop.f32.mrb[0].mxu0
    %v880 = vadd.f32 %v596, %v879
    %v881 = vpop.f32.mrb[0].mxu0
    %v882 = vpop.f32.mrb[0].mxu0
    %v883 = vadd.f32 %v599, %v882
    %v884 = vpop.f32.mrb[0].mxu0
    %885 = vmatprep.mubr.bf16.mxu0 0
    %886 = vmatmul.mubr.bf16.gmra.mrb[0].mxu0 %v398
    %v887 = vpop.f32.mrb[0].mxu0
    %v888 = vadd.f32 %v604, %v887
    %v889 = vpop.f32.mrb[0].mxu0
    %v890 = vpop.f32.mrb[0].mxu0
    %v891 = vadd.f32 %v607, %v890
    %v892 = vpop.f32.mrb[0].mxu0
    %893 = vmatprep.mubr.bf16.mxu0 0
    %894 = vmatmul.mubr.bf16.gmra.mrb[0].mxu0 %v401
    %v895 = vpop.f32.mrb[0].mxu0
    %v896 = vadd.f32 %v612, %v895
    %v897 = vpop.f32.mrb[0].mxu0
    %v898 = vpop.f32.mrb[0].mxu0
    %v899 = vadd.f32 %v615, %v898
    %v900 = vpop.f32.mrb[0].mxu0
    %901 = vmatprep.mubr.bf16.mxu0 0
    %902 = vmatmul.mubr.bf16.gmra.mrb[0].mxu0 %v404
    %v903 = vpop.f32.mrb[0].mxu0
    %v904 = vadd.f32 %v620, %v903
    %v905 = vpop.f32.mrb[0].mxu0
    %v906 = vpop.f32.mrb[0].mxu0
    %v907 = vadd.f32 %v623, %v906
    %v908 = vpop.f32.mrb[0].mxu0
    %909 = vmatprep.mubr.bf16.mxu0 0
    %910 = vmatmul.mubr.bf16.gmra.mrb[0].mxu0 %v407
    %v911 = vpop.f32.mrb[0].mxu0
    %v912 = vadd.f32 %v628, %v911
    %v913 = vpop.f32.mrb[0].mxu0
    %v914 = vpop.f32.mrb[0].mxu0
    %v915 = vadd.f32 %v631, %v914
    %v916 = vpop.f32.mrb[0].mxu0
    %917 = vmatprep.mubr.bf16.mxu0 0
    %918 = vmatmul.mubr.bf16.gmra.mrb[0].mxu0 %v410
    %v919 = vpop.f32.mrb[0].mxu0
    %v920 = vadd.f32 %v636, %v919
    %v921 = vpop.f32.mrb[0].mxu0
    %v922 = vpop.f32.mrb[0].mxu0
    %v923 = vadd.f32 %v639, %v922
    %v924 = vpop.f32.mrb[0].mxu0
    %925 = vmatprep.mubr.bf16.mxu0 0
    %926 = vmatmul.mubr.bf16.gmra.mrb[0].mxu0 %v413
    %v927 = vpop.f32.mrb[0].mxu0
    %v928 = vadd.f32 %v644, %v927
    %v929 = vpop.f32.mrb[0].mxu0
    %v930 = vpop.f32.mrb[0].mxu0
    %v931 = vadd.f32 %v647, %v930
    %v932 = vpop.f32.mrb[0].mxu0
    %933 = vmatprep.mubr.bf16.mxu0 0
    %934 = vmatmul.mubr.bf16.gmra.mrb[0].mxu0 %v416
    %v935 = vpop.f32.mrb[0].mxu0
    %v936 = vadd.f32 %v652, %v935
    %v937 = vpop.f32.mrb[0].mxu0
    %v938 = vpop.f32.mrb[0].mxu0
    %v939 = vadd.f32 %v655, %v938
    %v940 = vpop.f32.mrb[0].mxu0
    %941 = vmatprep.mubr.bf16.mxu0 0
    %942 = vmatmul.mubr.bf16.gmra.mrb[0].mxu0 %v419
    %v943 = vpop.f32.mrb[0].mxu0
    %v944 = vadd.f32 %v660, %v943
    %v945 = vpop.f32.mrb[0].mxu0
    %v946 = vpop.f32.mrb[0].mxu0
    %v947 = vadd.f32 %v663, %v946
    %v948 = vpop.f32.mrb[0].mxu0
    %949 = vmatprep.mubr.bf16.mxu0 0
    %950 = vmatmul.mubr.bf16.gmra.mrb[0].mxu0 %v422
    %v951 = vpop.f32.mrb[0].mxu0
    %v952 = vadd.f32 %v668, %v951
    %v953 = vpop.f32.mrb[0].mxu0
    %v954 = vpop.f32.mrb[0].mxu0
    %v955 = vadd.f32 %v671, %v954
    %v956 = vpop.f32.mrb[0].mxu0
    %957 = vmatprep.mubr.bf16.mxu0 0
    %958 = vmatmul.mubr.bf16.gmra.mrb[0].mxu0 %v425
    %v959 = vpop.f32.mrb[0].mxu0
    %v960 = vadd.f32 %v676, %v959
    %v961 = vpop.f32.mrb[0].mxu0
    %v962 = vpop.f32.mrb[0].mxu0
    %v963 = vadd.f32 %v679, %v962
    %v964 = vpop.f32.mrb[0].mxu0
    %965 = vmatprep.mubr.bf16.mxu0 0
    %966 = vmatmul.mubr.bf16.gmra.mrb[0].mxu0 %v428
    %v967 = vpop.f32.mrb[0].mxu0
    %v968 = vadd.f32 %v684, %v967
    %v969 = vpop.f32.mrb[0].mxu0
    %v970 = vpop.f32.mrb[0].mxu0
    %v971 = vadd.f32 %v687, %v970
    %v972 = vpop.f32.mrb[0].mxu0
    %973 = vmatprep.mubr.bf16.mxu0 0
    %974 = vmatmul.mubr.bf16.gmra.mrb[0].mxu0 %v431
    %v975 = vpop.f32.mrb[0].mxu0
    %v976 = vadd.f32 %v692, %v975
    %v977 = vpop.f32.mrb[0].mxu0
    %v978 = vpop.f32.mrb[0].mxu0
    %v979 = vadd.f32 %v695, %v978
    %v980 = vpop.f32.mrb[0].mxu0
    %981 = vmatprep.mubr.bf16.mxu0 0
    %982 = vmatmul.mubr.bf16.gmra.mrb[0].mxu0 %v434
    %v983 = vpop.f32.mrb[0].mxu0
    %v984 = vadd.f32 %v700, %v983
    %v985 = vpop.f32.mrb[0].mxu0
    %v986 = vpop.f32.mrb[0].mxu0
    %v987 = vadd.f32 %v703, %v986
    %v988 = vpop.f32.mrb[0].mxu0
    %989 = vmatprep.mubr.bf16.mxu0 0
    %990 = vmatmul.mubr.bf16.gmra.mrb[0].mxu0 %v437
    %v991 = vpop.f32.mrb[0].mxu0
    %v992 = vadd.f32 %v708, %v991
    %v993 = vpop.f32.mrb[0].mxu0
    %v994 = vpop.f32.mrb[0].mxu0
    %v995 = vadd.f32 %v711, %v994
    %v996 = vpop.f32.mrb[0].mxu0
    %997 = vmatprep.mubr.bf16.mxu0 0
    %998 = vmatmul.mubr.bf16.gmra.mrb[0].mxu0 %v440
    %v999 = vpop.f32.mrb[0].mxu0
    %v1000 = vadd.f32 %v716, %v999
    %v1001 = vpop.f32.mrb[0].mxu0
    %v1002 = vpop.f32.mrb[0].mxu0
    %v1003 = vadd.f32 %v719, %v1002
    %v1004 = vpop.f32.mrb[0].mxu0
    %1005 = vdwg.mxu0
    %s1006 = scalar_lea.vmem [#allocation4], 8
    %v1007 = vld [vmem:[%s1006] sm:$0xf]
    %v1010 = vunpack.c.l.b16 %v199
    %v1011 = vunpack.c.l.b16 %v200
    %v1012 = vpack.c.b16 %v1011, %v1010
    %v1014 = vsel %vm354, %v1012, 0
    %v1017 = vsel %vm445, %v1007, 0
    %1019 = vmatprep.subr.bf16.mxu0 0
    %1020 = vmatpush1.bf16.msra.mxu0 %v1017
    %1021 = vmatprep.subr.bf16.mxu0 0
    %1022 = vmatpush1.bf16.msra.mxu0 0
    %1023 = vmatprep.subr.bf16.mxu0 0
    %1024 = vmatpush1.bf16.msra.mxu0 0
    %1025 = vmatprep.subr.bf16.mxu0 0
    %1026 = vmatpush1.bf16.msra.mxu0 0
    %1027 = vmatprep.subr.bf16.mxu0 0
    %1028 = vmatpush1.bf16.msra.mxu0 0
    %1029 = vmatprep.subr.bf16.mxu0 0
    %1030 = vmatpush1.bf16.msra.mxu0 0
    %1031 = vmatprep.subr.bf16.mxu0 0
    %1032 = vmatpush1.bf16.msra.mxu0 0
    %1033 = vmatprep.subr.bf16.mxu0 0
    %1034 = vmatpush1.bf16.msra.mxu0 0
    %1035 = vmatprep.subr.bf16.mxu0 0
    %1036 = vmatpush1.bf16.msra.mxu0 0
    %1037 = vmatprep.subr.bf16.mxu0 0
    %1038 = vmatpush1.bf16.msra.mxu0 0
    %1039 = vmatprep.subr.bf16.mxu0 0
    %1040 = vmatpush1.bf16.msra.mxu0 0
    %1041 = vmatprep.subr.bf16.mxu0 0
    %1042 = vmatpush1.bf16.msra.mxu0 0
    %1043 = vmatprep.subr.bf16.mxu0 0
    %1044 = vmatpush1.bf16.msra.mxu0 0
    %1045 = vmatprep.subr.bf16.mxu0 0
    %1046 = vmatpush1.bf16.msra.mxu0 0
    %1047 = vmatprep.subr.bf16.mxu0 0
    %1048 = vmatpush1.bf16.msra.mxu0 0
    %1049 = vmatprep.subr.bf16.mxu0 0
    %1050 = vmatpush1.bf16.msra.mxu0 0
    %1051 = vmatprep.mubr.bf16.mxu0 0
    %1052 = vmatmul.mubr.bf16.gmra.mrb[0].mxu0 %v359
    %v1053 = vpop.f32.mrb[0].mxu0
    %v1054 = vadd.f32 0.0, %v1053
    %v1055 = vpop.f32.mrb[0].mxu0
    %v1056 = vpop.f32.mrb[0].mxu0
    %v1057 = vadd.f32 0.0, %v1056
    %v1058 = vpop.f32.mrb[0].mxu0
    %1059 = vmatprep.mubr.bf16.mxu0 0
    %1060 = vmatmul.mubr.bf16.gmra.mrb[0].mxu0 %v362
    %v1061 = vpop.f32.mrb[0].mxu0
    %v1062 = vadd.f32 0.0, %v1061
    %v1063 = vpop.f32.mrb[0].mxu0
    %v1064 = vpop.f32.mrb[0].mxu0
    %v1065 = vadd.f32 0.0, %v1064
    %v1066 = vpop.f32.mrb[0].mxu0
    %1067 = vmatprep.mubr.bf16.mxu0 0
    %1068 = vmatmul.mubr.bf16.gmra.mrb[0].mxu0 %v365
    %v1069 = vpop.f32.mrb[0].mxu0
    %v1070 = vadd.f32 0.0, %v1069
    %v1071 = vpop.f32.mrb[0].mxu0
    %v1072 = vpop.f32.mrb[0].mxu0
    %v1073 = vadd.f32 0.0, %v1072
    %v1074 = vpop.f32.mrb[0].mxu0
    %1075 = vmatprep.mubr.bf16.mxu0 0
    %1076 = vmatmul.mubr.bf16.gmra.mrb[0].mxu0 %v368
    %v1077 = vpop.f32.mrb[0].mxu0
    %v1078 = vadd.f32 0.0, %v1077
    %v1079 = vpop.f32.mrb[0].mxu0
    %v1080 = vpop.f32.mrb[0].mxu0
    %v1081 = vadd.f32 0.0, %v1080
    %v1082 = vpop.f32.mrb[0].mxu0
    %1083 = vmatprep.mubr.bf16.mxu0 0
    %1084 = vmatmul.mubr.bf16.gmra.mrb[0].mxu0 %v371
    %v1085 = vpop.f32.mrb[0].mxu0
    %v1086 = vadd.f32 0.0, %v1085
    %v1087 = vpop.f32.mrb[0].mxu0
    %v1088 = vpop.f32.mrb[0].mxu0
    %v1089 = vadd.f32 0.0, %v1088
    %v1090 = vpop.f32.mrb[0].mxu0
    %1091 = vmatprep.mubr.bf16.mxu0 0
    %1092 = vmatmul.mubr.bf16.gmra.mrb[0].mxu0 %v374
    %v1093 = vpop.f32.mrb[0].mxu0
    %v1094 = vadd.f32 0.0, %v1093
    %v1095 = vpop.f32.mrb[0].mxu0
    %v1096 = vpop.f32.mrb[0].mxu0
    %v1097 = vadd.f32 0.0, %v1096
    %v1098 = vpop.f32.mrb[0].mxu0
    %1099 = vmatprep.mubr.bf16.mxu0 0
    %1100 = vmatmul.mubr.bf16.gmra.mrb[0].mxu0 %v377
    %v1101 = vpop.f32.mrb[0].mxu0
    %v1102 = vadd.f32 0.0, %v1101
    %v1103 = vpop.f32.mrb[0].mxu0
    %v1104 = vpop.f32.mrb[0].mxu0
    %v1105 = vadd.f32 0.0, %v1104
    %v1106 = vpop.f32.mrb[0].mxu0
    %1107 = vmatprep.mubr.bf16.mxu0 0
    %1108 = vmatmul.mubr.bf16.gmra.mrb[0].mxu0 %v380
    %v1109 = vpop.f32.mrb[0].mxu0
    %v1110 = vadd.f32 0.0, %v1109
    %v1111 = vpop.f32.mrb[0].mxu0
    %v1112 = vpop.f32.mrb[0].mxu0
    %v1113 = vadd.f32 0.0, %v1112
    %v1114 = vpop.f32.mrb[0].mxu0
    %1115 = vmatprep.mubr.bf16.mxu0 0
    %1116 = vmatmul.mubr.bf16.gmra.mrb[0].mxu0 %v383
    %v1117 = vpop.f32.mrb[0].mxu0
    %v1118 = vadd.f32 0.0, %v1117
    %v1119 = vpop.f32.mrb[0].mxu0
    %v1120 = vpop.f32.mrb[0].mxu0
    %v1121 = vadd.f32 0.0, %v1120
    %v1122 = vpop.f32.mrb[0].mxu0
    %1123 = vmatprep.mubr.bf16.mxu0 0
    %1124 = vmatmul.mubr.bf16.gmra.mrb[0].mxu0 %v386
    %v1125 = vpop.f32.mrb[0].mxu0
    %v1126 = vadd.f32 0.0, %v1125
    %v1127 = vpop.f32.mrb[0].mxu0
    %v1128 = vpop.f32.mrb[0].mxu0
    %v1129 = vadd.f32 0.0, %v1128
    %v1130 = vpop.f32.mrb[0].mxu0
    %1131 = vmatprep.mubr.bf16.mxu0 0
    %1132 = vmatmul.mubr.bf16.gmra.mrb[0].mxu0 %v389
    %v1133 = vpop.f32.mrb[0].mxu0
    %v1134 = vadd.f32 0.0, %v1133
    %v1135 = vpop.f32.mrb[0].mxu0
    %v1136 = vpop.f32.mrb[0].mxu0
    %v1137 = vadd.f32 0.0, %v1136
    %v1138 = vpop.f32.mrb[0].mxu0
    %1139 = vmatprep.mubr.bf16.mxu0 0
    %1140 = vmatmul.mubr.bf16.gmra.mrb[0].mxu0 %v392
    %v1141 = vpop.f32.mrb[0].mxu0
    %v1142 = vadd.f32 0.0, %v1141
    %v1143 = vpop.f32.mrb[0].mxu0
    %v1144 = vpop.f32.mrb[0].mxu0
    %v1145 = vadd.f32 0.0, %v1144
    %v1146 = vpop.f32.mrb[0].mxu0
    %1147 = vmatprep.mubr.bf16.mxu0 0
    %1148 = vmatmul.mubr.bf16.gmra.mrb[0].mxu0 %v395
    %v1149 = vpop.f32.mrb[0].mxu0
    %v1150 = vadd.f32 0.0, %v1149
    %v1151 = vpop.f32.mrb[0].mxu0
    %v1152 = vpop.f32.mrb[0].mxu0
    %v1153 = vadd.f32 0.0, %v1152
    %v1154 = vpop.f32.mrb[0].mxu0
    %1155 = vmatprep.mubr.bf16.mxu0 0
    %1156 = vmatmul.mubr.bf16.gmra.mrb[0].mxu0 %v398
    %v1157 = vpop.f32.mrb[0].mxu0
    %v1158 = vadd.f32 0.0, %v1157
    %v1159 = vpop.f32.mrb[0].mxu0
    %v1160 = vpop.f32.mrb[0].mxu0
    %v1161 = vadd.f32 0.0, %v1160
    %v1162 = vpop.f32.mrb[0].mxu0
    %1163 = vmatprep.mubr.bf16.mxu0 0
    %1164 = vmatmul.mubr.bf16.gmra.mrb[0].mxu0 %v401
    %v1165 = vpop.f32.mrb[0].mxu0
    %v1166 = vadd.f32 0.0, %v1165
    %v1167 = vpop.f32.mrb[0].mxu0
    %v1168 = vpop.f32.mrb[0].mxu0
    %v1169 = vadd.f32 0.0, %v1168
    %v1170 = vpop.f32.mrb[0].mxu0
    %1171 = vmatprep.mubr.bf16.mxu0 0
    %1172 = vmatmul.mubr.bf16.gmra.mrb[0].mxu0 %v404
    %v1173 = vpop.f32.mrb[0].mxu0
    %v1174 = vadd.f32 0.0, %v1173
    %v1175 = vpop.f32.mrb[0].mxu0
    %v1176 = vpop.f32.mrb[0].mxu0
    %v1177 = vadd.f32 0.0, %v1176
    %v1178 = vpop.f32.mrb[0].mxu0
    %1179 = vmatprep.mubr.bf16.mxu0 0
    %1180 = vmatmul.mubr.bf16.gmra.mrb[0].mxu0 %v407
    %v1181 = vpop.f32.mrb[0].mxu0
    %v1182 = vadd.f32 0.0, %v1181
    %v1183 = vpop.f32.mrb[0].mxu0
    %v1184 = vpop.f32.mrb[0].mxu0
    %v1185 = vadd.f32 0.0, %v1184
    %v1186 = vpop.f32.mrb[0].mxu0
    %1187 = vmatprep.mubr.bf16.mxu0 0
    %1188 = vmatmul.mubr.bf16.gmra.mrb[0].mxu0 %v410
    %v1189 = vpop.f32.mrb[0].mxu0
    %v1190 = vadd.f32 0.0, %v1189
    %v1191 = vpop.f32.mrb[0].mxu0
    %v1192 = vpop.f32.mrb[0].mxu0
    %v1193 = vadd.f32 0.0, %v1192
    %v1194 = vpop.f32.mrb[0].mxu0
    %1195 = vmatprep.mubr.bf16.mxu0 0
    %1196 = vmatmul.mubr.bf16.gmra.mrb[0].mxu0 %v413
    %v1197 = vpop.f32.mrb[0].mxu0
    %v1198 = vadd.f32 0.0, %v1197
    %v1199 = vpop.f32.mrb[0].mxu0
    %v1200 = vpop.f32.mrb[0].mxu0
    %v1201 = vadd.f32 0.0, %v1200
    %v1202 = vpop.f32.mrb[0].mxu0
    %1203 = vmatprep.mubr.bf16.mxu0 0
    %1204 = vmatmul.mubr.bf16.gmra.mrb[0].mxu0 %v416
    %v1205 = vpop.f32.mrb[0].mxu0
    %v1206 = vadd.f32 0.0, %v1205
    %v1207 = vpop.f32.mrb[0].mxu0
    %v1208 = vpop.f32.mrb[0].mxu0
    %v1209 = vadd.f32 0.0, %v1208
    %v1210 = vpop.f32.mrb[0].mxu0
    %1211 = vmatprep.mubr.bf16.mxu0 0
    %1212 = vmatmul.mubr.bf16.gmra.mrb[0].mxu0 %v419
    %v1213 = vpop.f32.mrb[0].mxu0
    %v1214 = vadd.f32 0.0, %v1213
    %v1215 = vpop.f32.mrb[0].mxu0
    %v1216 = vpop.f32.mrb[0].mxu0
    %v1217 = vadd.f32 0.0, %v1216
    %v1218 = vpop.f32.mrb[0].mxu0
    %1219 = vmatprep.mubr.bf16.mxu0 0
    %1220 = vmatmul.mubr.bf16.gmra.mrb[0].mxu0 %v422
    %v1221 = vpop.f32.mrb[0].mxu0
    %v1222 = vadd.f32 0.0, %v1221
    %v1223 = vpop.f32.mrb[0].mxu0
    %v1224 = vpop.f32.mrb[0].mxu0
    %v1225 = vadd.f32 0.0, %v1224
    %v1226 = vpop.f32.mrb[0].mxu0
    %1227 = vmatprep.mubr.bf16.mxu0 0
    %1228 = vmatmul.mubr.bf16.gmra.mrb[0].mxu0 %v425
    %v1229 = vpop.f32.mrb[0].mxu0
    %v1230 = vadd.f32 0.0, %v1229
    %v1231 = vpop.f32.mrb[0].mxu0
    %v1232 = vpop.f32.mrb[0].mxu0
    %v1233 = vadd.f32 0.0, %v1232
    %v1234 = vpop.f32.mrb[0].mxu0
    %1235 = vmatprep.mubr.bf16.mxu0 0
    %1236 = vmatmul.mubr.bf16.gmra.mrb[0].mxu0 %v428
    %v1237 = vpop.f32.mrb[0].mxu0
    %v1238 = vadd.f32 0.0, %v1237
    %v1239 = vpop.f32.mrb[0].mxu0
    %v1240 = vpop.f32.mrb[0].mxu0
    %v1241 = vadd.f32 0.0, %v1240
    %v1242 = vpop.f32.mrb[0].mxu0
    %1243 = vmatprep.mubr.bf16.mxu0 0
    %1244 = vmatmul.mubr.bf16.gmra.mrb[0].mxu0 %v431
    %v1245 = vpop.f32.mrb[0].mxu0
    %v1246 = vadd.f32 0.0, %v1245
    %v1247 = vpop.f32.mrb[0].mxu0
    %v1248 = vpop.f32.mrb[0].mxu0
    %v1249 = vadd.f32 0.0, %v1248
    %v1250 = vpop.f32.mrb[0].mxu0
    %1251 = vmatprep.mubr.bf16.mxu0 0
    %1252 = vmatmul.mubr.bf16.gmra.mrb[0].mxu0 %v434
    %v1253 = vpop.f32.mrb[0].mxu0
    %v1254 = vadd.f32 0.0, %v1253
    %v1255 = vpop.f32.mrb[0].mxu0
    %v1256 = vpop.f32.mrb[0].mxu0
    %v1257 = vadd.f32 0.0, %v1256
    %v1258 = vpop.f32.mrb[0].mxu0
    %1259 = vmatprep.mubr.bf16.mxu0 0
    %1260 = vmatmul.mubr.bf16.gmra.mrb[0].mxu0 %v437
    %v1261 = vpop.f32.mrb[0].mxu0
    %v1262 = vadd.f32 0.0, %v1261
    %v1263 = vpop.f32.mrb[0].mxu0
    %v1264 = vpop.f32.mrb[0].mxu0
    %v1265 = vadd.f32 0.0, %v1264
    %v1266 = vpop.f32.mrb[0].mxu0
    %1267 = vmatprep.mubr.bf16.mxu0 0
    %1268 = vmatmul.mubr.bf16.gmra.mrb[0].mxu0 %v440
    %v1269 = vpop.f32.mrb[0].mxu0
    %v1270 = vadd.f32 0.0, %v1269
    %v1271 = vpop.f32.mrb[0].mxu0
    %v1272 = vpop.f32.mrb[0].mxu0
    %v1273 = vadd.f32 0.0, %v1272
    %v1274 = vpop.f32.mrb[0].mxu0
    %1275 = vmatprep.mubr.bf16.mxu0 0
    %1276 = vmatmul.mubr.bf16.gmra.mrb[0].mxu0 %v443
    %v1277 = vpop.f32.mrb[0].mxu0
    %v1278 = vadd.f32 0.0, %v1277
    %v1279 = vpop.f32.mrb[0].mxu0
    %v1280 = vpop.f32.mrb[0].mxu0
    %v1281 = vadd.f32 0.0, %v1280
    %v1282 = vpop.f32.mrb[0].mxu0
    %1283 = vmatprep.mubr.bf16.mxu0 0
    %1284 = vmatmul.mubr.bf16.gmra.mrb[0].mxu0 %v1014
    %v1285 = vpop.f32.mrb[0].mxu0
    %v1286 = vadd.f32 0.0, %v1285
    %v1287 = vpop.f32.mrb[0].mxu0
    %v1288 = vpop.f32.mrb[0].mxu0
    %v1289 = vadd.f32 0.0, %v1288
    %v1290 = vpop.f32.mrb[0].mxu0
    %1291 = vdwg.mxu0
    %v1292 = vadd.f32 %v768, %v1054
    %v1293 = vadd.f32 %v771, %v1057
    %v1294 = vadd.f32 %v776, %v1062
    %v1295 = vadd.f32 %v779, %v1065
    %v1296 = vadd.f32 %v784, %v1070
    %v1297 = vadd.f32 %v787, %v1073
    %v1298 = vadd.f32 %v792, %v1078
    %v1299 = vadd.f32 %v795, %v1081
    %v1300 = vadd.f32 %v800, %v1086
    %v1301 = vadd.f32 %v803, %v1089
    %v1302 = vadd.f32 %v808, %v1094
    %v1303 = vadd.f32 %v811, %v1097
    %v1304 = vadd.f32 %v816, %v1102
    %v1305 = vadd.f32 %v819, %v1105
    %v1306 = vadd.f32 %v824, %v1110
    %v1307 = vadd.f32 %v827, %v1113
    %v1308 = vadd.f32 %v832, %v1118
    %v1309 = vadd.f32 %v835, %v1121
    %v1310 = vadd.f32 %v840, %v1126
    %v1311 = vadd.f32 %v843, %v1129
    %v1312 = vadd.f32 %v848, %v1134
    %v1313 = vadd.f32 %v851, %v1137
    %v1314 = vadd.f32 %v856, %v1142
    %v1315 = vadd.f32 %v859, %v1145
    %v1316 = vadd.f32 %v864, %v1150
    %v1317 = vadd.f32 %v867, %v1153
    %v1318 = vadd.f32 %v872, %v1158
    %v1319 = vadd.f32 %v875, %v1161
    %v1320 = vadd.f32 %v880, %v1166
    %v1321 = vadd.f32 %v883, %v1169
    %v1322 = vadd.f32 %v888, %v1174
    %v1323 = vadd.f32 %v891, %v1177
    %v1324 = vadd.f32 %v896, %v1182
    %v1325 = vadd.f32 %v899, %v1185
    %v1326 = vadd.f32 %v904, %v1190
    %v1327 = vadd.f32 %v907, %v1193
    %v1328 = vadd.f32 %v912, %v1198
    %v1329 = vadd.f32 %v915, %v1201
    %v1330 = vadd.f32 %v920, %v1206
    %v1331 = vadd.f32 %v923, %v1209
    %v1332 = vadd.f32 %v928, %v1214
    %v1333 = vadd.f32 %v931, %v1217
    %v1334 = vadd.f32 %v936, %v1222
    %v1335 = vadd.f32 %v939, %v1225
    %v1336 = vadd.f32 %v944, %v1230
    %v1337 = vadd.f32 %v947, %v1233
    %v1338 = vadd.f32 %v952, %v1238
    %v1339 = vadd.f32 %v955, %v1241
    %v1340 = vadd.f32 %v960, %v1246
    %v1341 = vadd.f32 %v963, %v1249
    %v1342 = vadd.f32 %v968, %v1254
    %v1343 = vadd.f32 %v971, %v1257
    %v1344 = vadd.f32 %v976, %v1262
    %v1345 = vadd.f32 %v979, %v1265
    %v1346 = vadd.f32 %v984, %v1270
    %v1347 = vadd.f32 %v987, %v1273
    %v1348 = vadd.f32 %v992, %v1278
    %v1349 = vadd.f32 %v995, %v1281
    %v1350 = vadd.f32 %v1000, %v1286
    %v1351 = vadd.f32 %v1003, %v1289
    %v1352 = vld [vmem:[#allocation7] sm:$0x1]
    %v1354 = vlaneseq
    %v1355 = vshrl.u32 %v1354, 7
    %v1356 = vsub.s32 0, %v1355
    %v1357 = vrot.slane %v1352, %v1356
    %v1359 = vadd.f32 %v1292, %v1357
    %v1360 = vadd.f32 %v1293, %v1357
    %v1361 = vadd.f32 %v1294, %v1357
    %v1362 = vadd.f32 %v1295, %v1357
    %v1363 = vadd.f32 %v1296, %v1357
    %v1364 = vadd.f32 %v1297, %v1357
    %v1365 = vadd.f32 %v1298, %v1357
    %v1366 = vadd.f32 %v1299, %v1357
    %v1367 = vadd.f32 %v1300, %v1357
    %v1368 = vadd.f32 %v1301, %v1357
    %v1369 = vadd.f32 %v1302, %v1357
    %v1370 = vadd.f32 %v1303, %v1357
    %v1371 = vadd.f32 %v1304, %v1357
    %v1372 = vadd.f32 %v1305, %v1357
    %v1373 = vadd.f32 %v1306, %v1357
    %v1374 = vadd.f32 %v1307, %v1357
    %v1375 = vadd.f32 %v1308, %v1357
    %v1376 = vadd.f32 %v1309, %v1357
    %v1377 = vadd.f32 %v1310, %v1357
    %v1378 = vadd.f32 %v1311, %v1357
    %v1379 = vadd.f32 %v1312, %v1357
    %v1380 = vadd.f32 %v1313, %v1357
    %v1381 = vadd.f32 %v1314, %v1357
    %v1382 = vadd.f32 %v1315, %v1357
    %v1383 = vadd.f32 %v1316, %v1357
    %v1384 = vadd.f32 %v1317, %v1357
    %v1385 = vadd.f32 %v1318, %v1357
    %v1386 = vadd.f32 %v1319, %v1357
    %v1387 = vadd.f32 %v1320, %v1357
    %v1388 = vadd.f32 %v1321, %v1357
    %v1389 = vadd.f32 %v1322, %v1357
    %v1390 = vadd.f32 %v1323, %v1357
    %v1391 = vadd.f32 %v1324, %v1357
    %v1392 = vadd.f32 %v1325, %v1357
    %v1393 = vadd.f32 %v1326, %v1357
    %v1394 = vadd.f32 %v1327, %v1357
    %v1395 = vadd.f32 %v1328, %v1357
    %v1396 = vadd.f32 %v1329, %v1357
    %v1397 = vadd.f32 %v1330, %v1357
    %v1398 = vadd.f32 %v1331, %v1357
    %v1399 = vadd.f32 %v1332, %v1357
    %v1400 = vadd.f32 %v1333, %v1357
    %v1401 = vadd.f32 %v1334, %v1357
    %v1402 = vadd.f32 %v1335, %v1357
    %v1403 = vadd.f32 %v1336, %v1357
    %v1404 = vadd.f32 %v1337, %v1357
    %v1405 = vadd.f32 %v1338, %v1357
    %v1406 = vadd.f32 %v1339, %v1357
    %v1407 = vadd.f32 %v1340, %v1357
    %v1408 = vadd.f32 %v1341, %v1357
    %v1409 = vadd.f32 %v1342, %v1357
    %v1410 = vadd.f32 %v1343, %v1357
    %v1411 = vadd.f32 %v1344, %v1357
    %v1412 = vadd.f32 %v1345, %v1357
    %v1413 = vadd.f32 %v1346, %v1357
    %v1414 = vadd.f32 %v1347, %v1357
    %v1415 = vadd.f32 %v1348, %v1357
    %v1416 = vadd.f32 %v1349, %v1357
    %v1417 = vadd.f32 %v1350, %v1357
    %v1418 = vadd.f32 %v1351, %v1357
    %v1419 = vmax.f32 %v1359, 0.0
    %v1420 = vmax.f32 %v1360, 0.0
    %v1421 = vmax.f32 %v1361, 0.0
    %v1422 = vmax.f32 %v1362, 0.0
    %v1423 = vmax.f32 %v1363, 0.0
    %v1424 = vmax.f32 %v1364, 0.0
    %v1425 = vmax.f32 %v1365, 0.0
    %v1426 = vmax.f32 %v1366, 0.0
    %v1427 = vmax.f32 %v1367, 0.0
    %v1428 = vmax.f32 %v1368, 0.0
    %v1429 = vmax.f32 %v1369, 0.0
    %v1430 = vmax.f32 %v1370, 0.0
    %v1431 = vmax.f32 %v1371, 0.0
    %v1432 = vmax.f32 %v1372, 0.0
    %v1433 = vmax.f32 %v1373, 0.0
    %v1434 = vmax.f32 %v1374, 0.0
    %v1435 = vmax.f32 %v1375, 0.0
    %v1436 = vmax.f32 %v1376, 0.0
    %v1437 = vmax.f32 %v1377, 0.0
    %v1438 = vmax.f32 %v1378, 0.0
    %v1439 = vmax.f32 %v1379, 0.0
    %v1440 = vmax.f32 %v1380, 0.0
    %v1441 = vmax.f32 %v1381, 0.0
    %v1442 = vmax.f32 %v1382, 0.0
    %v1443 = vmax.f32 %v1383, 0.0
    %v1444 = vmax.f32 %v1384, 0.0
    %v1445 = vmax.f32 %v1385, 0.0
    %v1446 = vmax.f32 %v1386, 0.0
    %v1447 = vmax.f32 %v1387, 0.0
    %v1448 = vmax.f32 %v1388, 0.0
    %v1449 = vmax.f32 %v1389, 0.0
    %v1450 = vmax.f32 %v1390, 0.0
    %v1451 = vmax.f32 %v1391, 0.0
    %v1452 = vmax.f32 %v1392, 0.0
    %v1453 = vmax.f32 %v1393, 0.0
    %v1454 = vmax.f32 %v1394, 0.0
    %v1455 = vmax.f32 %v1395, 0.0
    %v1456 = vmax.f32 %v1396, 0.0
    %v1457 = vmax.f32 %v1397, 0.0
    %v1458 = vmax.f32 %v1398, 0.0
    %v1459 = vmax.f32 %v1399, 0.0
    %v1460 = vmax.f32 %v1400, 0.0
    %v1461 = vmax.f32 %v1401, 0.0
    %v1462 = vmax.f32 %v1402, 0.0
    %v1463 = vmax.f32 %v1403, 0.0
    %v1464 = vmax.f32 %v1404, 0.0
    %v1465 = vmax.f32 %v1405, 0.0
    %v1466 = vmax.f32 %v1406, 0.0
    %v1467 = vmax.f32 %v1407, 0.0
    %v1468 = vmax.f32 %v1408, 0.0
    %v1469 = vmax.f32 %v1409, 0.0
    %v1470 = vmax.f32 %v1410, 0.0
    %v1471 = vmax.f32 %v1411, 0.0
    %v1472 = vmax.f32 %v1412, 0.0
    %v1473 = vmax.f32 %v1413, 0.0
    %v1474 = vmax.f32 %v1414, 0.0
    %v1475 = vmax.f32 %v1415, 0.0
    %v1476 = vmax.f32 %v1416, 0.0
    %v1477 = vmax.f32 %v1417, 0.0
    %v1478 = vmax.f32 %v1418, 0.0
    %v1479 = vpack.c.bf16 %v1420, %v1419
    %v1480 = vpack.c.bf16 %v1422, %v1421
    %v1481 = vpack.c.bf16 %v1424, %v1423
    %v1482 = vpack.c.bf16 %v1426, %v1425
    %v1483 = vpack.c.bf16 %v1428, %v1427
    %v1484 = vpack.c.bf16 %v1430, %v1429
    %v1485 = vpack.c.bf16 %v1432, %v1431
    %v1486 = vpack.c.bf16 %v1434, %v1433
    %v1487 = vpack.c.bf16 %v1436, %v1435
    %v1488 = vpack.c.bf16 %v1438, %v1437
    %v1489 = vpack.c.bf16 %v1440, %v1439
    %v1490 = vpack.c.bf16 %v1442, %v1441
    %v1491 = vpack.c.bf16 %v1444, %v1443
    %v1492 = vpack.c.bf16 %v1446, %v1445
    %v1493 = vpack.c.bf16 %v1448, %v1447
    %v1494 = vpack.c.bf16 %v1450, %v1449
    %v1495 = vpack.c.bf16 %v1452, %v1451
    %v1496 = vpack.c.bf16 %v1454, %v1453
    %v1497 = vpack.c.bf16 %v1456, %v1455
    %v1498 = vpack.c.bf16 %v1458, %v1457
    %v1499 = vpack.c.bf16 %v1460, %v1459
    %v1500 = vpack.c.bf16 %v1462, %v1461
    %v1501 = vpack.c.bf16 %v1464, %v1463
    %v1502 = vpack.c.bf16 %v1466, %v1465
    %v1503 = vpack.c.bf16 %v1468, %v1467
    %v1504 = vpack.c.bf16 %v1470, %v1469
    %v1505 = vpack.c.bf16 %v1472, %v1471
    %v1506 = vpack.c.bf16 %v1474, %v1473
    %v1507 = vpack.c.bf16 %v1476, %v1475
    %v1508 = vpack.c.bf16 %v1478, %v1477
    %1509 = vst [vmem:[#allocation2 + $0x8] sm:$0xff] %v1479
    %1510 = vst [vmem:[#allocation2 + $0x10] sm:$0xff] %v1480
    %1511 = vst [vmem:[#allocation2 + $0x18] sm:$0xff] %v1481
    %1512 = vst [vmem:[#allocation2 + $0x20] sm:$0xff] %v1482
    %1513 = vst [vmem:[#allocation2 + $0x28] sm:$0xff] %v1483
    %1514 = vst [vmem:[#allocation2 + $0x30] sm:$0xff] %v1484
    %1515 = vst [vmem:[#allocation2 + $0x38] sm:$0xff] %v1485
    %1516 = vst [vmem:[#allocation2 + $0x40] sm:$0xff] %v1486
    %1517 = vst [vmem:[#allocation2 + $0x48] sm:$0xff] %v1487
    %1518 = vst [vmem:[#allocation2 + $0x50] sm:$0xff] %v1488
    %1519 = vst [vmem:[#allocation2 + $0x58] sm:$0xff] %v1489
    %1520 = vst [vmem:[#allocation2 + $0x60] sm:$0xff] %v1490
    %1521 = vst [vmem:[#allocation2 + $0x68] sm:$0xff] %v1491
    %1522 = vst [vmem:[#allocation2 + $0x70] sm:$0xff] %v1492
    %1523 = vst [vmem:[#allocation2 + $0x78] sm:$0xff] %v1493
    %1524 = vst [vmem:[#allocation2 + $0x80] sm:$0xff] %v1494
    %1525 = vst [vmem:[#allocation2 + $0x88] sm:$0xff] %v1495
    %1526 = vst [vmem:[#allocation2 + $0x90] sm:$0xff] %v1496
    %1527 = vst [vmem:[#allocation2 + $0x98] sm:$0xff] %v1497
    %1528 = vst [vmem:[#allocation2 + $0xa0] sm:$0xff] %v1498
    %1529 = vst [vmem:[#allocation2 + $0xa8] sm:$0xff] %v1499
    %1530 = vst [vmem:[#allocation2 + $0xb0] sm:$0xff] %v1500
    %1531 = vst [vmem:[#allocation2 + $0xb8] sm:$0xff] %v1501
    %1532 = vst [vmem:[#allocation2 + $0xc0] sm:$0xff] %v1502
    %1533 = vst [vmem:[#allocation2 + $0xc8] sm:$0xff] %v1503
    %1534 = vst [vmem:[#allocation2 + $0xd0] sm:$0xff] %v1504
    %1535 = vst [vmem:[#allocation2 + $0xd8] sm:$0xff] %v1505
    %1536 = vst [vmem:[#allocation2 + $0xe0] sm:$0xff] %v1506
    %1537 = vst [vmem:[#allocation2 + $0xe8] sm:$0xff] %v1507
    %1538 = vst [vmem:[#allocation2 + $0xf0] sm:$0xff] %v1508
    %v1539 = vld [vmem:[#allocation2] sm:$0xff]
    %v1540 = vld [vmem:[#allocation2 + $0x8] sm:$0xff]
    %v1541 = vld [vmem:[#allocation2 + $0x10] sm:$0xff]
    %v1542 = vld [vmem:[#allocation2 + $0x18] sm:$0xff]
    %v1543 = vld [vmem:[#allocation2 + $0x20] sm:$0xff]
    %v1544 = vld [vmem:[#allocation2 + $0x28] sm:$0xff]
    %v1545 = vld [vmem:[#allocation2 + $0x30] sm:$0xff]
    %v1546 = vld [vmem:[#allocation2 + $0x38] sm:$0xff]
    %v1547 = vld [vmem:[#allocation2 + $0x40] sm:$0xff]
    %v1548 = vld [vmem:[#allocation2 + $0x48] sm:$0xff]
    %v1549 = vld [vmem:[#allocation2 + $0x50] sm:$0xff]
    %v1550 = vld [vmem:[#allocation2 + $0x58] sm:$0xff]
    %v1551 = vld [vmem:[#allocation2 + $0x60] sm:$0xff]
    %v1552 = vld [vmem:[#allocation2 + $0x68] sm:$0xff]
    %v1553 = vld [vmem:[#allocation2 + $0x70] sm:$0xff]
    %v1554 = vld [vmem:[#allocation2 + $0x78] sm:$0xff]
    %v1555 = vld [vmem:[#allocation2 + $0x80] sm:$0xff]
    %v1556 = vld [vmem:[#allocation2 + $0x88] sm:$0xff]
    %v1557 = vld [vmem:[#allocation2 + $0x90] sm:$0xff]
    %v1558 = vld [vmem:[#allocation2 + $0x98] sm:$0xff]
    %v1559 = vld [vmem:[#allocation2 + $0xa0] sm:$0xff]
    %v1560 = vld [vmem:[#allocation2 + $0xa8] sm:$0xff]
    %v1561 = vld [vmem:[#allocation2 + $0xb0] sm:$0xff]
    %v1562 = vld [vmem:[#allocation2 + $0xb8] sm:$0xff]
    %v1563 = vld [vmem:[#allocation2 + $0xc0] sm:$0xff]
    %v1564 = vld [vmem:[#allocation2 + $0xc8] sm:$0xff]
    %v1565 = vld [vmem:[#allocation2 + $0xd0] sm:$0xff]
    %v1566 = vld [vmem:[#allocation2 + $0xd8] sm:$0xff]
    %v1567 = vld [vmem:[#allocation2 + $0xe0] sm:$0xff]
    %v1568 = vld [vmem:[#allocation2 + $0xe8] sm:$0xff]
    %v1569 = vld [vmem:[#allocation9] sm:$0xf]
    %v1570 = vld [vmem:[#allocation9 + $0x4] sm:$0xf]
    %v1571 = vld [vmem:[#allocation9 + $0x8] sm:$0xf]
    %v1572 = vld [vmem:[#allocation9 + $0xc] sm:$0xf]
    %v1573 = vld [vmem:[#allocation9 + $0x10] sm:$0xf]
    %v1574 = vld [vmem:[#allocation9 + $0x14] sm:$0xf]
    %v1575 = vld [vmem:[#allocation9 + $0x18] sm:$0xf]
    %v1576 = vld [vmem:[#allocation9 + $0x1c] sm:$0xf]
    %v1577 = vld [vmem:[#allocation9 + $0x20] sm:$0xf]
    %v1578 = vld [vmem:[#allocation9 + $0x24] sm:$0xf]
    %v1579 = vld [vmem:[#allocation9 + $0x28] sm:$0xf]
    %v1580 = vld [vmem:[#allocation9 + $0x2c] sm:$0xf]
    %v1581 = vld [vmem:[#allocation9 + $0x30] sm:$0xf]
    %v1582 = vld [vmem:[#allocation9 + $0x34] sm:$0xf]
    %v1583 = vld [vmem:[#allocation9 + $0x38] sm:$0xf]
    %v1584 = vld [vmem:[#allocation9 + $0x3c] sm:$0xf]
    %v1585 = vld [vmem:[#allocation2 + $0xf0] sm:$0xff]
    %s1586 = scalar_lea.vmem [#allocation9], 64
    %v1587 = vld [vmem:[%s1586] sm:$0xf]
    %v1588 = vld [vmem:[%s1586 + $0x4] sm:$0xf]
    %v1589 = vld [vmem:[%s1586 + $0x8] sm:$0xf]
    %v1590 = vld [vmem:[%s1586 + $0xc] sm:$0xf]
    %v1591 = vld [vmem:[%s1586 + $0x10] sm:$0xf]
    %v1592 = vld [vmem:[%s1586 + $0x14] sm:$0xf]
    %v1593 = vld [vmem:[%s1586 + $0x18] sm:$0xf]
    %v1594 = vld [vmem:[%s1586 + $0x1c] sm:$0xf]
    %v1595 = vld [vmem:[%s1586 + $0x20] sm:$0xf]
    %v1596 = vld [vmem:[%s1586 + $0x24] sm:$0xf]
    %v1597 = vld [vmem:[%s1586 + $0x28] sm:$0xf]
    %v1598 = vld [vmem:[%s1586 + $0x2c] sm:$0xf]
    %v1599 = vld [vmem:[%s1586 + $0x30] sm:$0xf]
    %v1600 = vld [vmem:[%s1586 + $0x34] sm:$0xf]
    %v1601 = vld [vmem:[%s1586 + $0x38] sm:$0xf]
    %v1602 = vld [vmem:[%s1586 + $0x3c] sm:$0xf]
    %v1619 = vunpack.c.l.b16 %v1587
    %v1620 = vunpack.c.l.b16 %v1588
    %v1621 = vunpack.c.l.b16 %v1589
    %v1622 = vunpack.c.l.b16 %v1590
    %v1623 = vunpack.c.l.b16 %v1591
    %v1624 = vunpack.c.l.b16 %v1592
    %v1625 = vunpack.c.l.b16 %v1593
    %v1626 = vunpack.c.l.b16 %v1594
    %v1627 = vunpack.c.l.b16 %v1595
    %v1628 = vunpack.c.l.b16 %v1596
    %v1629 = vunpack.c.l.b16 %v1597
    %v1630 = vunpack.c.l.b16 %v1598
    %v1631 = vunpack.c.l.b16 %v1599
    %v1632 = vunpack.c.l.b16 %v1600
    %v1633 = vunpack.c.l.b16 %v1601
    %v1634 = vunpack.c.l.b16 %v1602
    %v1635 = vpack.c.b16 %v1620, %v1619
    %v1636 = vpack.c.b16 %v1622, %v1621
    %v1637 = vpack.c.b16 %v1624, %v1623
    %v1638 = vpack.c.b16 %v1626, %v1625
    %v1639 = vpack.c.b16 %v1628, %v1627
    %v1640 = vpack.c.b16 %v1630, %v1629
    %v1641 = vpack.c.b16 %v1632, %v1631
    %v1642 = vpack.c.b16 %v1634, %v1633
    %1651 = vmatprep.subr.bf16.mxu0 0
    %1652 = vmatpush1.bf16.msra.mxu0 %v1635
    %1653 = vmatprep.subr.bf16.mxu0 0
    %1654 = vmatpush1.bf16.msra.mxu0 %v1636
    %1655 = vmatprep.subr.bf16.mxu0 0
    %1656 = vmatpush1.bf16.msra.mxu0 %v1637
    %1657 = vmatprep.subr.bf16.mxu0 0
    %1658 = vmatpush1.bf16.msra.mxu0 %v1638
    %1659 = vmatprep.subr.bf16.mxu0 0
    %1660 = vmatpush1.bf16.msra.mxu0 %v1639
    %1661 = vmatprep.subr.bf16.mxu0 0
    %1662 = vmatpush1.bf16.msra.mxu0 %v1640
    %1663 = vmatprep.subr.bf16.mxu0 0
    %1664 = vmatpush1.bf16.msra.mxu0 %v1641
    %1665 = vmatprep.subr.bf16.mxu0 0
    %1666 = vmatpush1.bf16.msra.mxu0 %v1642
    %1667 = vmatprep.subr.bf16.mxu0 0
    %1668 = vmatpush1.bf16.msra.mxu0 0
    %1669 = vmatprep.subr.bf16.mxu0 0
    %1670 = vmatpush1.bf16.msra.mxu0 0
    %1671 = vmatprep.subr.bf16.mxu0 0
    %1672 = vmatpush1.bf16.msra.mxu0 0
    %1673 = vmatprep.subr.bf16.mxu0 0
    %1674 = vmatpush1.bf16.msra.mxu0 0
    %1675 = vmatprep.subr.bf16.mxu0 0
    %1676 = vmatpush1.bf16.msra.mxu0 0
    %1677 = vmatprep.subr.bf16.mxu0 0
    %1678 = vmatpush1.bf16.msra.mxu0 0
    %1679 = vmatprep.subr.bf16.mxu0 0
    %1680 = vmatpush1.bf16.msra.mxu0 0
    %1681 = vmatprep.subr.bf16.mxu0 0
    %1682 = vmatpush1.bf16.msra.mxu0 0
    %1683 = vmatprep.mubr.bf16.mxu0 0
    %1684 = vmatmul.mubr.bf16.gmra.mrb[0].mxu0 %v1540
    %v1685 = vpop.f32.mrb[0].mxu0
    %v1686 = vadd.f32 0.0, %v1685
    %v1687 = vpop.f32.mrb[0].mxu0
    %v1688 = vpop.f32.mrb[0].mxu0
    %v1689 = vadd.f32 0.0, %v1688
    %v1690 = vpop.f32.mrb[0].mxu0
    %1691 = vmatprep.mubr.bf16.mxu0 0
    %1692 = vmatmul.mubr.bf16.gmra.mrb[0].mxu0 %v1541
    %v1693 = vpop.f32.mrb[0].mxu0
    %v1694 = vadd.f32 0.0, %v1693
    %v1695 = vpop.f32.mrb[0].mxu0
    %v1696 = vpop.f32.mrb[0].mxu0
    %v1697 = vadd.f32 0.0, %v1696
    %v1698 = vpop.f32.mrb[0].mxu0
    %1699 = vmatprep.mubr.bf16.mxu0 0
    %1700 = vmatmul.mubr.bf16.gmra.mrb[0].mxu0 %v1542
    %v1701 = vpop.f32.mrb[0].mxu0
    %v1702 = vadd.f32 0.0, %v1701
    %v1703 = vpop.f32.mrb[0].mxu0
    %v1704 = vpop.f32.mrb[0].mxu0
    %v1705 = vadd.f32 0.0, %v1704
    %v1706 = vpop.f32.mrb[0].mxu0
    %1707 = vmatprep.mubr.bf16.mxu0 0
    %1708 = vmatmul.mubr.bf16.gmra.mrb[0].mxu0 %v1543
    %v1709 = vpop.f32.mrb[0].mxu0
    %v1710 = vadd.f32 0.0, %v1709
    %v1711 = vpop.f32.mrb[0].mxu0
    %v1712 = vpop.f32.mrb[0].mxu0
    %v1713 = vadd.f32 0.0, %v1712
    %v1714 = vpop.f32.mrb[0].mxu0
    %1715 = vmatprep.mubr.bf16.mxu0 0
    %1716 = vmatmul.mubr.bf16.gmra.mrb[0].mxu0 %v1544
    %v1717 = vpop.f32.mrb[0].mxu0
    %v1718 = vadd.f32 0.0, %v1717
    %v1719 = vpop.f32.mrb[0].mxu0
    %v1720 = vpop.f32.mrb[0].mxu0
    %v1721 = vadd.f32 0.0, %v1720
    %v1722 = vpop.f32.mrb[0].mxu0
    %1723 = vmatprep.mubr.bf16.mxu0 0
    %1724 = vmatmul.mubr.bf16.gmra.mrb[0].mxu0 %v1545
    %v1725 = vpop.f32.mrb[0].mxu0
    %v1726 = vadd.f32 0.0, %v1725
    %v1727 = vpop.f32.mrb[0].mxu0
    %v1728 = vpop.f32.mrb[0].mxu0
    %v1729 = vadd.f32 0.0, %v1728
    %v1730 = vpop.f32.mrb[0].mxu0
    %1731 = vmatprep.mubr.bf16.mxu0 0
    %1732 = vmatmul.mubr.bf16.gmra.mrb[0].mxu0 %v1546
    %v1733 = vpop.f32.mrb[0].mxu0
    %v1734 = vadd.f32 0.0, %v1733
    %v1735 = vpop.f32.mrb[0].mxu0
    %v1736 = vpop.f32.mrb[0].mxu0
    %v1737 = vadd.f32 0.0, %v1736
    %v1738 = vpop.f32.mrb[0].mxu0
    %1739 = vmatprep.mubr.bf16.mxu0 0
    %1740 = vmatmul.mubr.bf16.gmra.mrb[0].mxu0 %v1547
    %v1741 = vpop.f32.mrb[0].mxu0
    %v1742 = vadd.f32 0.0, %v1741
    %v1743 = vpop.f32.mrb[0].mxu0
    %v1744 = vpop.f32.mrb[0].mxu0
    %v1745 = vadd.f32 0.0, %v1744
    %v1746 = vpop.f32.mrb[0].mxu0
    %1747 = vmatprep.mubr.bf16.mxu0 0
    %1748 = vmatmul.mubr.bf16.gmra.mrb[0].mxu0 %v1548
    %v1749 = vpop.f32.mrb[0].mxu0
    %v1750 = vadd.f32 0.0, %v1749
    %v1751 = vpop.f32.mrb[0].mxu0
    %v1752 = vpop.f32.mrb[0].mxu0
    %v1753 = vadd.f32 0.0, %v1752
    %v1754 = vpop.f32.mrb[0].mxu0
    %1755 = vmatprep.mubr.bf16.mxu0 0
    %1756 = vmatmul.mubr.bf16.gmra.mrb[0].mxu0 %v1549
    %v1757 = vpop.f32.mrb[0].mxu0
    %v1758 = vadd.f32 0.0, %v1757
    %v1759 = vpop.f32.mrb[0].mxu0
    %v1760 = vpop.f32.mrb[0].mxu0
    %v1761 = vadd.f32 0.0, %v1760
    %v1762 = vpop.f32.mrb[0].mxu0
    %1763 = vmatprep.mubr.bf16.mxu0 0
    %1764 = vmatmul.mubr.bf16.gmra.mrb[0].mxu0 %v1550
    %v1765 = vpop.f32.mrb[0].mxu0
    %v1766 = vadd.f32 0.0, %v1765
    %v1767 = vpop.f32.mrb[0].mxu0
    %v1768 = vpop.f32.mrb[0].mxu0
    %v1769 = vadd.f32 0.0, %v1768
    %v1770 = vpop.f32.mrb[0].mxu0
    %1771 = vmatprep.mubr.bf16.mxu0 0
    %1772 = vmatmul.mubr.bf16.gmra.mrb[0].mxu0 %v1551
    %v1773 = vpop.f32.mrb[0].mxu0
    %v1774 = vadd.f32 0.0, %v1773
    %v1775 = vpop.f32.mrb[0].mxu0
    %v1776 = vpop.f32.mrb[0].mxu0
    %v1777 = vadd.f32 0.0, %v1776
    %v1778 = vpop.f32.mrb[0].mxu0
    %1779 = vmatprep.mubr.bf16.mxu0 0
    %1780 = vmatmul.mubr.bf16.gmra.mrb[0].mxu0 %v1552
    %v1781 = vpop.f32.mrb[0].mxu0
    %v1782 = vadd.f32 0.0, %v1781
    %v1783 = vpop.f32.mrb[0].mxu0
    %v1784 = vpop.f32.mrb[0].mxu0
    %v1785 = vadd.f32 0.0, %v1784
    %v1786 = vpop.f32.mrb[0].mxu0
    %1787 = vmatprep.mubr.bf16.mxu0 0
    %1788 = vmatmul.mubr.bf16.gmra.mrb[0].mxu0 %v1553
    %v1789 = vpop.f32.mrb[0].mxu0
    %v1790 = vadd.f32 0.0, %v1789
    %v1791 = vpop.f32.mrb[0].mxu0
    %v1792 = vpop.f32.mrb[0].mxu0
    %v1793 = vadd.f32 0.0, %v1792
    %v1794 = vpop.f32.mrb[0].mxu0
    %1795 = vmatprep.mubr.bf16.mxu0 0
    %1796 = vmatmul.mubr.bf16.gmra.mrb[0].mxu0 %v1554
    %v1797 = vpop.f32.mrb[0].mxu0
    %v1798 = vadd.f32 0.0, %v1797
    %v1799 = vpop.f32.mrb[0].mxu0
    %v1800 = vpop.f32.mrb[0].mxu0
    %v1801 = vadd.f32 0.0, %v1800
    %v1802 = vpop.f32.mrb[0].mxu0
    %1803 = vmatprep.mubr.bf16.mxu0 0
    %1804 = vmatmul.mubr.bf16.gmra.mrb[0].mxu0 %v1555
    %v1805 = vpop.f32.mrb[0].mxu0
    %v1806 = vadd.f32 0.0, %v1805
    %v1807 = vpop.f32.mrb[0].mxu0
    %v1808 = vpop.f32.mrb[0].mxu0
    %v1809 = vadd.f32 0.0, %v1808
    %v1810 = vpop.f32.mrb[0].mxu0
    %1811 = vmatprep.mubr.bf16.mxu0 0
    %1812 = vmatmul.mubr.bf16.gmra.mrb[0].mxu0 %v1556
    %v1813 = vpop.f32.mrb[0].mxu0
    %v1814 = vadd.f32 0.0, %v1813
    %v1815 = vpop.f32.mrb[0].mxu0
    %v1816 = vpop.f32.mrb[0].mxu0
    %v1817 = vadd.f32 0.0, %v1816
    %v1818 = vpop.f32.mrb[0].mxu0
    %1819 = vmatprep.mubr.bf16.mxu0 0
    %1820 = vmatmul.mubr.bf16.gmra.mrb[0].mxu0 %v1557
    %v1821 = vpop.f32.mrb[0].mxu0
    %v1822 = vadd.f32 0.0, %v1821
    %v1823 = vpop.f32.mrb[0].mxu0
    %v1824 = vpop.f32.mrb[0].mxu0
    %v1825 = vadd.f32 0.0, %v1824
    %v1826 = vpop.f32.mrb[0].mxu0
    %1827 = vmatprep.mubr.bf16.mxu0 0
    %1828 = vmatmul.mubr.bf16.gmra.mrb[0].mxu0 %v1558
    %v1829 = vpop.f32.mrb[0].mxu0
    %v1830 = vadd.f32 0.0, %v1829
    %v1831 = vpop.f32.mrb[0].mxu0
    %v1832 = vpop.f32.mrb[0].mxu0
    %v1833 = vadd.f32 0.0, %v1832
    %v1834 = vpop.f32.mrb[0].mxu0
    %1835 = vmatprep.mubr.bf16.mxu0 0
    %1836 = vmatmul.mubr.bf16.gmra.mrb[0].mxu0 %v1559
    %v1837 = vpop.f32.mrb[0].mxu0
    %v1838 = vadd.f32 0.0, %v1837
    %v1839 = vpop.f32.mrb[0].mxu0
    %v1840 = vpop.f32.mrb[0].mxu0
    %v1841 = vadd.f32 0.0, %v1840
    %v1842 = vpop.f32.mrb[0].mxu0
    %1843 = vmatprep.mubr.bf16.mxu0 0
    %1844 = vmatmul.mubr.bf16.gmra.mrb[0].mxu0 %v1560
    %v1845 = vpop.f32.mrb[0].mxu0
    %v1846 = vadd.f32 0.0, %v1845
    %v1847 = vpop.f32.mrb[0].mxu0
    %v1848 = vpop.f32.mrb[0].mxu0
    %v1849 = vadd.f32 0.0, %v1848
    %v1850 = vpop.f32.mrb[0].mxu0
    %1851 = vmatprep.mubr.bf16.mxu0 0
    %1852 = vmatmul.mubr.bf16.gmra.mrb[0].mxu0 %v1561
    %v1853 = vpop.f32.mrb[0].mxu0
    %v1854 = vadd.f32 0.0, %v1853
    %v1855 = vpop.f32.mrb[0].mxu0
    %v1856 = vpop.f32.mrb[0].mxu0
    %v1857 = vadd.f32 0.0, %v1856
    %v1858 = vpop.f32.mrb[0].mxu0
    %1859 = vmatprep.mubr.bf16.mxu0 0
    %1860 = vmatmul.mubr.bf16.gmra.mrb[0].mxu0 %v1562
    %v1861 = vpop.f32.mrb[0].mxu0
    %v1862 = vadd.f32 0.0, %v1861
    %v1863 = vpop.f32.mrb[0].mxu0
    %v1864 = vpop.f32.mrb[0].mxu0
    %v1865 = vadd.f32 0.0, %v1864
    %v1866 = vpop.f32.mrb[0].mxu0
    %1867 = vmatprep.mubr.bf16.mxu0 0
    %1868 = vmatmul.mubr.bf16.gmra.mrb[0].mxu0 %v1563
    %v1869 = vpop.f32.mrb[0].mxu0
    %v1870 = vadd.f32 0.0, %v1869
    %v1871 = vpop.f32.mrb[0].mxu0
    %v1872 = vpop.f32.mrb[0].mxu0
    %v1873 = vadd.f32 0.0, %v1872
    %v1874 = vpop.f32.mrb[0].mxu0
    %1875 = vmatprep.mubr.bf16.mxu0 0
    %1876 = vmatmul.mubr.bf16.gmra.mrb[0].mxu0 %v1564
    %v1877 = vpop.f32.mrb[0].mxu0
    %v1878 = vadd.f32 0.0, %v1877
    %v1879 = vpop.f32.mrb[0].mxu0
    %v1880 = vpop.f32.mrb[0].mxu0
    %v1881 = vadd.f32 0.0, %v1880
    %v1882 = vpop.f32.mrb[0].mxu0
    %1883 = vmatprep.mubr.bf16.mxu0 0
    %1884 = vmatmul.mubr.bf16.gmra.mrb[0].mxu0 %v1565
    %v1885 = vpop.f32.mrb[0].mxu0
    %v1886 = vadd.f32 0.0, %v1885
    %v1887 = vpop.f32.mrb[0].mxu0
    %v1888 = vpop.f32.mrb[0].mxu0
    %v1889 = vadd.f32 0.0, %v1888
    %v1890 = vpop.f32.mrb[0].mxu0
    %1891 = vmatprep.mubr.bf16.mxu0 0
    %1892 = vmatmul.mubr.bf16.gmra.mrb[0].mxu0 %v1566
    %v1893 = vpop.f32.mrb[0].mxu0
    %v1894 = vadd.f32 0.0, %v1893
    %v1895 = vpop.f32.mrb[0].mxu0
    %v1896 = vpop.f32.mrb[0].mxu0
    %v1897 = vadd.f32 0.0, %v1896
    %v1898 = vpop.f32.mrb[0].mxu0
    %1899 = vmatprep.mubr.bf16.mxu0 0
    %1900 = vmatmul.mubr.bf16.gmra.mrb[0].mxu0 %v1567
    %v1901 = vpop.f32.mrb[0].mxu0
    %v1902 = vadd.f32 0.0, %v1901
    %v1903 = vpop.f32.mrb[0].mxu0
    %v1904 = vpop.f32.mrb[0].mxu0
    %v1905 = vadd.f32 0.0, %v1904
    %v1906 = vpop.f32.mrb[0].mxu0
    %1907 = vmatprep.mubr.bf16.mxu0 0
    %1908 = vmatmul.mubr.bf16.gmra.mrb[0].mxu0 %v1568
    %v1909 = vpop.f32.mrb[0].mxu0
    %v1910 = vadd.f32 0.0, %v1909
    %v1911 = vpop.f32.mrb[0].mxu0
    %v1912 = vpop.f32.mrb[0].mxu0
    %v1913 = vadd.f32 0.0, %v1912
    %v1914 = vpop.f32.mrb[0].mxu0
    %1915 = vmatprep.mubr.bf16.mxu0 0
    %1916 = vmatmul.mubr.bf16.gmra.mrb[0].mxu0 %v1585
    %v1917 = vpop.f32.mrb[0].mxu0
    %v1918 = vadd.f32 0.0, %v1917
    %v1919 = vpop.f32.mrb[0].mxu0
    %v1920 = vpop.f32.mrb[0].mxu0
    %v1921 = vadd.f32 0.0, %v1920
    %v1922 = vpop.f32.mrb[0].mxu0
    %1923 = vdwg.mxu0
    %v1940 = vunpack.c.l.b16 %v1569
    %v1941 = vunpack.c.l.b16 %v1570
    %v1942 = vunpack.c.l.b16 %v1571
    %v1943 = vunpack.c.l.b16 %v1572
    %v1944 = vunpack.c.l.b16 %v1573
    %v1945 = vunpack.c.l.b16 %v1574
    %v1946 = vunpack.c.l.b16 %v1575
    %v1947 = vunpack.c.l.b16 %v1576
    %v1948 = vunpack.c.l.b16 %v1577
    %v1949 = vunpack.c.l.b16 %v1578
    %v1950 = vunpack.c.l.b16 %v1579
    %v1951 = vunpack.c.l.b16 %v1580
    %v1952 = vunpack.c.l.b16 %v1581
    %v1953 = vunpack.c.l.b16 %v1582
    %v1954 = vunpack.c.l.b16 %v1583
    %v1955 = vunpack.c.l.b16 %v1584
    %v1956 = vpack.c.b16 %v1941, %v1940
    %v1957 = vpack.c.b16 %v1943, %v1942
    %v1958 = vpack.c.b16 %v1945, %v1944
    %v1959 = vpack.c.b16 %v1947, %v1946
    %v1960 = vpack.c.b16 %v1949, %v1948
    %v1961 = vpack.c.b16 %v1951, %v1950
    %v1962 = vpack.c.b16 %v1953, %v1952
    %v1963 = vpack.c.b16 %v1955, %v1954
    %1972 = vmatprep.subr.bf16.mxu0 0
    %1973 = vmatpush1.bf16.msra.mxu0 %v1956
    %1974 = vmatprep.subr.bf16.mxu0 0
    %1975 = vmatpush1.bf16.msra.mxu0 %v1957
    %1976 = vmatprep.subr.bf16.mxu0 0
    %1977 = vmatpush1.bf16.msra.mxu0 %v1958
    %1978 = vmatprep.subr.bf16.mxu0 0
    %1979 = vmatpush1.bf16.msra.mxu0 %v1959
    %1980 = vmatprep.subr.bf16.mxu0 0
    %1981 = vmatpush1.bf16.msra.mxu0 %v1960
    %1982 = vmatprep.subr.bf16.mxu0 0
    %1983 = vmatpush1.bf16.msra.mxu0 %v1961
    %1984 = vmatprep.subr.bf16.mxu0 0
    %1985 = vmatpush1.bf16.msra.mxu0 %v1962
    %1986 = vmatprep.subr.bf16.mxu0 0
    %1987 = vmatpush1.bf16.msra.mxu0 %v1963
    %1988 = vmatprep.subr.bf16.mxu0 0
    %1989 = vmatpush1.bf16.msra.mxu0 0
    %1990 = vmatprep.subr.bf16.mxu0 0
    %1991 = vmatpush1.bf16.msra.mxu0 0
    %1992 = vmatprep.subr.bf16.mxu0 0
    %1993 = vmatpush1.bf16.msra.mxu0 0
    %1994 = vmatprep.subr.bf16.mxu0 0
    %1995 = vmatpush1.bf16.msra.mxu0 0
    %1996 = vmatprep.subr.bf16.mxu0 0
    %1997 = vmatpush1.bf16.msra.mxu0 0
    %1998 = vmatprep.subr.bf16.mxu0 0
    %1999 = vmatpush1.bf16.msra.mxu0 0
    %2000 = vmatprep.subr.bf16.mxu0 0
    %2001 = vmatpush1.bf16.msra.mxu0 0
    %2002 = vmatprep.subr.bf16.mxu0 0
    %2003 = vmatpush1.bf16.msra.mxu0 0
    %2004 = vmatprep.mubr.bf16.mxu0 0
    %2005 = vmatmul.mubr.bf16.gmra.mrb[0].mxu0 %v1539
    %v2006 = vpop.f32.mrb[0].mxu0
    %v2007 = vadd.f32 %v1686, %v2006
    %v2008 = vpop.f32.mrb[0].mxu0
    %v2009 = vpop.f32.mrb[0].mxu0
    %v2010 = vadd.f32 %v1689, %v2009
    %v2011 = vpop.f32.mrb[0].mxu0
    %2012 = vmatprep.mubr.bf16.mxu0 0
    %2013 = vmatmul.mubr.bf16.gmra.mrb[0].mxu0 %v1540
    %v2014 = vpop.f32.mrb[0].mxu0
    %v2015 = vadd.f32 %v1694, %v2014
    %v2016 = vpop.f32.mrb[0].mxu0
    %v2017 = vpop.f32.mrb[0].mxu0
    %v2018 = vadd.f32 %v1697, %v2017
    %v2019 = vpop.f32.mrb[0].mxu0
    %2020 = vmatprep.mubr.bf16.mxu0 0
    %2021 = vmatmul.mubr.bf16.gmra.mrb[0].mxu0 %v1541
    %v2022 = vpop.f32.mrb[0].mxu0
    %v2023 = vadd.f32 %v1702, %v2022
    %v2024 = vpop.f32.mrb[0].mxu0
    %v2025 = vpop.f32.mrb[0].mxu0
    %v2026 = vadd.f32 %v1705, %v2025
    %v2027 = vpop.f32.mrb[0].mxu0
    %2028 = vmatprep.mubr.bf16.mxu0 0
    %2029 = vmatmul.mubr.bf16.gmra.mrb[0].mxu0 %v1542
    %v2030 = vpop.f32.mrb[0].mxu0
    %v2031 = vadd.f32 %v1710, %v2030
    %v2032 = vpop.f32.mrb[0].mxu0
    %v2033 = vpop.f32.mrb[0].mxu0
    %v2034 = vadd.f32 %v1713, %v2033
    %v2035 = vpop.f32.mrb[0].mxu0
    %2036 = vmatprep.mubr.bf16.mxu0 0
    %2037 = vmatmul.mubr.bf16.gmra.mrb[0].mxu0 %v1543
    %v2038 = vpop.f32.mrb[0].mxu0
    %v2039 = vadd.f32 %v1718, %v2038
    %v2040 = vpop.f32.mrb[0].mxu0
    %v2041 = vpop.f32.mrb[0].mxu0
    %v2042 = vadd.f32 %v1721, %v2041
    %v2043 = vpop.f32.mrb[0].mxu0
    %2044 = vmatprep.mubr.bf16.mxu0 0
    %2045 = vmatmul.mubr.bf16.gmra.mrb[0].mxu0 %v1544
    %v2046 = vpop.f32.mrb[0].mxu0
    %v2047 = vadd.f32 %v1726, %v2046
    %v2048 = vpop.f32.mrb[0].mxu0
    %v2049 = vpop.f32.mrb[0].mxu0
    %v2050 = vadd.f32 %v1729, %v2049
    %v2051 = vpop.f32.mrb[0].mxu0
    %2052 = vmatprep.mubr.bf16.mxu0 0
    %2053 = vmatmul.mubr.bf16.gmra.mrb[0].mxu0 %v1545
    %v2054 = vpop.f32.mrb[0].mxu0
    %v2055 = vadd.f32 %v1734, %v2054
    %v2056 = vpop.f32.mrb[0].mxu0
    %v2057 = vpop.f32.mrb[0].mxu0
    %v2058 = vadd.f32 %v1737, %v2057
    %v2059 = vpop.f32.mrb[0].mxu0
    %2060 = vmatprep.mubr.bf16.mxu0 0
    %2061 = vmatmul.mubr.bf16.gmra.mrb[0].mxu0 %v1546
    %v2062 = vpop.f32.mrb[0].mxu0
    %v2063 = vadd.f32 %v1742, %v2062
    %v2064 = vpop.f32.mrb[0].mxu0
    %v2065 = vpop.f32.mrb[0].mxu0
    %v2066 = vadd.f32 %v1745, %v2065
    %v2067 = vpop.f32.mrb[0].mxu0
    %2068 = vmatprep.mubr.bf16.mxu0 0
    %2069 = vmatmul.mubr.bf16.gmra.mrb[0].mxu0 %v1547
    %v2070 = vpop.f32.mrb[0].mxu0
    %v2071 = vadd.f32 %v1750, %v2070
    %v2072 = vpop.f32.mrb[0].mxu0
    %v2073 = vpop.f32.mrb[0].mxu0
    %v2074 = vadd.f32 %v1753, %v2073
    %v2075 = vpop.f32.mrb[0].mxu0
    %2076 = vmatprep.mubr.bf16.mxu0 0
    %2077 = vmatmul.mubr.bf16.gmra.mrb[0].mxu0 %v1548
    %v2078 = vpop.f32.mrb[0].mxu0
    %v2079 = vadd.f32 %v1758, %v2078
    %v2080 = vpop.f32.mrb[0].mxu0
    %v2081 = vpop.f32.mrb[0].mxu0
    %v2082 = vadd.f32 %v1761, %v2081
    %v2083 = vpop.f32.mrb[0].mxu0
    %2084 = vmatprep.mubr.bf16.mxu0 0
    %2085 = vmatmul.mubr.bf16.gmra.mrb[0].mxu0 %v1549
    %v2086 = vpop.f32.mrb[0].mxu0
    %v2087 = vadd.f32 %v1766, %v2086
    %v2088 = vpop.f32.mrb[0].mxu0
    %v2089 = vpop.f32.mrb[0].mxu0
    %v2090 = vadd.f32 %v1769, %v2089
    %v2091 = vpop.f32.mrb[0].mxu0
    %2092 = vmatprep.mubr.bf16.mxu0 0
    %2093 = vmatmul.mubr.bf16.gmra.mrb[0].mxu0 %v1550
    %v2094 = vpop.f32.mrb[0].mxu0
    %v2095 = vadd.f32 %v1774, %v2094
    %v2096 = vpop.f32.mrb[0].mxu0
    %v2097 = vpop.f32.mrb[0].mxu0
    %v2098 = vadd.f32 %v1777, %v2097
    %v2099 = vpop.f32.mrb[0].mxu0
    %2100 = vmatprep.mubr.bf16.mxu0 0
    %2101 = vmatmul.mubr.bf16.gmra.mrb[0].mxu0 %v1551
    %v2102 = vpop.f32.mrb[0].mxu0
    %v2103 = vadd.f32 %v1782, %v2102
    %v2104 = vpop.f32.mrb[0].mxu0
    %v2105 = vpop.f32.mrb[0].mxu0
    %v2106 = vadd.f32 %v1785, %v2105
    %v2107 = vpop.f32.mrb[0].mxu0
    %2108 = vmatprep.mubr.bf16.mxu0 0
    %2109 = vmatmul.mubr.bf16.gmra.mrb[0].mxu0 %v1552
    %v2110 = vpop.f32.mrb[0].mxu0
    %v2111 = vadd.f32 %v1790, %v2110
    %v2112 = vpop.f32.mrb[0].mxu0
    %v2113 = vpop.f32.mrb[0].mxu0
    %v2114 = vadd.f32 %v1793, %v2113
    %v2115 = vpop.f32.mrb[0].mxu0
    %2116 = vmatprep.mubr.bf16.mxu0 0
    %2117 = vmatmul.mubr.bf16.gmra.mrb[0].mxu0 %v1553
    %v2118 = vpop.f32.mrb[0].mxu0
    %v2119 = vadd.f32 %v1798, %v2118
    %v2120 = vpop.f32.mrb[0].mxu0
    %v2121 = vpop.f32.mrb[0].mxu0
    %v2122 = vadd.f32 %v1801, %v2121
    %v2123 = vpop.f32.mrb[0].mxu0
    %2124 = vmatprep.mubr.bf16.mxu0 0
    %2125 = vmatmul.mubr.bf16.gmra.mrb[0].mxu0 %v1554
    %v2126 = vpop.f32.mrb[0].mxu0
    %v2127 = vadd.f32 %v1806, %v2126
    %v2128 = vpop.f32.mrb[0].mxu0
    %v2129 = vpop.f32.mrb[0].mxu0
    %v2130 = vadd.f32 %v1809, %v2129
    %v2131 = vpop.f32.mrb[0].mxu0
    %2132 = vmatprep.mubr.bf16.mxu0 0
    %2133 = vmatmul.mubr.bf16.gmra.mrb[0].mxu0 %v1555
    %v2134 = vpop.f32.mrb[0].mxu0
    %v2135 = vadd.f32 %v1814, %v2134
    %v2136 = vpop.f32.mrb[0].mxu0
    %v2137 = vpop.f32.mrb[0].mxu0
    %v2138 = vadd.f32 %v1817, %v2137
    %v2139 = vpop.f32.mrb[0].mxu0
    %2140 = vmatprep.mubr.bf16.mxu0 0
    %2141 = vmatmul.mubr.bf16.gmra.mrb[0].mxu0 %v1556
    %v2142 = vpop.f32.mrb[0].mxu0
    %v2143 = vadd.f32 %v1822, %v2142
    %v2144 = vpop.f32.mrb[0].mxu0
    %v2145 = vpop.f32.mrb[0].mxu0
    %v2146 = vadd.f32 %v1825, %v2145
    %v2147 = vpop.f32.mrb[0].mxu0
    %2148 = vmatprep.mubr.bf16.mxu0 0
    %2149 = vmatmul.mubr.bf16.gmra.mrb[0].mxu0 %v1557
    %v2150 = vpop.f32.mrb[0].mxu0
    %v2151 = vadd.f32 %v1830, %v2150
    %v2152 = vpop.f32.mrb[0].mxu0
    %v2153 = vpop.f32.mrb[0].mxu0
    %v2154 = vadd.f32 %v1833, %v2153
    %v2155 = vpop.f32.mrb[0].mxu0
    %2156 = vmatprep.mubr.bf16.mxu0 0
    %2157 = vmatmul.mubr.bf16.gmra.mrb[0].mxu0 %v1558
    %v2158 = vpop.f32.mrb[0].mxu0
    %v2159 = vadd.f32 %v1838, %v2158
    %v2160 = vpop.f32.mrb[0].mxu0
    %v2161 = vpop.f32.mrb[0].mxu0
    %v2162 = vadd.f32 %v1841, %v2161
    %v2163 = vpop.f32.mrb[0].mxu0
    %2164 = vmatprep.mubr.bf16.mxu0 0
    %2165 = vmatmul.mubr.bf16.gmra.mrb[0].mxu0 %v1559
    %v2166 = vpop.f32.mrb[0].mxu0
    %v2167 = vadd.f32 %v1846, %v2166
    %v2168 = vpop.f32.mrb[0].mxu0
    %v2169 = vpop.f32.mrb[0].mxu0
    %v2170 = vadd.f32 %v1849, %v2169
    %v2171 = vpop.f32.mrb[0].mxu0
    %2172 = vmatprep.mubr.bf16.mxu0 0
    %2173 = vmatmul.mubr.bf16.gmra.mrb[0].mxu0 %v1560
    %v2174 = vpop.f32.mrb[0].mxu0
    %v2175 = vadd.f32 %v1854, %v2174
    %v2176 = vpop.f32.mrb[0].mxu0
    %v2177 = vpop.f32.mrb[0].mxu0
    %v2178 = vadd.f32 %v1857, %v2177
    %v2179 = vpop.f32.mrb[0].mxu0
    %2180 = vmatprep.mubr.bf16.mxu0 0
    %2181 = vmatmul.mubr.bf16.gmra.mrb[0].mxu0 %v1561
    %v2182 = vpop.f32.mrb[0].mxu0
    %v2183 = vadd.f32 %v1862, %v2182
    %v2184 = vpop.f32.mrb[0].mxu0
    %v2185 = vpop.f32.mrb[0].mxu0
    %v2186 = vadd.f32 %v1865, %v2185
    %v2187 = vpop.f32.mrb[0].mxu0
    %2188 = vmatprep.mubr.bf16.mxu0 0
    %2189 = vmatmul.mubr.bf16.gmra.mrb[0].mxu0 %v1562
    %v2190 = vpop.f32.mrb[0].mxu0
    %v2191 = vadd.f32 %v1870, %v2190
    %v2192 = vpop.f32.mrb[0].mxu0
    %v2193 = vpop.f32.mrb[0].mxu0
    %v2194 = vadd.f32 %v1873, %v2193
    %v2195 = vpop.f32.mrb[0].mxu0
    %2196 = vmatprep.mubr.bf16.mxu0 0
    %2197 = vmatmul.mubr.bf16.gmra.mrb[0].mxu0 %v1563
    %v2198 = vpop.f32.mrb[0].mxu0
    %v2199 = vadd.f32 %v1878, %v2198
    %v2200 = vpop.f32.mrb[0].mxu0
    %v2201 = vpop.f32.mrb[0].mxu0
    %v2202 = vadd.f32 %v1881, %v2201
    %v2203 = vpop.f32.mrb[0].mxu0
    %2204 = vmatprep.mubr.bf16.mxu0 0
    %2205 = vmatmul.mubr.bf16.gmra.mrb[0].mxu0 %v1564
    %v2206 = vpop.f32.mrb[0].mxu0
    %v2207 = vadd.f32 %v1886, %v2206
    %v2208 = vpop.f32.mrb[0].mxu0
    %v2209 = vpop.f32.mrb[0].mxu0
    %v2210 = vadd.f32 %v1889, %v2209
    %v2211 = vpop.f32.mrb[0].mxu0
    %2212 = vmatprep.mubr.bf16.mxu0 0
    %2213 = vmatmul.mubr.bf16.gmra.mrb[0].mxu0 %v1565
    %v2214 = vpop.f32.mrb[0].mxu0
    %v2215 = vadd.f32 %v1894, %v2214
    %v2216 = vpop.f32.mrb[0].mxu0
    %v2217 = vpop.f32.mrb[0].mxu0
    %v2218 = vadd.f32 %v1897, %v2217
    %v2219 = vpop.f32.mrb[0].mxu0
    %2220 = vmatprep.mubr.bf16.mxu0 0
    %2221 = vmatmul.mubr.bf16.gmra.mrb[0].mxu0 %v1566
    %v2222 = vpop.f32.mrb[0].mxu0
    %v2223 = vadd.f32 %v1902, %v2222
    %v2224 = vpop.f32.mrb[0].mxu0
    %v2225 = vpop.f32.mrb[0].mxu0
    %v2226 = vadd.f32 %v1905, %v2225
    %v2227 = vpop.f32.mrb[0].mxu0
    %2228 = vmatprep.mubr.bf16.mxu0 0
    %2229 = vmatmul.mubr.bf16.gmra.mrb[0].mxu0 %v1567
    %v2230 = vpop.f32.mrb[0].mxu0
    %v2231 = vadd.f32 %v1910, %v2230
    %v2232 = vpop.f32.mrb[0].mxu0
    %v2233 = vpop.f32.mrb[0].mxu0
    %v2234 = vadd.f32 %v1913, %v2233
    %v2235 = vpop.f32.mrb[0].mxu0
    %2236 = vmatprep.mubr.bf16.mxu0 0
    %2237 = vmatmul.mubr.bf16.gmra.mrb[0].mxu0 %v1568
    %v2238 = vpop.f32.mrb[0].mxu0
    %v2239 = vadd.f32 %v1918, %v2238
    %v2240 = vpop.f32.mrb[0].mxu0
    %v2241 = vpop.f32.mrb[0].mxu0
    %v2242 = vadd.f32 %v1921, %v2241
    %v2243 = vpop.f32.mrb[0].mxu0
    %2244 = vdwg.mxu0
    %v2245 = vld [vmem:[#allocation2 + $0x10] sm:$0xff]
    %v2246 = vld [vmem:[#allocation2 + $0x18] sm:$0xff]
    %v2247 = vld [vmem:[#allocation2 + $0x20] sm:$0xff]
    %v2248 = vld [vmem:[#allocation2 + $0x28] sm:$0xff]
    %v2249 = vld [vmem:[#allocation2 + $0x30] sm:$0xff]
    %v2250 = vld [vmem:[#allocation2 + $0x38] sm:$0xff]
    %v2251 = vld [vmem:[#allocation2 + $0x40] sm:$0xff]
    %v2252 = vld [vmem:[#allocation2 + $0x48] sm:$0xff]
    %v2253 = vld [vmem:[#allocation2 + $0x50] sm:$0xff]
    %v2254 = vld [vmem:[#allocation2 + $0x58] sm:$0xff]
    %v2255 = vld [vmem:[#allocation2 + $0x60] sm:$0xff]
    %v2256 = vld [vmem:[#allocation2 + $0x68] sm:$0xff]
    %v2257 = vld [vmem:[#allocation2 + $0x70] sm:$0xff]
    %v2258 = vld [vmem:[#allocation2 + $0x78] sm:$0xff]
    %v2259 = vld [vmem:[#allocation2 + $0x80] sm:$0xff]
    %v2260 = vld [vmem:[#allocation2 + $0x88] sm:$0xff]
    %v2261 = vld [vmem:[#allocation2 + $0x90] sm:$0xff]
    %v2262 = vld [vmem:[#allocation2 + $0x98] sm:$0xff]
    %v2263 = vld [vmem:[#allocation2 + $0xa0] sm:$0xff]
    %v2264 = vld [vmem:[#allocation2 + $0xa8] sm:$0xff]
    %v2265 = vld [vmem:[#allocation2 + $0xb0] sm:$0xff]
    %v2266 = vld [vmem:[#allocation2 + $0xb8] sm:$0xff]
    %v2267 = vld [vmem:[#allocation2 + $0xc0] sm:$0xff]
    %v2268 = vld [vmem:[#allocation2 + $0xc8] sm:$0xff]
    %v2269 = vld [vmem:[#allocation2 + $0xd0] sm:$0xff]
    %v2270 = vld [vmem:[#allocation2 + $0xd8] sm:$0xff]
    %v2271 = vld [vmem:[#allocation2 + $0xe0] sm:$0xff]
    %v2272 = vld [vmem:[#allocation2 + $0xe8] sm:$0xff]
    %v2273 = vld [vmem:[#allocation2 + $0xf0] sm:$0xff]
    %v2274 = vld [vmem:[#allocation2 + $0xf8] sm:$0xff]
    %s2275 = scalar_lea.vmem [#allocation9], 128
    %v2276 = vld [vmem:[%s2275] sm:$0xf]
    %v2277 = vld [vmem:[%s2275 + $0x4] sm:$0xf]
    %v2278 = vld [vmem:[%s2275 + $0x8] sm:$0xf]
    %v2279 = vld [vmem:[%s2275 + $0xc] sm:$0xf]
    %v2280 = vld [vmem:[%s2275 + $0x10] sm:$0xf]
    %v2281 = vld [vmem:[%s2275 + $0x14] sm:$0xf]
    %v2282 = vld [vmem:[%s2275 + $0x18] sm:$0xf]
    %v2283 = vld [vmem:[%s2275 + $0x1c] sm:$0xf]
    %v2284 = vld [vmem:[%s2275 + $0x20] sm:$0xf]
    %v2285 = vld [vmem:[%s2275 + $0x24] sm:$0xf]
    %v2286 = vld [vmem:[%s2275 + $0x28] sm:$0xf]
    %v2287 = vld [vmem:[%s2275 + $0x2c] sm:$0xf]
    %v2288 = vld [vmem:[%s2275 + $0x30] sm:$0xf]
    %v2289 = vld [vmem:[%s2275 + $0x34] sm:$0xf]
    %v2290 = vld [vmem:[%s2275 + $0x38] sm:$0xf]
    %v2291 = vld [vmem:[%s2275 + $0x3c] sm:$0xf]
    %v2308 = vunpack.c.l.b16 %v2276
    %v2309 = vunpack.c.l.b16 %v2277
    %v2310 = vunpack.c.l.b16 %v2278
    %v2311 = vunpack.c.l.b16 %v2279
    %v2312 = vunpack.c.l.b16 %v2280
    %v2313 = vunpack.c.l.b16 %v2281
    %v2314 = vunpack.c.l.b16 %v2282
    %v2315 = vunpack.c.l.b16 %v2283
    %v2316 = vunpack.c.l.b16 %v2284
    %v2317 = vunpack.c.l.b16 %v2285
    %v2318 = vunpack.c.l.b16 %v2286
    %v2319 = vunpack.c.l.b16 %v2287
    %v2320 = vunpack.c.l.b16 %v2288
    %v2321 = vunpack.c.l.b16 %v2289
    %v2322 = vunpack.c.l.b16 %v2290
    %v2323 = vunpack.c.l.b16 %v2291
    %v2324 = vpack.c.b16 %v2309, %v2308
    %v2325 = vpack.c.b16 %v2311, %v2310
    %v2326 = vpack.c.b16 %v2313, %v2312
    %v2327 = vpack.c.b16 %v2315, %v2314
    %v2328 = vpack.c.b16 %v2317, %v2316
    %v2329 = vpack.c.b16 %v2319, %v2318
    %v2330 = vpack.c.b16 %v2321, %v2320
    %v2331 = vpack.c.b16 %v2323, %v2322
    %2340 = vmatprep.subr.bf16.mxu0 0
    %2341 = vmatpush1.bf16.msra.mxu0 %v2324
    %2342 = vmatprep.subr.bf16.mxu0 0
    %2343 = vmatpush1.bf16.msra.mxu0 %v2325
    %2344 = vmatprep.subr.bf16.mxu0 0
    %2345 = vmatpush1.bf16.msra.mxu0 %v2326
    %2346 = vmatprep.subr.bf16.mxu0 0
    %2347 = vmatpush1.bf16.msra.mxu0 %v2327
    %2348 = vmatprep.subr.bf16.mxu0 0
    %2349 = vmatpush1.bf16.msra.mxu0 %v2328
    %2350 = vmatprep.subr.bf16.mxu0 0
    %2351 = vmatpush1.bf16.msra.mxu0 %v2329
    %2352 = vmatprep.subr.bf16.mxu0 0
    %2353 = vmatpush1.bf16.msra.mxu0 %v2330
    %2354 = vmatprep.subr.bf16.mxu0 0
    %2355 = vmatpush1.bf16.msra.mxu0 %v2331
    %2356 = vmatprep.subr.bf16.mxu0 0
    %2357 = vmatpush1.bf16.msra.mxu0 0
    %2358 = vmatprep.subr.bf16.mxu0 0
    %2359 = vmatpush1.bf16.msra.mxu0 0
    %2360 = vmatprep.subr.bf16.mxu0 0
    %2361 = vmatpush1.bf16.msra.mxu0 0
    %2362 = vmatprep.subr.bf16.mxu0 0
    %2363 = vmatpush1.bf16.msra.mxu0 0
    %2364 = vmatprep.subr.bf16.mxu0 0
    %2365 = vmatpush1.bf16.msra.mxu0 0
    %2366 = vmatprep.subr.bf16.mxu0 0
    %2367 = vmatpush1.bf16.msra.mxu0 0
    %2368 = vmatprep.subr.bf16.mxu0 0
    %2369 = vmatpush1.bf16.msra.mxu0 0
    %2370 = vmatprep.subr.bf16.mxu0 0
    %2371 = vmatpush1.bf16.msra.mxu0 0
    %2372 = vmatprep.mubr.bf16.mxu0 0
    %2373 = vmatmul.mubr.bf16.gmra.mrb[0].mxu0 %v2245
    %v2374 = vpop.f32.mrb[0].mxu0
    %v2375 = vadd.f32 0.0, %v2374
    %v2376 = vpop.f32.mrb[0].mxu0
    %v2377 = vpop.f32.mrb[0].mxu0
    %v2378 = vadd.f32 0.0, %v2377
    %v2379 = vpop.f32.mrb[0].mxu0
    %2380 = vmatprep.mubr.bf16.mxu0 0
    %2381 = vmatmul.mubr.bf16.gmra.mrb[0].mxu0 %v2246
    %v2382 = vpop.f32.mrb[0].mxu0
    %v2383 = vadd.f32 0.0, %v2382
    %v2384 = vpop.f32.mrb[0].mxu0
    %v2385 = vpop.f32.mrb[0].mxu0
    %v2386 = vadd.f32 0.0, %v2385
    %v2387 = vpop.f32.mrb[0].mxu0
    %2388 = vmatprep.mubr.bf16.mxu0 0
    %2389 = vmatmul.mubr.bf16.gmra.mrb[0].mxu0 %v2247
    %v2390 = vpop.f32.mrb[0].mxu0
    %v2391 = vadd.f32 0.0, %v2390
    %v2392 = vpop.f32.mrb[0].mxu0
    %v2393 = vpop.f32.mrb[0].mxu0
    %v2394 = vadd.f32 0.0, %v2393
    %v2395 = vpop.f32.mrb[0].mxu0
    %2396 = vmatprep.mubr.bf16.mxu0 0
    %2397 = vmatmul.mubr.bf16.gmra.mrb[0].mxu0 %v2248
    %v2398 = vpop.f32.mrb[0].mxu0
    %v2399 = vadd.f32 0.0, %v2398
    %v2400 = vpop.f32.mrb[0].mxu0
    %v2401 = vpop.f32.mrb[0].mxu0
    %v2402 = vadd.f32 0.0, %v2401
    %v2403 = vpop.f32.mrb[0].mxu0
    %2404 = vmatprep.mubr.bf16.mxu0 0
    %2405 = vmatmul.mubr.bf16.gmra.mrb[0].mxu0 %v2249
    %v2406 = vpop.f32.mrb[0].mxu0
    %v2407 = vadd.f32 0.0, %v2406
    %v2408 = vpop.f32.mrb[0].mxu0
    %v2409 = vpop.f32.mrb[0].mxu0
    %v2410 = vadd.f32 0.0, %v2409
    %v2411 = vpop.f32.mrb[0].mxu0
    %2412 = vmatprep.mubr.bf16.mxu0 0
    %2413 = vmatmul.mubr.bf16.gmra.mrb[0].mxu0 %v2250
    %v2414 = vpop.f32.mrb[0].mxu0
    %v2415 = vadd.f32 0.0, %v2414
    %v2416 = vpop.f32.mrb[0].mxu0
    %v2417 = vpop.f32.mrb[0].mxu0
    %v2418 = vadd.f32 0.0, %v2417
    %v2419 = vpop.f32.mrb[0].mxu0
    %2420 = vmatprep.mubr.bf16.mxu0 0
    %2421 = vmatmul.mubr.bf16.gmra.mrb[0].mxu0 %v2251
    %v2422 = vpop.f32.mrb[0].mxu0
    %v2423 = vadd.f32 0.0, %v2422
    %v2424 = vpop.f32.mrb[0].mxu0
    %v2425 = vpop.f32.mrb[0].mxu0
    %v2426 = vadd.f32 0.0, %v2425
    %v2427 = vpop.f32.mrb[0].mxu0
    %2428 = vmatprep.mubr.bf16.mxu0 0
    %2429 = vmatmul.mubr.bf16.gmra.mrb[0].mxu0 %v2252
    %v2430 = vpop.f32.mrb[0].mxu0
    %v2431 = vadd.f32 0.0, %v2430
    %v2432 = vpop.f32.mrb[0].mxu0
    %v2433 = vpop.f32.mrb[0].mxu0
    %v2434 = vadd.f32 0.0, %v2433
    %v2435 = vpop.f32.mrb[0].mxu0
    %2436 = vmatprep.mubr.bf16.mxu0 0
    %2437 = vmatmul.mubr.bf16.gmra.mrb[0].mxu0 %v2253
    %v2438 = vpop.f32.mrb[0].mxu0
    %v2439 = vadd.f32 0.0, %v2438
    %v2440 = vpop.f32.mrb[0].mxu0
    %v2441 = vpop.f32.mrb[0].mxu0
    %v2442 = vadd.f32 0.0, %v2441
    %v2443 = vpop.f32.mrb[0].mxu0
    %2444 = vmatprep.mubr.bf16.mxu0 0
    %2445 = vmatmul.mubr.bf16.gmra.mrb[0].mxu0 %v2254
    %v2446 = vpop.f32.mrb[0].mxu0
    %v2447 = vadd.f32 0.0, %v2446
    %v2448 = vpop.f32.mrb[0].mxu0
    %v2449 = vpop.f32.mrb[0].mxu0
    %v2450 = vadd.f32 0.0, %v2449
    %v2451 = vpop.f32.mrb[0].mxu0
    %2452 = vmatprep.mubr.bf16.mxu0 0
    %2453 = vmatmul.mubr.bf16.gmra.mrb[0].mxu0 %v2255
    %v2454 = vpop.f32.mrb[0].mxu0
    %v2455 = vadd.f32 0.0, %v2454
    %v2456 = vpop.f32.mrb[0].mxu0
    %v2457 = vpop.f32.mrb[0].mxu0
    %v2458 = vadd.f32 0.0, %v2457
    %v2459 = vpop.f32.mrb[0].mxu0
    %2460 = vmatprep.mubr.bf16.mxu0 0
    %2461 = vmatmul.mubr.bf16.gmra.mrb[0].mxu0 %v2256
    %v2462 = vpop.f32.mrb[0].mxu0
    %v2463 = vadd.f32 0.0, %v2462
    %v2464 = vpop.f32.mrb[0].mxu0
    %v2465 = vpop.f32.mrb[0].mxu0
    %v2466 = vadd.f32 0.0, %v2465
    %v2467 = vpop.f32.mrb[0].mxu0
    %2468 = vmatprep.mubr.bf16.mxu0 0
    %2469 = vmatmul.mubr.bf16.gmra.mrb[0].mxu0 %v2257
    %v2470 = vpop.f32.mrb[0].mxu0
    %v2471 = vadd.f32 0.0, %v2470
    %v2472 = vpop.f32.mrb[0].mxu0
    %v2473 = vpop.f32.mrb[0].mxu0
    %v2474 = vadd.f32 0.0, %v2473
    %v2475 = vpop.f32.mrb[0].mxu0
    %2476 = vmatprep.mubr.bf16.mxu0 0
    %2477 = vmatmul.mubr.bf16.gmra.mrb[0].mxu0 %v2258
    %v2478 = vpop.f32.mrb[0].mxu0
    %v2479 = vadd.f32 0.0, %v2478
    %v2480 = vpop.f32.mrb[0].mxu0
    %v2481 = vpop.f32.mrb[0].mxu0
    %v2482 = vadd.f32 0.0, %v2481
    %v2483 = vpop.f32.mrb[0].mxu0
    %2484 = vmatprep.mubr.bf16.mxu0 0
    %2485 = vmatmul.mubr.bf16.gmra.mrb[0].mxu0 %v2259
    %v2486 = vpop.f32.mrb[0].mxu0
    %v2487 = vadd.f32 0.0, %v2486
    %v2488 = vpop.f32.mrb[0].mxu0
    %v2489 = vpop.f32.mrb[0].mxu0
    %v2490 = vadd.f32 0.0, %v2489
    %v2491 = vpop.f32.mrb[0].mxu0
    %2492 = vmatprep.mubr.bf16.mxu0 0
    %2493 = vmatmul.mubr.bf16.gmra.mrb[0].mxu0 %v2260
    %v2494 = vpop.f32.mrb[0].mxu0
    %v2495 = vadd.f32 0.0, %v2494
    %v2496 = vpop.f32.mrb[0].mxu0
    %v2497 = vpop.f32.mrb[0].mxu0
    %v2498 = vadd.f32 0.0, %v2497
    %v2499 = vpop.f32.mrb[0].mxu0
    %2500 = vmatprep.mubr.bf16.mxu0 0
    %2501 = vmatmul.mubr.bf16.gmra.mrb[0].mxu0 %v2261
    %v2502 = vpop.f32.mrb[0].mxu0
    %v2503 = vadd.f32 0.0, %v2502
    %v2504 = vpop.f32.mrb[0].mxu0
    %v2505 = vpop.f32.mrb[0].mxu0
    %v2506 = vadd.f32 0.0, %v2505
    %v2507 = vpop.f32.mrb[0].mxu0
    %2508 = vmatprep.mubr.bf16.mxu0 0
    %2509 = vmatmul.mubr.bf16.gmra.mrb[0].mxu0 %v2262
    %v2510 = vpop.f32.mrb[0].mxu0
    %v2511 = vadd.f32 0.0, %v2510
    %v2512 = vpop.f32.mrb[0].mxu0
    %v2513 = vpop.f32.mrb[0].mxu0
    %v2514 = vadd.f32 0.0, %v2513
    %v2515 = vpop.f32.mrb[0].mxu0
    %2516 = vmatprep.mubr.bf16.mxu0 0
    %2517 = vmatmul.mubr.bf16.gmra.mrb[0].mxu0 %v2263
    %v2518 = vpop.f32.mrb[0].mxu0
    %v2519 = vadd.f32 0.0, %v2518
    %v2520 = vpop.f32.mrb[0].mxu0
    %v2521 = vpop.f32.mrb[0].mxu0
    %v2522 = vadd.f32 0.0, %v2521
    %v2523 = vpop.f32.mrb[0].mxu0
    %2524 = vmatprep.mubr.bf16.mxu0 0
    %2525 = vmatmul.mubr.bf16.gmra.mrb[0].mxu0 %v2264
    %v2526 = vpop.f32.mrb[0].mxu0
    %v2527 = vadd.f32 0.0, %v2526
    %v2528 = vpop.f32.mrb[0].mxu0
    %v2529 = vpop.f32.mrb[0].mxu0
    %v2530 = vadd.f32 0.0, %v2529
    %v2531 = vpop.f32.mrb[0].mxu0
    %2532 = vmatprep.mubr.bf16.mxu0 0
    %2533 = vmatmul.mubr.bf16.gmra.mrb[0].mxu0 %v2265
    %v2534 = vpop.f32.mrb[0].mxu0
    %v2535 = vadd.f32 0.0, %v2534
    %v2536 = vpop.f32.mrb[0].mxu0
    %v2537 = vpop.f32.mrb[0].mxu0
    %v2538 = vadd.f32 0.0, %v2537
    %v2539 = vpop.f32.mrb[0].mxu0
    %2540 = vmatprep.mubr.bf16.mxu0 0
    %2541 = vmatmul.mubr.bf16.gmra.mrb[0].mxu0 %v2266
    %v2542 = vpop.f32.mrb[0].mxu0
    %v2543 = vadd.f32 0.0, %v2542
    %v2544 = vpop.f32.mrb[0].mxu0
    %v2545 = vpop.f32.mrb[0].mxu0
    %v2546 = vadd.f32 0.0, %v2545
    %v2547 = vpop.f32.mrb[0].mxu0
    %2548 = vmatprep.mubr.bf16.mxu0 0
    %2549 = vmatmul.mubr.bf16.gmra.mrb[0].mxu0 %v2267
    %v2550 = vpop.f32.mrb[0].mxu0
    %v2551 = vadd.f32 0.0, %v2550
    %v2552 = vpop.f32.mrb[0].mxu0
    %v2553 = vpop.f32.mrb[0].mxu0
    %v2554 = vadd.f32 0.0, %v2553
    %v2555 = vpop.f32.mrb[0].mxu0
    %2556 = vmatprep.mubr.bf16.mxu0 0
    %2557 = vmatmul.mubr.bf16.gmra.mrb[0].mxu0 %v2268
    %v2558 = vpop.f32.mrb[0].mxu0
    %v2559 = vadd.f32 0.0, %v2558
    %v2560 = vpop.f32.mrb[0].mxu0
    %v2561 = vpop.f32.mrb[0].mxu0
    %v2562 = vadd.f32 0.0, %v2561
    %v2563 = vpop.f32.mrb[0].mxu0
    %2564 = vmatprep.mubr.bf16.mxu0 0
    %2565 = vmatmul.mubr.bf16.gmra.mrb[0].mxu0 %v2269
    %v2566 = vpop.f32.mrb[0].mxu0
    %v2567 = vadd.f32 0.0, %v2566
    %v2568 = vpop.f32.mrb[0].mxu0
    %v2569 = vpop.f32.mrb[0].mxu0
    %v2570 = vadd.f32 0.0, %v2569
    %v2571 = vpop.f32.mrb[0].mxu0
    %2572 = vmatprep.mubr.bf16.mxu0 0
    %2573 = vmatmul.mubr.bf16.gmra.mrb[0].mxu0 %v2270
    %v2574 = vpop.f32.mrb[0].mxu0
    %v2575 = vadd.f32 0.0, %v2574
    %v2576 = vpop.f32.mrb[0].mxu0
    %v2577 = vpop.f32.mrb[0].mxu0
    %v2578 = vadd.f32 0.0, %v2577
    %v2579 = vpop.f32.mrb[0].mxu0
    %2580 = vmatprep.mubr.bf16.mxu0 0
    %2581 = vmatmul.mubr.bf16.gmra.mrb[0].mxu0 %v2271
    %v2582 = vpop.f32.mrb[0].mxu0
    %v2583 = vadd.f32 0.0, %v2582
    %v2584 = vpop.f32.mrb[0].mxu0
    %v2585 = vpop.f32.mrb[0].mxu0
    %v2586 = vadd.f32 0.0, %v2585
    %v2587 = vpop.f32.mrb[0].mxu0
    %2588 = vmatprep.mubr.bf16.mxu0 0
    %2589 = vmatmul.mubr.bf16.gmra.mrb[0].mxu0 %v2272
    %v2590 = vpop.f32.mrb[0].mxu0
    %v2591 = vadd.f32 0.0, %v2590
    %v2592 = vpop.f32.mrb[0].mxu0
    %v2593 = vpop.f32.mrb[0].mxu0
    %v2594 = vadd.f32 0.0, %v2593
    %v2595 = vpop.f32.mrb[0].mxu0
    %2596 = vmatprep.mubr.bf16.mxu0 0
    %2597 = vmatmul.mubr.bf16.gmra.mrb[0].mxu0 %v2273
    %v2598 = vpop.f32.mrb[0].mxu0
    %v2599 = vadd.f32 0.0, %v2598
    %v2600 = vpop.f32.mrb[0].mxu0
    %v2601 = vpop.f32.mrb[0].mxu0
    %v2602 = vadd.f32 0.0, %v2601
    %v2603 = vpop.f32.mrb[0].mxu0
    %2604 = vmatprep.mubr.bf16.mxu0 0
    %2605 = vmatmul.mubr.bf16.gmra.mrb[0].mxu0 %v2274
    %v2606 = vpop.f32.mrb[0].mxu0
    %v2607 = vadd.f32 0.0, %v2606
    %v2608 = vpop.f32.mrb[0].mxu0
    %v2609 = vpop.f32.mrb[0].mxu0
    %v2610 = vadd.f32 0.0, %v2609
    %v2611 = vpop.f32.mrb[0].mxu0
    %2612 = vdwg.mxu0
    %v2613 = vadd.f32 %v2007, %v2375
    %v2614 = vadd.f32 %v2010, %v2378
    %v2615 = vadd.f32 %v2015, %v2383
    %v2616 = vadd.f32 %v2018, %v2386
    %v2617 = vadd.f32 %v2023, %v2391
    %v2618 = vadd.f32 %v2026, %v2394
    %v2619 = vadd.f32 %v2031, %v2399
    %v2620 = vadd.f32 %v2034, %v2402
    %v2621 = vadd.f32 %v2039, %v2407
    %v2622 = vadd.f32 %v2042, %v2410
    %v2623 = vadd.f32 %v2047, %v2415
    %v2624 = vadd.f32 %v2050, %v2418
    %v2625 = vadd.f32 %v2055, %v2423
    %v2626 = vadd.f32 %v2058, %v2426
    %v2627 = vadd.f32 %v2063, %v2431
    %v2628 = vadd.f32 %v2066, %v2434
    %v2629 = vadd.f32 %v2071, %v2439
    %v2630 = vadd.f32 %v2074, %v2442
    %v2631 = vadd.f32 %v2079, %v2447
    %v2632 = vadd.f32 %v2082, %v2450
    %v2633 = vadd.f32 %v2087, %v2455
    %v2634 = vadd.f32 %v2090, %v2458
    %v2635 = vadd.f32 %v2095, %v2463
    %v2636 = vadd.f32 %v2098, %v2466
    %v2637 = vadd.f32 %v2103, %v2471
    %v2638 = vadd.f32 %v2106, %v2474
    %v2639 = vadd.f32 %v2111, %v2479
    %v2640 = vadd.f32 %v2114, %v2482
    %v2641 = vadd.f32 %v2119, %v2487
    %v2642 = vadd.f32 %v2122, %v2490
    %v2643 = vadd.f32 %v2127, %v2495
    %v2644 = vadd.f32 %v2130, %v2498
    %v2645 = vadd.f32 %v2135, %v2503
    %v2646 = vadd.f32 %v2138, %v2506
    %v2647 = vadd.f32 %v2143, %v2511
    %v2648 = vadd.f32 %v2146, %v2514
    %v2649 = vadd.f32 %v2151, %v2519
    %v2650 = vadd.f32 %v2154, %v2522
    %v2651 = vadd.f32 %v2159, %v2527
    %v2652 = vadd.f32 %v2162, %v2530
    %v2653 = vadd.f32 %v2167, %v2535
    %v2654 = vadd.f32 %v2170, %v2538
    %v2655 = vadd.f32 %v2175, %v2543
    %v2656 = vadd.f32 %v2178, %v2546
    %v2657 = vadd.f32 %v2183, %v2551
    %v2658 = vadd.f32 %v2186, %v2554
    %v2659 = vadd.f32 %v2191, %v2559
    %v2660 = vadd.f32 %v2194, %v2562
    %v2661 = vadd.f32 %v2199, %v2567
    %v2662 = vadd.f32 %v2202, %v2570
    %v2663 = vadd.f32 %v2207, %v2575
    %v2664 = vadd.f32 %v2210, %v2578
    %v2665 = vadd.f32 %v2215, %v2583
    %v2666 = vadd.f32 %v2218, %v2586
    %v2667 = vadd.f32 %v2223, %v2591
    %v2668 = vadd.f32 %v2226, %v2594
    %v2669 = vadd.f32 %v2231, %v2599
    %v2670 = vadd.f32 %v2234, %v2602
    %v2671 = vadd.f32 %v2239, %v2607
    %v2672 = vadd.f32 %v2242, %v2610
    %v2673 = vld [vmem:[#allocation10] sm:$0x1]
    %v2675 = vlaneseq
    %v2676 = vshrl.u32 %v2675, 7
    %v2677 = vsub.s32 0, %v2676
    %v2678 = vrot.slane %v2673, %v2677
    %v2680 = vadd.f32 %v2613, %v2678
    %v2681 = vadd.f32 %v2614, %v2678
    %v2682 = vadd.f32 %v2615, %v2678
    %v2683 = vadd.f32 %v2616, %v2678
    %v2684 = vadd.f32 %v2617, %v2678
    %v2685 = vadd.f32 %v2618, %v2678
    %v2686 = vadd.f32 %v2619, %v2678
    %v2687 = vadd.f32 %v2620, %v2678
    %v2688 = vadd.f32 %v2621, %v2678
    %v2689 = vadd.f32 %v2622, %v2678
    %v2690 = vadd.f32 %v2623, %v2678
    %v2691 = vadd.f32 %v2624, %v2678
    %v2692 = vadd.f32 %v2625, %v2678
    %v2693 = vadd.f32 %v2626, %v2678
    %v2694 = vadd.f32 %v2627, %v2678
    %v2695 = vadd.f32 %v2628, %v2678
    %v2696 = vadd.f32 %v2629, %v2678
    %v2697 = vadd.f32 %v2630, %v2678
    %v2698 = vadd.f32 %v2631, %v2678
    %v2699 = vadd.f32 %v2632, %v2678
    %v2700 = vadd.f32 %v2633, %v2678
    %v2701 = vadd.f32 %v2634, %v2678
    %v2702 = vadd.f32 %v2635, %v2678
    %v2703 = vadd.f32 %v2636, %v2678
    %v2704 = vadd.f32 %v2637, %v2678
    %v2705 = vadd.f32 %v2638, %v2678
    %v2706 = vadd.f32 %v2639, %v2678
    %v2707 = vadd.f32 %v2640, %v2678
    %v2708 = vadd.f32 %v2641, %v2678
    %v2709 = vadd.f32 %v2642, %v2678
    %v2710 = vadd.f32 %v2643, %v2678
    %v2711 = vadd.f32 %v2644, %v2678
    %v2712 = vadd.f32 %v2645, %v2678
    %v2713 = vadd.f32 %v2646, %v2678
    %v2714 = vadd.f32 %v2647, %v2678
    %v2715 = vadd.f32 %v2648, %v2678
    %v2716 = vadd.f32 %v2649, %v2678
    %v2717 = vadd.f32 %v2650, %v2678
    %v2718 = vadd.f32 %v2651, %v2678
    %v2719 = vadd.f32 %v2652, %v2678
    %v2720 = vadd.f32 %v2653, %v2678
    %v2721 = vadd.f32 %v2654, %v2678
    %v2722 = vadd.f32 %v2655, %v2678
    %v2723 = vadd.f32 %v2656, %v2678
    %v2724 = vadd.f32 %v2657, %v2678
    %v2725 = vadd.f32 %v2658, %v2678
    %v2726 = vadd.f32 %v2659, %v2678
    %v2727 = vadd.f32 %v2660, %v2678
    %v2728 = vadd.f32 %v2661, %v2678
    %v2729 = vadd.f32 %v2662, %v2678
    %v2730 = vadd.f32 %v2663, %v2678
    %v2731 = vadd.f32 %v2664, %v2678
    %v2732 = vadd.f32 %v2665, %v2678
    %v2733 = vadd.f32 %v2666, %v2678
    %v2734 = vadd.f32 %v2667, %v2678
    %v2735 = vadd.f32 %v2668, %v2678
    %v2736 = vadd.f32 %v2669, %v2678
    %v2737 = vadd.f32 %v2670, %v2678
    %v2738 = vadd.f32 %v2671, %v2678
    %v2739 = vadd.f32 %v2672, %v2678
    %v2740 = vmax.f32 %v2680, 0.0
    %v2741 = vmax.f32 %v2681, 0.0
    %v2742 = vmax.f32 %v2682, 0.0
    %v2743 = vmax.f32 %v2683, 0.0
    %v2744 = vmax.f32 %v2684, 0.0
    %v2745 = vmax.f32 %v2685, 0.0
    %v2746 = vmax.f32 %v2686, 0.0
    %v2747 = vmax.f32 %v2687, 0.0
    %v2748 = vmax.f32 %v2688, 0.0
    %v2749 = vmax.f32 %v2689, 0.0
    %v2750 = vmax.f32 %v2690, 0.0
    %v2751 = vmax.f32 %v2691, 0.0
    %v2752 = vmax.f32 %v2692, 0.0
    %v2753 = vmax.f32 %v2693, 0.0
    %v2754 = vmax.f32 %v2694, 0.0
    %v2755 = vmax.f32 %v2695, 0.0
    %v2756 = vmax.f32 %v2696, 0.0
    %v2757 = vmax.f32 %v2697, 0.0
    %v2758 = vmax.f32 %v2698, 0.0
    %v2759 = vmax.f32 %v2699, 0.0
    %v2760 = vmax.f32 %v2700, 0.0
    %v2761 = vmax.f32 %v2701, 0.0
    %v2762 = vmax.f32 %v2702, 0.0
    %v2763 = vmax.f32 %v2703, 0.0
    %v2764 = vmax.f32 %v2704, 0.0
    %v2765 = vmax.f32 %v2705, 0.0
    %v2766 = vmax.f32 %v2706, 0.0
    %v2767 = vmax.f32 %v2707, 0.0
    %v2768 = vmax.f32 %v2708, 0.0
    %v2769 = vmax.f32 %v2709, 0.0
    %v2770 = vmax.f32 %v2710, 0.0
    %v2771 = vmax.f32 %v2711, 0.0
    %v2772 = vmax.f32 %v2712, 0.0
    %v2773 = vmax.f32 %v2713, 0.0
    %v2774 = vmax.f32 %v2714, 0.0
    %v2775 = vmax.f32 %v2715, 0.0
    %v2776 = vmax.f32 %v2716, 0.0
    %v2777 = vmax.f32 %v2717, 0.0
    %v2778 = vmax.f32 %v2718, 0.0
    %v2779 = vmax.f32 %v2719, 0.0
    %v2780 = vmax.f32 %v2720, 0.0
    %v2781 = vmax.f32 %v2721, 0.0
    %v2782 = vmax.f32 %v2722, 0.0
    %v2783 = vmax.f32 %v2723, 0.0
    %v2784 = vmax.f32 %v2724, 0.0
    %v2785 = vmax.f32 %v2725, 0.0
    %v2786 = vmax.f32 %v2726, 0.0
    %v2787 = vmax.f32 %v2727, 0.0
    %v2788 = vmax.f32 %v2728, 0.0
    %v2789 = vmax.f32 %v2729, 0.0
    %v2790 = vmax.f32 %v2730, 0.0
    %v2791 = vmax.f32 %v2731, 0.0
    %v2792 = vmax.f32 %v2732, 0.0
    %v2793 = vmax.f32 %v2733, 0.0
    %v2794 = vmax.f32 %v2734, 0.0
    %v2795 = vmax.f32 %v2735, 0.0
    %v2796 = vmax.f32 %v2736, 0.0
    %v2797 = vmax.f32 %v2737, 0.0
    %v2798 = vmax.f32 %v2738, 0.0
    %v2799 = vmax.f32 %v2739, 0.0
    %v2800 = vpack.c.bf16 %v2741, %v2740
    %v2801 = vpack.c.bf16 %v2743, %v2742
    %v2802 = vpack.c.bf16 %v2745, %v2744
    %v2803 = vpack.c.bf16 %v2747, %v2746
    %v2804 = vpack.c.bf16 %v2749, %v2748
    %v2805 = vpack.c.bf16 %v2751, %v2750
    %v2806 = vpack.c.bf16 %v2753, %v2752
    %v2807 = vpack.c.bf16 %v2755, %v2754
    %v2808 = vpack.c.bf16 %v2757, %v2756
    %v2809 = vpack.c.bf16 %v2759, %v2758
    %v2810 = vpack.c.bf16 %v2761, %v2760
    %v2811 = vpack.c.bf16 %v2763, %v2762
    %v2812 = vpack.c.bf16 %v2765, %v2764
    %v2813 = vpack.c.bf16 %v2767, %v2766
    %v2814 = vpack.c.bf16 %v2769, %v2768
    %v2815 = vpack.c.bf16 %v2771, %v2770
    %v2816 = vpack.c.bf16 %v2773, %v2772
    %v2817 = vpack.c.bf16 %v2775, %v2774
    %v2818 = vpack.c.bf16 %v2777, %v2776
    %v2819 = vpack.c.bf16 %v2779, %v2778
    %v2820 = vpack.c.bf16 %v2781, %v2780
    %v2821 = vpack.c.bf16 %v2783, %v2782
    %v2822 = vpack.c.bf16 %v2785, %v2784
    %v2823 = vpack.c.bf16 %v2787, %v2786
    %v2824 = vpack.c.bf16 %v2789, %v2788
    %v2825 = vpack.c.bf16 %v2791, %v2790
    %v2826 = vpack.c.bf16 %v2793, %v2792
    %v2827 = vpack.c.bf16 %v2795, %v2794
    %v2828 = vpack.c.bf16 %v2797, %v2796
    %v2829 = vpack.c.bf16 %v2799, %v2798
    %2830 = vst [vmem:[#allocation3] sm:$0xff] %v2800
    %2831 = vst [vmem:[#allocation3 + $0x8] sm:$0xff] %v2801
    %2832 = vst [vmem:[#allocation3 + $0x10] sm:$0xff] %v2802
    %2833 = vst [vmem:[#allocation3 + $0x18] sm:$0xff] %v2803
    %2834 = vst [vmem:[#allocation3 + $0x20] sm:$0xff] %v2804
    %2835 = vst [vmem:[#allocation3 + $0x28] sm:$0xff] %v2805
    %2836 = vst [vmem:[#allocation3 + $0x30] sm:$0xff] %v2806
    %2837 = vst [vmem:[#allocation3 + $0x38] sm:$0xff] %v2807
    %2838 = vst [vmem:[#allocation3 + $0x40] sm:$0xff] %v2808
    %2839 = vst [vmem:[#allocation3 + $0x48] sm:$0xff] %v2809
    %2840 = vst [vmem:[#allocation3 + $0x50] sm:$0xff] %v2810
    %2841 = vst [vmem:[#allocation3 + $0x58] sm:$0xff] %v2811
    %2842 = vst [vmem:[#allocation3 + $0x60] sm:$0xff] %v2812
    %2843 = vst [vmem:[#allocation3 + $0x68] sm:$0xff] %v2813
    %2844 = vst [vmem:[#allocation3 + $0x70] sm:$0xff] %v2814
    %2845 = vst [vmem:[#allocation3 + $0x78] sm:$0xff] %v2815
    %2846 = vst [vmem:[#allocation3 + $0x80] sm:$0xff] %v2816
    %2847 = vst [vmem:[#allocation3 + $0x88] sm:$0xff] %v2817
    %2848 = vst [vmem:[#allocation3 + $0x90] sm:$0xff] %v2818
    %2849 = vst [vmem:[#allocation3 + $0x98] sm:$0xff] %v2819
    %2850 = vst [vmem:[#allocation3 + $0xa0] sm:$0xff] %v2820
    %2851 = vst [vmem:[#allocation3 + $0xa8] sm:$0xff] %v2821
    %2852 = vst [vmem:[#allocation3 + $0xb0] sm:$0xff] %v2822
    %2853 = vst [vmem:[#allocation3 + $0xb8] sm:$0xff] %v2823
    %2854 = vst [vmem:[#allocation3 + $0xc0] sm:$0xff] %v2824
    %2855 = vst [vmem:[#allocation3 + $0xc8] sm:$0xff] %v2825
    %2856 = vst [vmem:[#allocation3 + $0xd0] sm:$0xff] %v2826
    %2857 = vst [vmem:[#allocation3 + $0xd8] sm:$0xff] %v2827
    %2858 = vst [vmem:[#allocation3 + $0xe0] sm:$0xff] %v2828
    %2859 = vst [vmem:[#allocation3 + $0xe8] sm:$0xff] %v2829
    %v2860 = vld [vmem:[#allocation3] sm:$0xff]
    %v2861 = vld [vmem:[#allocation12] sm:$0xff]
    %v2862 = vld [vmem:[#allocation12 + $0x8] sm:$0xff]
    %v2863 = vld [vmem:[#allocation12 + $0x10] sm:$0xff]
    %v2864 = vld [vmem:[#allocation12 + $0x18] sm:$0xff]
    %v2865 = vld [vmem:[#allocation12 + $0x20] sm:$0xff]
    %v2866 = vld [vmem:[#allocation12 + $0x28] sm:$0xff]
    %v2867 = vld [vmem:[#allocation12 + $0x30] sm:$0xff]
    %v2868 = vld [vmem:[#allocation12 + $0x38] sm:$0xff]
    %v2869 = vld [vmem:[#allocation12 + $0x40] sm:$0xff]
    %v2870 = vld [vmem:[#allocation12 + $0x48] sm:$0xff]
    %v2871 = vld [vmem:[#allocation12 + $0x50] sm:$0xff]
    %v2872 = vld [vmem:[#allocation12 + $0x58] sm:$0xff]
    %v2873 = vld [vmem:[#allocation12 + $0x60] sm:$0xff]
    %v2874 = vld [vmem:[#allocation12 + $0x68] sm:$0xff]
    %v2875 = vld [vmem:[#allocation12 + $0x70] sm:$0xff]
    %v2876 = vld [vmem:[#allocation12 + $0x78] sm:$0xff]
    %v2877 = vld [vmem:[#allocation3 + $0x8] sm:$0xff]
    %s2878 = scalar_lea.vmem [#allocation12], 128
    %v2879 = vld [vmem:[%s2878] sm:$0xff]
    %v2880 = vld [vmem:[%s2878 + $0x8] sm:$0xff]
    %v2881 = vld [vmem:[%s2878 + $0x10] sm:$0xff]
    %v2882 = vld [vmem:[%s2878 + $0x18] sm:$0xff]
    %v2883 = vld [vmem:[%s2878 + $0x20] sm:$0xff]
    %v2884 = vld [vmem:[%s2878 + $0x28] sm:$0xff]
    %v2885 = vld [vmem:[%s2878 + $0x30] sm:$0xff]
    %v2886 = vld [vmem:[%s2878 + $0x38] sm:$0xff]
    %v2887 = vld [vmem:[%s2878 + $0x40] sm:$0xff]
    %v2888 = vld [vmem:[%s2878 + $0x48] sm:$0xff]
    %v2889 = vld [vmem:[%s2878 + $0x50] sm:$0xff]
    %v2890 = vld [vmem:[%s2878 + $0x58] sm:$0xff]
    %v2891 = vld [vmem:[%s2878 + $0x60] sm:$0xff]
    %v2892 = vld [vmem:[%s2878 + $0x68] sm:$0xff]
    %v2893 = vld [vmem:[%s2878 + $0x70] sm:$0xff]
    %v2894 = vld [vmem:[%s2878 + $0x78] sm:$0xff]
    %v2895 = vld [vmem:[#allocation3 + $0x10] sm:$0xff]
    %s2896 = scalar_lea.vmem [#allocation12], 256
    %v2897 = vld [vmem:[%s2896] sm:$0xff]
    %v2898 = vld [vmem:[%s2896 + $0x8] sm:$0xff]
    %v2899 = vld [vmem:[%s2896 + $0x10] sm:$0xff]
    %v2900 = vld [vmem:[%s2896 + $0x18] sm:$0xff]
    %v2901 = vld [vmem:[%s2896 + $0x20] sm:$0xff]
    %v2902 = vld [vmem:[%s2896 + $0x28] sm:$0xff]
    %v2903 = vld [vmem:[%s2896 + $0x30] sm:$0xff]
    %v2904 = vld [vmem:[%s2896 + $0x38] sm:$0xff]
    %v2905 = vld [vmem:[%s2896 + $0x40] sm:$0xff]
    %v2906 = vld [vmem:[%s2896 + $0x48] sm:$0xff]
    %v2907 = vld [vmem:[%s2896 + $0x50] sm:$0xff]
    %v2908 = vld [vmem:[%s2896 + $0x58] sm:$0xff]
    %v2909 = vld [vmem:[%s2896 + $0x60] sm:$0xff]
    %v2910 = vld [vmem:[%s2896 + $0x68] sm:$0xff]
    %v2911 = vld [vmem:[%s2896 + $0x70] sm:$0xff]
    %v2912 = vld [vmem:[%s2896 + $0x78] sm:$0xff]
    %v2929 = vunpack.c.l.b16 %v2897
    %v2930 = vunpack.c.h.b16 %v2897
    %v2931 = vunpack.c.l.b16 %v2898
    %v2932 = vunpack.c.h.b16 %v2898
    %v2933 = vunpack.c.l.b16 %v2899
    %v2934 = vunpack.c.h.b16 %v2899
    %v2935 = vunpack.c.l.b16 %v2900
    %v2936 = vunpack.c.h.b16 %v2900
    %v2937 = vunpack.c.l.b16 %v2901
    %v2938 = vunpack.c.h.b16 %v2901
    %v2939 = vunpack.c.l.b16 %v2902
    %v2940 = vunpack.c.h.b16 %v2902
    %v2941 = vunpack.c.l.b16 %v2903
    %v2942 = vunpack.c.h.b16 %v2903
    %v2943 = vunpack.c.l.b16 %v2904
    %v2944 = vunpack.c.h.b16 %v2904
    %v2945 = vunpack.c.l.b16 %v2905
    %v2946 = vunpack.c.h.b16 %v2905
    %v2947 = vunpack.c.l.b16 %v2906
    %v2948 = vunpack.c.h.b16 %v2906
    %v2949 = vunpack.c.l.b16 %v2907
    %v2950 = vunpack.c.h.b16 %v2907
    %v2951 = vunpack.c.l.b16 %v2908
    %v2952 = vunpack.c.h.b16 %v2908
    %v2953 = vunpack.c.l.b16 %v2909
    %v2954 = vunpack.c.h.b16 %v2909
    %v2955 = vunpack.c.l.b16 %v2910
    %v2956 = vunpack.c.h.b16 %v2910
    %v2957 = vunpack.c.l.b16 %v2911
    %v2958 = vunpack.c.h.b16 %v2911
    %v2959 = vunpack.c.l.b16 %v2912
    %v2960 = vunpack.c.h.b16 %v2912
    %v2961 = vpack.c.b16 %v2931, %v2929
    %v2962 = vpack.c.b16 %v2932, %v2930
    %v2963 = vpack.c.b16 %v2935, %v2933
    %v2964 = vpack.c.b16 %v2936, %v2934
    %v2965 = vpack.c.b16 %v2939, %v2937
    %v2966 = vpack.c.b16 %v2940, %v2938
    %v2967 = vpack.c.b16 %v2943, %v2941
    %v2968 = vpack.c.b16 %v2944, %v2942
    %v2969 = vpack.c.b16 %v2947, %v2945
    %v2970 = vpack.c.b16 %v2948, %v2946
    %v2971 = vpack.c.b16 %v2951, %v2949
    %v2972 = vpack.c.b16 %v2952, %v2950
    %v2973 = vpack.c.b16 %v2955, %v2953
    %v2974 = vpack.c.b16 %v2956, %v2954
    %v2975 = vpack.c.b16 %v2959, %v2957
    %v2976 = vpack.c.b16 %v2960, %v2958
    %2993 = vmatprep.subr.bf16.mxu0 %v2962
    %2994 = vmatpush1.bf16.msra.mxu0 %v2961
    %2995 = vmatprep.subr.bf16.mxu0 %v2964
    %2996 = vmatpush1.bf16.msra.mxu0 %v2963
    %2997 = vmatprep.subr.bf16.mxu0 %v2966
    %2998 = vmatpush1.bf16.msra.mxu0 %v2965
    %2999 = vmatprep.subr.bf16.mxu0 %v2968
    %3000 = vmatpush1.bf16.msra.mxu0 %v2967
    %3001 = vmatprep.subr.bf16.mxu0 %v2970
    %3002 = vmatpush1.bf16.msra.mxu0 %v2969
    %3003 = vmatprep.subr.bf16.mxu0 %v2972
    %3004 = vmatpush1.bf16.msra.mxu0 %v2971
    %3005 = vmatprep.subr.bf16.mxu0 %v2974
    %3006 = vmatpush1.bf16.msra.mxu0 %v2973
    %3007 = vmatprep.subr.bf16.mxu0 %v2976
    %3008 = vmatpush1.bf16.msra.mxu0 %v2975
    %3009 = vmatprep.subr.bf16.mxu0 0
    %3010 = vmatpush1.bf16.msra.mxu0 0
    %3011 = vmatprep.subr.bf16.mxu0 0
    %3012 = vmatpush1.bf16.msra.mxu0 0
    %3013 = vmatprep.subr.bf16.mxu0 0
    %3014 = vmatpush1.bf16.msra.mxu0 0
    %3015 = vmatprep.subr.bf16.mxu0 0
    %3016 = vmatpush1.bf16.msra.mxu0 0
    %3017 = vmatprep.subr.bf16.mxu0 0
    %3018 = vmatpush1.bf16.msra.mxu0 0
    %3019 = vmatprep.subr.bf16.mxu0 0
    %3020 = vmatpush1.bf16.msra.mxu0 0
    %3021 = vmatprep.subr.bf16.mxu0 0
    %3022 = vmatpush1.bf16.msra.mxu0 0
    %3023 = vmatprep.subr.bf16.mxu0 0
    %3024 = vmatpush1.bf16.msra.mxu0 0
    %3025 = vmatprep.mubr.bf16.mxu0 0
    %3026 = vmatmul.mubr.bf16.gmra.mrb[0].mxu0 %v2895
    %v3027 = vpop.f32.mrb[0].mxu0
    %v3028 = vadd.f32 0.0, %v3027
    %v3029 = vpop.f32.mrb[0].mxu0
    %v3030 = vadd.f32 0.0, %v3029
    %v3031 = vpop.f32.mrb[0].mxu0
    %v3032 = vadd.f32 0.0, %v3031
    %v3033 = vpop.f32.mrb[0].mxu0
    %v3034 = vadd.f32 0.0, %v3033
    %3035 = vdwg.mxu0
    %v3052 = vunpack.c.l.b16 %v2861
    %v3053 = vunpack.c.h.b16 %v2861
    %v3054 = vunpack.c.l.b16 %v2862
    %v3055 = vunpack.c.h.b16 %v2862
    %v3056 = vunpack.c.l.b16 %v2863
    %v3057 = vunpack.c.h.b16 %v2863
    %v3058 = vunpack.c.l.b16 %v2864
    %v3059 = vunpack.c.h.b16 %v2864
    %v3060 = vunpack.c.l.b16 %v2865
    %v3061 = vunpack.c.h.b16 %v2865
    %v3062 = vunpack.c.l.b16 %v2866
    %v3063 = vunpack.c.h.b16 %v2866
    %v3064 = vunpack.c.l.b16 %v2867
    %v3065 = vunpack.c.h.b16 %v2867
    %v3066 = vunpack.c.l.b16 %v2868
    %v3067 = vunpack.c.h.b16 %v2868
    %v3068 = vunpack.c.l.b16 %v2869
    %v3069 = vunpack.c.h.b16 %v2869
    %v3070 = vunpack.c.l.b16 %v2870
    %v3071 = vunpack.c.h.b16 %v2870
    %v3072 = vunpack.c.l.b16 %v2871
    %v3073 = vunpack.c.h.b16 %v2871
    %v3074 = vunpack.c.l.b16 %v2872
    %v3075 = vunpack.c.h.b16 %v2872
    %v3076 = vunpack.c.l.b16 %v2873
    %v3077 = vunpack.c.h.b16 %v2873
    %v3078 = vunpack.c.l.b16 %v2874
    %v3079 = vunpack.c.h.b16 %v2874
    %v3080 = vunpack.c.l.b16 %v2875
    %v3081 = vunpack.c.h.b16 %v2875
    %v3082 = vunpack.c.l.b16 %v2876
    %v3083 = vunpack.c.h.b16 %v2876
    %v3084 = vpack.c.b16 %v3054, %v3052
    %v3085 = vpack.c.b16 %v3055, %v3053
    %v3086 = vpack.c.b16 %v3058, %v3056
    %v3087 = vpack.c.b16 %v3059, %v3057
    %v3088 = vpack.c.b16 %v3062, %v3060
    %v3089 = vpack.c.b16 %v3063, %v3061
    %v3090 = vpack.c.b16 %v3066, %v3064
    %v3091 = vpack.c.b16 %v3067, %v3065
    %v3092 = vpack.c.b16 %v3070, %v3068
    %v3093 = vpack.c.b16 %v3071, %v3069
    %v3094 = vpack.c.b16 %v3074, %v3072
    %v3095 = vpack.c.b16 %v3075, %v3073
    %v3096 = vpack.c.b16 %v3078, %v3076
    %v3097 = vpack.c.b16 %v3079, %v3077
    %v3098 = vpack.c.b16 %v3082, %v3080
    %v3099 = vpack.c.b16 %v3083, %v3081
    %3116 = vmatprep.subr.bf16.mxu0 %v3085
    %3117 = vmatpush1.bf16.msra.mxu0 %v3084
    %3118 = vmatprep.subr.bf16.mxu0 %v3087
    %3119 = vmatpush1.bf16.msra.mxu0 %v3086
    %3120 = vmatprep.subr.bf16.mxu0 %v3089
    %3121 = vmatpush1.bf16.msra.mxu0 %v3088
    %3122 = vmatprep.subr.bf16.mxu0 %v3091
    %3123 = vmatpush1.bf16.msra.mxu0 %v3090
    %3124 = vmatprep.subr.bf16.mxu0 %v3093
    %3125 = vmatpush1.bf16.msra.mxu0 %v3092
    %3126 = vmatprep.subr.bf16.mxu0 %v3095
    %3127 = vmatpush1.bf16.msra.mxu0 %v3094
    %3128 = vmatprep.subr.bf16.mxu0 %v3097
    %3129 = vmatpush1.bf16.msra.mxu0 %v3096
    %3130 = vmatprep.subr.bf16.mxu0 %v3099
    %3131 = vmatpush1.bf16.msra.mxu0 %v3098
    %3132 = vmatprep.subr.bf16.mxu0 0
    %3133 = vmatpush1.bf16.msra.mxu0 0
    %3134 = vmatprep.subr.bf16.mxu0 0
    %3135 = vmatpush1.bf16.msra.mxu0 0
    %3136 = vmatprep.subr.bf16.mxu0 0
    %3137 = vmatpush1.bf16.msra.mxu0 0
    %3138 = vmatprep.subr.bf16.mxu0 0
    %3139 = vmatpush1.bf16.msra.mxu0 0
    %3140 = vmatprep.subr.bf16.mxu0 0
    %3141 = vmatpush1.bf16.msra.mxu0 0
    %3142 = vmatprep.subr.bf16.mxu0 0
    %3143 = vmatpush1.bf16.msra.mxu0 0
    %3144 = vmatprep.subr.bf16.mxu0 0
    %3145 = vmatpush1.bf16.msra.mxu0 0
    %3146 = vmatprep.subr.bf16.mxu0 0
    %3147 = vmatpush1.bf16.msra.mxu0 0
    %3148 = vmatprep.mubr.bf16.mxu0 0
    %3149 = vmatmul.mubr.bf16.gmra.mrb[0].mxu0 %v2860
    %v3150 = vpop.f32.mrb[0].mxu0
    %v3151 = vadd.f32 %v3028, %v3150
    %v3152 = vpop.f32.mrb[0].mxu0
    %v3153 = vadd.f32 %v3030, %v3152
    %v3154 = vpop.f32.mrb[0].mxu0
    %v3155 = vadd.f32 %v3032, %v3154
    %v3156 = vpop.f32.mrb[0].mxu0
    %v3157 = vadd.f32 %v3034, %v3156
    %3158 = vdwg.mxu0
    %v3159 = vld [vmem:[#allocation3 + $0x18] sm:$0xff]
    %s3160 = scalar_lea.vmem [#allocation12], 384
    %v3161 = vld [vmem:[%s3160] sm:$0xff]
    %v3162 = vld [vmem:[%s3160 + $0x8] sm:$0xff]
    %v3163 = vld [vmem:[%s3160 + $0x10] sm:$0xff]
    %v3164 = vld [vmem:[%s3160 + $0x18] sm:$0xff]
    %v3165 = vld [vmem:[%s3160 + $0x20] sm:$0xff]
    %v3166 = vld [vmem:[%s3160 + $0x28] sm:$0xff]
    %v3167 = vld [vmem:[%s3160 + $0x30] sm:$0xff]
    %v3168 = vld [vmem:[%s3160 + $0x38] sm:$0xff]
    %v3169 = vld [vmem:[%s3160 + $0x40] sm:$0xff]
    %v3170 = vld [vmem:[%s3160 + $0x48] sm:$0xff]
    %v3171 = vld [vmem:[%s3160 + $0x50] sm:$0xff]
    %v3172 = vld [vmem:[%s3160 + $0x58] sm:$0xff]
    %v3173 = vld [vmem:[%s3160 + $0x60] sm:$0xff]
    %v3174 = vld [vmem:[%s3160 + $0x68] sm:$0xff]
    %v3175 = vld [vmem:[%s3160 + $0x70] sm:$0xff]
    %v3176 = vld [vmem:[%s3160 + $0x78] sm:$0xff]
    %v3193 = vunpack.c.l.b16 %v3161
    %v3194 = vunpack.c.h.b16 %v3161
    %v3195 = vunpack.c.l.b16 %v3162
    %v3196 = vunpack.c.h.b16 %v3162
    %v3197 = vunpack.c.l.b16 %v3163
    %v3198 = vunpack.c.h.b16 %v3163
    %v3199 = vunpack.c.l.b16 %v3164
    %v3200 = vunpack.c.h.b16 %v3164
    %v3201 = vunpack.c.l.b16 %v3165
    %v3202 = vunpack.c.h.b16 %v3165
    %v3203 = vunpack.c.l.b16 %v3166
    %v3204 = vunpack.c.h.b16 %v3166
    %v3205 = vunpack.c.l.b16 %v3167
    %v3206 = vunpack.c.h.b16 %v3167
    %v3207 = vunpack.c.l.b16 %v3168
    %v3208 = vunpack.c.h.b16 %v3168
    %v3209 = vunpack.c.l.b16 %v3169
    %v3210 = vunpack.c.h.b16 %v3169
    %v3211 = vunpack.c.l.b16 %v3170
    %v3212 = vunpack.c.h.b16 %v3170
    %v3213 = vunpack.c.l.b16 %v3171
    %v3214 = vunpack.c.h.b16 %v3171
    %v3215 = vunpack.c.l.b16 %v3172
    %v3216 = vunpack.c.h.b16 %v3172
    %v3217 = vunpack.c.l.b16 %v3173
    %v3218 = vunpack.c.h.b16 %v3173
    %v3219 = vunpack.c.l.b16 %v3174
    %v3220 = vunpack.c.h.b16 %v3174
    %v3221 = vunpack.c.l.b16 %v3175
    %v3222 = vunpack.c.h.b16 %v3175
    %v3223 = vunpack.c.l.b16 %v3176
    %v3224 = vunpack.c.h.b16 %v3176
    %v3225 = vpack.c.b16 %v3195, %v3193
    %v3226 = vpack.c.b16 %v3196, %v3194
    %v3227 = vpack.c.b16 %v3199, %v3197
    %v3228 = vpack.c.b16 %v3200, %v3198
    %v3229 = vpack.c.b16 %v3203, %v3201
    %v3230 = vpack.c.b16 %v3204, %v3202
    %v3231 = vpack.c.b16 %v3207, %v3205
    %v3232 = vpack.c.b16 %v3208, %v3206
    %v3233 = vpack.c.b16 %v3211, %v3209
    %v3234 = vpack.c.b16 %v3212, %v3210
    %v3235 = vpack.c.b16 %v3215, %v3213
    %v3236 = vpack.c.b16 %v3216, %v3214
    %v3237 = vpack.c.b16 %v3219, %v3217
    %v3238 = vpack.c.b16 %v3220, %v3218
    %v3239 = vpack.c.b16 %v3223, %v3221
    %v3240 = vpack.c.b16 %v3224, %v3222
    %3257 = vmatprep.subr.bf16.mxu0 %v3226
    %3258 = vmatpush1.bf16.msra.mxu0 %v3225
    %3259 = vmatprep.subr.bf16.mxu0 %v3228
    %3260 = vmatpush1.bf16.msra.mxu0 %v3227
    %3261 = vmatprep.subr.bf16.mxu0 %v3230
    %3262 = vmatpush1.bf16.msra.mxu0 %v3229
    %3263 = vmatprep.subr.bf16.mxu0 %v3232
    %3264 = vmatpush1.bf16.msra.mxu0 %v3231
    %3265 = vmatprep.subr.bf16.mxu0 %v3234
    %3266 = vmatpush1.bf16.msra.mxu0 %v3233
    %3267 = vmatprep.subr.bf16.mxu0 %v3236
    %3268 = vmatpush1.bf16.msra.mxu0 %v3235
    %3269 = vmatprep.subr.bf16.mxu0 %v3238
    %3270 = vmatpush1.bf16.msra.mxu0 %v3237
    %3271 = vmatprep.subr.bf16.mxu0 %v3240
    %3272 = vmatpush1.bf16.msra.mxu0 %v3239
    %3273 = vmatprep.subr.bf16.mxu0 0
    %3274 = vmatpush1.bf16.msra.mxu0 0
    %3275 = vmatprep.subr.bf16.mxu0 0
    %3276 = vmatpush1.bf16.msra.mxu0 0
    %3277 = vmatprep.subr.bf16.mxu0 0
    %3278 = vmatpush1.bf16.msra.mxu0 0
    %3279 = vmatprep.subr.bf16.mxu0 0
    %3280 = vmatpush1.bf16.msra.mxu0 0
    %3281 = vmatprep.subr.bf16.mxu0 0
    %3282 = vmatpush1.bf16.msra.mxu0 0
    %3283 = vmatprep.subr.bf16.mxu0 0
    %3284 = vmatpush1.bf16.msra.mxu0 0
    %3285 = vmatprep.subr.bf16.mxu0 0
    %3286 = vmatpush1.bf16.msra.mxu0 0
    %3287 = vmatprep.subr.bf16.mxu0 0
    %3288 = vmatpush1.bf16.msra.mxu0 0
    %3289 = vmatprep.mubr.bf16.mxu0 0
    %3290 = vmatmul.mubr.bf16.gmra.mrb[0].mxu0 %v3159
    %v3291 = vpop.f32.mrb[0].mxu0
    %v3292 = vadd.f32 0.0, %v3291
    %v3293 = vpop.f32.mrb[0].mxu0
    %v3294 = vadd.f32 0.0, %v3293
    %v3295 = vpop.f32.mrb[0].mxu0
    %v3296 = vadd.f32 0.0, %v3295
    %v3297 = vpop.f32.mrb[0].mxu0
    %v3298 = vadd.f32 0.0, %v3297
    %3299 = vdwg.mxu0
    %v3316 = vunpack.c.l.b16 %v2879
    %v3317 = vunpack.c.h.b16 %v2879
    %v3318 = vunpack.c.l.b16 %v2880
    %v3319 = vunpack.c.h.b16 %v2880
    %v3320 = vunpack.c.l.b16 %v2881
    %v3321 = vunpack.c.h.b16 %v2881
    %v3322 = vunpack.c.l.b16 %v2882
    %v3323 = vunpack.c.h.b16 %v2882
    %v3324 = vunpack.c.l.b16 %v2883
    %v3325 = vunpack.c.h.b16 %v2883
    %v3326 = vunpack.c.l.b16 %v2884
    %v3327 = vunpack.c.h.b16 %v2884
    %v3328 = vunpack.c.l.b16 %v2885
    %v3329 = vunpack.c.h.b16 %v2885
    %v3330 = vunpack.c.l.b16 %v2886
    %v3331 = vunpack.c.h.b16 %v2886
    %v3332 = vunpack.c.l.b16 %v2887
    %v3333 = vunpack.c.h.b16 %v2887
    %v3334 = vunpack.c.l.b16 %v2888
    %v3335 = vunpack.c.h.b16 %v2888
    %v3336 = vunpack.c.l.b16 %v2889
    %v3337 = vunpack.c.h.b16 %v2889
    %v3338 = vunpack.c.l.b16 %v2890
    %v3339 = vunpack.c.h.b16 %v2890
    %v3340 = vunpack.c.l.b16 %v2891
    %v3341 = vunpack.c.h.b16 %v2891
    %v3342 = vunpack.c.l.b16 %v2892
    %v3343 = vunpack.c.h.b16 %v2892
    %v3344 = vunpack.c.l.b16 %v2893
    %v3345 = vunpack.c.h.b16 %v2893
    %v3346 = vunpack.c.l.b16 %v2894
    %v3347 = vunpack.c.h.b16 %v2894
    %v3348 = vpack.c.b16 %v3318, %v3316
    %v3349 = vpack.c.b16 %v3319, %v3317
    %v3350 = vpack.c.b16 %v3322, %v3320
    %v3351 = vpack.c.b16 %v3323, %v3321
    %v3352 = vpack.c.b16 %v3326, %v3324
    %v3353 = vpack.c.b16 %v3327, %v3325
    %v3354 = vpack.c.b16 %v3330, %v3328
    %v3355 = vpack.c.b16 %v3331, %v3329
    %v3356 = vpack.c.b16 %v3334, %v3332
    %v3357 = vpack.c.b16 %v3335, %v3333
    %v3358 = vpack.c.b16 %v3338, %v3336
    %v3359 = vpack.c.b16 %v3339, %v3337
    %v3360 = vpack.c.b16 %v3342, %v3340
    %v3361 = vpack.c.b16 %v3343, %v3341
    %v3362 = vpack.c.b16 %v3346, %v3344
    %v3363 = vpack.c.b16 %v3347, %v3345
    %3380 = vmatprep.subr.bf16.mxu0 %v3349
    %3381 = vmatpush1.bf16.msra.mxu0 %v3348
    %3382 = vmatprep.subr.bf16.mxu0 %v3351
    %3383 = vmatpush1.bf16.msra.mxu0 %v3350
    %3384 = vmatprep.subr.bf16.mxu0 %v3353
    %3385 = vmatpush1.bf16.msra.mxu0 %v3352
    %3386 = vmatprep.subr.bf16.mxu0 %v3355
    %3387 = vmatpush1.bf16.msra.mxu0 %v3354
    %3388 = vmatprep.subr.bf16.mxu0 %v3357
    %3389 = vmatpush1.bf16.msra.mxu0 %v3356
    %3390 = vmatprep.subr.bf16.mxu0 %v3359
    %3391 = vmatpush1.bf16.msra.mxu0 %v3358
    %3392 = vmatprep.subr.bf16.mxu0 %v3361
    %3393 = vmatpush1.bf16.msra.mxu0 %v3360
    %3394 = vmatprep.subr.bf16.mxu0 %v3363
    %3395 = vmatpush1.bf16.msra.mxu0 %v3362
    %3396 = vmatprep.subr.bf16.mxu0 0
    %3397 = vmatpush1.bf16.msra.mxu0 0
    %3398 = vmatprep.subr.bf16.mxu0 0
    %3399 = vmatpush1.bf16.msra.mxu0 0
    %3400 = vmatprep.subr.bf16.mxu0 0
    %3401 = vmatpush1.bf16.msra.mxu0 0
    %3402 = vmatprep.subr.bf16.mxu0 0
    %3403 = vmatpush1.bf16.msra.mxu0 0
    %3404 = vmatprep.subr.bf16.mxu0 0
    %3405 = vmatpush1.bf16.msra.mxu0 0
    %3406 = vmatprep.subr.bf16.mxu0 0
    %3407 = vmatpush1.bf16.msra.mxu0 0
    %3408 = vmatprep.subr.bf16.mxu0 0
    %3409 = vmatpush1.bf16.msra.mxu0 0
    %3410 = vmatprep.subr.bf16.mxu0 0
    %3411 = vmatpush1.bf16.msra.mxu0 0
    %3412 = vmatprep.mubr.bf16.mxu0 0
    %3413 = vmatmul.mubr.bf16.gmra.mrb[0].mxu0 %v2877
    %v3414 = vpop.f32.mrb[0].mxu0
    %v3415 = vadd.f32 %v3292, %v3414
    %v3416 = vpop.f32.mrb[0].mxu0
    %v3417 = vadd.f32 %v3294, %v3416
    %v3418 = vpop.f32.mrb[0].mxu0
    %v3419 = vadd.f32 %v3296, %v3418
    %v3420 = vpop.f32.mrb[0].mxu0
    %v3421 = vadd.f32 %v3298, %v3420
    %3422 = vdwg.mxu0
    %v3423 = vld [vmem:[#allocation3 + $0x20] sm:$0xff]
    %s3424 = scalar_lea.vmem [#allocation12], 512
    %v3425 = vld [vmem:[%s3424] sm:$0xff]
    %v3426 = vld [vmem:[%s3424 + $0x8] sm:$0xff]
    %v3427 = vld [vmem:[%s3424 + $0x10] sm:$0xff]
    %v3428 = vld [vmem:[%s3424 + $0x18] sm:$0xff]
    %v3429 = vld [vmem:[%s3424 + $0x20] sm:$0xff]
    %v3430 = vld [vmem:[%s3424 + $0x28] sm:$0xff]
    %v3431 = vld [vmem:[%s3424 + $0x30] sm:$0xff]
    %v3432 = vld [vmem:[%s3424 + $0x38] sm:$0xff]
    %v3433 = vld [vmem:[%s3424 + $0x40] sm:$0xff]
    %v3434 = vld [vmem:[%s3424 + $0x48] sm:$0xff]
    %v3435 = vld [vmem:[%s3424 + $0x50] sm:$0xff]
    %v3436 = vld [vmem:[%s3424 + $0x58] sm:$0xff]
    %v3437 = vld [vmem:[%s3424 + $0x60] sm:$0xff]
    %v3438 = vld [vmem:[%s3424 + $0x68] sm:$0xff]
    %v3439 = vld [vmem:[%s3424 + $0x70] sm:$0xff]
    %v3440 = vld [vmem:[%s3424 + $0x78] sm:$0xff]
    %v3457 = vunpack.c.l.b16 %v3425
    %v3458 = vunpack.c.h.b16 %v3425
    %v3459 = vunpack.c.l.b16 %v3426
    %v3460 = vunpack.c.h.b16 %v3426
    %v3461 = vunpack.c.l.b16 %v3427
    %v3462 = vunpack.c.h.b16 %v3427
    %v3463 = vunpack.c.l.b16 %v3428
    %v3464 = vunpack.c.h.b16 %v3428
    %v3465 = vunpack.c.l.b16 %v3429
    %v3466 = vunpack.c.h.b16 %v3429
    %v3467 = vunpack.c.l.b16 %v3430
    %v3468 = vunpack.c.h.b16 %v3430
    %v3469 = vunpack.c.l.b16 %v3431
    %v3470 = vunpack.c.h.b16 %v3431
    %v3471 = vunpack.c.l.b16 %v3432
    %v3472 = vunpack.c.h.b16 %v3432
    %v3473 = vunpack.c.l.b16 %v3433
    %v3474 = vunpack.c.h.b16 %v3433
    %v3475 = vunpack.c.l.b16 %v3434
    %v3476 = vunpack.c.h.b16 %v3434
    %v3477 = vunpack.c.l.b16 %v3435
    %v3478 = vunpack.c.h.b16 %v3435
    %v3479 = vunpack.c.l.b16 %v3436
    %v3480 = vunpack.c.h.b16 %v3436
    %v3481 = vunpack.c.l.b16 %v3437
    %v3482 = vunpack.c.h.b16 %v3437
    %v3483 = vunpack.c.l.b16 %v3438
    %v3484 = vunpack.c.h.b16 %v3438
    %v3485 = vunpack.c.l.b16 %v3439
    %v3486 = vunpack.c.h.b16 %v3439
    %v3487 = vunpack.c.l.b16 %v3440
    %v3488 = vunpack.c.h.b16 %v3440
    %v3489 = vpack.c.b16 %v3459, %v3457
    %v3490 = vpack.c.b16 %v3460, %v3458
    %v3491 = vpack.c.b16 %v3463, %v3461
    %v3492 = vpack.c.b16 %v3464, %v3462
    %v3493 = vpack.c.b16 %v3467, %v3465
    %v3494 = vpack.c.b16 %v3468, %v3466
    %v3495 = vpack.c.b16 %v3471, %v3469
    %v3496 = vpack.c.b16 %v3472, %v3470
    %v3497 = vpack.c.b16 %v3475, %v3473
    %v3498 = vpack.c.b16 %v3476, %v3474
    %v3499 = vpack.c.b16 %v3479, %v3477
    %v3500 = vpack.c.b16 %v3480, %v3478
    %v3501 = vpack.c.b16 %v3483, %v3481
    %v3502 = vpack.c.b16 %v3484, %v3482
    %v3503 = vpack.c.b16 %v3487, %v3485
    %v3504 = vpack.c.b16 %v3488, %v3486
    %3521 = vmatprep.subr.bf16.mxu0 %v3490
    %3522 = vmatpush1.bf16.msra.mxu0 %v3489
    %3523 = vmatprep.subr.bf16.mxu0 %v3492
    %3524 = vmatpush1.bf16.msra.mxu0 %v3491
    %3525 = vmatprep.subr.bf16.mxu0 %v3494
    %3526 = vmatpush1.bf16.msra.mxu0 %v3493
    %3527 = vmatprep.subr.bf16.mxu0 %v3496
    %3528 = vmatpush1.bf16.msra.mxu0 %v3495
    %3529 = vmatprep.subr.bf16.mxu0 %v3498
    %3530 = vmatpush1.bf16.msra.mxu0 %v3497
    %3531 = vmatprep.subr.bf16.mxu0 %v3500
    %3532 = vmatpush1.bf16.msra.mxu0 %v3499
    %3533 = vmatprep.subr.bf16.mxu0 %v3502
    %3534 = vmatpush1.bf16.msra.mxu0 %v3501
    %3535 = vmatprep.subr.bf16.mxu0 %v3504
    %3536 = vmatpush1.bf16.msra.mxu0 %v3503
    %3537 = vmatprep.subr.bf16.mxu0 0
    %3538 = vmatpush1.bf16.msra.mxu0 0
    %3539 = vmatprep.subr.bf16.mxu0 0
    %3540 = vmatpush1.bf16.msra.mxu0 0
    %3541 = vmatprep.subr.bf16.mxu0 0
    %3542 = vmatpush1.bf16.msra.mxu0 0
    %3543 = vmatprep.subr.bf16.mxu0 0
    %3544 = vmatpush1.bf16.msra.mxu0 0
    %3545 = vmatprep.subr.bf16.mxu0 0
    %3546 = vmatpush1.bf16.msra.mxu0 0
    %3547 = vmatprep.subr.bf16.mxu0 0
    %3548 = vmatpush1.bf16.msra.mxu0 0
    %3549 = vmatprep.subr.bf16.mxu0 0
    %3550 = vmatpush1.bf16.msra.mxu0 0
    %3551 = vmatprep.subr.bf16.mxu0 0
    %3552 = vmatpush1.bf16.msra.mxu0 0
    %3553 = vmatprep.mubr.bf16.mxu0 0
    %3554 = vmatmul.mubr.bf16.gmra.mrb[0].mxu0 %v3423
    %v3555 = vpop.f32.mrb[0].mxu0
    %v3556 = vadd.f32 0.0, %v3555
    %v3557 = vpop.f32.mrb[0].mxu0
    %v3558 = vadd.f32 0.0, %v3557
    %v3559 = vpop.f32.mrb[0].mxu0
    %v3560 = vadd.f32 0.0, %v3559
    %v3561 = vpop.f32.mrb[0].mxu0
    %v3562 = vadd.f32 0.0, %v3561
    %3563 = vdwg.mxu0
    %v3564 = vadd.f32 %v3151, %v3556
    %v3565 = vadd.f32 %v3153, %v3558
    %v3566 = vadd.f32 %v3155, %v3560
    %v3567 = vadd.f32 %v3157, %v3562
    %v3568 = vld [vmem:[#allocation3 + $0x28] sm:$0xff]
    %s3569 = scalar_lea.vmem [#allocation12], 640
    %v3570 = vld [vmem:[%s3569] sm:$0xff]
    %v3571 = vld [vmem:[%s3569 + $0x8] sm:$0xff]
    %v3572 = vld [vmem:[%s3569 + $0x10] sm:$0xff]
    %v3573 = vld [vmem:[%s3569 + $0x18] sm:$0xff]
    %v3574 = vld [vmem:[%s3569 + $0x20] sm:$0xff]
    %v3575 = vld [vmem:[%s3569 + $0x28] sm:$0xff]
    %v3576 = vld [vmem:[%s3569 + $0x30] sm:$0xff]
    %v3577 = vld [vmem:[%s3569 + $0x38] sm:$0xff]
    %v3578 = vld [vmem:[%s3569 + $0x40] sm:$0xff]
    %v3579 = vld [vmem:[%s3569 + $0x48] sm:$0xff]
    %v3580 = vld [vmem:[%s3569 + $0x50] sm:$0xff]
    %v3581 = vld [vmem:[%s3569 + $0x58] sm:$0xff]
    %v3582 = vld [vmem:[%s3569 + $0x60] sm:$0xff]
    %v3583 = vld [vmem:[%s3569 + $0x68] sm:$0xff]
    %v3584 = vld [vmem:[%s3569 + $0x70] sm:$0xff]
    %v3585 = vld [vmem:[%s3569 + $0x78] sm:$0xff]
    %v3602 = vunpack.c.l.b16 %v3570
    %v3603 = vunpack.c.h.b16 %v3570
    %v3604 = vunpack.c.l.b16 %v3571
    %v3605 = vunpack.c.h.b16 %v3571
    %v3606 = vunpack.c.l.b16 %v3572
    %v3607 = vunpack.c.h.b16 %v3572
    %v3608 = vunpack.c.l.b16 %v3573
    %v3609 = vunpack.c.h.b16 %v3573
    %v3610 = vunpack.c.l.b16 %v3574
    %v3611 = vunpack.c.h.b16 %v3574
    %v3612 = vunpack.c.l.b16 %v3575
    %v3613 = vunpack.c.h.b16 %v3575
    %v3614 = vunpack.c.l.b16 %v3576
    %v3615 = vunpack.c.h.b16 %v3576
    %v3616 = vunpack.c.l.b16 %v3577
    %v3617 = vunpack.c.h.b16 %v3577
    %v3618 = vunpack.c.l.b16 %v3578
    %v3619 = vunpack.c.h.b16 %v3578
    %v3620 = vunpack.c.l.b16 %v3579
    %v3621 = vunpack.c.h.b16 %v3579
    %v3622 = vunpack.c.l.b16 %v3580
    %v3623 = vunpack.c.h.b16 %v3580
    %v3624 = vunpack.c.l.b16 %v3581
    %v3625 = vunpack.c.h.b16 %v3581
    %v3626 = vunpack.c.l.b16 %v3582
    %v3627 = vunpack.c.h.b16 %v3582
    %v3628 = vunpack.c.l.b16 %v3583
    %v3629 = vunpack.c.h.b16 %v3583
    %v3630 = vunpack.c.l.b16 %v3584
    %v3631 = vunpack.c.h.b16 %v3584
    %v3632 = vunpack.c.l.b16 %v3585
    %v3633 = vunpack.c.h.b16 %v3585
    %v3634 = vpack.c.b16 %v3604, %v3602
    %v3635 = vpack.c.b16 %v3605, %v3603
    %v3636 = vpack.c.b16 %v3608, %v3606
    %v3637 = vpack.c.b16 %v3609, %v3607
    %v3638 = vpack.c.b16 %v3612, %v3610
    %v3639 = vpack.c.b16 %v3613, %v3611
    %v3640 = vpack.c.b16 %v3616, %v3614
    %v3641 = vpack.c.b16 %v3617, %v3615
    %v3642 = vpack.c.b16 %v3620, %v3618
    %v3643 = vpack.c.b16 %v3621, %v3619
    %v3644 = vpack.c.b16 %v3624, %v3622
    %v3645 = vpack.c.b16 %v3625, %v3623
    %v3646 = vpack.c.b16 %v3628, %v3626
    %v3647 = vpack.c.b16 %v3629, %v3627
    %v3648 = vpack.c.b16 %v3632, %v3630
    %v3649 = vpack.c.b16 %v3633, %v3631
    %3666 = vmatprep.subr.bf16.mxu0 %v3635
    %3667 = vmatpush1.bf16.msra.mxu0 %v3634
    %3668 = vmatprep.subr.bf16.mxu0 %v3637
    %3669 = vmatpush1.bf16.msra.mxu0 %v3636
    %3670 = vmatprep.subr.bf16.mxu0 %v3639
    %3671 = vmatpush1.bf16.msra.mxu0 %v3638
    %3672 = vmatprep.subr.bf16.mxu0 %v3641
    %3673 = vmatpush1.bf16.msra.mxu0 %v3640
    %3674 = vmatprep.subr.bf16.mxu0 %v3643
    %3675 = vmatpush1.bf16.msra.mxu0 %v3642
    %3676 = vmatprep.subr.bf16.mxu0 %v3645
    %3677 = vmatpush1.bf16.msra.mxu0 %v3644
    %3678 = vmatprep.subr.bf16.mxu0 %v3647
    %3679 = vmatpush1.bf16.msra.mxu0 %v3646
    %3680 = vmatprep.subr.bf16.mxu0 %v3649
    %3681 = vmatpush1.bf16.msra.mxu0 %v3648
    %3682 = vmatprep.subr.bf16.mxu0 0
    %3683 = vmatpush1.bf16.msra.mxu0 0
    %3684 = vmatprep.subr.bf16.mxu0 0
    %3685 = vmatpush1.bf16.msra.mxu0 0
    %3686 = vmatprep.subr.bf16.mxu0 0
    %3687 = vmatpush1.bf16.msra.mxu0 0
    %3688 = vmatprep.subr.bf16.mxu0 0
    %3689 = vmatpush1.bf16.msra.mxu0 0
    %3690 = vmatprep.subr.bf16.mxu0 0
    %3691 = vmatpush1.bf16.msra.mxu0 0
    %3692 = vmatprep.subr.bf16.mxu0 0
    %3693 = vmatpush1.bf16.msra.mxu0 0
    %3694 = vmatprep.subr.bf16.mxu0 0
    %3695 = vmatpush1.bf16.msra.mxu0 0
    %3696 = vmatprep.subr.bf16.mxu0 0
    %3697 = vmatpush1.bf16.msra.mxu0 0
    %3698 = vmatprep.mubr.bf16.mxu0 0
    %3699 = vmatmul.mubr.bf16.gmra.mrb[0].mxu0 %v3568
    %v3700 = vpop.f32.mrb[0].mxu0
    %v3701 = vadd.f32 0.0, %v3700
    %v3702 = vpop.f32.mrb[0].mxu0
    %v3703 = vadd.f32 0.0, %v3702
    %v3704 = vpop.f32.mrb[0].mxu0
    %v3705 = vadd.f32 0.0, %v3704
    %v3706 = vpop.f32.mrb[0].mxu0
    %v3707 = vadd.f32 0.0, %v3706
    %3708 = vdwg.mxu0
    %v3709 = vadd.f32 %v3415, %v3701
    %v3710 = vadd.f32 %v3417, %v3703
    %v3711 = vadd.f32 %v3419, %v3705
    %v3712 = vadd.f32 %v3421, %v3707
    %v3713 = vld [vmem:[#allocation3 + $0x30] sm:$0xff]
    %s3714 = scalar_lea.vmem [#allocation12], 768
    %v3715 = vld [vmem:[%s3714] sm:$0xff]
    %v3716 = vld [vmem:[%s3714 + $0x8] sm:$0xff]
    %v3717 = vld [vmem:[%s3714 + $0x10] sm:$0xff]
    %v3718 = vld [vmem:[%s3714 + $0x18] sm:$0xff]
    %v3719 = vld [vmem:[%s3714 + $0x20] sm:$0xff]
    %v3720 = vld [vmem:[%s3714 + $0x28] sm:$0xff]
    %v3721 = vld [vmem:[%s3714 + $0x30] sm:$0xff]
    %v3722 = vld [vmem:[%s3714 + $0x38] sm:$0xff]
    %v3723 = vld [vmem:[%s3714 + $0x40] sm:$0xff]
    %v3724 = vld [vmem:[%s3714 + $0x48] sm:$0xff]
    %v3725 = vld [vmem:[%s3714 + $0x50] sm:$0xff]
    %v3726 = vld [vmem:[%s3714 + $0x58] sm:$0xff]
    %v3727 = vld [vmem:[%s3714 + $0x60] sm:$0xff]
    %v3728 = vld [vmem:[%s3714 + $0x68] sm:$0xff]
    %v3729 = vld [vmem:[%s3714 + $0x70] sm:$0xff]
    %v3730 = vld [vmem:[%s3714 + $0x78] sm:$0xff]
    %v3747 = vunpack.c.l.b16 %v3715
    %v3748 = vunpack.c.h.b16 %v3715
    %v3749 = vunpack.c.l.b16 %v3716
    %v3750 = vunpack.c.h.b16 %v3716
    %v3751 = vunpack.c.l.b16 %v3717
    %v3752 = vunpack.c.h.b16 %v3717
    %v3753 = vunpack.c.l.b16 %v3718
    %v3754 = vunpack.c.h.b16 %v3718
    %v3755 = vunpack.c.l.b16 %v3719
    %v3756 = vunpack.c.h.b16 %v3719
    %v3757 = vunpack.c.l.b16 %v3720
    %v3758 = vunpack.c.h.b16 %v3720
    %v3759 = vunpack.c.l.b16 %v3721
    %v3760 = vunpack.c.h.b16 %v3721
    %v3761 = vunpack.c.l.b16 %v3722
    %v3762 = vunpack.c.h.b16 %v3722
    %v3763 = vunpack.c.l.b16 %v3723
    %v3764 = vunpack.c.h.b16 %v3723
    %v3765 = vunpack.c.l.b16 %v3724
    %v3766 = vunpack.c.h.b16 %v3724
    %v3767 = vunpack.c.l.b16 %v3725
    %v3768 = vunpack.c.h.b16 %v3725
    %v3769 = vunpack.c.l.b16 %v3726
    %v3770 = vunpack.c.h.b16 %v3726
    %v3771 = vunpack.c.l.b16 %v3727
    %v3772 = vunpack.c.h.b16 %v3727
    %v3773 = vunpack.c.l.b16 %v3728
    %v3774 = vunpack.c.h.b16 %v3728
    %v3775 = vunpack.c.l.b16 %v3729
    %v3776 = vunpack.c.h.b16 %v3729
    %v3777 = vunpack.c.l.b16 %v3730
    %v3778 = vunpack.c.h.b16 %v3730
    %v3779 = vpack.c.b16 %v3749, %v3747
    %v3780 = vpack.c.b16 %v3750, %v3748
    %v3781 = vpack.c.b16 %v3753, %v3751
    %v3782 = vpack.c.b16 %v3754, %v3752
    %v3783 = vpack.c.b16 %v3757, %v3755
    %v3784 = vpack.c.b16 %v3758, %v3756
    %v3785 = vpack.c.b16 %v3761, %v3759
    %v3786 = vpack.c.b16 %v3762, %v3760
    %v3787 = vpack.c.b16 %v3765, %v3763
    %v3788 = vpack.c.b16 %v3766, %v3764
    %v3789 = vpack.c.b16 %v3769, %v3767
    %v3790 = vpack.c.b16 %v3770, %v3768
    %v3791 = vpack.c.b16 %v3773, %v3771
    %v3792 = vpack.c.b16 %v3774, %v3772
    %v3793 = vpack.c.b16 %v3777, %v3775
    %v3794 = vpack.c.b16 %v3778, %v3776
    %3811 = vmatprep.subr.bf16.mxu0 %v3780
    %3812 = vmatpush1.bf16.msra.mxu0 %v3779
    %3813 = vmatprep.subr.bf16.mxu0 %v3782
    %3814 = vmatpush1.bf16.msra.mxu0 %v3781
    %3815 = vmatprep.subr.bf16.mxu0 %v3784
    %3816 = vmatpush1.bf16.msra.mxu0 %v3783
    %3817 = vmatprep.subr.bf16.mxu0 %v3786
    %3818 = vmatpush1.bf16.msra.mxu0 %v3785
    %3819 = vmatprep.subr.bf16.mxu0 %v3788
    %3820 = vmatpush1.bf16.msra.mxu0 %v3787
    %3821 = vmatprep.subr.bf16.mxu0 %v3790
    %3822 = vmatpush1.bf16.msra.mxu0 %v3789
    %3823 = vmatprep.subr.bf16.mxu0 %v3792
    %3824 = vmatpush1.bf16.msra.mxu0 %v3791
    %3825 = vmatprep.subr.bf16.mxu0 %v3794
    %3826 = vmatpush1.bf16.msra.mxu0 %v3793
    %3827 = vmatprep.subr.bf16.mxu0 0
    %3828 = vmatpush1.bf16.msra.mxu0 0
    %3829 = vmatprep.subr.bf16.mxu0 0
    %3830 = vmatpush1.bf16.msra.mxu0 0
    %3831 = vmatprep.subr.bf16.mxu0 0
    %3832 = vmatpush1.bf16.msra.mxu0 0
    %3833 = vmatprep.subr.bf16.mxu0 0
    %3834 = vmatpush1.bf16.msra.mxu0 0
    %3835 = vmatprep.subr.bf16.mxu0 0
    %3836 = vmatpush1.bf16.msra.mxu0 0
    %3837 = vmatprep.subr.bf16.mxu0 0
    %3838 = vmatpush1.bf16.msra.mxu0 0
    %3839 = vmatprep.subr.bf16.mxu0 0
    %3840 = vmatpush1.bf16.msra.mxu0 0
    %3841 = vmatprep.subr.bf16.mxu0 0
    %3842 = vmatpush1.bf16.msra.mxu0 0
    %3843 = vmatprep.mubr.bf16.mxu0 0
    %3844 = vmatmul.mubr.bf16.gmra.mrb[0].mxu0 %v3713
    %v3845 = vpop.f32.mrb[0].mxu0
    %v3846 = vadd.f32 0.0, %v3845
    %v3847 = vpop.f32.mrb[0].mxu0
    %v3848 = vadd.f32 0.0, %v3847
    %v3849 = vpop.f32.mrb[0].mxu0
    %v3850 = vadd.f32 0.0, %v3849
    %v3851 = vpop.f32.mrb[0].mxu0
    %v3852 = vadd.f32 0.0, %v3851
    %3853 = vdwg.mxu0
    %v3854 = vadd.f32 %v3564, %v3846
    %v3855 = vadd.f32 %v3565, %v3848
    %v3856 = vadd.f32 %v3566, %v3850
    %v3857 = vadd.f32 %v3567, %v3852
    %v3858 = vld [vmem:[#allocation3 + $0x38] sm:$0xff]
    %s3859 = scalar_lea.vmem [#allocation12], 896
    %v3860 = vld [vmem:[%s3859] sm:$0xff]
    %v3861 = vld [vmem:[%s3859 + $0x8] sm:$0xff]
    %v3862 = vld [vmem:[%s3859 + $0x10] sm:$0xff]
    %v3863 = vld [vmem:[%s3859 + $0x18] sm:$0xff]
    %v3864 = vld [vmem:[%s3859 + $0x20] sm:$0xff]
    %v3865 = vld [vmem:[%s3859 + $0x28] sm:$0xff]
    %v3866 = vld [vmem:[%s3859 + $0x30] sm:$0xff]
    %v3867 = vld [vmem:[%s3859 + $0x38] sm:$0xff]
    %v3868 = vld [vmem:[%s3859 + $0x40] sm:$0xff]
    %v3869 = vld [vmem:[%s3859 + $0x48] sm:$0xff]
    %v3870 = vld [vmem:[%s3859 + $0x50] sm:$0xff]
    %v3871 = vld [vmem:[%s3859 + $0x58] sm:$0xff]
    %v3872 = vld [vmem:[%s3859 + $0x60] sm:$0xff]
    %v3873 = vld [vmem:[%s3859 + $0x68] sm:$0xff]
    %v3874 = vld [vmem:[%s3859 + $0x70] sm:$0xff]
    %v3875 = vld [vmem:[%s3859 + $0x78] sm:$0xff]
    %v3892 = vunpack.c.l.b16 %v3860
    %v3893 = vunpack.c.h.b16 %v3860
    %v3894 = vunpack.c.l.b16 %v3861
    %v3895 = vunpack.c.h.b16 %v3861
    %v3896 = vunpack.c.l.b16 %v3862
    %v3897 = vunpack.c.h.b16 %v3862
    %v3898 = vunpack.c.l.b16 %v3863
    %v3899 = vunpack.c.h.b16 %v3863
    %v3900 = vunpack.c.l.b16 %v3864
    %v3901 = vunpack.c.h.b16 %v3864
    %v3902 = vunpack.c.l.b16 %v3865
    %v3903 = vunpack.c.h.b16 %v3865
    %v3904 = vunpack.c.l.b16 %v3866
    %v3905 = vunpack.c.h.b16 %v3866
    %v3906 = vunpack.c.l.b16 %v3867
    %v3907 = vunpack.c.h.b16 %v3867
    %v3908 = vunpack.c.l.b16 %v3868
    %v3909 = vunpack.c.h.b16 %v3868
    %v3910 = vunpack.c.l.b16 %v3869
    %v3911 = vunpack.c.h.b16 %v3869
    %v3912 = vunpack.c.l.b16 %v3870
    %v3913 = vunpack.c.h.b16 %v3870
    %v3914 = vunpack.c.l.b16 %v3871
    %v3915 = vunpack.c.h.b16 %v3871
    %v3916 = vunpack.c.l.b16 %v3872
    %v3917 = vunpack.c.h.b16 %v3872
    %v3918 = vunpack.c.l.b16 %v3873
    %v3919 = vunpack.c.h.b16 %v3873
    %v3920 = vunpack.c.l.b16 %v3874
    %v3921 = vunpack.c.h.b16 %v3874
    %v3922 = vunpack.c.l.b16 %v3875
    %v3923 = vunpack.c.h.b16 %v3875
    %v3924 = vpack.c.b16 %v3894, %v3892
    %v3925 = vpack.c.b16 %v3895, %v3893
    %v3926 = vpack.c.b16 %v3898, %v3896
    %v3927 = vpack.c.b16 %v3899, %v3897
    %v3928 = vpack.c.b16 %v3902, %v3900
    %v3929 = vpack.c.b16 %v3903, %v3901
    %v3930 = vpack.c.b16 %v3906, %v3904
    %v3931 = vpack.c.b16 %v3907, %v3905
    %v3932 = vpack.c.b16 %v3910, %v3908
    %v3933 = vpack.c.b16 %v3911, %v3909
    %v3934 = vpack.c.b16 %v3914, %v3912
    %v3935 = vpack.c.b16 %v3915, %v3913
    %v3936 = vpack.c.b16 %v3918, %v3916
    %v3937 = vpack.c.b16 %v3919, %v3917
    %v3938 = vpack.c.b16 %v3922, %v3920
    %v3939 = vpack.c.b16 %v3923, %v3921
    %3956 = vmatprep.subr.bf16.mxu0 %v3925
    %3957 = vmatpush1.bf16.msra.mxu0 %v3924
    %3958 = vmatprep.subr.bf16.mxu0 %v3927
    %3959 = vmatpush1.bf16.msra.mxu0 %v3926
    %3960 = vmatprep.subr.bf16.mxu0 %v3929
    %3961 = vmatpush1.bf16.msra.mxu0 %v3928
    %3962 = vmatprep.subr.bf16.mxu0 %v3931
    %3963 = vmatpush1.bf16.msra.mxu0 %v3930
    %3964 = vmatprep.subr.bf16.mxu0 %v3933
    %3965 = vmatpush1.bf16.msra.mxu0 %v3932
    %3966 = vmatprep.subr.bf16.mxu0 %v3935
    %3967 = vmatpush1.bf16.msra.mxu0 %v3934
    %3968 = vmatprep.subr.bf16.mxu0 %v3937
    %3969 = vmatpush1.bf16.msra.mxu0 %v3936
    %3970 = vmatprep.subr.bf16.mxu0 %v3939
    %3971 = vmatpush1.bf16.msra.mxu0 %v3938
    %3972 = vmatprep.subr.bf16.mxu0 0
    %3973 = vmatpush1.bf16.msra.mxu0 0
    %3974 = vmatprep.subr.bf16.mxu0 0
    %3975 = vmatpush1.bf16.msra.mxu0 0
    %3976 = vmatprep.subr.bf16.mxu0 0
    %3977 = vmatpush1.bf16.msra.mxu0 0
    %3978 = vmatprep.subr.bf16.mxu0 0
    %3979 = vmatpush1.bf16.msra.mxu0 0
    %3980 = vmatprep.subr.bf16.mxu0 0
    %3981 = vmatpush1.bf16.msra.mxu0 0
    %3982 = vmatprep.subr.bf16.mxu0 0
    %3983 = vmatpush1.bf16.msra.mxu0 0
    %3984 = vmatprep.subr.bf16.mxu0 0
    %3985 = vmatpush1.bf16.msra.mxu0 0
    %3986 = vmatprep.subr.bf16.mxu0 0
    %3987 = vmatpush1.bf16.msra.mxu0 0
    %3988 = vmatprep.mubr.bf16.mxu0 0
    %3989 = vmatmul.mubr.bf16.gmra.mrb[0].mxu0 %v3858
    %v3990 = vpop.f32.mrb[0].mxu0
    %v3991 = vadd.f32 0.0, %v3990
    %v3992 = vpop.f32.mrb[0].mxu0
    %v3993 = vadd.f32 0.0, %v3992
    %v3994 = vpop.f32.mrb[0].mxu0
    %v3995 = vadd.f32 0.0, %v3994
    %v3996 = vpop.f32.mrb[0].mxu0
    %v3997 = vadd.f32 0.0, %v3996
    %3998 = vdwg.mxu0
    %v3999 = vadd.f32 %v3709, %v3991
    %v4000 = vadd.f32 %v3710, %v3993
    %v4001 = vadd.f32 %v3711, %v3995
    %v4002 = vadd.f32 %v3712, %v3997
    %v4003 = vld [vmem:[#allocation3 + $0x40] sm:$0xff]
    %s4004 = scalar_lea.vmem [#allocation12], 1024
    %v4005 = vld [vmem:[%s4004] sm:$0xff]
    %v4006 = vld [vmem:[%s4004 + $0x8] sm:$0xff]
    %v4007 = vld [vmem:[%s4004 + $0x10] sm:$0xff]
    %v4008 = vld [vmem:[%s4004 + $0x18] sm:$0xff]
    %v4009 = vld [vmem:[%s4004 + $0x20] sm:$0xff]
    %v4010 = vld [vmem:[%s4004 + $0x28] sm:$0xff]
    %v4011 = vld [vmem:[%s4004 + $0x30] sm:$0xff]
    %v4012 = vld [vmem:[%s4004 + $0x38] sm:$0xff]
    %v4013 = vld [vmem:[%s4004 + $0x40] sm:$0xff]
    %v4014 = vld [vmem:[%s4004 + $0x48] sm:$0xff]
    %v4015 = vld [vmem:[%s4004 + $0x50] sm:$0xff]
    %v4016 = vld [vmem:[%s4004 + $0x58] sm:$0xff]
    %v4017 = vld [vmem:[%s4004 + $0x60] sm:$0xff]
    %v4018 = vld [vmem:[%s4004 + $0x68] sm:$0xff]
    %v4019 = vld [vmem:[%s4004 + $0x70] sm:$0xff]
    %v4020 = vld [vmem:[%s4004 + $0x78] sm:$0xff]
    %v4037 = vunpack.c.l.b16 %v4005
    %v4038 = vunpack.c.h.b16 %v4005
    %v4039 = vunpack.c.l.b16 %v4006
    %v4040 = vunpack.c.h.b16 %v4006
    %v4041 = vunpack.c.l.b16 %v4007
    %v4042 = vunpack.c.h.b16 %v4007
    %v4043 = vunpack.c.l.b16 %v4008
    %v4044 = vunpack.c.h.b16 %v4008
    %v4045 = vunpack.c.l.b16 %v4009
    %v4046 = vunpack.c.h.b16 %v4009
    %v4047 = vunpack.c.l.b16 %v4010
    %v4048 = vunpack.c.h.b16 %v4010
    %v4049 = vunpack.c.l.b16 %v4011
    %v4050 = vunpack.c.h.b16 %v4011
    %v4051 = vunpack.c.l.b16 %v4012
    %v4052 = vunpack.c.h.b16 %v4012
    %v4053 = vunpack.c.l.b16 %v4013
    %v4054 = vunpack.c.h.b16 %v4013
    %v4055 = vunpack.c.l.b16 %v4014
    %v4056 = vunpack.c.h.b16 %v4014
    %v4057 = vunpack.c.l.b16 %v4015
    %v4058 = vunpack.c.h.b16 %v4015
    %v4059 = vunpack.c.l.b16 %v4016
    %v4060 = vunpack.c.h.b16 %v4016
    %v4061 = vunpack.c.l.b16 %v4017
    %v4062 = vunpack.c.h.b16 %v4017
    %v4063 = vunpack.c.l.b16 %v4018
    %v4064 = vunpack.c.h.b16 %v4018
    %v4065 = vunpack.c.l.b16 %v4019
    %v4066 = vunpack.c.h.b16 %v4019
    %v4067 = vunpack.c.l.b16 %v4020
    %v4068 = vunpack.c.h.b16 %v4020
    %v4069 = vpack.c.b16 %v4039, %v4037
    %v4070 = vpack.c.b16 %v4040, %v4038
    %v4071 = vpack.c.b16 %v4043, %v4041
    %v4072 = vpack.c.b16 %v4044, %v4042
    %v4073 = vpack.c.b16 %v4047, %v4045
    %v4074 = vpack.c.b16 %v4048, %v4046
    %v4075 = vpack.c.b16 %v4051, %v4049
    %v4076 = vpack.c.b16 %v4052, %v4050
    %v4077 = vpack.c.b16 %v4055, %v4053
    %v4078 = vpack.c.b16 %v4056, %v4054
    %v4079 = vpack.c.b16 %v4059, %v4057
    %v4080 = vpack.c.b16 %v4060, %v4058
    %v4081 = vpack.c.b16 %v4063, %v4061
    %v4082 = vpack.c.b16 %v4064, %v4062
    %v4083 = vpack.c.b16 %v4067, %v4065
    %v4084 = vpack.c.b16 %v4068, %v4066
    %4101 = vmatprep.subr.bf16.mxu0 %v4070
    %4102 = vmatpush1.bf16.msra.mxu0 %v4069
    %4103 = vmatprep.subr.bf16.mxu0 %v4072
    %4104 = vmatpush1.bf16.msra.mxu0 %v4071
    %4105 = vmatprep.subr.bf16.mxu0 %v4074
    %4106 = vmatpush1.bf16.msra.mxu0 %v4073
    %4107 = vmatprep.subr.bf16.mxu0 %v4076
    %4108 = vmatpush1.bf16.msra.mxu0 %v4075
    %4109 = vmatprep.subr.bf16.mxu0 %v4078
    %4110 = vmatpush1.bf16.msra.mxu0 %v4077
    %4111 = vmatprep.subr.bf16.mxu0 %v4080
    %4112 = vmatpush1.bf16.msra.mxu0 %v4079
    %4113 = vmatprep.subr.bf16.mxu0 %v4082
    %4114 = vmatpush1.bf16.msra.mxu0 %v4081
    %4115 = vmatprep.subr.bf16.mxu0 %v4084
    %4116 = vmatpush1.bf16.msra.mxu0 %v4083
    %4117 = vmatprep.subr.bf16.mxu0 0
    %4118 = vmatpush1.bf16.msra.mxu0 0
    %4119 = vmatprep.subr.bf16.mxu0 0
    %4120 = vmatpush1.bf16.msra.mxu0 0
    %4121 = vmatprep.subr.bf16.mxu0 0
    %4122 = vmatpush1.bf16.msra.mxu0 0
    %4123 = vmatprep.subr.bf16.mxu0 0
    %4124 = vmatpush1.bf16.msra.mxu0 0
    %4125 = vmatprep.subr.bf16.mxu0 0
    %4126 = vmatpush1.bf16.msra.mxu0 0
    %4127 = vmatprep.subr.bf16.mxu0 0
    %4128 = vmatpush1.bf16.msra.mxu0 0
    %4129 = vmatprep.subr.bf16.mxu0 0
    %4130 = vmatpush1.bf16.msra.mxu0 0
    %4131 = vmatprep.subr.bf16.mxu0 0
    %4132 = vmatpush1.bf16.msra.mxu0 0
    %4133 = vmatprep.mubr.bf16.mxu0 0
    %4134 = vmatmul.mubr.bf16.gmra.mrb[0].mxu0 %v4003
    %v4135 = vpop.f32.mrb[0].mxu0
    %v4136 = vadd.f32 0.0, %v4135
    %v4137 = vpop.f32.mrb[0].mxu0
    %v4138 = vadd.f32 0.0, %v4137
    %v4139 = vpop.f32.mrb[0].mxu0
    %v4140 = vadd.f32 0.0, %v4139
    %v4141 = vpop.f32.mrb[0].mxu0
    %v4142 = vadd.f32 0.0, %v4141
    %4143 = vdwg.mxu0
    %v4144 = vadd.f32 %v3854, %v4136
    %v4145 = vadd.f32 %v3855, %v4138
    %v4146 = vadd.f32 %v3856, %v4140
    %v4147 = vadd.f32 %v3857, %v4142
    %v4148 = vld [vmem:[#allocation3 + $0x48] sm:$0xff]
    %s4149 = scalar_lea.vmem [#allocation12], 1152
    %v4150 = vld [vmem:[%s4149] sm:$0xff]
    %v4151 = vld [vmem:[%s4149 + $0x8] sm:$0xff]
    %v4152 = vld [vmem:[%s4149 + $0x10] sm:$0xff]
    %v4153 = vld [vmem:[%s4149 + $0x18] sm:$0xff]
    %v4154 = vld [vmem:[%s4149 + $0x20] sm:$0xff]
    %v4155 = vld [vmem:[%s4149 + $0x28] sm:$0xff]
    %v4156 = vld [vmem:[%s4149 + $0x30] sm:$0xff]
    %v4157 = vld [vmem:[%s4149 + $0x38] sm:$0xff]
    %v4158 = vld [vmem:[%s4149 + $0x40] sm:$0xff]
    %v4159 = vld [vmem:[%s4149 + $0x48] sm:$0xff]
    %v4160 = vld [vmem:[%s4149 + $0x50] sm:$0xff]
    %v4161 = vld [vmem:[%s4149 + $0x58] sm:$0xff]
    %v4162 = vld [vmem:[%s4149 + $0x60] sm:$0xff]
    %v4163 = vld [vmem:[%s4149 + $0x68] sm:$0xff]
    %v4164 = vld [vmem:[%s4149 + $0x70] sm:$0xff]
    %v4165 = vld [vmem:[%s4149 + $0x78] sm:$0xff]
    %v4182 = vunpack.c.l.b16 %v4150
    %v4183 = vunpack.c.h.b16 %v4150
    %v4184 = vunpack.c.l.b16 %v4151
    %v4185 = vunpack.c.h.b16 %v4151
    %v4186 = vunpack.c.l.b16 %v4152
    %v4187 = vunpack.c.h.b16 %v4152
    %v4188 = vunpack.c.l.b16 %v4153
    %v4189 = vunpack.c.h.b16 %v4153
    %v4190 = vunpack.c.l.b16 %v4154
    %v4191 = vunpack.c.h.b16 %v4154
    %v4192 = vunpack.c.l.b16 %v4155
    %v4193 = vunpack.c.h.b16 %v4155
    %v4194 = vunpack.c.l.b16 %v4156
    %v4195 = vunpack.c.h.b16 %v4156
    %v4196 = vunpack.c.l.b16 %v4157
    %v4197 = vunpack.c.h.b16 %v4157
    %v4198 = vunpack.c.l.b16 %v4158
    %v4199 = vunpack.c.h.b16 %v4158
    %v4200 = vunpack.c.l.b16 %v4159
    %v4201 = vunpack.c.h.b16 %v4159
    %v4202 = vunpack.c.l.b16 %v4160
    %v4203 = vunpack.c.h.b16 %v4160
    %v4204 = vunpack.c.l.b16 %v4161
    %v4205 = vunpack.c.h.b16 %v4161
    %v4206 = vunpack.c.l.b16 %v4162
    %v4207 = vunpack.c.h.b16 %v4162
    %v4208 = vunpack.c.l.b16 %v4163
    %v4209 = vunpack.c.h.b16 %v4163
    %v4210 = vunpack.c.l.b16 %v4164
    %v4211 = vunpack.c.h.b16 %v4164
    %v4212 = vunpack.c.l.b16 %v4165
    %v4213 = vunpack.c.h.b16 %v4165
    %v4214 = vpack.c.b16 %v4184, %v4182
    %v4215 = vpack.c.b16 %v4185, %v4183
    %v4216 = vpack.c.b16 %v4188, %v4186
    %v4217 = vpack.c.b16 %v4189, %v4187
    %v4218 = vpack.c.b16 %v4192, %v4190
    %v4219 = vpack.c.b16 %v4193, %v4191
    %v4220 = vpack.c.b16 %v4196, %v4194
    %v4221 = vpack.c.b16 %v4197, %v4195
    %v4222 = vpack.c.b16 %v4200, %v4198
    %v4223 = vpack.c.b16 %v4201, %v4199
    %v4224 = vpack.c.b16 %v4204, %v4202
    %v4225 = vpack.c.b16 %v4205, %v4203
    %v4226 = vpack.c.b16 %v4208, %v4206
    %v4227 = vpack.c.b16 %v4209, %v4207
    %v4228 = vpack.c.b16 %v4212, %v4210
    %v4229 = vpack.c.b16 %v4213, %v4211
    %4246 = vmatprep.subr.bf16.mxu0 %v4215
    %4247 = vmatpush1.bf16.msra.mxu0 %v4214
    %4248 = vmatprep.subr.bf16.mxu0 %v4217
    %4249 = vmatpush1.bf16.msra.mxu0 %v4216
    %4250 = vmatprep.subr.bf16.mxu0 %v4219
    %4251 = vmatpush1.bf16.msra.mxu0 %v4218
    %4252 = vmatprep.subr.bf16.mxu0 %v4221
    %4253 = vmatpush1.bf16.msra.mxu0 %v4220
    %4254 = vmatprep.subr.bf16.mxu0 %v4223
    %4255 = vmatpush1.bf16.msra.mxu0 %v4222
    %4256 = vmatprep.subr.bf16.mxu0 %v4225
    %4257 = vmatpush1.bf16.msra.mxu0 %v4224
    %4258 = vmatprep.subr.bf16.mxu0 %v4227
    %4259 = vmatpush1.bf16.msra.mxu0 %v4226
    %4260 = vmatprep.subr.bf16.mxu0 %v4229
    %4261 = vmatpush1.bf16.msra.mxu0 %v4228
    %4262 = vmatprep.subr.bf16.mxu0 0
    %4263 = vmatpush1.bf16.msra.mxu0 0
    %4264 = vmatprep.subr.bf16.mxu0 0
    %4265 = vmatpush1.bf16.msra.mxu0 0
    %4266 = vmatprep.subr.bf16.mxu0 0
    %4267 = vmatpush1.bf16.msra.mxu0 0
    %4268 = vmatprep.subr.bf16.mxu0 0
    %4269 = vmatpush1.bf16.msra.mxu0 0
    %4270 = vmatprep.subr.bf16.mxu0 0
    %4271 = vmatpush1.bf16.msra.mxu0 0
    %4272 = vmatprep.subr.bf16.mxu0 0
    %4273 = vmatpush1.bf16.msra.mxu0 0
    %4274 = vmatprep.subr.bf16.mxu0 0
    %4275 = vmatpush1.bf16.msra.mxu0 0
    %4276 = vmatprep.subr.bf16.mxu0 0
    %4277 = vmatpush1.bf16.msra.mxu0 0
    %4278 = vmatprep.mubr.bf16.mxu0 0
    %4279 = vmatmul.mubr.bf16.gmra.mrb[0].mxu0 %v4148
    %v4280 = vpop.f32.mrb[0].mxu0
    %v4281 = vadd.f32 0.0, %v4280
    %v4282 = vpop.f32.mrb[0].mxu0
    %v4283 = vadd.f32 0.0, %v4282
    %v4284 = vpop.f32.mrb[0].mxu0
    %v4285 = vadd.f32 0.0, %v4284
    %v4286 = vpop.f32.mrb[0].mxu0
    %v4287 = vadd.f32 0.0, %v4286
    %4288 = vdwg.mxu0
    %v4289 = vadd.f32 %v3999, %v4281
    %v4290 = vadd.f32 %v4000, %v4283
    %v4291 = vadd.f32 %v4001, %v4285
    %v4292 = vadd.f32 %v4002, %v4287
    %v4293 = vld [vmem:[#allocation3 + $0x50] sm:$0xff]
    %s4294 = scalar_lea.vmem [#allocation12], 1280
    %v4295 = vld [vmem:[%s4294] sm:$0xff]
    %v4296 = vld [vmem:[%s4294 + $0x8] sm:$0xff]
    %v4297 = vld [vmem:[%s4294 + $0x10] sm:$0xff]
    %v4298 = vld [vmem:[%s4294 + $0x18] sm:$0xff]
    %v4299 = vld [vmem:[%s4294 + $0x20] sm:$0xff]
    %v4300 = vld [vmem:[%s4294 + $0x28] sm:$0xff]
    %v4301 = vld [vmem:[%s4294 + $0x30] sm:$0xff]
    %v4302 = vld [vmem:[%s4294 + $0x38] sm:$0xff]
    %v4303 = vld [vmem:[%s4294 + $0x40] sm:$0xff]
    %v4304 = vld [vmem:[%s4294 + $0x48] sm:$0xff]
    %v4305 = vld [vmem:[%s4294 + $0x50] sm:$0xff]
    %v4306 = vld [vmem:[%s4294 + $0x58] sm:$0xff]
    %v4307 = vld [vmem:[%s4294 + $0x60] sm:$0xff]
    %v4308 = vld [vmem:[%s4294 + $0x68] sm:$0xff]
    %v4309 = vld [vmem:[%s4294 + $0x70] sm:$0xff]
    %v4310 = vld [vmem:[%s4294 + $0x78] sm:$0xff]
    %v4327 = vunpack.c.l.b16 %v4295
    %v4328 = vunpack.c.h.b16 %v4295
    %v4329 = vunpack.c.l.b16 %v4296
    %v4330 = vunpack.c.h.b16 %v4296
    %v4331 = vunpack.c.l.b16 %v4297
    %v4332 = vunpack.c.h.b16 %v4297
    %v4333 = vunpack.c.l.b16 %v4298
    %v4334 = vunpack.c.h.b16 %v4298
    %v4335 = vunpack.c.l.b16 %v4299
    %v4336 = vunpack.c.h.b16 %v4299
    %v4337 = vunpack.c.l.b16 %v4300
    %v4338 = vunpack.c.h.b16 %v4300
    %v4339 = vunpack.c.l.b16 %v4301
    %v4340 = vunpack.c.h.b16 %v4301
    %v4341 = vunpack.c.l.b16 %v4302
    %v4342 = vunpack.c.h.b16 %v4302
    %v4343 = vunpack.c.l.b16 %v4303
    %v4344 = vunpack.c.h.b16 %v4303
    %v4345 = vunpack.c.l.b16 %v4304
    %v4346 = vunpack.c.h.b16 %v4304
    %v4347 = vunpack.c.l.b16 %v4305
    %v4348 = vunpack.c.h.b16 %v4305
    %v4349 = vunpack.c.l.b16 %v4306
    %v4350 = vunpack.c.h.b16 %v4306
    %v4351 = vunpack.c.l.b16 %v4307
    %v4352 = vunpack.c.h.b16 %v4307
    %v4353 = vunpack.c.l.b16 %v4308
    %v4354 = vunpack.c.h.b16 %v4308
    %v4355 = vunpack.c.l.b16 %v4309
    %v4356 = vunpack.c.h.b16 %v4309
    %v4357 = vunpack.c.l.b16 %v4310
    %v4358 = vunpack.c.h.b16 %v4310
    %v4359 = vpack.c.b16 %v4329, %v4327
    %v4360 = vpack.c.b16 %v4330, %v4328
    %v4361 = vpack.c.b16 %v4333, %v4331
    %v4362 = vpack.c.b16 %v4334, %v4332
    %v4363 = vpack.c.b16 %v4337, %v4335
    %v4364 = vpack.c.b16 %v4338, %v4336
    %v4365 = vpack.c.b16 %v4341, %v4339
    %v4366 = vpack.c.b16 %v4342, %v4340
    %v4367 = vpack.c.b16 %v4345, %v4343
    %v4368 = vpack.c.b16 %v4346, %v4344
    %v4369 = vpack.c.b16 %v4349, %v4347
    %v4370 = vpack.c.b16 %v4350, %v4348
    %v4371 = vpack.c.b16 %v4353, %v4351
    %v4372 = vpack.c.b16 %v4354, %v4352
    %v4373 = vpack.c.b16 %v4357, %v4355
    %v4374 = vpack.c.b16 %v4358, %v4356
    %4391 = vmatprep.subr.bf16.mxu0 %v4360
    %4392 = vmatpush1.bf16.msra.mxu0 %v4359
    %4393 = vmatprep.subr.bf16.mxu0 %v4362
    %4394 = vmatpush1.bf16.msra.mxu0 %v4361
    %4395 = vmatprep.subr.bf16.mxu0 %v4364
    %4396 = vmatpush1.bf16.msra.mxu0 %v4363
    %4397 = vmatprep.subr.bf16.mxu0 %v4366
    %4398 = vmatpush1.bf16.msra.mxu0 %v4365
    %4399 = vmatprep.subr.bf16.mxu0 %v4368
    %4400 = vmatpush1.bf16.msra.mxu0 %v4367
    %4401 = vmatprep.subr.bf16.mxu0 %v4370
    %4402 = vmatpush1.bf16.msra.mxu0 %v4369
    %4403 = vmatprep.subr.bf16.mxu0 %v4372
    %4404 = vmatpush1.bf16.msra.mxu0 %v4371
    %4405 = vmatprep.subr.bf16.mxu0 %v4374
    %4406 = vmatpush1.bf16.msra.mxu0 %v4373
    %4407 = vmatprep.subr.bf16.mxu0 0
    %4408 = vmatpush1.bf16.msra.mxu0 0
    %4409 = vmatprep.subr.bf16.mxu0 0
    %4410 = vmatpush1.bf16.msra.mxu0 0
    %4411 = vmatprep.subr.bf16.mxu0 0
    %4412 = vmatpush1.bf16.msra.mxu0 0
    %4413 = vmatprep.subr.bf16.mxu0 0
    %4414 = vmatpush1.bf16.msra.mxu0 0
    %4415 = vmatprep.subr.bf16.mxu0 0
    %4416 = vmatpush1.bf16.msra.mxu0 0
    %4417 = vmatprep.subr.bf16.mxu0 0
    %4418 = vmatpush1.bf16.msra.mxu0 0
    %4419 = vmatprep.subr.bf16.mxu0 0
    %4420 = vmatpush1.bf16.msra.mxu0 0
    %4421 = vmatprep.subr.bf16.mxu0 0
    %4422 = vmatpush1.bf16.msra.mxu0 0
    %4423 = vmatprep.mubr.bf16.mxu0 0
    %4424 = vmatmul.mubr.bf16.gmra.mrb[0].mxu0 %v4293
    %v4425 = vpop.f32.mrb[0].mxu0
    %v4426 = vadd.f32 0.0, %v4425
    %v4427 = vpop.f32.mrb[0].mxu0
    %v4428 = vadd.f32 0.0, %v4427
    %v4429 = vpop.f32.mrb[0].mxu0
    %v4430 = vadd.f32 0.0, %v4429
    %v4431 = vpop.f32.mrb[0].mxu0
    %v4432 = vadd.f32 0.0, %v4431
    %4433 = vdwg.mxu0
    %v4434 = vadd.f32 %v4144, %v4426
    %v4435 = vadd.f32 %v4145, %v4428
    %v4436 = vadd.f32 %v4146, %v4430
    %v4437 = vadd.f32 %v4147, %v4432
    %v4438 = vld [vmem:[#allocation3 + $0x58] sm:$0xff]
    %s4439 = scalar_lea.vmem [#allocation12], 1408
    %v4440 = vld [vmem:[%s4439] sm:$0xff]
    %v4441 = vld [vmem:[%s4439 + $0x8] sm:$0xff]
    %v4442 = vld [vmem:[%s4439 + $0x10] sm:$0xff]
    %v4443 = vld [vmem:[%s4439 + $0x18] sm:$0xff]
    %v4444 = vld [vmem:[%s4439 + $0x20] sm:$0xff]
    %v4445 = vld [vmem:[%s4439 + $0x28] sm:$0xff]
    %v4446 = vld [vmem:[%s4439 + $0x30] sm:$0xff]
    %v4447 = vld [vmem:[%s4439 + $0x38] sm:$0xff]
    %v4448 = vld [vmem:[%s4439 + $0x40] sm:$0xff]
    %v4449 = vld [vmem:[%s4439 + $0x48] sm:$0xff]
    %v4450 = vld [vmem:[%s4439 + $0x50] sm:$0xff]
    %v4451 = vld [vmem:[%s4439 + $0x58] sm:$0xff]
    %v4452 = vld [vmem:[%s4439 + $0x60] sm:$0xff]
    %v4453 = vld [vmem:[%s4439 + $0x68] sm:$0xff]
    %v4454 = vld [vmem:[%s4439 + $0x70] sm:$0xff]
    %v4455 = vld [vmem:[%s4439 + $0x78] sm:$0xff]
    %v4472 = vunpack.c.l.b16 %v4440
    %v4473 = vunpack.c.h.b16 %v4440
    %v4474 = vunpack.c.l.b16 %v4441
    %v4475 = vunpack.c.h.b16 %v4441
    %v4476 = vunpack.c.l.b16 %v4442
    %v4477 = vunpack.c.h.b16 %v4442
    %v4478 = vunpack.c.l.b16 %v4443
    %v4479 = vunpack.c.h.b16 %v4443
    %v4480 = vunpack.c.l.b16 %v4444
    %v4481 = vunpack.c.h.b16 %v4444
    %v4482 = vunpack.c.l.b16 %v4445
    %v4483 = vunpack.c.h.b16 %v4445
    %v4484 = vunpack.c.l.b16 %v4446
    %v4485 = vunpack.c.h.b16 %v4446
    %v4486 = vunpack.c.l.b16 %v4447
    %v4487 = vunpack.c.h.b16 %v4447
    %v4488 = vunpack.c.l.b16 %v4448
    %v4489 = vunpack.c.h.b16 %v4448
    %v4490 = vunpack.c.l.b16 %v4449
    %v4491 = vunpack.c.h.b16 %v4449
    %v4492 = vunpack.c.l.b16 %v4450
    %v4493 = vunpack.c.h.b16 %v4450
    %v4494 = vunpack.c.l.b16 %v4451
    %v4495 = vunpack.c.h.b16 %v4451
    %v4496 = vunpack.c.l.b16 %v4452
    %v4497 = vunpack.c.h.b16 %v4452
    %v4498 = vunpack.c.l.b16 %v4453
    %v4499 = vunpack.c.h.b16 %v4453
    %v4500 = vunpack.c.l.b16 %v4454
    %v4501 = vunpack.c.h.b16 %v4454
    %v4502 = vunpack.c.l.b16 %v4455
    %v4503 = vunpack.c.h.b16 %v4455
    %v4504 = vpack.c.b16 %v4474, %v4472
    %v4505 = vpack.c.b16 %v4475, %v4473
    %v4506 = vpack.c.b16 %v4478, %v4476
    %v4507 = vpack.c.b16 %v4479, %v4477
    %v4508 = vpack.c.b16 %v4482, %v4480
    %v4509 = vpack.c.b16 %v4483, %v4481
    %v4510 = vpack.c.b16 %v4486, %v4484
    %v4511 = vpack.c.b16 %v4487, %v4485
    %v4512 = vpack.c.b16 %v4490, %v4488
    %v4513 = vpack.c.b16 %v4491, %v4489
    %v4514 = vpack.c.b16 %v4494, %v4492
    %v4515 = vpack.c.b16 %v4495, %v4493
    %v4516 = vpack.c.b16 %v4498, %v4496
    %v4517 = vpack.c.b16 %v4499, %v4497
    %v4518 = vpack.c.b16 %v4502, %v4500
    %v4519 = vpack.c.b16 %v4503, %v4501
    %4536 = vmatprep.subr.bf16.mxu0 %v4505
    %4537 = vmatpush1.bf16.msra.mxu0 %v4504
    %4538 = vmatprep.subr.bf16.mxu0 %v4507
    %4539 = vmatpush1.bf16.msra.mxu0 %v4506
    %4540 = vmatprep.subr.bf16.mxu0 %v4509
    %4541 = vmatpush1.bf16.msra.mxu0 %v4508
    %4542 = vmatprep.subr.bf16.mxu0 %v4511
    %4543 = vmatpush1.bf16.msra.mxu0 %v4510
    %4544 = vmatprep.subr.bf16.mxu0 %v4513
    %4545 = vmatpush1.bf16.msra.mxu0 %v4512
    %4546 = vmatprep.subr.bf16.mxu0 %v4515
    %4547 = vmatpush1.bf16.msra.mxu0 %v4514
    %4548 = vmatprep.subr.bf16.mxu0 %v4517
    %4549 = vmatpush1.bf16.msra.mxu0 %v4516
    %4550 = vmatprep.subr.bf16.mxu0 %v4519
    %4551 = vmatpush1.bf16.msra.mxu0 %v4518
    %4552 = vmatprep.subr.bf16.mxu0 0
    %4553 = vmatpush1.bf16.msra.mxu0 0
    %4554 = vmatprep.subr.bf16.mxu0 0
    %4555 = vmatpush1.bf16.msra.mxu0 0
    %4556 = vmatprep.subr.bf16.mxu0 0
    %4557 = vmatpush1.bf16.msra.mxu0 0
    %4558 = vmatprep.subr.bf16.mxu0 0
    %4559 = vmatpush1.bf16.msra.mxu0 0
    %4560 = vmatprep.subr.bf16.mxu0 0
    %4561 = vmatpush1.bf16.msra.mxu0 0
    %4562 = vmatprep.subr.bf16.mxu0 0
    %4563 = vmatpush1.bf16.msra.mxu0 0
    %4564 = vmatprep.subr.bf16.mxu0 0
    %4565 = vmatpush1.bf16.msra.mxu0 0
    %4566 = vmatprep.subr.bf16.mxu0 0
    %4567 = vmatpush1.bf16.msra.mxu0 0
    %4568 = vmatprep.mubr.bf16.mxu0 0
    %4569 = vmatmul.mubr.bf16.gmra.mrb[0].mxu0 %v4438
    %v4570 = vpop.f32.mrb[0].mxu0
    %v4571 = vadd.f32 0.0, %v4570
    %v4572 = vpop.f32.mrb[0].mxu0
    %v4573 = vadd.f32 0.0, %v4572
    %v4574 = vpop.f32.mrb[0].mxu0
    %v4575 = vadd.f32 0.0, %v4574
    %v4576 = vpop.f32.mrb[0].mxu0
    %v4577 = vadd.f32 0.0, %v4576
    %4578 = vdwg.mxu0
    %v4579 = vadd.f32 %v4289, %v4571
    %v4580 = vadd.f32 %v4290, %v4573
    %v4581 = vadd.f32 %v4291, %v4575
    %v4582 = vadd.f32 %v4292, %v4577
    %v4583 = vld [vmem:[#allocation3 + $0x60] sm:$0xff]
    %s4584 = scalar_lea.vmem [#allocation12], 1536
    %v4585 = vld [vmem:[%s4584] sm:$0xff]
    %v4586 = vld [vmem:[%s4584 + $0x8] sm:$0xff]
    %v4587 = vld [vmem:[%s4584 + $0x10] sm:$0xff]
    %v4588 = vld [vmem:[%s4584 + $0x18] sm:$0xff]
    %v4589 = vld [vmem:[%s4584 + $0x20] sm:$0xff]
    %v4590 = vld [vmem:[%s4584 + $0x28] sm:$0xff]
    %v4591 = vld [vmem:[%s4584 + $0x30] sm:$0xff]
    %v4592 = vld [vmem:[%s4584 + $0x38] sm:$0xff]
    %v4593 = vld [vmem:[%s4584 + $0x40] sm:$0xff]
    %v4594 = vld [vmem:[%s4584 + $0x48] sm:$0xff]
    %v4595 = vld [vmem:[%s4584 + $0x50] sm:$0xff]
    %v4596 = vld [vmem:[%s4584 + $0x58] sm:$0xff]
    %v4597 = vld [vmem:[%s4584 + $0x60] sm:$0xff]
    %v4598 = vld [vmem:[%s4584 + $0x68] sm:$0xff]
    %v4599 = vld [vmem:[%s4584 + $0x70] sm:$0xff]
    %v4600 = vld [vmem:[%s4584 + $0x78] sm:$0xff]
    %v4617 = vunpack.c.l.b16 %v4585
    %v4618 = vunpack.c.h.b16 %v4585
    %v4619 = vunpack.c.l.b16 %v4586
    %v4620 = vunpack.c.h.b16 %v4586
    %v4621 = vunpack.c.l.b16 %v4587
    %v4622 = vunpack.c.h.b16 %v4587
    %v4623 = vunpack.c.l.b16 %v4588
    %v4624 = vunpack.c.h.b16 %v4588
    %v4625 = vunpack.c.l.b16 %v4589
    %v4626 = vunpack.c.h.b16 %v4589
    %v4627 = vunpack.c.l.b16 %v4590
    %v4628 = vunpack.c.h.b16 %v4590
    %v4629 = vunpack.c.l.b16 %v4591
    %v4630 = vunpack.c.h.b16 %v4591
    %v4631 = vunpack.c.l.b16 %v4592
    %v4632 = vunpack.c.h.b16 %v4592
    %v4633 = vunpack.c.l.b16 %v4593
    %v4634 = vunpack.c.h.b16 %v4593
    %v4635 = vunpack.c.l.b16 %v4594
    %v4636 = vunpack.c.h.b16 %v4594
    %v4637 = vunpack.c.l.b16 %v4595
    %v4638 = vunpack.c.h.b16 %v4595
    %v4639 = vunpack.c.l.b16 %v4596
    %v4640 = vunpack.c.h.b16 %v4596
    %v4641 = vunpack.c.l.b16 %v4597
    %v4642 = vunpack.c.h.b16 %v4597
    %v4643 = vunpack.c.l.b16 %v4598
    %v4644 = vunpack.c.h.b16 %v4598
    %v4645 = vunpack.c.l.b16 %v4599
    %v4646 = vunpack.c.h.b16 %v4599
    %v4647 = vunpack.c.l.b16 %v4600
    %v4648 = vunpack.c.h.b16 %v4600
    %v4649 = vpack.c.b16 %v4619, %v4617
    %v4650 = vpack.c.b16 %v4620, %v4618
    %v4651 = vpack.c.b16 %v4623, %v4621
    %v4652 = vpack.c.b16 %v4624, %v4622
    %v4653 = vpack.c.b16 %v4627, %v4625
    %v4654 = vpack.c.b16 %v4628, %v4626
    %v4655 = vpack.c.b16 %v4631, %v4629
    %v4656 = vpack.c.b16 %v4632, %v4630
    %v4657 = vpack.c.b16 %v4635, %v4633
    %v4658 = vpack.c.b16 %v4636, %v4634
    %v4659 = vpack.c.b16 %v4639, %v4637
    %v4660 = vpack.c.b16 %v4640, %v4638
    %v4661 = vpack.c.b16 %v4643, %v4641
    %v4662 = vpack.c.b16 %v4644, %v4642
    %v4663 = vpack.c.b16 %v4647, %v4645
    %v4664 = vpack.c.b16 %v4648, %v4646
    %4681 = vmatprep.subr.bf16.mxu0 %v4650
    %4682 = vmatpush1.bf16.msra.mxu0 %v4649
    %4683 = vmatprep.subr.bf16.mxu0 %v4652
    %4684 = vmatpush1.bf16.msra.mxu0 %v4651
    %4685 = vmatprep.subr.bf16.mxu0 %v4654
    %4686 = vmatpush1.bf16.msra.mxu0 %v4653
    %4687 = vmatprep.subr.bf16.mxu0 %v4656
    %4688 = vmatpush1.bf16.msra.mxu0 %v4655
    %4689 = vmatprep.subr.bf16.mxu0 %v4658
    %4690 = vmatpush1.bf16.msra.mxu0 %v4657
    %4691 = vmatprep.subr.bf16.mxu0 %v4660
    %4692 = vmatpush1.bf16.msra.mxu0 %v4659
    %4693 = vmatprep.subr.bf16.mxu0 %v4662
    %4694 = vmatpush1.bf16.msra.mxu0 %v4661
    %4695 = vmatprep.subr.bf16.mxu0 %v4664
    %4696 = vmatpush1.bf16.msra.mxu0 %v4663
    %4697 = vmatprep.subr.bf16.mxu0 0
    %4698 = vmatpush1.bf16.msra.mxu0 0
    %4699 = vmatprep.subr.bf16.mxu0 0
    %4700 = vmatpush1.bf16.msra.mxu0 0
    %4701 = vmatprep.subr.bf16.mxu0 0
    %4702 = vmatpush1.bf16.msra.mxu0 0
    %4703 = vmatprep.subr.bf16.mxu0 0
    %4704 = vmatpush1.bf16.msra.mxu0 0
    %4705 = vmatprep.subr.bf16.mxu0 0
    %4706 = vmatpush1.bf16.msra.mxu0 0
    %4707 = vmatprep.subr.bf16.mxu0 0
    %4708 = vmatpush1.bf16.msra.mxu0 0
    %4709 = vmatprep.subr.bf16.mxu0 0
    %4710 = vmatpush1.bf16.msra.mxu0 0
    %4711 = vmatprep.subr.bf16.mxu0 0
    %4712 = vmatpush1.bf16.msra.mxu0 0
    %4713 = vmatprep.mubr.bf16.mxu0 0
    %4714 = vmatmul.mubr.bf16.gmra.mrb[0].mxu0 %v4583
    %v4715 = vpop.f32.mrb[0].mxu0
    %v4716 = vadd.f32 0.0, %v4715
    %v4717 = vpop.f32.mrb[0].mxu0
    %v4718 = vadd.f32 0.0, %v4717
    %v4719 = vpop.f32.mrb[0].mxu0
    %v4720 = vadd.f32 0.0, %v4719
    %v4721 = vpop.f32.mrb[0].mxu0
    %v4722 = vadd.f32 0.0, %v4721
    %4723 = vdwg.mxu0
    %v4724 = vadd.f32 %v4434, %v4716
    %v4725 = vadd.f32 %v4435, %v4718
    %v4726 = vadd.f32 %v4436, %v4720
    %v4727 = vadd.f32 %v4437, %v4722
    %v4728 = vld [vmem:[#allocation3 + $0x68] sm:$0xff]
    %s4729 = scalar_lea.vmem [#allocation12], 1664
    %v4730 = vld [vmem:[%s4729] sm:$0xff]
    %v4731 = vld [vmem:[%s4729 + $0x8] sm:$0xff]
    %v4732 = vld [vmem:[%s4729 + $0x10] sm:$0xff]
    %v4733 = vld [vmem:[%s4729 + $0x18] sm:$0xff]
    %v4734 = vld [vmem:[%s4729 + $0x20] sm:$0xff]
    %v4735 = vld [vmem:[%s4729 + $0x28] sm:$0xff]
    %v4736 = vld [vmem:[%s4729 + $0x30] sm:$0xff]
    %v4737 = vld [vmem:[%s4729 + $0x38] sm:$0xff]
    %v4738 = vld [vmem:[%s4729 + $0x40] sm:$0xff]
    %v4739 = vld [vmem:[%s4729 + $0x48] sm:$0xff]
    %v4740 = vld [vmem:[%s4729 + $0x50] sm:$0xff]
    %v4741 = vld [vmem:[%s4729 + $0x58] sm:$0xff]
    %v4742 = vld [vmem:[%s4729 + $0x60] sm:$0xff]
    %v4743 = vld [vmem:[%s4729 + $0x68] sm:$0xff]
    %v4744 = vld [vmem:[%s4729 + $0x70] sm:$0xff]
    %v4745 = vld [vmem:[%s4729 + $0x78] sm:$0xff]
    %v4762 = vunpack.c.l.b16 %v4730
    %v4763 = vunpack.c.h.b16 %v4730
    %v4764 = vunpack.c.l.b16 %v4731
    %v4765 = vunpack.c.h.b16 %v4731
    %v4766 = vunpack.c.l.b16 %v4732
    %v4767 = vunpack.c.h.b16 %v4732
    %v4768 = vunpack.c.l.b16 %v4733
    %v4769 = vunpack.c.h.b16 %v4733
    %v4770 = vunpack.c.l.b16 %v4734
    %v4771 = vunpack.c.h.b16 %v4734
    %v4772 = vunpack.c.l.b16 %v4735
    %v4773 = vunpack.c.h.b16 %v4735
    %v4774 = vunpack.c.l.b16 %v4736
    %v4775 = vunpack.c.h.b16 %v4736
    %v4776 = vunpack.c.l.b16 %v4737
    %v4777 = vunpack.c.h.b16 %v4737
    %v4778 = vunpack.c.l.b16 %v4738
    %v4779 = vunpack.c.h.b16 %v4738
    %v4780 = vunpack.c.l.b16 %v4739
    %v4781 = vunpack.c.h.b16 %v4739
    %v4782 = vunpack.c.l.b16 %v4740
    %v4783 = vunpack.c.h.b16 %v4740
    %v4784 = vunpack.c.l.b16 %v4741
    %v4785 = vunpack.c.h.b16 %v4741
    %v4786 = vunpack.c.l.b16 %v4742
    %v4787 = vunpack.c.h.b16 %v4742
    %v4788 = vunpack.c.l.b16 %v4743
    %v4789 = vunpack.c.h.b16 %v4743
    %v4790 = vunpack.c.l.b16 %v4744
    %v4791 = vunpack.c.h.b16 %v4744
    %v4792 = vunpack.c.l.b16 %v4745
    %v4793 = vunpack.c.h.b16 %v4745
    %v4794 = vpack.c.b16 %v4764, %v4762
    %v4795 = vpack.c.b16 %v4765, %v4763
    %v4796 = vpack.c.b16 %v4768, %v4766
    %v4797 = vpack.c.b16 %v4769, %v4767
    %v4798 = vpack.c.b16 %v4772, %v4770
    %v4799 = vpack.c.b16 %v4773, %v4771
    %v4800 = vpack.c.b16 %v4776, %v4774
    %v4801 = vpack.c.b16 %v4777, %v4775
    %v4802 = vpack.c.b16 %v4780, %v4778
    %v4803 = vpack.c.b16 %v4781, %v4779
    %v4804 = vpack.c.b16 %v4784, %v4782
    %v4805 = vpack.c.b16 %v4785, %v4783
    %v4806 = vpack.c.b16 %v4788, %v4786
    %v4807 = vpack.c.b16 %v4789, %v4787
    %v4808 = vpack.c.b16 %v4792, %v4790
    %v4809 = vpack.c.b16 %v4793, %v4791
    %4826 = vmatprep.subr.bf16.mxu0 %v4795
    %4827 = vmatpush1.bf16.msra.mxu0 %v4794
    %4828 = vmatprep.subr.bf16.mxu0 %v4797
    %4829 = vmatpush1.bf16.msra.mxu0 %v4796
    %4830 = vmatprep.subr.bf16.mxu0 %v4799
    %4831 = vmatpush1.bf16.msra.mxu0 %v4798
    %4832 = vmatprep.subr.bf16.mxu0 %v4801
    %4833 = vmatpush1.bf16.msra.mxu0 %v4800
    %4834 = vmatprep.subr.bf16.mxu0 %v4803
    %4835 = vmatpush1.bf16.msra.mxu0 %v4802
    %4836 = vmatprep.subr.bf16.mxu0 %v4805
    %4837 = vmatpush1.bf16.msra.mxu0 %v4804
    %4838 = vmatprep.subr.bf16.mxu0 %v4807
    %4839 = vmatpush1.bf16.msra.mxu0 %v4806
    %4840 = vmatprep.subr.bf16.mxu0 %v4809
    %4841 = vmatpush1.bf16.msra.mxu0 %v4808
    %4842 = vmatprep.subr.bf16.mxu0 0
    %4843 = vmatpush1.bf16.msra.mxu0 0
    %4844 = vmatprep.subr.bf16.mxu0 0
    %4845 = vmatpush1.bf16.msra.mxu0 0
    %4846 = vmatprep.subr.bf16.mxu0 0
    %4847 = vmatpush1.bf16.msra.mxu0 0
    %4848 = vmatprep.subr.bf16.mxu0 0
    %4849 = vmatpush1.bf16.msra.mxu0 0
    %4850 = vmatprep.subr.bf16.mxu0 0
    %4851 = vmatpush1.bf16.msra.mxu0 0
    %4852 = vmatprep.subr.bf16.mxu0 0
    %4853 = vmatpush1.bf16.msra.mxu0 0
    %4854 = vmatprep.subr.bf16.mxu0 0
    %4855 = vmatpush1.bf16.msra.mxu0 0
    %4856 = vmatprep.subr.bf16.mxu0 0
    %4857 = vmatpush1.bf16.msra.mxu0 0
    %4858 = vmatprep.mubr.bf16.mxu0 0
    %4859 = vmatmul.mubr.bf16.gmra.mrb[0].mxu0 %v4728
    %v4860 = vpop.f32.mrb[0].mxu0
    %v4861 = vadd.f32 0.0, %v4860
    %v4862 = vpop.f32.mrb[0].mxu0
    %v4863 = vadd.f32 0.0, %v4862
    %v4864 = vpop.f32.mrb[0].mxu0
    %v4865 = vadd.f32 0.0, %v4864
    %v4866 = vpop.f32.mrb[0].mxu0
    %v4867 = vadd.f32 0.0, %v4866
    %4868 = vdwg.mxu0
    %v4869 = vadd.f32 %v4579, %v4861
    %v4870 = vadd.f32 %v4580, %v4863
    %v4871 = vadd.f32 %v4581, %v4865
    %v4872 = vadd.f32 %v4582, %v4867
    %v4873 = vld [vmem:[#allocation3 + $0x70] sm:$0xff]
    %s4874 = scalar_lea.vmem [#allocation12], 1792
    %v4875 = vld [vmem:[%s4874] sm:$0xff]
    %v4876 = vld [vmem:[%s4874 + $0x8] sm:$0xff]
    %v4877 = vld [vmem:[%s4874 + $0x10] sm:$0xff]
    %v4878 = vld [vmem:[%s4874 + $0x18] sm:$0xff]
    %v4879 = vld [vmem:[%s4874 + $0x20] sm:$0xff]
    %v4880 = vld [vmem:[%s4874 + $0x28] sm:$0xff]
    %v4881 = vld [vmem:[%s4874 + $0x30] sm:$0xff]
    %v4882 = vld [vmem:[%s4874 + $0x38] sm:$0xff]
    %v4883 = vld [vmem:[%s4874 + $0x40] sm:$0xff]
    %v4884 = vld [vmem:[%s4874 + $0x48] sm:$0xff]
    %v4885 = vld [vmem:[%s4874 + $0x50] sm:$0xff]
    %v4886 = vld [vmem:[%s4874 + $0x58] sm:$0xff]
    %v4887 = vld [vmem:[%s4874 + $0x60] sm:$0xff]
    %v4888 = vld [vmem:[%s4874 + $0x68] sm:$0xff]
    %v4889 = vld [vmem:[%s4874 + $0x70] sm:$0xff]
    %v4890 = vld [vmem:[%s4874 + $0x78] sm:$0xff]
    %v4907 = vunpack.c.l.b16 %v4875
    %v4908 = vunpack.c.h.b16 %v4875
    %v4909 = vunpack.c.l.b16 %v4876
    %v4910 = vunpack.c.h.b16 %v4876
    %v4911 = vunpack.c.l.b16 %v4877
    %v4912 = vunpack.c.h.b16 %v4877
    %v4913 = vunpack.c.l.b16 %v4878
    %v4914 = vunpack.c.h.b16 %v4878
    %v4915 = vunpack.c.l.b16 %v4879
    %v4916 = vunpack.c.h.b16 %v4879
    %v4917 = vunpack.c.l.b16 %v4880
    %v4918 = vunpack.c.h.b16 %v4880
    %v4919 = vunpack.c.l.b16 %v4881
    %v4920 = vunpack.c.h.b16 %v4881
    %v4921 = vunpack.c.l.b16 %v4882
    %v4922 = vunpack.c.h.b16 %v4882
    %v4923 = vunpack.c.l.b16 %v4883
    %v4924 = vunpack.c.h.b16 %v4883
    %v4925 = vunpack.c.l.b16 %v4884
    %v4926 = vunpack.c.h.b16 %v4884
    %v4927 = vunpack.c.l.b16 %v4885
    %v4928 = vunpack.c.h.b16 %v4885
    %v4929 = vunpack.c.l.b16 %v4886
    %v4930 = vunpack.c.h.b16 %v4886
    %v4931 = vunpack.c.l.b16 %v4887
    %v4932 = vunpack.c.h.b16 %v4887
    %v4933 = vunpack.c.l.b16 %v4888
    %v4934 = vunpack.c.h.b16 %v4888
    %v4935 = vunpack.c.l.b16 %v4889
    %v4936 = vunpack.c.h.b16 %v4889
    %v4937 = vunpack.c.l.b16 %v4890
    %v4938 = vunpack.c.h.b16 %v4890
    %v4939 = vpack.c.b16 %v4909, %v4907
    %v4940 = vpack.c.b16 %v4910, %v4908
    %v4941 = vpack.c.b16 %v4913, %v4911
    %v4942 = vpack.c.b16 %v4914, %v4912
    %v4943 = vpack.c.b16 %v4917, %v4915
    %v4944 = vpack.c.b16 %v4918, %v4916
    %v4945 = vpack.c.b16 %v4921, %v4919
    %v4946 = vpack.c.b16 %v4922, %v4920
    %v4947 = vpack.c.b16 %v4925, %v4923
    %v4948 = vpack.c.b16 %v4926, %v4924
    %v4949 = vpack.c.b16 %v4929, %v4927
    %v4950 = vpack.c.b16 %v4930, %v4928
    %v4951 = vpack.c.b16 %v4933, %v4931
    %v4952 = vpack.c.b16 %v4934, %v4932
    %v4953 = vpack.c.b16 %v4937, %v4935
    %v4954 = vpack.c.b16 %v4938, %v4936
    %4971 = vmatprep.subr.bf16.mxu0 %v4940
    %4972 = vmatpush1.bf16.msra.mxu0 %v4939
    %4973 = vmatprep.subr.bf16.mxu0 %v4942
    %4974 = vmatpush1.bf16.msra.mxu0 %v4941
    %4975 = vmatprep.subr.bf16.mxu0 %v4944
    %4976 = vmatpush1.bf16.msra.mxu0 %v4943
    %4977 = vmatprep.subr.bf16.mxu0 %v4946
    %4978 = vmatpush1.bf16.msra.mxu0 %v4945
    %4979 = vmatprep.subr.bf16.mxu0 %v4948
    %4980 = vmatpush1.bf16.msra.mxu0 %v4947
    %4981 = vmatprep.subr.bf16.mxu0 %v4950
    %4982 = vmatpush1.bf16.msra.mxu0 %v4949
    %4983 = vmatprep.subr.bf16.mxu0 %v4952
    %4984 = vmatpush1.bf16.msra.mxu0 %v4951
    %4985 = vmatprep.subr.bf16.mxu0 %v4954
    %4986 = vmatpush1.bf16.msra.mxu0 %v4953
    %4987 = vmatprep.subr.bf16.mxu0 0
    %4988 = vmatpush1.bf16.msra.mxu0 0
    %4989 = vmatprep.subr.bf16.mxu0 0
    %4990 = vmatpush1.bf16.msra.mxu0 0
    %4991 = vmatprep.subr.bf16.mxu0 0
    %4992 = vmatpush1.bf16.msra.mxu0 0
    %4993 = vmatprep.subr.bf16.mxu0 0
    %4994 = vmatpush1.bf16.msra.mxu0 0
    %4995 = vmatprep.subr.bf16.mxu0 0
    %4996 = vmatpush1.bf16.msra.mxu0 0
    %4997 = vmatprep.subr.bf16.mxu0 0
    %4998 = vmatpush1.bf16.msra.mxu0 0
    %4999 = vmatprep.subr.bf16.mxu0 0
    %5000 = vmatpush1.bf16.msra.mxu0 0
    %5001 = vmatprep.subr.bf16.mxu0 0
    %5002 = vmatpush1.bf16.msra.mxu0 0
    %5003 = vmatprep.mubr.bf16.mxu0 0
    %5004 = vmatmul.mubr.bf16.gmra.mrb[0].mxu0 %v4873
    %v5005 = vpop.f32.mrb[0].mxu0
    %v5006 = vadd.f32 0.0, %v5005
    %v5007 = vpop.f32.mrb[0].mxu0
    %v5008 = vadd.f32 0.0, %v5007
    %v5009 = vpop.f32.mrb[0].mxu0
    %v5010 = vadd.f32 0.0, %v5009
    %v5011 = vpop.f32.mrb[0].mxu0
    %v5012 = vadd.f32 0.0, %v5011
    %5013 = vdwg.mxu0
    %v5014 = vadd.f32 %v4724, %v5006
    %v5015 = vadd.f32 %v4725, %v5008
    %v5016 = vadd.f32 %v4726, %v5010
    %v5017 = vadd.f32 %v4727, %v5012
    %v5018 = vld [vmem:[#allocation3 + $0x78] sm:$0xff]
    %s5019 = scalar_lea.vmem [#allocation12], 1920
    %v5020 = vld [vmem:[%s5019] sm:$0xff]
    %v5021 = vld [vmem:[%s5019 + $0x8] sm:$0xff]
    %v5022 = vld [vmem:[%s5019 + $0x10] sm:$0xff]
    %v5023 = vld [vmem:[%s5019 + $0x18] sm:$0xff]
    %v5024 = vld [vmem:[%s5019 + $0x20] sm:$0xff]
    %v5025 = vld [vmem:[%s5019 + $0x28] sm:$0xff]
    %v5026 = vld [vmem:[%s5019 + $0x30] sm:$0xff]
    %v5027 = vld [vmem:[%s5019 + $0x38] sm:$0xff]
    %v5028 = vld [vmem:[%s5019 + $0x40] sm:$0xff]
    %v5029 = vld [vmem:[%s5019 + $0x48] sm:$0xff]
    %v5030 = vld [vmem:[%s5019 + $0x50] sm:$0xff]
    %v5031 = vld [vmem:[%s5019 + $0x58] sm:$0xff]
    %v5032 = vld [vmem:[%s5019 + $0x60] sm:$0xff]
    %v5033 = vld [vmem:[%s5019 + $0x68] sm:$0xff]
    %v5034 = vld [vmem:[%s5019 + $0x70] sm:$0xff]
    %v5035 = vld [vmem:[%s5019 + $0x78] sm:$0xff]
    %v5052 = vunpack.c.l.b16 %v5020
    %v5053 = vunpack.c.h.b16 %v5020
    %v5054 = vunpack.c.l.b16 %v5021
    %v5055 = vunpack.c.h.b16 %v5021
    %v5056 = vunpack.c.l.b16 %v5022
    %v5057 = vunpack.c.h.b16 %v5022
    %v5058 = vunpack.c.l.b16 %v5023
    %v5059 = vunpack.c.h.b16 %v5023
    %v5060 = vunpack.c.l.b16 %v5024
    %v5061 = vunpack.c.h.b16 %v5024
    %v5062 = vunpack.c.l.b16 %v5025
    %v5063 = vunpack.c.h.b16 %v5025
    %v5064 = vunpack.c.l.b16 %v5026
    %v5065 = vunpack.c.h.b16 %v5026
    %v5066 = vunpack.c.l.b16 %v5027
    %v5067 = vunpack.c.h.b16 %v5027
    %v5068 = vunpack.c.l.b16 %v5028
    %v5069 = vunpack.c.h.b16 %v5028
    %v5070 = vunpack.c.l.b16 %v5029
    %v5071 = vunpack.c.h.b16 %v5029
    %v5072 = vunpack.c.l.b16 %v5030
    %v5073 = vunpack.c.h.b16 %v5030
    %v5074 = vunpack.c.l.b16 %v5031
    %v5075 = vunpack.c.h.b16 %v5031
    %v5076 = vunpack.c.l.b16 %v5032
    %v5077 = vunpack.c.h.b16 %v5032
    %v5078 = vunpack.c.l.b16 %v5033
    %v5079 = vunpack.c.h.b16 %v5033
    %v5080 = vunpack.c.l.b16 %v5034
    %v5081 = vunpack.c.h.b16 %v5034
    %v5082 = vunpack.c.l.b16 %v5035
    %v5083 = vunpack.c.h.b16 %v5035
    %v5084 = vpack.c.b16 %v5054, %v5052
    %v5085 = vpack.c.b16 %v5055, %v5053
    %v5086 = vpack.c.b16 %v5058, %v5056
    %v5087 = vpack.c.b16 %v5059, %v5057
    %v5088 = vpack.c.b16 %v5062, %v5060
    %v5089 = vpack.c.b16 %v5063, %v5061
    %v5090 = vpack.c.b16 %v5066, %v5064
    %v5091 = vpack.c.b16 %v5067, %v5065
    %v5092 = vpack.c.b16 %v5070, %v5068
    %v5093 = vpack.c.b16 %v5071, %v5069
    %v5094 = vpack.c.b16 %v5074, %v5072
    %v5095 = vpack.c.b16 %v5075, %v5073
    %v5096 = vpack.c.b16 %v5078, %v5076
    %v5097 = vpack.c.b16 %v5079, %v5077
    %v5098 = vpack.c.b16 %v5082, %v5080
    %v5099 = vpack.c.b16 %v5083, %v5081
    %5116 = vmatprep.subr.bf16.mxu0 %v5085
    %5117 = vmatpush1.bf16.msra.mxu0 %v5084
    %5118 = vmatprep.subr.bf16.mxu0 %v5087
    %5119 = vmatpush1.bf16.msra.mxu0 %v5086
    %5120 = vmatprep.subr.bf16.mxu0 %v5089
    %5121 = vmatpush1.bf16.msra.mxu0 %v5088
    %5122 = vmatprep.subr.bf16.mxu0 %v5091
    %5123 = vmatpush1.bf16.msra.mxu0 %v5090
    %5124 = vmatprep.subr.bf16.mxu0 %v5093
    %5125 = vmatpush1.bf16.msra.mxu0 %v5092
    %5126 = vmatprep.subr.bf16.mxu0 %v5095
    %5127 = vmatpush1.bf16.msra.mxu0 %v5094
    %5128 = vmatprep.subr.bf16.mxu0 %v5097
    %5129 = vmatpush1.bf16.msra.mxu0 %v5096
    %5130 = vmatprep.subr.bf16.mxu0 %v5099
    %5131 = vmatpush1.bf16.msra.mxu0 %v5098
    %5132 = vmatprep.subr.bf16.mxu0 0
    %5133 = vmatpush1.bf16.msra.mxu0 0
    %5134 = vmatprep.subr.bf16.mxu0 0
    %5135 = vmatpush1.bf16.msra.mxu0 0
    %5136 = vmatprep.subr.bf16.mxu0 0
    %5137 = vmatpush1.bf16.msra.mxu0 0
    %5138 = vmatprep.subr.bf16.mxu0 0
    %5139 = vmatpush1.bf16.msra.mxu0 0
    %5140 = vmatprep.subr.bf16.mxu0 0
    %5141 = vmatpush1.bf16.msra.mxu0 0
    %5142 = vmatprep.subr.bf16.mxu0 0
    %5143 = vmatpush1.bf16.msra.mxu0 0
    %5144 = vmatprep.subr.bf16.mxu0 0
    %5145 = vmatpush1.bf16.msra.mxu0 0
    %5146 = vmatprep.subr.bf16.mxu0 0
    %5147 = vmatpush1.bf16.msra.mxu0 0
    %5148 = vmatprep.mubr.bf16.mxu0 0
    %5149 = vmatmul.mubr.bf16.gmra.mrb[0].mxu0 %v5018
    %v5150 = vpop.f32.mrb[0].mxu0
    %v5151 = vadd.f32 0.0, %v5150
    %v5152 = vpop.f32.mrb[0].mxu0
    %v5153 = vadd.f32 0.0, %v5152
    %v5154 = vpop.f32.mrb[0].mxu0
    %v5155 = vadd.f32 0.0, %v5154
    %v5156 = vpop.f32.mrb[0].mxu0
    %v5157 = vadd.f32 0.0, %v5156
    %5158 = vdwg.mxu0
    %v5159 = vadd.f32 %v4869, %v5151
    %v5160 = vadd.f32 %v4870, %v5153
    %v5161 = vadd.f32 %v4871, %v5155
    %v5162 = vadd.f32 %v4872, %v5157
    %v5163 = vld [vmem:[#allocation3 + $0x80] sm:$0xff]
    %s5164 = scalar_lea.vmem [#allocation12], 2048
    %v5165 = vld [vmem:[%s5164] sm:$0xff]
    %v5166 = vld [vmem:[%s5164 + $0x8] sm:$0xff]
    %v5167 = vld [vmem:[%s5164 + $0x10] sm:$0xff]
    %v5168 = vld [vmem:[%s5164 + $0x18] sm:$0xff]
    %v5169 = vld [vmem:[%s5164 + $0x20] sm:$0xff]
    %v5170 = vld [vmem:[%s5164 + $0x28] sm:$0xff]
    %v5171 = vld [vmem:[%s5164 + $0x30] sm:$0xff]
    %v5172 = vld [vmem:[%s5164 + $0x38] sm:$0xff]
    %v5173 = vld [vmem:[%s5164 + $0x40] sm:$0xff]
    %v5174 = vld [vmem:[%s5164 + $0x48] sm:$0xff]
    %v5175 = vld [vmem:[%s5164 + $0x50] sm:$0xff]
    %v5176 = vld [vmem:[%s5164 + $0x58] sm:$0xff]
    %v5177 = vld [vmem:[%s5164 + $0x60] sm:$0xff]
    %v5178 = vld [vmem:[%s5164 + $0x68] sm:$0xff]
    %v5179 = vld [vmem:[%s5164 + $0x70] sm:$0xff]
    %v5180 = vld [vmem:[%s5164 + $0x78] sm:$0xff]
    %v5197 = vunpack.c.l.b16 %v5165
    %v5198 = vunpack.c.h.b16 %v5165
    %v5199 = vunpack.c.l.b16 %v5166
    %v5200 = vunpack.c.h.b16 %v5166
    %v5201 = vunpack.c.l.b16 %v5167
    %v5202 = vunpack.c.h.b16 %v5167
    %v5203 = vunpack.c.l.b16 %v5168
    %v5204 = vunpack.c.h.b16 %v5168
    %v5205 = vunpack.c.l.b16 %v5169
    %v5206 = vunpack.c.h.b16 %v5169
    %v5207 = vunpack.c.l.b16 %v5170
    %v5208 = vunpack.c.h.b16 %v5170
    %v5209 = vunpack.c.l.b16 %v5171
    %v5210 = vunpack.c.h.b16 %v5171
    %v5211 = vunpack.c.l.b16 %v5172
    %v5212 = vunpack.c.h.b16 %v5172
    %v5213 = vunpack.c.l.b16 %v5173
    %v5214 = vunpack.c.h.b16 %v5173
    %v5215 = vunpack.c.l.b16 %v5174
    %v5216 = vunpack.c.h.b16 %v5174
    %v5217 = vunpack.c.l.b16 %v5175
    %v5218 = vunpack.c.h.b16 %v5175
    %v5219 = vunpack.c.l.b16 %v5176
    %v5220 = vunpack.c.h.b16 %v5176
    %v5221 = vunpack.c.l.b16 %v5177
    %v5222 = vunpack.c.h.b16 %v5177
    %v5223 = vunpack.c.l.b16 %v5178
    %v5224 = vunpack.c.h.b16 %v5178
    %v5225 = vunpack.c.l.b16 %v5179
    %v5226 = vunpack.c.h.b16 %v5179
    %v5227 = vunpack.c.l.b16 %v5180
    %v5228 = vunpack.c.h.b16 %v5180
    %v5229 = vpack.c.b16 %v5199, %v5197
    %v5230 = vpack.c.b16 %v5200, %v5198
    %v5231 = vpack.c.b16 %v5203, %v5201
    %v5232 = vpack.c.b16 %v5204, %v5202
    %v5233 = vpack.c.b16 %v5207, %v5205
    %v5234 = vpack.c.b16 %v5208, %v5206
    %v5235 = vpack.c.b16 %v5211, %v5209
    %v5236 = vpack.c.b16 %v5212, %v5210
    %v5237 = vpack.c.b16 %v5215, %v5213
    %v5238 = vpack.c.b16 %v5216, %v5214
    %v5239 = vpack.c.b16 %v5219, %v5217
    %v5240 = vpack.c.b16 %v5220, %v5218
    %v5241 = vpack.c.b16 %v5223, %v5221
    %v5242 = vpack.c.b16 %v5224, %v5222
    %v5243 = vpack.c.b16 %v5227, %v5225
    %v5244 = vpack.c.b16 %v5228, %v5226
    %5261 = vmatprep.subr.bf16.mxu0 %v5230
    %5262 = vmatpush1.bf16.msra.mxu0 %v5229
    %5263 = vmatprep.subr.bf16.mxu0 %v5232
    %5264 = vmatpush1.bf16.msra.mxu0 %v5231
    %5265 = vmatprep.subr.bf16.mxu0 %v5234
    %5266 = vmatpush1.bf16.msra.mxu0 %v5233
    %5267 = vmatprep.subr.bf16.mxu0 %v5236
    %5268 = vmatpush1.bf16.msra.mxu0 %v5235
    %5269 = vmatprep.subr.bf16.mxu0 %v5238
    %5270 = vmatpush1.bf16.msra.mxu0 %v5237
    %5271 = vmatprep.subr.bf16.mxu0 %v5240
    %5272 = vmatpush1.bf16.msra.mxu0 %v5239
    %5273 = vmatprep.subr.bf16.mxu0 %v5242
    %5274 = vmatpush1.bf16.msra.mxu0 %v5241
    %5275 = vmatprep.subr.bf16.mxu0 %v5244
    %5276 = vmatpush1.bf16.msra.mxu0 %v5243
    %5277 = vmatprep.subr.bf16.mxu0 0
    %5278 = vmatpush1.bf16.msra.mxu0 0
    %5279 = vmatprep.subr.bf16.mxu0 0
    %5280 = vmatpush1.bf16.msra.mxu0 0
    %5281 = vmatprep.subr.bf16.mxu0 0
    %5282 = vmatpush1.bf16.msra.mxu0 0
    %5283 = vmatprep.subr.bf16.mxu0 0
    %5284 = vmatpush1.bf16.msra.mxu0 0
    %5285 = vmatprep.subr.bf16.mxu0 0
    %5286 = vmatpush1.bf16.msra.mxu0 0
    %5287 = vmatprep.subr.bf16.mxu0 0
    %5288 = vmatpush1.bf16.msra.mxu0 0
    %5289 = vmatprep.subr.bf16.mxu0 0
    %5290 = vmatpush1.bf16.msra.mxu0 0
    %5291 = vmatprep.subr.bf16.mxu0 0
    %5292 = vmatpush1.bf16.msra.mxu0 0
    %5293 = vmatprep.mubr.bf16.mxu0 0
    %5294 = vmatmul.mubr.bf16.gmra.mrb[0].mxu0 %v5163
    %v5295 = vpop.f32.mrb[0].mxu0
    %v5296 = vadd.f32 0.0, %v5295
    %v5297 = vpop.f32.mrb[0].mxu0
    %v5298 = vadd.f32 0.0, %v5297
    %v5299 = vpop.f32.mrb[0].mxu0
    %v5300 = vadd.f32 0.0, %v5299
    %v5301 = vpop.f32.mrb[0].mxu0
    %v5302 = vadd.f32 0.0, %v5301
    %5303 = vdwg.mxu0
    %v5304 = vadd.f32 %v5014, %v5296
    %v5305 = vadd.f32 %v5015, %v5298
    %v5306 = vadd.f32 %v5016, %v5300
    %v5307 = vadd.f32 %v5017, %v5302
    %v5308 = vld [vmem:[#allocation3 + $0x88] sm:$0xff]
    %s5309 = scalar_lea.vmem [#allocation12], 2176
    %v5310 = vld [vmem:[%s5309] sm:$0xff]
    %v5311 = vld [vmem:[%s5309 + $0x8] sm:$0xff]
    %v5312 = vld [vmem:[%s5309 + $0x10] sm:$0xff]
    %v5313 = vld [vmem:[%s5309 + $0x18] sm:$0xff]
    %v5314 = vld [vmem:[%s5309 + $0x20] sm:$0xff]
    %v5315 = vld [vmem:[%s5309 + $0x28] sm:$0xff]
    %v5316 = vld [vmem:[%s5309 + $0x30] sm:$0xff]
    %v5317 = vld [vmem:[%s5309 + $0x38] sm:$0xff]
    %v5318 = vld [vmem:[%s5309 + $0x40] sm:$0xff]
    %v5319 = vld [vmem:[%s5309 + $0x48] sm:$0xff]
    %v5320 = vld [vmem:[%s5309 + $0x50] sm:$0xff]
    %v5321 = vld [vmem:[%s5309 + $0x58] sm:$0xff]
    %v5322 = vld [vmem:[%s5309 + $0x60] sm:$0xff]
    %v5323 = vld [vmem:[%s5309 + $0x68] sm:$0xff]
    %v5324 = vld [vmem:[%s5309 + $0x70] sm:$0xff]
    %v5325 = vld [vmem:[%s5309 + $0x78] sm:$0xff]
    %v5342 = vunpack.c.l.b16 %v5310
    %v5343 = vunpack.c.h.b16 %v5310
    %v5344 = vunpack.c.l.b16 %v5311
    %v5345 = vunpack.c.h.b16 %v5311
    %v5346 = vunpack.c.l.b16 %v5312
    %v5347 = vunpack.c.h.b16 %v5312
    %v5348 = vunpack.c.l.b16 %v5313
    %v5349 = vunpack.c.h.b16 %v5313
    %v5350 = vunpack.c.l.b16 %v5314
    %v5351 = vunpack.c.h.b16 %v5314
    %v5352 = vunpack.c.l.b16 %v5315
    %v5353 = vunpack.c.h.b16 %v5315
    %v5354 = vunpack.c.l.b16 %v5316
    %v5355 = vunpack.c.h.b16 %v5316
    %v5356 = vunpack.c.l.b16 %v5317
    %v5357 = vunpack.c.h.b16 %v5317
    %v5358 = vunpack.c.l.b16 %v5318
    %v5359 = vunpack.c.h.b16 %v5318
    %v5360 = vunpack.c.l.b16 %v5319
    %v5361 = vunpack.c.h.b16 %v5319
    %v5362 = vunpack.c.l.b16 %v5320
    %v5363 = vunpack.c.h.b16 %v5320
    %v5364 = vunpack.c.l.b16 %v5321
    %v5365 = vunpack.c.h.b16 %v5321
    %v5366 = vunpack.c.l.b16 %v5322
    %v5367 = vunpack.c.h.b16 %v5322
    %v5368 = vunpack.c.l.b16 %v5323
    %v5369 = vunpack.c.h.b16 %v5323
    %v5370 = vunpack.c.l.b16 %v5324
    %v5371 = vunpack.c.h.b16 %v5324
    %v5372 = vunpack.c.l.b16 %v5325
    %v5373 = vunpack.c.h.b16 %v5325
    %v5374 = vpack.c.b16 %v5344, %v5342
    %v5375 = vpack.c.b16 %v5345, %v5343
    %v5376 = vpack.c.b16 %v5348, %v5346
    %v5377 = vpack.c.b16 %v5349, %v5347
    %v5378 = vpack.c.b16 %v5352, %v5350
    %v5379 = vpack.c.b16 %v5353, %v5351
    %v5380 = vpack.c.b16 %v5356, %v5354
    %v5381 = vpack.c.b16 %v5357, %v5355
    %v5382 = vpack.c.b16 %v5360, %v5358
    %v5383 = vpack.c.b16 %v5361, %v5359
    %v5384 = vpack.c.b16 %v5364, %v5362
    %v5385 = vpack.c.b16 %v5365, %v5363
    %v5386 = vpack.c.b16 %v5368, %v5366
    %v5387 = vpack.c.b16 %v5369, %v5367
    %v5388 = vpack.c.b16 %v5372, %v5370
    %v5389 = vpack.c.b16 %v5373, %v5371
    %5406 = vmatprep.subr.bf16.mxu0 %v5375
    %5407 = vmatpush1.bf16.msra.mxu0 %v5374
    %5408 = vmatprep.subr.bf16.mxu0 %v5377
    %5409 = vmatpush1.bf16.msra.mxu0 %v5376
    %5410 = vmatprep.subr.bf16.mxu0 %v5379
    %5411 = vmatpush1.bf16.msra.mxu0 %v5378
    %5412 = vmatprep.subr.bf16.mxu0 %v5381
    %5413 = vmatpush1.bf16.msra.mxu0 %v5380
    %5414 = vmatprep.subr.bf16.mxu0 %v5383
    %5415 = vmatpush1.bf16.msra.mxu0 %v5382
    %5416 = vmatprep.subr.bf16.mxu0 %v5385
    %5417 = vmatpush1.bf16.msra.mxu0 %v5384
    %5418 = vmatprep.subr.bf16.mxu0 %v5387
    %5419 = vmatpush1.bf16.msra.mxu0 %v5386
    %5420 = vmatprep.subr.bf16.mxu0 %v5389
    %5421 = vmatpush1.bf16.msra.mxu0 %v5388
    %5422 = vmatprep.subr.bf16.mxu0 0
    %5423 = vmatpush1.bf16.msra.mxu0 0
    %5424 = vmatprep.subr.bf16.mxu0 0
    %5425 = vmatpush1.bf16.msra.mxu0 0
    %5426 = vmatprep.subr.bf16.mxu0 0
    %5427 = vmatpush1.bf16.msra.mxu0 0
    %5428 = vmatprep.subr.bf16.mxu0 0
    %5429 = vmatpush1.bf16.msra.mxu0 0
    %5430 = vmatprep.subr.bf16.mxu0 0
    %5431 = vmatpush1.bf16.msra.mxu0 0
    %5432 = vmatprep.subr.bf16.mxu0 0
    %5433 = vmatpush1.bf16.msra.mxu0 0
    %5434 = vmatprep.subr.bf16.mxu0 0
    %5435 = vmatpush1.bf16.msra.mxu0 0
    %5436 = vmatprep.subr.bf16.mxu0 0
    %5437 = vmatpush1.bf16.msra.mxu0 0
    %5438 = vmatprep.mubr.bf16.mxu0 0
    %5439 = vmatmul.mubr.bf16.gmra.mrb[0].mxu0 %v5308
    %v5440 = vpop.f32.mrb[0].mxu0
    %v5441 = vadd.f32 0.0, %v5440
    %v5442 = vpop.f32.mrb[0].mxu0
    %v5443 = vadd.f32 0.0, %v5442
    %v5444 = vpop.f32.mrb[0].mxu0
    %v5445 = vadd.f32 0.0, %v5444
    %v5446 = vpop.f32.mrb[0].mxu0
    %v5447 = vadd.f32 0.0, %v5446
    %5448 = vdwg.mxu0
    %v5449 = vadd.f32 %v5159, %v5441
    %v5450 = vadd.f32 %v5160, %v5443
    %v5451 = vadd.f32 %v5161, %v5445
    %v5452 = vadd.f32 %v5162, %v5447
    %v5453 = vld [vmem:[#allocation3 + $0x90] sm:$0xff]
    %s5454 = scalar_lea.vmem [#allocation12], 2304
    %v5455 = vld [vmem:[%s5454] sm:$0xff]
    %v5456 = vld [vmem:[%s5454 + $0x8] sm:$0xff]
    %v5457 = vld [vmem:[%s5454 + $0x10] sm:$0xff]
    %v5458 = vld [vmem:[%s5454 + $0x18] sm:$0xff]
    %v5459 = vld [vmem:[%s5454 + $0x20] sm:$0xff]
    %v5460 = vld [vmem:[%s5454 + $0x28] sm:$0xff]
    %v5461 = vld [vmem:[%s5454 + $0x30] sm:$0xff]
    %v5462 = vld [vmem:[%s5454 + $0x38] sm:$0xff]
    %v5463 = vld [vmem:[%s5454 + $0x40] sm:$0xff]
    %v5464 = vld [vmem:[%s5454 + $0x48] sm:$0xff]
    %v5465 = vld [vmem:[%s5454 + $0x50] sm:$0xff]
    %v5466 = vld [vmem:[%s5454 + $0x58] sm:$0xff]
    %v5467 = vld [vmem:[%s5454 + $0x60] sm:$0xff]
    %v5468 = vld [vmem:[%s5454 + $0x68] sm:$0xff]
    %v5469 = vld [vmem:[%s5454 + $0x70] sm:$0xff]
    %v5470 = vld [vmem:[%s5454 + $0x78] sm:$0xff]
    %v5487 = vunpack.c.l.b16 %v5455
    %v5488 = vunpack.c.h.b16 %v5455
    %v5489 = vunpack.c.l.b16 %v5456
    %v5490 = vunpack.c.h.b16 %v5456
    %v5491 = vunpack.c.l.b16 %v5457
    %v5492 = vunpack.c.h.b16 %v5457
    %v5493 = vunpack.c.l.b16 %v5458
    %v5494 = vunpack.c.h.b16 %v5458
    %v5495 = vunpack.c.l.b16 %v5459
    %v5496 = vunpack.c.h.b16 %v5459
    %v5497 = vunpack.c.l.b16 %v5460
    %v5498 = vunpack.c.h.b16 %v5460
    %v5499 = vunpack.c.l.b16 %v5461
    %v5500 = vunpack.c.h.b16 %v5461
    %v5501 = vunpack.c.l.b16 %v5462
    %v5502 = vunpack.c.h.b16 %v5462
    %v5503 = vunpack.c.l.b16 %v5463
    %v5504 = vunpack.c.h.b16 %v5463
    %v5505 = vunpack.c.l.b16 %v5464
    %v5506 = vunpack.c.h.b16 %v5464
    %v5507 = vunpack.c.l.b16 %v5465
    %v5508 = vunpack.c.h.b16 %v5465
    %v5509 = vunpack.c.l.b16 %v5466
    %v5510 = vunpack.c.h.b16 %v5466
    %v5511 = vunpack.c.l.b16 %v5467
    %v5512 = vunpack.c.h.b16 %v5467
    %v5513 = vunpack.c.l.b16 %v5468
    %v5514 = vunpack.c.h.b16 %v5468
    %v5515 = vunpack.c.l.b16 %v5469
    %v5516 = vunpack.c.h.b16 %v5469
    %v5517 = vunpack.c.l.b16 %v5470
    %v5518 = vunpack.c.h.b16 %v5470
    %v5519 = vpack.c.b16 %v5489, %v5487
    %v5520 = vpack.c.b16 %v5490, %v5488
    %v5521 = vpack.c.b16 %v5493, %v5491
    %v5522 = vpack.c.b16 %v5494, %v5492
    %v5523 = vpack.c.b16 %v5497, %v5495
    %v5524 = vpack.c.b16 %v5498, %v5496
    %v5525 = vpack.c.b16 %v5501, %v5499
    %v5526 = vpack.c.b16 %v5502, %v5500
    %v5527 = vpack.c.b16 %v5505, %v5503
    %v5528 = vpack.c.b16 %v5506, %v5504
    %v5529 = vpack.c.b16 %v5509, %v5507
    %v5530 = vpack.c.b16 %v5510, %v5508
    %v5531 = vpack.c.b16 %v5513, %v5511
    %v5532 = vpack.c.b16 %v5514, %v5512
    %v5533 = vpack.c.b16 %v5517, %v5515
    %v5534 = vpack.c.b16 %v5518, %v5516
    %5551 = vmatprep.subr.bf16.mxu0 %v5520
    %5552 = vmatpush1.bf16.msra.mxu0 %v5519
    %5553 = vmatprep.subr.bf16.mxu0 %v5522
    %5554 = vmatpush1.bf16.msra.mxu0 %v5521
    %5555 = vmatprep.subr.bf16.mxu0 %v5524
    %5556 = vmatpush1.bf16.msra.mxu0 %v5523
    %5557 = vmatprep.subr.bf16.mxu0 %v5526
    %5558 = vmatpush1.bf16.msra.mxu0 %v5525
    %5559 = vmatprep.subr.bf16.mxu0 %v5528
    %5560 = vmatpush1.bf16.msra.mxu0 %v5527
    %5561 = vmatprep.subr.bf16.mxu0 %v5530
    %5562 = vmatpush1.bf16.msra.mxu0 %v5529
    %5563 = vmatprep.subr.bf16.mxu0 %v5532
    %5564 = vmatpush1.bf16.msra.mxu0 %v5531
    %5565 = vmatprep.subr.bf16.mxu0 %v5534
    %5566 = vmatpush1.bf16.msra.mxu0 %v5533
    %5567 = vmatprep.subr.bf16.mxu0 0
    %5568 = vmatpush1.bf16.msra.mxu0 0
    %5569 = vmatprep.subr.bf16.mxu0 0
    %5570 = vmatpush1.bf16.msra.mxu0 0
    %5571 = vmatprep.subr.bf16.mxu0 0
    %5572 = vmatpush1.bf16.msra.mxu0 0
    %5573 = vmatprep.subr.bf16.mxu0 0
    %5574 = vmatpush1.bf16.msra.mxu0 0
    %5575 = vmatprep.subr.bf16.mxu0 0
    %5576 = vmatpush1.bf16.msra.mxu0 0
    %5577 = vmatprep.subr.bf16.mxu0 0
    %5578 = vmatpush1.bf16.msra.mxu0 0
    %5579 = vmatprep.subr.bf16.mxu0 0
    %5580 = vmatpush1.bf16.msra.mxu0 0
    %5581 = vmatprep.subr.bf16.mxu0 0
    %5582 = vmatpush1.bf16.msra.mxu0 0
    %5583 = vmatprep.mubr.bf16.mxu0 0
    %5584 = vmatmul.mubr.bf16.gmra.mrb[0].mxu0 %v5453
    %v5585 = vpop.f32.mrb[0].mxu0
    %v5586 = vadd.f32 0.0, %v5585
    %v5587 = vpop.f32.mrb[0].mxu0
    %v5588 = vadd.f32 0.0, %v5587
    %v5589 = vpop.f32.mrb[0].mxu0
    %v5590 = vadd.f32 0.0, %v5589
    %v5591 = vpop.f32.mrb[0].mxu0
    %v5592 = vadd.f32 0.0, %v5591
    %5593 = vdwg.mxu0
    %v5594 = vadd.f32 %v5304, %v5586
    %v5595 = vadd.f32 %v5305, %v5588
    %v5596 = vadd.f32 %v5306, %v5590
    %v5597 = vadd.f32 %v5307, %v5592
    %v5598 = vld [vmem:[#allocation3 + $0x98] sm:$0xff]
    %s5599 = scalar_lea.vmem [#allocation12], 2432
    %v5600 = vld [vmem:[%s5599] sm:$0xff]
    %v5601 = vld [vmem:[%s5599 + $0x8] sm:$0xff]
    %v5602 = vld [vmem:[%s5599 + $0x10] sm:$0xff]
    %v5603 = vld [vmem:[%s5599 + $0x18] sm:$0xff]
    %v5604 = vld [vmem:[%s5599 + $0x20] sm:$0xff]
    %v5605 = vld [vmem:[%s5599 + $0x28] sm:$0xff]
    %v5606 = vld [vmem:[%s5599 + $0x30] sm:$0xff]
    %v5607 = vld [vmem:[%s5599 + $0x38] sm:$0xff]
    %v5608 = vld [vmem:[%s5599 + $0x40] sm:$0xff]
    %v5609 = vld [vmem:[%s5599 + $0x48] sm:$0xff]
    %v5610 = vld [vmem:[%s5599 + $0x50] sm:$0xff]
    %v5611 = vld [vmem:[%s5599 + $0x58] sm:$0xff]
    %v5612 = vld [vmem:[%s5599 + $0x60] sm:$0xff]
    %v5613 = vld [vmem:[%s5599 + $0x68] sm:$0xff]
    %v5614 = vld [vmem:[%s5599 + $0x70] sm:$0xff]
    %v5615 = vld [vmem:[%s5599 + $0x78] sm:$0xff]
    %v5632 = vunpack.c.l.b16 %v5600
    %v5633 = vunpack.c.h.b16 %v5600
    %v5634 = vunpack.c.l.b16 %v5601
    %v5635 = vunpack.c.h.b16 %v5601
    %v5636 = vunpack.c.l.b16 %v5602
    %v5637 = vunpack.c.h.b16 %v5602
    %v5638 = vunpack.c.l.b16 %v5603
    %v5639 = vunpack.c.h.b16 %v5603
    %v5640 = vunpack.c.l.b16 %v5604
    %v5641 = vunpack.c.h.b16 %v5604
    %v5642 = vunpack.c.l.b16 %v5605
    %v5643 = vunpack.c.h.b16 %v5605
    %v5644 = vunpack.c.l.b16 %v5606
    %v5645 = vunpack.c.h.b16 %v5606
    %v5646 = vunpack.c.l.b16 %v5607
    %v5647 = vunpack.c.h.b16 %v5607
    %v5648 = vunpack.c.l.b16 %v5608
    %v5649 = vunpack.c.h.b16 %v5608
    %v5650 = vunpack.c.l.b16 %v5609
    %v5651 = vunpack.c.h.b16 %v5609
    %v5652 = vunpack.c.l.b16 %v5610
    %v5653 = vunpack.c.h.b16 %v5610
    %v5654 = vunpack.c.l.b16 %v5611
    %v5655 = vunpack.c.h.b16 %v5611
    %v5656 = vunpack.c.l.b16 %v5612
    %v5657 = vunpack.c.h.b16 %v5612
    %v5658 = vunpack.c.l.b16 %v5613
    %v5659 = vunpack.c.h.b16 %v5613
    %v5660 = vunpack.c.l.b16 %v5614
    %v5661 = vunpack.c.h.b16 %v5614
    %v5662 = vunpack.c.l.b16 %v5615
    %v5663 = vunpack.c.h.b16 %v5615
    %v5664 = vpack.c.b16 %v5634, %v5632
    %v5665 = vpack.c.b16 %v5635, %v5633
    %v5666 = vpack.c.b16 %v5638, %v5636
    %v5667 = vpack.c.b16 %v5639, %v5637
    %v5668 = vpack.c.b16 %v5642, %v5640
    %v5669 = vpack.c.b16 %v5643, %v5641
    %v5670 = vpack.c.b16 %v5646, %v5644
    %v5671 = vpack.c.b16 %v5647, %v5645
    %v5672 = vpack.c.b16 %v5650, %v5648
    %v5673 = vpack.c.b16 %v5651, %v5649
    %v5674 = vpack.c.b16 %v5654, %v5652
    %v5675 = vpack.c.b16 %v5655, %v5653
    %v5676 = vpack.c.b16 %v5658, %v5656
    %v5677 = vpack.c.b16 %v5659, %v5657
    %v5678 = vpack.c.b16 %v5662, %v5660
    %v5679 = vpack.c.b16 %v5663, %v5661
    %5696 = vmatprep.subr.bf16.mxu0 %v5665
    %5697 = vmatpush1.bf16.msra.mxu0 %v5664
    %5698 = vmatprep.subr.bf16.mxu0 %v5667
    %5699 = vmatpush1.bf16.msra.mxu0 %v5666
    %5700 = vmatprep.subr.bf16.mxu0 %v5669
    %5701 = vmatpush1.bf16.msra.mxu0 %v5668
    %5702 = vmatprep.subr.bf16.mxu0 %v5671
    %5703 = vmatpush1.bf16.msra.mxu0 %v5670
    %5704 = vmatprep.subr.bf16.mxu0 %v5673
    %5705 = vmatpush1.bf16.msra.mxu0 %v5672
    %5706 = vmatprep.subr.bf16.mxu0 %v5675
    %5707 = vmatpush1.bf16.msra.mxu0 %v5674
    %5708 = vmatprep.subr.bf16.mxu0 %v5677
    %5709 = vmatpush1.bf16.msra.mxu0 %v5676
    %5710 = vmatprep.subr.bf16.mxu0 %v5679
    %5711 = vmatpush1.bf16.msra.mxu0 %v5678
    %5712 = vmatprep.subr.bf16.mxu0 0
    %5713 = vmatpush1.bf16.msra.mxu0 0
    %5714 = vmatprep.subr.bf16.mxu0 0
    %5715 = vmatpush1.bf16.msra.mxu0 0
    %5716 = vmatprep.subr.bf16.mxu0 0
    %5717 = vmatpush1.bf16.msra.mxu0 0
    %5718 = vmatprep.subr.bf16.mxu0 0
    %5719 = vmatpush1.bf16.msra.mxu0 0
    %5720 = vmatprep.subr.bf16.mxu0 0
    %5721 = vmatpush1.bf16.msra.mxu0 0
    %5722 = vmatprep.subr.bf16.mxu0 0
    %5723 = vmatpush1.bf16.msra.mxu0 0
    %5724 = vmatprep.subr.bf16.mxu0 0
    %5725 = vmatpush1.bf16.msra.mxu0 0
    %5726 = vmatprep.subr.bf16.mxu0 0
    %5727 = vmatpush1.bf16.msra.mxu0 0
    %5728 = vmatprep.mubr.bf16.mxu0 0
    %5729 = vmatmul.mubr.bf16.gmra.mrb[0].mxu0 %v5598
    %v5730 = vpop.f32.mrb[0].mxu0
    %v5731 = vadd.f32 0.0, %v5730
    %v5732 = vpop.f32.mrb[0].mxu0
    %v5733 = vadd.f32 0.0, %v5732
    %v5734 = vpop.f32.mrb[0].mxu0
    %v5735 = vadd.f32 0.0, %v5734
    %v5736 = vpop.f32.mrb[0].mxu0
    %v5737 = vadd.f32 0.0, %v5736
    %5738 = vdwg.mxu0
    %v5739 = vadd.f32 %v5449, %v5731
    %v5740 = vadd.f32 %v5450, %v5733
    %v5741 = vadd.f32 %v5451, %v5735
    %v5742 = vadd.f32 %v5452, %v5737
    %v5743 = vld [vmem:[#allocation3 + $0xa0] sm:$0xff]
    %s5744 = scalar_lea.vmem [#allocation12], 2560
    %v5745 = vld [vmem:[%s5744] sm:$0xff]
    %v5746 = vld [vmem:[%s5744 + $0x8] sm:$0xff]
    %v5747 = vld [vmem:[%s5744 + $0x10] sm:$0xff]
    %v5748 = vld [vmem:[%s5744 + $0x18] sm:$0xff]
    %v5749 = vld [vmem:[%s5744 + $0x20] sm:$0xff]
    %v5750 = vld [vmem:[%s5744 + $0x28] sm:$0xff]
    %v5751 = vld [vmem:[%s5744 + $0x30] sm:$0xff]
    %v5752 = vld [vmem:[%s5744 + $0x38] sm:$0xff]
    %v5753 = vld [vmem:[%s5744 + $0x40] sm:$0xff]
    %v5754 = vld [vmem:[%s5744 + $0x48] sm:$0xff]
    %v5755 = vld [vmem:[%s5744 + $0x50] sm:$0xff]
    %v5756 = vld [vmem:[%s5744 + $0x58] sm:$0xff]
    %v5757 = vld [vmem:[%s5744 + $0x60] sm:$0xff]
    %v5758 = vld [vmem:[%s5744 + $0x68] sm:$0xff]
    %v5759 = vld [vmem:[%s5744 + $0x70] sm:$0xff]
    %v5760 = vld [vmem:[%s5744 + $0x78] sm:$0xff]
    %v5777 = vunpack.c.l.b16 %v5745
    %v5778 = vunpack.c.h.b16 %v5745
    %v5779 = vunpack.c.l.b16 %v5746
    %v5780 = vunpack.c.h.b16 %v5746
    %v5781 = vunpack.c.l.b16 %v5747
    %v5782 = vunpack.c.h.b16 %v5747
    %v5783 = vunpack.c.l.b16 %v5748
    %v5784 = vunpack.c.h.b16 %v5748
    %v5785 = vunpack.c.l.b16 %v5749
    %v5786 = vunpack.c.h.b16 %v5749
    %v5787 = vunpack.c.l.b16 %v5750
    %v5788 = vunpack.c.h.b16 %v5750
    %v5789 = vunpack.c.l.b16 %v5751
    %v5790 = vunpack.c.h.b16 %v5751
    %v5791 = vunpack.c.l.b16 %v5752
    %v5792 = vunpack.c.h.b16 %v5752
    %v5793 = vunpack.c.l.b16 %v5753
    %v5794 = vunpack.c.h.b16 %v5753
    %v5795 = vunpack.c.l.b16 %v5754
    %v5796 = vunpack.c.h.b16 %v5754
    %v5797 = vunpack.c.l.b16 %v5755
    %v5798 = vunpack.c.h.b16 %v5755
    %v5799 = vunpack.c.l.b16 %v5756
    %v5800 = vunpack.c.h.b16 %v5756
    %v5801 = vunpack.c.l.b16 %v5757
    %v5802 = vunpack.c.h.b16 %v5757
    %v5803 = vunpack.c.l.b16 %v5758
    %v5804 = vunpack.c.h.b16 %v5758
    %v5805 = vunpack.c.l.b16 %v5759
    %v5806 = vunpack.c.h.b16 %v5759
    %v5807 = vunpack.c.l.b16 %v5760
    %v5808 = vunpack.c.h.b16 %v5760
    %v5809 = vpack.c.b16 %v5779, %v5777
    %v5810 = vpack.c.b16 %v5780, %v5778
    %v5811 = vpack.c.b16 %v5783, %v5781
    %v5812 = vpack.c.b16 %v5784, %v5782
    %v5813 = vpack.c.b16 %v5787, %v5785
    %v5814 = vpack.c.b16 %v5788, %v5786
    %v5815 = vpack.c.b16 %v5791, %v5789
    %v5816 = vpack.c.b16 %v5792, %v5790
    %v5817 = vpack.c.b16 %v5795, %v5793
    %v5818 = vpack.c.b16 %v5796, %v5794
    %v5819 = vpack.c.b16 %v5799, %v5797
    %v5820 = vpack.c.b16 %v5800, %v5798
    %v5821 = vpack.c.b16 %v5803, %v5801
    %v5822 = vpack.c.b16 %v5804, %v5802
    %v5823 = vpack.c.b16 %v5807, %v5805
    %v5824 = vpack.c.b16 %v5808, %v5806
    %5841 = vmatprep.subr.bf16.mxu0 %v5810
    %5842 = vmatpush1.bf16.msra.mxu0 %v5809
    %5843 = vmatprep.subr.bf16.mxu0 %v5812
    %5844 = vmatpush1.bf16.msra.mxu0 %v5811
    %5845 = vmatprep.subr.bf16.mxu0 %v5814
    %5846 = vmatpush1.bf16.msra.mxu0 %v5813
    %5847 = vmatprep.subr.bf16.mxu0 %v5816
    %5848 = vmatpush1.bf16.msra.mxu0 %v5815
    %5849 = vmatprep.subr.bf16.mxu0 %v5818
    %5850 = vmatpush1.bf16.msra.mxu0 %v5817
    %5851 = vmatprep.subr.bf16.mxu0 %v5820
    %5852 = vmatpush1.bf16.msra.mxu0 %v5819
    %5853 = vmatprep.subr.bf16.mxu0 %v5822
    %5854 = vmatpush1.bf16.msra.mxu0 %v5821
    %5855 = vmatprep.subr.bf16.mxu0 %v5824
    %5856 = vmatpush1.bf16.msra.mxu0 %v5823
    %5857 = vmatprep.subr.bf16.mxu0 0
    %5858 = vmatpush1.bf16.msra.mxu0 0
    %5859 = vmatprep.subr.bf16.mxu0 0
    %5860 = vmatpush1.bf16.msra.mxu0 0
    %5861 = vmatprep.subr.bf16.mxu0 0
    %5862 = vmatpush1.bf16.msra.mxu0 0
    %5863 = vmatprep.subr.bf16.mxu0 0
    %5864 = vmatpush1.bf16.msra.mxu0 0
    %5865 = vmatprep.subr.bf16.mxu0 0
    %5866 = vmatpush1.bf16.msra.mxu0 0
    %5867 = vmatprep.subr.bf16.mxu0 0
    %5868 = vmatpush1.bf16.msra.mxu0 0
    %5869 = vmatprep.subr.bf16.mxu0 0
    %5870 = vmatpush1.bf16.msra.mxu0 0
    %5871 = vmatprep.subr.bf16.mxu0 0
    %5872 = vmatpush1.bf16.msra.mxu0 0
    %5873 = vmatprep.mubr.bf16.mxu0 0
    %5874 = vmatmul.mubr.bf16.gmra.mrb[0].mxu0 %v5743
    %v5875 = vpop.f32.mrb[0].mxu0
    %v5876 = vadd.f32 0.0, %v5875
    %v5877 = vpop.f32.mrb[0].mxu0
    %v5878 = vadd.f32 0.0, %v5877
    %v5879 = vpop.f32.mrb[0].mxu0
    %v5880 = vadd.f32 0.0, %v5879
    %v5881 = vpop.f32.mrb[0].mxu0
    %v5882 = vadd.f32 0.0, %v5881
    %5883 = vdwg.mxu0
    %v5884 = vadd.f32 %v5594, %v5876
    %v5885 = vadd.f32 %v5595, %v5878
    %v5886 = vadd.f32 %v5596, %v5880
    %v5887 = vadd.f32 %v5597, %v5882
    %v5888 = vld [vmem:[#allocation3 + $0xa8] sm:$0xff]
    %s5889 = scalar_lea.vmem [#allocation12], 2688
    %v5890 = vld [vmem:[%s5889] sm:$0xff]
    %v5891 = vld [vmem:[%s5889 + $0x8] sm:$0xff]
    %v5892 = vld [vmem:[%s5889 + $0x10] sm:$0xff]
    %v5893 = vld [vmem:[%s5889 + $0x18] sm:$0xff]
    %v5894 = vld [vmem:[%s5889 + $0x20] sm:$0xff]
    %v5895 = vld [vmem:[%s5889 + $0x28] sm:$0xff]
    %v5896 = vld [vmem:[%s5889 + $0x30] sm:$0xff]
    %v5897 = vld [vmem:[%s5889 + $0x38] sm:$0xff]
    %v5898 = vld [vmem:[%s5889 + $0x40] sm:$0xff]
    %v5899 = vld [vmem:[%s5889 + $0x48] sm:$0xff]
    %v5900 = vld [vmem:[%s5889 + $0x50] sm:$0xff]
    %v5901 = vld [vmem:[%s5889 + $0x58] sm:$0xff]
    %v5902 = vld [vmem:[%s5889 + $0x60] sm:$0xff]
    %v5903 = vld [vmem:[%s5889 + $0x68] sm:$0xff]
    %v5904 = vld [vmem:[%s5889 + $0x70] sm:$0xff]
    %v5905 = vld [vmem:[%s5889 + $0x78] sm:$0xff]
    %v5922 = vunpack.c.l.b16 %v5890
    %v5923 = vunpack.c.h.b16 %v5890
    %v5924 = vunpack.c.l.b16 %v5891
    %v5925 = vunpack.c.h.b16 %v5891
    %v5926 = vunpack.c.l.b16 %v5892
    %v5927 = vunpack.c.h.b16 %v5892
    %v5928 = vunpack.c.l.b16 %v5893
    %v5929 = vunpack.c.h.b16 %v5893
    %v5930 = vunpack.c.l.b16 %v5894
    %v5931 = vunpack.c.h.b16 %v5894
    %v5932 = vunpack.c.l.b16 %v5895
    %v5933 = vunpack.c.h.b16 %v5895
    %v5934 = vunpack.c.l.b16 %v5896
    %v5935 = vunpack.c.h.b16 %v5896
    %v5936 = vunpack.c.l.b16 %v5897
    %v5937 = vunpack.c.h.b16 %v5897
    %v5938 = vunpack.c.l.b16 %v5898
    %v5939 = vunpack.c.h.b16 %v5898
    %v5940 = vunpack.c.l.b16 %v5899
    %v5941 = vunpack.c.h.b16 %v5899
    %v5942 = vunpack.c.l.b16 %v5900
    %v5943 = vunpack.c.h.b16 %v5900
    %v5944 = vunpack.c.l.b16 %v5901
    %v5945 = vunpack.c.h.b16 %v5901
    %v5946 = vunpack.c.l.b16 %v5902
    %v5947 = vunpack.c.h.b16 %v5902
    %v5948 = vunpack.c.l.b16 %v5903
    %v5949 = vunpack.c.h.b16 %v5903
    %v5950 = vunpack.c.l.b16 %v5904
    %v5951 = vunpack.c.h.b16 %v5904
    %v5952 = vunpack.c.l.b16 %v5905
    %v5953 = vunpack.c.h.b16 %v5905
    %v5954 = vpack.c.b16 %v5924, %v5922
    %v5955 = vpack.c.b16 %v5925, %v5923
    %v5956 = vpack.c.b16 %v5928, %v5926
    %v5957 = vpack.c.b16 %v5929, %v5927
    %v5958 = vpack.c.b16 %v5932, %v5930
    %v5959 = vpack.c.b16 %v5933, %v5931
    %v5960 = vpack.c.b16 %v5936, %v5934
    %v5961 = vpack.c.b16 %v5937, %v5935
    %v5962 = vpack.c.b16 %v5940, %v5938
    %v5963 = vpack.c.b16 %v5941, %v5939
    %v5964 = vpack.c.b16 %v5944, %v5942
    %v5965 = vpack.c.b16 %v5945, %v5943
    %v5966 = vpack.c.b16 %v5948, %v5946
    %v5967 = vpack.c.b16 %v5949, %v5947
    %v5968 = vpack.c.b16 %v5952, %v5950
    %v5969 = vpack.c.b16 %v5953, %v5951
    %5986 = vmatprep.subr.bf16.mxu0 %v5955
    %5987 = vmatpush1.bf16.msra.mxu0 %v5954
    %5988 = vmatprep.subr.bf16.mxu0 %v5957
    %5989 = vmatpush1.bf16.msra.mxu0 %v5956
    %5990 = vmatprep.subr.bf16.mxu0 %v5959
    %5991 = vmatpush1.bf16.msra.mxu0 %v5958
    %5992 = vmatprep.subr.bf16.mxu0 %v5961
    %5993 = vmatpush1.bf16.msra.mxu0 %v5960
    %5994 = vmatprep.subr.bf16.mxu0 %v5963
    %5995 = vmatpush1.bf16.msra.mxu0 %v5962
    %5996 = vmatprep.subr.bf16.mxu0 %v5965
    %5997 = vmatpush1.bf16.msra.mxu0 %v5964
    %5998 = vmatprep.subr.bf16.mxu0 %v5967
    %5999 = vmatpush1.bf16.msra.mxu0 %v5966
    %6000 = vmatprep.subr.bf16.mxu0 %v5969
    %6001 = vmatpush1.bf16.msra.mxu0 %v5968
    %6002 = vmatprep.subr.bf16.mxu0 0
    %6003 = vmatpush1.bf16.msra.mxu0 0
    %6004 = vmatprep.subr.bf16.mxu0 0
    %6005 = vmatpush1.bf16.msra.mxu0 0
    %6006 = vmatprep.subr.bf16.mxu0 0
    %6007 = vmatpush1.bf16.msra.mxu0 0
    %6008 = vmatprep.subr.bf16.mxu0 0
    %6009 = vmatpush1.bf16.msra.mxu0 0
    %6010 = vmatprep.subr.bf16.mxu0 0
    %6011 = vmatpush1.bf16.msra.mxu0 0
    %6012 = vmatprep.subr.bf16.mxu0 0
    %6013 = vmatpush1.bf16.msra.mxu0 0
    %6014 = vmatprep.subr.bf16.mxu0 0
    %6015 = vmatpush1.bf16.msra.mxu0 0
    %6016 = vmatprep.subr.bf16.mxu0 0
    %6017 = vmatpush1.bf16.msra.mxu0 0
    %6018 = vmatprep.mubr.bf16.mxu0 0
    %6019 = vmatmul.mubr.bf16.gmra.mrb[0].mxu0 %v5888
    %v6020 = vpop.f32.mrb[0].mxu0
    %v6021 = vadd.f32 0.0, %v6020
    %v6022 = vpop.f32.mrb[0].mxu0
    %v6023 = vadd.f32 0.0, %v6022
    %v6024 = vpop.f32.mrb[0].mxu0
    %v6025 = vadd.f32 0.0, %v6024
    %v6026 = vpop.f32.mrb[0].mxu0
    %v6027 = vadd.f32 0.0, %v6026
    %6028 = vdwg.mxu0
    %v6029 = vadd.f32 %v5739, %v6021
    %v6030 = vadd.f32 %v5740, %v6023
    %v6031 = vadd.f32 %v5741, %v6025
    %v6032 = vadd.f32 %v5742, %v6027
    %v6033 = vld [vmem:[#allocation3 + $0xb0] sm:$0xff]
    %s6034 = scalar_lea.vmem [#allocation12], 2816
    %v6035 = vld [vmem:[%s6034] sm:$0xff]
    %v6036 = vld [vmem:[%s6034 + $0x8] sm:$0xff]
    %v6037 = vld [vmem:[%s6034 + $0x10] sm:$0xff]
    %v6038 = vld [vmem:[%s6034 + $0x18] sm:$0xff]
    %v6039 = vld [vmem:[%s6034 + $0x20] sm:$0xff]
    %v6040 = vld [vmem:[%s6034 + $0x28] sm:$0xff]
    %v6041 = vld [vmem:[%s6034 + $0x30] sm:$0xff]
    %v6042 = vld [vmem:[%s6034 + $0x38] sm:$0xff]
    %v6043 = vld [vmem:[%s6034 + $0x40] sm:$0xff]
    %v6044 = vld [vmem:[%s6034 + $0x48] sm:$0xff]
    %v6045 = vld [vmem:[%s6034 + $0x50] sm:$0xff]
    %v6046 = vld [vmem:[%s6034 + $0x58] sm:$0xff]
    %v6047 = vld [vmem:[%s6034 + $0x60] sm:$0xff]
    %v6048 = vld [vmem:[%s6034 + $0x68] sm:$0xff]
    %v6049 = vld [vmem:[%s6034 + $0x70] sm:$0xff]
    %v6050 = vld [vmem:[%s6034 + $0x78] sm:$0xff]
    %v6067 = vunpack.c.l.b16 %v6035
    %v6068 = vunpack.c.h.b16 %v6035
    %v6069 = vunpack.c.l.b16 %v6036
    %v6070 = vunpack.c.h.b16 %v6036
    %v6071 = vunpack.c.l.b16 %v6037
    %v6072 = vunpack.c.h.b16 %v6037
    %v6073 = vunpack.c.l.b16 %v6038
    %v6074 = vunpack.c.h.b16 %v6038
    %v6075 = vunpack.c.l.b16 %v6039
    %v6076 = vunpack.c.h.b16 %v6039
    %v6077 = vunpack.c.l.b16 %v6040
    %v6078 = vunpack.c.h.b16 %v6040
    %v6079 = vunpack.c.l.b16 %v6041
    %v6080 = vunpack.c.h.b16 %v6041
    %v6081 = vunpack.c.l.b16 %v6042
    %v6082 = vunpack.c.h.b16 %v6042
    %v6083 = vunpack.c.l.b16 %v6043
    %v6084 = vunpack.c.h.b16 %v6043
    %v6085 = vunpack.c.l.b16 %v6044
    %v6086 = vunpack.c.h.b16 %v6044
    %v6087 = vunpack.c.l.b16 %v6045
    %v6088 = vunpack.c.h.b16 %v6045
    %v6089 = vunpack.c.l.b16 %v6046
    %v6090 = vunpack.c.h.b16 %v6046
    %v6091 = vunpack.c.l.b16 %v6047
    %v6092 = vunpack.c.h.b16 %v6047
    %v6093 = vunpack.c.l.b16 %v6048
    %v6094 = vunpack.c.h.b16 %v6048
    %v6095 = vunpack.c.l.b16 %v6049
    %v6096 = vunpack.c.h.b16 %v6049
    %v6097 = vunpack.c.l.b16 %v6050
    %v6098 = vunpack.c.h.b16 %v6050
    %v6099 = vpack.c.b16 %v6069, %v6067
    %v6100 = vpack.c.b16 %v6070, %v6068
    %v6101 = vpack.c.b16 %v6073, %v6071
    %v6102 = vpack.c.b16 %v6074, %v6072
    %v6103 = vpack.c.b16 %v6077, %v6075
    %v6104 = vpack.c.b16 %v6078, %v6076
    %v6105 = vpack.c.b16 %v6081, %v6079
    %v6106 = vpack.c.b16 %v6082, %v6080
    %v6107 = vpack.c.b16 %v6085, %v6083
    %v6108 = vpack.c.b16 %v6086, %v6084
    %v6109 = vpack.c.b16 %v6089, %v6087
    %v6110 = vpack.c.b16 %v6090, %v6088
    %v6111 = vpack.c.b16 %v6093, %v6091
    %v6112 = vpack.c.b16 %v6094, %v6092
    %v6113 = vpack.c.b16 %v6097, %v6095
    %v6114 = vpack.c.b16 %v6098, %v6096
    %6131 = vmatprep.subr.bf16.mxu0 %v6100
    %6132 = vmatpush1.bf16.msra.mxu0 %v6099
    %6133 = vmatprep.subr.bf16.mxu0 %v6102
    %6134 = vmatpush1.bf16.msra.mxu0 %v6101
    %6135 = vmatprep.subr.bf16.mxu0 %v6104
    %6136 = vmatpush1.bf16.msra.mxu0 %v6103
    %6137 = vmatprep.subr.bf16.mxu0 %v6106
    %6138 = vmatpush1.bf16.msra.mxu0 %v6105
    %6139 = vmatprep.subr.bf16.mxu0 %v6108
    %6140 = vmatpush1.bf16.msra.mxu0 %v6107
    %6141 = vmatprep.subr.bf16.mxu0 %v6110
    %6142 = vmatpush1.bf16.msra.mxu0 %v6109
    %6143 = vmatprep.subr.bf16.mxu0 %v6112
    %6144 = vmatpush1.bf16.msra.mxu0 %v6111
    %6145 = vmatprep.subr.bf16.mxu0 %v6114
    %6146 = vmatpush1.bf16.msra.mxu0 %v6113
    %6147 = vmatprep.subr.bf16.mxu0 0
    %6148 = vmatpush1.bf16.msra.mxu0 0
    %6149 = vmatprep.subr.bf16.mxu0 0
    %6150 = vmatpush1.bf16.msra.mxu0 0
    %6151 = vmatprep.subr.bf16.mxu0 0
    %6152 = vmatpush1.bf16.msra.mxu0 0
    %6153 = vmatprep.subr.bf16.mxu0 0
    %6154 = vmatpush1.bf16.msra.mxu0 0
    %6155 = vmatprep.subr.bf16.mxu0 0
    %6156 = vmatpush1.bf16.msra.mxu0 0
    %6157 = vmatprep.subr.bf16.mxu0 0
    %6158 = vmatpush1.bf16.msra.mxu0 0
    %6159 = vmatprep.subr.bf16.mxu0 0
    %6160 = vmatpush1.bf16.msra.mxu0 0
    %6161 = vmatprep.subr.bf16.mxu0 0
    %6162 = vmatpush1.bf16.msra.mxu0 0
    %6163 = vmatprep.mubr.bf16.mxu0 0
    %6164 = vmatmul.mubr.bf16.gmra.mrb[0].mxu0 %v6033
    %v6165 = vpop.f32.mrb[0].mxu0
    %v6166 = vadd.f32 0.0, %v6165
    %v6167 = vpop.f32.mrb[0].mxu0
    %v6168 = vadd.f32 0.0, %v6167
    %v6169 = vpop.f32.mrb[0].mxu0
    %v6170 = vadd.f32 0.0, %v6169
    %v6171 = vpop.f32.mrb[0].mxu0
    %v6172 = vadd.f32 0.0, %v6171
    %6173 = vdwg.mxu0
    %v6174 = vadd.f32 %v5884, %v6166
    %v6175 = vadd.f32 %v5885, %v6168
    %v6176 = vadd.f32 %v5886, %v6170
    %v6177 = vadd.f32 %v5887, %v6172
    %v6178 = vld [vmem:[#allocation3 + $0xb8] sm:$0xff]
    %s6179 = scalar_lea.vmem [#allocation12], 2944
    %v6180 = vld [vmem:[%s6179] sm:$0xff]
    %v6181 = vld [vmem:[%s6179 + $0x8] sm:$0xff]
    %v6182 = vld [vmem:[%s6179 + $0x10] sm:$0xff]
    %v6183 = vld [vmem:[%s6179 + $0x18] sm:$0xff]
    %v6184 = vld [vmem:[%s6179 + $0x20] sm:$0xff]
    %v6185 = vld [vmem:[%s6179 + $0x28] sm:$0xff]
    %v6186 = vld [vmem:[%s6179 + $0x30] sm:$0xff]
    %v6187 = vld [vmem:[%s6179 + $0x38] sm:$0xff]
    %v6188 = vld [vmem:[%s6179 + $0x40] sm:$0xff]
    %v6189 = vld [vmem:[%s6179 + $0x48] sm:$0xff]
    %v6190 = vld [vmem:[%s6179 + $0x50] sm:$0xff]
    %v6191 = vld [vmem:[%s6179 + $0x58] sm:$0xff]
    %v6192 = vld [vmem:[%s6179 + $0x60] sm:$0xff]
    %v6193 = vld [vmem:[%s6179 + $0x68] sm:$0xff]
    %v6194 = vld [vmem:[%s6179 + $0x70] sm:$0xff]
    %v6195 = vld [vmem:[%s6179 + $0x78] sm:$0xff]
    %v6212 = vunpack.c.l.b16 %v6180
    %v6213 = vunpack.c.h.b16 %v6180
    %v6214 = vunpack.c.l.b16 %v6181
    %v6215 = vunpack.c.h.b16 %v6181
    %v6216 = vunpack.c.l.b16 %v6182
    %v6217 = vunpack.c.h.b16 %v6182
    %v6218 = vunpack.c.l.b16 %v6183
    %v6219 = vunpack.c.h.b16 %v6183
    %v6220 = vunpack.c.l.b16 %v6184
    %v6221 = vunpack.c.h.b16 %v6184
    %v6222 = vunpack.c.l.b16 %v6185
    %v6223 = vunpack.c.h.b16 %v6185
    %v6224 = vunpack.c.l.b16 %v6186
    %v6225 = vunpack.c.h.b16 %v6186
    %v6226 = vunpack.c.l.b16 %v6187
    %v6227 = vunpack.c.h.b16 %v6187
    %v6228 = vunpack.c.l.b16 %v6188
    %v6229 = vunpack.c.h.b16 %v6188
    %v6230 = vunpack.c.l.b16 %v6189
    %v6231 = vunpack.c.h.b16 %v6189
    %v6232 = vunpack.c.l.b16 %v6190
    %v6233 = vunpack.c.h.b16 %v6190
    %v6234 = vunpack.c.l.b16 %v6191
    %v6235 = vunpack.c.h.b16 %v6191
    %v6236 = vunpack.c.l.b16 %v6192
    %v6237 = vunpack.c.h.b16 %v6192
    %v6238 = vunpack.c.l.b16 %v6193
    %v6239 = vunpack.c.h.b16 %v6193
    %v6240 = vunpack.c.l.b16 %v6194
    %v6241 = vunpack.c.h.b16 %v6194
    %v6242 = vunpack.c.l.b16 %v6195
    %v6243 = vunpack.c.h.b16 %v6195
    %v6244 = vpack.c.b16 %v6214, %v6212
    %v6245 = vpack.c.b16 %v6215, %v6213
    %v6246 = vpack.c.b16 %v6218, %v6216
    %v6247 = vpack.c.b16 %v6219, %v6217
    %v6248 = vpack.c.b16 %v6222, %v6220
    %v6249 = vpack.c.b16 %v6223, %v6221
    %v6250 = vpack.c.b16 %v6226, %v6224
    %v6251 = vpack.c.b16 %v6227, %v6225
    %v6252 = vpack.c.b16 %v6230, %v6228
    %v6253 = vpack.c.b16 %v6231, %v6229
    %v6254 = vpack.c.b16 %v6234, %v6232
    %v6255 = vpack.c.b16 %v6235, %v6233
    %v6256 = vpack.c.b16 %v6238, %v6236
    %v6257 = vpack.c.b16 %v6239, %v6237
    %v6258 = vpack.c.b16 %v6242, %v6240
    %v6259 = vpack.c.b16 %v6243, %v6241
    %6276 = vmatprep.subr.bf16.mxu0 %v6245
    %6277 = vmatpush1.bf16.msra.mxu0 %v6244
    %6278 = vmatprep.subr.bf16.mxu0 %v6247
    %6279 = vmatpush1.bf16.msra.mxu0 %v6246
    %6280 = vmatprep.subr.bf16.mxu0 %v6249
    %6281 = vmatpush1.bf16.msra.mxu0 %v6248
    %6282 = vmatprep.subr.bf16.mxu0 %v6251
    %6283 = vmatpush1.bf16.msra.mxu0 %v6250
    %6284 = vmatprep.subr.bf16.mxu0 %v6253
    %6285 = vmatpush1.bf16.msra.mxu0 %v6252
    %6286 = vmatprep.subr.bf16.mxu0 %v6255
    %6287 = vmatpush1.bf16.msra.mxu0 %v6254
    %6288 = vmatprep.subr.bf16.mxu0 %v6257
    %6289 = vmatpush1.bf16.msra.mxu0 %v6256
    %6290 = vmatprep.subr.bf16.mxu0 %v6259
    %6291 = vmatpush1.bf16.msra.mxu0 %v6258
    %6292 = vmatprep.subr.bf16.mxu0 0
    %6293 = vmatpush1.bf16.msra.mxu0 0
    %6294 = vmatprep.subr.bf16.mxu0 0
    %6295 = vmatpush1.bf16.msra.mxu0 0
    %6296 = vmatprep.subr.bf16.mxu0 0
    %6297 = vmatpush1.bf16.msra.mxu0 0
    %6298 = vmatprep.subr.bf16.mxu0 0
    %6299 = vmatpush1.bf16.msra.mxu0 0
    %6300 = vmatprep.subr.bf16.mxu0 0
    %6301 = vmatpush1.bf16.msra.mxu0 0
    %6302 = vmatprep.subr.bf16.mxu0 0
    %6303 = vmatpush1.bf16.msra.mxu0 0
    %6304 = vmatprep.subr.bf16.mxu0 0
    %6305 = vmatpush1.bf16.msra.mxu0 0
    %6306 = vmatprep.subr.bf16.mxu0 0
    %6307 = vmatpush1.bf16.msra.mxu0 0
    %6308 = vmatprep.mubr.bf16.mxu0 0
    %6309 = vmatmul.mubr.bf16.gmra.mrb[0].mxu0 %v6178
    %v6310 = vpop.f32.mrb[0].mxu0
    %v6311 = vadd.f32 0.0, %v6310
    %v6312 = vpop.f32.mrb[0].mxu0
    %v6313 = vadd.f32 0.0, %v6312
    %v6314 = vpop.f32.mrb[0].mxu0
    %v6315 = vadd.f32 0.0, %v6314
    %v6316 = vpop.f32.mrb[0].mxu0
    %v6317 = vadd.f32 0.0, %v6316
    %6318 = vdwg.mxu0
    %v6319 = vadd.f32 %v6029, %v6311
    %v6320 = vadd.f32 %v6030, %v6313
    %v6321 = vadd.f32 %v6031, %v6315
    %v6322 = vadd.f32 %v6032, %v6317
    %v6323 = vld [vmem:[#allocation3 + $0xc0] sm:$0xff]
    %s6324 = scalar_lea.vmem [#allocation12], 3072
    %v6325 = vld [vmem:[%s6324] sm:$0xff]
    %v6326 = vld [vmem:[%s6324 + $0x8] sm:$0xff]
    %v6327 = vld [vmem:[%s6324 + $0x10] sm:$0xff]
    %v6328 = vld [vmem:[%s6324 + $0x18] sm:$0xff]
    %v6329 = vld [vmem:[%s6324 + $0x20] sm:$0xff]
    %v6330 = vld [vmem:[%s6324 + $0x28] sm:$0xff]
    %v6331 = vld [vmem:[%s6324 + $0x30] sm:$0xff]
    %v6332 = vld [vmem:[%s6324 + $0x38] sm:$0xff]
    %v6333 = vld [vmem:[%s6324 + $0x40] sm:$0xff]
    %v6334 = vld [vmem:[%s6324 + $0x48] sm:$0xff]
    %v6335 = vld [vmem:[%s6324 + $0x50] sm:$0xff]
    %v6336 = vld [vmem:[%s6324 + $0x58] sm:$0xff]
    %v6337 = vld [vmem:[%s6324 + $0x60] sm:$0xff]
    %v6338 = vld [vmem:[%s6324 + $0x68] sm:$0xff]
    %v6339 = vld [vmem:[%s6324 + $0x70] sm:$0xff]
    %v6340 = vld [vmem:[%s6324 + $0x78] sm:$0xff]
    %v6357 = vunpack.c.l.b16 %v6325
    %v6358 = vunpack.c.h.b16 %v6325
    %v6359 = vunpack.c.l.b16 %v6326
    %v6360 = vunpack.c.h.b16 %v6326
    %v6361 = vunpack.c.l.b16 %v6327
    %v6362 = vunpack.c.h.b16 %v6327
    %v6363 = vunpack.c.l.b16 %v6328
    %v6364 = vunpack.c.h.b16 %v6328
    %v6365 = vunpack.c.l.b16 %v6329
    %v6366 = vunpack.c.h.b16 %v6329
    %v6367 = vunpack.c.l.b16 %v6330
    %v6368 = vunpack.c.h.b16 %v6330
    %v6369 = vunpack.c.l.b16 %v6331
    %v6370 = vunpack.c.h.b16 %v6331
    %v6371 = vunpack.c.l.b16 %v6332
    %v6372 = vunpack.c.h.b16 %v6332
    %v6373 = vunpack.c.l.b16 %v6333
    %v6374 = vunpack.c.h.b16 %v6333
    %v6375 = vunpack.c.l.b16 %v6334
    %v6376 = vunpack.c.h.b16 %v6334
    %v6377 = vunpack.c.l.b16 %v6335
    %v6378 = vunpack.c.h.b16 %v6335
    %v6379 = vunpack.c.l.b16 %v6336
    %v6380 = vunpack.c.h.b16 %v6336
    %v6381 = vunpack.c.l.b16 %v6337
    %v6382 = vunpack.c.h.b16 %v6337
    %v6383 = vunpack.c.l.b16 %v6338
    %v6384 = vunpack.c.h.b16 %v6338
    %v6385 = vunpack.c.l.b16 %v6339
    %v6386 = vunpack.c.h.b16 %v6339
    %v6387 = vunpack.c.l.b16 %v6340
    %v6388 = vunpack.c.h.b16 %v6340
    %v6389 = vpack.c.b16 %v6359, %v6357
    %v6390 = vpack.c.b16 %v6360, %v6358
    %v6391 = vpack.c.b16 %v6363, %v6361
    %v6392 = vpack.c.b16 %v6364, %v6362
    %v6393 = vpack.c.b16 %v6367, %v6365
    %v6394 = vpack.c.b16 %v6368, %v6366
    %v6395 = vpack.c.b16 %v6371, %v6369
    %v6396 = vpack.c.b16 %v6372, %v6370
    %v6397 = vpack.c.b16 %v6375, %v6373
    %v6398 = vpack.c.b16 %v6376, %v6374
    %v6399 = vpack.c.b16 %v6379, %v6377
    %v6400 = vpack.c.b16 %v6380, %v6378
    %v6401 = vpack.c.b16 %v6383, %v6381
    %v6402 = vpack.c.b16 %v6384, %v6382
    %v6403 = vpack.c.b16 %v6387, %v6385
    %v6404 = vpack.c.b16 %v6388, %v6386
    %6421 = vmatprep.subr.bf16.mxu0 %v6390
    %6422 = vmatpush1.bf16.msra.mxu0 %v6389
    %6423 = vmatprep.subr.bf16.mxu0 %v6392
    %6424 = vmatpush1.bf16.msra.mxu0 %v6391
    %6425 = vmatprep.subr.bf16.mxu0 %v6394
    %6426 = vmatpush1.bf16.msra.mxu0 %v6393
    %6427 = vmatprep.subr.bf16.mxu0 %v6396
    %6428 = vmatpush1.bf16.msra.mxu0 %v6395
    %6429 = vmatprep.subr.bf16.mxu0 %v6398
    %6430 = vmatpush1.bf16.msra.mxu0 %v6397
    %6431 = vmatprep.subr.bf16.mxu0 %v6400
    %6432 = vmatpush1.bf16.msra.mxu0 %v6399
    %6433 = vmatprep.subr.bf16.mxu0 %v6402
    %6434 = vmatpush1.bf16.msra.mxu0 %v6401
    %6435 = vmatprep.subr.bf16.mxu0 %v6404
    %6436 = vmatpush1.bf16.msra.mxu0 %v6403
    %6437 = vmatprep.subr.bf16.mxu0 0
    %6438 = vmatpush1.bf16.msra.mxu0 0
    %6439 = vmatprep.subr.bf16.mxu0 0
    %6440 = vmatpush1.bf16.msra.mxu0 0
    %6441 = vmatprep.subr.bf16.mxu0 0
    %6442 = vmatpush1.bf16.msra.mxu0 0
    %6443 = vmatprep.subr.bf16.mxu0 0
    %6444 = vmatpush1.bf16.msra.mxu0 0
    %6445 = vmatprep.subr.bf16.mxu0 0
    %6446 = vmatpush1.bf16.msra.mxu0 0
    %6447 = vmatprep.subr.bf16.mxu0 0
    %6448 = vmatpush1.bf16.msra.mxu0 0
    %6449 = vmatprep.subr.bf16.mxu0 0
    %6450 = vmatpush1.bf16.msra.mxu0 0
    %6451 = vmatprep.subr.bf16.mxu0 0
    %6452 = vmatpush1.bf16.msra.mxu0 0
    %6453 = vmatprep.mubr.bf16.mxu0 0
    %6454 = vmatmul.mubr.bf16.gmra.mrb[0].mxu0 %v6323
    %v6455 = vpop.f32.mrb[0].mxu0
    %v6456 = vadd.f32 0.0, %v6455
    %v6457 = vpop.f32.mrb[0].mxu0
    %v6458 = vadd.f32 0.0, %v6457
    %v6459 = vpop.f32.mrb[0].mxu0
    %v6460 = vadd.f32 0.0, %v6459
    %v6461 = vpop.f32.mrb[0].mxu0
    %v6462 = vadd.f32 0.0, %v6461
    %6463 = vdwg.mxu0
    %v6464 = vadd.f32 %v6174, %v6456
    %v6465 = vadd.f32 %v6175, %v6458
    %v6466 = vadd.f32 %v6176, %v6460
    %v6467 = vadd.f32 %v6177, %v6462
    %v6468 = vld [vmem:[#allocation3 + $0xc8] sm:$0xff]
    %s6469 = scalar_lea.vmem [#allocation12], 3200
    %v6470 = vld [vmem:[%s6469] sm:$0xff]
    %v6471 = vld [vmem:[%s6469 + $0x8] sm:$0xff]
    %v6472 = vld [vmem:[%s6469 + $0x10] sm:$0xff]
    %v6473 = vld [vmem:[%s6469 + $0x18] sm:$0xff]
    %v6474 = vld [vmem:[%s6469 + $0x20] sm:$0xff]
    %v6475 = vld [vmem:[%s6469 + $0x28] sm:$0xff]
    %v6476 = vld [vmem:[%s6469 + $0x30] sm:$0xff]
    %v6477 = vld [vmem:[%s6469 + $0x38] sm:$0xff]
    %v6478 = vld [vmem:[%s6469 + $0x40] sm:$0xff]
    %v6479 = vld [vmem:[%s6469 + $0x48] sm:$0xff]
    %v6480 = vld [vmem:[%s6469 + $0x50] sm:$0xff]
    %v6481 = vld [vmem:[%s6469 + $0x58] sm:$0xff]
    %v6482 = vld [vmem:[%s6469 + $0x60] sm:$0xff]
    %v6483 = vld [vmem:[%s6469 + $0x68] sm:$0xff]
    %v6484 = vld [vmem:[%s6469 + $0x70] sm:$0xff]
    %v6485 = vld [vmem:[%s6469 + $0x78] sm:$0xff]
    %v6502 = vunpack.c.l.b16 %v6470
    %v6503 = vunpack.c.h.b16 %v6470
    %v6504 = vunpack.c.l.b16 %v6471
    %v6505 = vunpack.c.h.b16 %v6471
    %v6506 = vunpack.c.l.b16 %v6472
    %v6507 = vunpack.c.h.b16 %v6472
    %v6508 = vunpack.c.l.b16 %v6473
    %v6509 = vunpack.c.h.b16 %v6473
    %v6510 = vunpack.c.l.b16 %v6474
    %v6511 = vunpack.c.h.b16 %v6474
    %v6512 = vunpack.c.l.b16 %v6475
    %v6513 = vunpack.c.h.b16 %v6475
    %v6514 = vunpack.c.l.b16 %v6476
    %v6515 = vunpack.c.h.b16 %v6476
    %v6516 = vunpack.c.l.b16 %v6477
    %v6517 = vunpack.c.h.b16 %v6477
    %v6518 = vunpack.c.l.b16 %v6478
    %v6519 = vunpack.c.h.b16 %v6478
    %v6520 = vunpack.c.l.b16 %v6479
    %v6521 = vunpack.c.h.b16 %v6479
    %v6522 = vunpack.c.l.b16 %v6480
    %v6523 = vunpack.c.h.b16 %v6480
    %v6524 = vunpack.c.l.b16 %v6481
    %v6525 = vunpack.c.h.b16 %v6481
    %v6526 = vunpack.c.l.b16 %v6482
    %v6527 = vunpack.c.h.b16 %v6482
    %v6528 = vunpack.c.l.b16 %v6483
    %v6529 = vunpack.c.h.b16 %v6483
    %v6530 = vunpack.c.l.b16 %v6484
    %v6531 = vunpack.c.h.b16 %v6484
    %v6532 = vunpack.c.l.b16 %v6485
    %v6533 = vunpack.c.h.b16 %v6485
    %v6534 = vpack.c.b16 %v6504, %v6502
    %v6535 = vpack.c.b16 %v6505, %v6503
    %v6536 = vpack.c.b16 %v6508, %v6506
    %v6537 = vpack.c.b16 %v6509, %v6507
    %v6538 = vpack.c.b16 %v6512, %v6510
    %v6539 = vpack.c.b16 %v6513, %v6511
    %v6540 = vpack.c.b16 %v6516, %v6514
    %v6541 = vpack.c.b16 %v6517, %v6515
    %v6542 = vpack.c.b16 %v6520, %v6518
    %v6543 = vpack.c.b16 %v6521, %v6519
    %v6544 = vpack.c.b16 %v6524, %v6522
    %v6545 = vpack.c.b16 %v6525, %v6523
    %v6546 = vpack.c.b16 %v6528, %v6526
    %v6547 = vpack.c.b16 %v6529, %v6527
    %v6548 = vpack.c.b16 %v6532, %v6530
    %v6549 = vpack.c.b16 %v6533, %v6531
    %6566 = vmatprep.subr.bf16.mxu0 %v6535
    %6567 = vmatpush1.bf16.msra.mxu0 %v6534
    %6568 = vmatprep.subr.bf16.mxu0 %v6537
    %6569 = vmatpush1.bf16.msra.mxu0 %v6536
    %6570 = vmatprep.subr.bf16.mxu0 %v6539
    %6571 = vmatpush1.bf16.msra.mxu0 %v6538
    %6572 = vmatprep.subr.bf16.mxu0 %v6541
    %6573 = vmatpush1.bf16.msra.mxu0 %v6540
    %6574 = vmatprep.subr.bf16.mxu0 %v6543
    %6575 = vmatpush1.bf16.msra.mxu0 %v6542
    %6576 = vmatprep.subr.bf16.mxu0 %v6545
    %6577 = vmatpush1.bf16.msra.mxu0 %v6544
    %6578 = vmatprep.subr.bf16.mxu0 %v6547
    %6579 = vmatpush1.bf16.msra.mxu0 %v6546
    %6580 = vmatprep.subr.bf16.mxu0 %v6549
    %6581 = vmatpush1.bf16.msra.mxu0 %v6548
    %6582 = vmatprep.subr.bf16.mxu0 0
    %6583 = vmatpush1.bf16.msra.mxu0 0
    %6584 = vmatprep.subr.bf16.mxu0 0
    %6585 = vmatpush1.bf16.msra.mxu0 0
    %6586 = vmatprep.subr.bf16.mxu0 0
    %6587 = vmatpush1.bf16.msra.mxu0 0
    %6588 = vmatprep.subr.bf16.mxu0 0
    %6589 = vmatpush1.bf16.msra.mxu0 0
    %6590 = vmatprep.subr.bf16.mxu0 0
    %6591 = vmatpush1.bf16.msra.mxu0 0
    %6592 = vmatprep.subr.bf16.mxu0 0
    %6593 = vmatpush1.bf16.msra.mxu0 0
    %6594 = vmatprep.subr.bf16.mxu0 0
    %6595 = vmatpush1.bf16.msra.mxu0 0
    %6596 = vmatprep.subr.bf16.mxu0 0
    %6597 = vmatpush1.bf16.msra.mxu0 0
    %6598 = vmatprep.mubr.bf16.mxu0 0
    %6599 = vmatmul.mubr.bf16.gmra.mrb[0].mxu0 %v6468
    %v6600 = vpop.f32.mrb[0].mxu0
    %v6601 = vadd.f32 0.0, %v6600
    %v6602 = vpop.f32.mrb[0].mxu0
    %v6603 = vadd.f32 0.0, %v6602
    %v6604 = vpop.f32.mrb[0].mxu0
    %v6605 = vadd.f32 0.0, %v6604
    %v6606 = vpop.f32.mrb[0].mxu0
    %v6607 = vadd.f32 0.0, %v6606
    %6608 = vdwg.mxu0
    %v6609 = vadd.f32 %v6319, %v6601
    %v6610 = vadd.f32 %v6320, %v6603
    %v6611 = vadd.f32 %v6321, %v6605
    %v6612 = vadd.f32 %v6322, %v6607
    %v6613 = vld [vmem:[#allocation3 + $0xd0] sm:$0xff]
    %s6614 = scalar_lea.vmem [#allocation12], 3328
    %v6615 = vld [vmem:[%s6614] sm:$0xff]
    %v6616 = vld [vmem:[%s6614 + $0x8] sm:$0xff]
    %v6617 = vld [vmem:[%s6614 + $0x10] sm:$0xff]
    %v6618 = vld [vmem:[%s6614 + $0x18] sm:$0xff]
    %v6619 = vld [vmem:[%s6614 + $0x20] sm:$0xff]
    %v6620 = vld [vmem:[%s6614 + $0x28] sm:$0xff]
    %v6621 = vld [vmem:[%s6614 + $0x30] sm:$0xff]
    %v6622 = vld [vmem:[%s6614 + $0x38] sm:$0xff]
    %v6623 = vld [vmem:[%s6614 + $0x40] sm:$0xff]
    %v6624 = vld [vmem:[%s6614 + $0x48] sm:$0xff]
    %v6625 = vld [vmem:[%s6614 + $0x50] sm:$0xff]
    %v6626 = vld [vmem:[%s6614 + $0x58] sm:$0xff]
    %v6627 = vld [vmem:[%s6614 + $0x60] sm:$0xff]
    %v6628 = vld [vmem:[%s6614 + $0x68] sm:$0xff]
    %v6629 = vld [vmem:[%s6614 + $0x70] sm:$0xff]
    %v6630 = vld [vmem:[%s6614 + $0x78] sm:$0xff]
    %v6647 = vunpack.c.l.b16 %v6615
    %v6648 = vunpack.c.h.b16 %v6615
    %v6649 = vunpack.c.l.b16 %v6616
    %v6650 = vunpack.c.h.b16 %v6616
    %v6651 = vunpack.c.l.b16 %v6617
    %v6652 = vunpack.c.h.b16 %v6617
    %v6653 = vunpack.c.l.b16 %v6618
    %v6654 = vunpack.c.h.b16 %v6618
    %v6655 = vunpack.c.l.b16 %v6619
    %v6656 = vunpack.c.h.b16 %v6619
    %v6657 = vunpack.c.l.b16 %v6620
    %v6658 = vunpack.c.h.b16 %v6620
    %v6659 = vunpack.c.l.b16 %v6621
    %v6660 = vunpack.c.h.b16 %v6621
    %v6661 = vunpack.c.l.b16 %v6622
    %v6662 = vunpack.c.h.b16 %v6622
    %v6663 = vunpack.c.l.b16 %v6623
    %v6664 = vunpack.c.h.b16 %v6623
    %v6665 = vunpack.c.l.b16 %v6624
    %v6666 = vunpack.c.h.b16 %v6624
    %v6667 = vunpack.c.l.b16 %v6625
    %v6668 = vunpack.c.h.b16 %v6625
    %v6669 = vunpack.c.l.b16 %v6626
    %v6670 = vunpack.c.h.b16 %v6626
    %v6671 = vunpack.c.l.b16 %v6627
    %v6672 = vunpack.c.h.b16 %v6627
    %v6673 = vunpack.c.l.b16 %v6628
    %v6674 = vunpack.c.h.b16 %v6628
    %v6675 = vunpack.c.l.b16 %v6629
    %v6676 = vunpack.c.h.b16 %v6629
    %v6677 = vunpack.c.l.b16 %v6630
    %v6678 = vunpack.c.h.b16 %v6630
    %v6679 = vpack.c.b16 %v6649, %v6647
    %v6680 = vpack.c.b16 %v6650, %v6648
    %v6681 = vpack.c.b16 %v6653, %v6651
    %v6682 = vpack.c.b16 %v6654, %v6652
    %v6683 = vpack.c.b16 %v6657, %v6655
    %v6684 = vpack.c.b16 %v6658, %v6656
    %v6685 = vpack.c.b16 %v6661, %v6659
    %v6686 = vpack.c.b16 %v6662, %v6660
    %v6687 = vpack.c.b16 %v6665, %v6663
    %v6688 = vpack.c.b16 %v6666, %v6664
    %v6689 = vpack.c.b16 %v6669, %v6667
    %v6690 = vpack.c.b16 %v6670, %v6668
    %v6691 = vpack.c.b16 %v6673, %v6671
    %v6692 = vpack.c.b16 %v6674, %v6672
    %v6693 = vpack.c.b16 %v6677, %v6675
    %v6694 = vpack.c.b16 %v6678, %v6676
    %6711 = vmatprep.subr.bf16.mxu0 %v6680
    %6712 = vmatpush1.bf16.msra.mxu0 %v6679
    %6713 = vmatprep.subr.bf16.mxu0 %v6682
    %6714 = vmatpush1.bf16.msra.mxu0 %v6681
    %6715 = vmatprep.subr.bf16.mxu0 %v6684
    %6716 = vmatpush1.bf16.msra.mxu0 %v6683
    %6717 = vmatprep.subr.bf16.mxu0 %v6686
    %6718 = vmatpush1.bf16.msra.mxu0 %v6685
    %6719 = vmatprep.subr.bf16.mxu0 %v6688
    %6720 = vmatpush1.bf16.msra.mxu0 %v6687
    %6721 = vmatprep.subr.bf16.mxu0 %v6690
    %6722 = vmatpush1.bf16.msra.mxu0 %v6689
    %6723 = vmatprep.subr.bf16.mxu0 %v6692
    %6724 = vmatpush1.bf16.msra.mxu0 %v6691
    %6725 = vmatprep.subr.bf16.mxu0 %v6694
    %6726 = vmatpush1.bf16.msra.mxu0 %v6693
    %6727 = vmatprep.subr.bf16.mxu0 0
    %6728 = vmatpush1.bf16.msra.mxu0 0
    %6729 = vmatprep.subr.bf16.mxu0 0
    %6730 = vmatpush1.bf16.msra.mxu0 0
    %6731 = vmatprep.subr.bf16.mxu0 0
    %6732 = vmatpush1.bf16.msra.mxu0 0
    %6733 = vmatprep.subr.bf16.mxu0 0
    %6734 = vmatpush1.bf16.msra.mxu0 0
    %6735 = vmatprep.subr.bf16.mxu0 0
    %6736 = vmatpush1.bf16.msra.mxu0 0
    %6737 = vmatprep.subr.bf16.mxu0 0
    %6738 = vmatpush1.bf16.msra.mxu0 0
    %6739 = vmatprep.subr.bf16.mxu0 0
    %6740 = vmatpush1.bf16.msra.mxu0 0
    %6741 = vmatprep.subr.bf16.mxu0 0
    %6742 = vmatpush1.bf16.msra.mxu0 0
    %6743 = vmatprep.mubr.bf16.mxu0 0
    %6744 = vmatmul.mubr.bf16.gmra.mrb[0].mxu0 %v6613
    %v6745 = vpop.f32.mrb[0].mxu0
    %v6746 = vadd.f32 0.0, %v6745
    %v6747 = vpop.f32.mrb[0].mxu0
    %v6748 = vadd.f32 0.0, %v6747
    %v6749 = vpop.f32.mrb[0].mxu0
    %v6750 = vadd.f32 0.0, %v6749
    %v6751 = vpop.f32.mrb[0].mxu0
    %v6752 = vadd.f32 0.0, %v6751
    %6753 = vdwg.mxu0
    %v6754 = vadd.f32 %v6464, %v6746
    %v6755 = vadd.f32 %v6465, %v6748
    %v6756 = vadd.f32 %v6466, %v6750
    %v6757 = vadd.f32 %v6467, %v6752
    %v6758 = vld [vmem:[#allocation3 + $0xd8] sm:$0xff]
    %s6759 = scalar_lea.vmem [#allocation12], 3456
    %v6760 = vld [vmem:[%s6759] sm:$0xff]
    %v6761 = vld [vmem:[%s6759 + $0x8] sm:$0xff]
    %v6762 = vld [vmem:[%s6759 + $0x10] sm:$0xff]
    %v6763 = vld [vmem:[%s6759 + $0x18] sm:$0xff]
    %v6764 = vld [vmem:[%s6759 + $0x20] sm:$0xff]
    %v6765 = vld [vmem:[%s6759 + $0x28] sm:$0xff]
    %v6766 = vld [vmem:[%s6759 + $0x30] sm:$0xff]
    %v6767 = vld [vmem:[%s6759 + $0x38] sm:$0xff]
    %v6768 = vld [vmem:[%s6759 + $0x40] sm:$0xff]
    %v6769 = vld [vmem:[%s6759 + $0x48] sm:$0xff]
    %v6770 = vld [vmem:[%s6759 + $0x50] sm:$0xff]
    %v6771 = vld [vmem:[%s6759 + $0x58] sm:$0xff]
    %v6772 = vld [vmem:[%s6759 + $0x60] sm:$0xff]
    %v6773 = vld [vmem:[%s6759 + $0x68] sm:$0xff]
    %v6774 = vld [vmem:[%s6759 + $0x70] sm:$0xff]
    %v6775 = vld [vmem:[%s6759 + $0x78] sm:$0xff]
    %v6792 = vunpack.c.l.b16 %v6760
    %v6793 = vunpack.c.h.b16 %v6760
    %v6794 = vunpack.c.l.b16 %v6761
    %v6795 = vunpack.c.h.b16 %v6761
    %v6796 = vunpack.c.l.b16 %v6762
    %v6797 = vunpack.c.h.b16 %v6762
    %v6798 = vunpack.c.l.b16 %v6763
    %v6799 = vunpack.c.h.b16 %v6763
    %v6800 = vunpack.c.l.b16 %v6764
    %v6801 = vunpack.c.h.b16 %v6764
    %v6802 = vunpack.c.l.b16 %v6765
    %v6803 = vunpack.c.h.b16 %v6765
    %v6804 = vunpack.c.l.b16 %v6766
    %v6805 = vunpack.c.h.b16 %v6766
    %v6806 = vunpack.c.l.b16 %v6767
    %v6807 = vunpack.c.h.b16 %v6767
    %v6808 = vunpack.c.l.b16 %v6768
    %v6809 = vunpack.c.h.b16 %v6768
    %v6810 = vunpack.c.l.b16 %v6769
    %v6811 = vunpack.c.h.b16 %v6769
    %v6812 = vunpack.c.l.b16 %v6770
    %v6813 = vunpack.c.h.b16 %v6770
    %v6814 = vunpack.c.l.b16 %v6771
    %v6815 = vunpack.c.h.b16 %v6771
    %v6816 = vunpack.c.l.b16 %v6772
    %v6817 = vunpack.c.h.b16 %v6772
    %v6818 = vunpack.c.l.b16 %v6773
    %v6819 = vunpack.c.h.b16 %v6773
    %v6820 = vunpack.c.l.b16 %v6774
    %v6821 = vunpack.c.h.b16 %v6774
    %v6822 = vunpack.c.l.b16 %v6775
    %v6823 = vunpack.c.h.b16 %v6775
    %v6824 = vpack.c.b16 %v6794, %v6792
    %v6825 = vpack.c.b16 %v6795, %v6793
    %v6826 = vpack.c.b16 %v6798, %v6796
    %v6827 = vpack.c.b16 %v6799, %v6797
    %v6828 = vpack.c.b16 %v6802, %v6800
    %v6829 = vpack.c.b16 %v6803, %v6801
    %v6830 = vpack.c.b16 %v6806, %v6804
    %v6831 = vpack.c.b16 %v6807, %v6805
    %v6832 = vpack.c.b16 %v6810, %v6808
    %v6833 = vpack.c.b16 %v6811, %v6809
    %v6834 = vpack.c.b16 %v6814, %v6812
    %v6835 = vpack.c.b16 %v6815, %v6813
    %v6836 = vpack.c.b16 %v6818, %v6816
    %v6837 = vpack.c.b16 %v6819, %v6817
    %v6838 = vpack.c.b16 %v6822, %v6820
    %v6839 = vpack.c.b16 %v6823, %v6821
    %6856 = vmatprep.subr.bf16.mxu0 %v6825
    %6857 = vmatpush1.bf16.msra.mxu0 %v6824
    %6858 = vmatprep.subr.bf16.mxu0 %v6827
    %6859 = vmatpush1.bf16.msra.mxu0 %v6826
    %6860 = vmatprep.subr.bf16.mxu0 %v6829
    %6861 = vmatpush1.bf16.msra.mxu0 %v6828
    %6862 = vmatprep.subr.bf16.mxu0 %v6831
    %6863 = vmatpush1.bf16.msra.mxu0 %v6830
    %6864 = vmatprep.subr.bf16.mxu0 %v6833
    %6865 = vmatpush1.bf16.msra.mxu0 %v6832
    %6866 = vmatprep.subr.bf16.mxu0 %v6835
    %6867 = vmatpush1.bf16.msra.mxu0 %v6834
    %6868 = vmatprep.subr.bf16.mxu0 %v6837
    %6869 = vmatpush1.bf16.msra.mxu0 %v6836
    %6870 = vmatprep.subr.bf16.mxu0 %v6839
    %6871 = vmatpush1.bf16.msra.mxu0 %v6838
    %6872 = vmatprep.subr.bf16.mxu0 0
    %6873 = vmatpush1.bf16.msra.mxu0 0
    %6874 = vmatprep.subr.bf16.mxu0 0
    %6875 = vmatpush1.bf16.msra.mxu0 0
    %6876 = vmatprep.subr.bf16.mxu0 0
    %6877 = vmatpush1.bf16.msra.mxu0 0
    %6878 = vmatprep.subr.bf16.mxu0 0
    %6879 = vmatpush1.bf16.msra.mxu0 0
    %6880 = vmatprep.subr.bf16.mxu0 0
    %6881 = vmatpush1.bf16.msra.mxu0 0
    %6882 = vmatprep.subr.bf16.mxu0 0
    %6883 = vmatpush1.bf16.msra.mxu0 0
    %6884 = vmatprep.subr.bf16.mxu0 0
    %6885 = vmatpush1.bf16.msra.mxu0 0
    %6886 = vmatprep.subr.bf16.mxu0 0
    %6887 = vmatpush1.bf16.msra.mxu0 0
    %6888 = vmatprep.mubr.bf16.mxu0 0
    %6889 = vmatmul.mubr.bf16.gmra.mrb[0].mxu0 %v6758
    %v6890 = vpop.f32.mrb[0].mxu0
    %v6891 = vadd.f32 0.0, %v6890
    %v6892 = vpop.f32.mrb[0].mxu0
    %v6893 = vadd.f32 0.0, %v6892
    %v6894 = vpop.f32.mrb[0].mxu0
    %v6895 = vadd.f32 0.0, %v6894
    %v6896 = vpop.f32.mrb[0].mxu0
    %v6897 = vadd.f32 0.0, %v6896
    %6898 = vdwg.mxu0
    %v6899 = vadd.f32 %v6609, %v6891
    %v6900 = vadd.f32 %v6610, %v6893
    %v6901 = vadd.f32 %v6611, %v6895
    %v6902 = vadd.f32 %v6612, %v6897
    %v6903 = vld [vmem:[#allocation3 + $0xe0] sm:$0xff]
    %s6904 = scalar_lea.vmem [#allocation12], 3584
    %v6905 = vld [vmem:[%s6904] sm:$0xff]
    %v6906 = vld [vmem:[%s6904 + $0x8] sm:$0xff]
    %v6907 = vld [vmem:[%s6904 + $0x10] sm:$0xff]
    %v6908 = vld [vmem:[%s6904 + $0x18] sm:$0xff]
    %v6909 = vld [vmem:[%s6904 + $0x20] sm:$0xff]
    %v6910 = vld [vmem:[%s6904 + $0x28] sm:$0xff]
    %v6911 = vld [vmem:[%s6904 + $0x30] sm:$0xff]
    %v6912 = vld [vmem:[%s6904 + $0x38] sm:$0xff]
    %v6913 = vld [vmem:[%s6904 + $0x40] sm:$0xff]
    %v6914 = vld [vmem:[%s6904 + $0x48] sm:$0xff]
    %v6915 = vld [vmem:[%s6904 + $0x50] sm:$0xff]
    %v6916 = vld [vmem:[%s6904 + $0x58] sm:$0xff]
    %v6917 = vld [vmem:[%s6904 + $0x60] sm:$0xff]
    %v6918 = vld [vmem:[%s6904 + $0x68] sm:$0xff]
    %v6919 = vld [vmem:[%s6904 + $0x70] sm:$0xff]
    %v6920 = vld [vmem:[%s6904 + $0x78] sm:$0xff]
    %v6937 = vunpack.c.l.b16 %v6905
    %v6938 = vunpack.c.h.b16 %v6905
    %v6939 = vunpack.c.l.b16 %v6906
    %v6940 = vunpack.c.h.b16 %v6906
    %v6941 = vunpack.c.l.b16 %v6907
    %v6942 = vunpack.c.h.b16 %v6907
    %v6943 = vunpack.c.l.b16 %v6908
    %v6944 = vunpack.c.h.b16 %v6908
    %v6945 = vunpack.c.l.b16 %v6909
    %v6946 = vunpack.c.h.b16 %v6909
    %v6947 = vunpack.c.l.b16 %v6910
    %v6948 = vunpack.c.h.b16 %v6910
    %v6949 = vunpack.c.l.b16 %v6911
    %v6950 = vunpack.c.h.b16 %v6911
    %v6951 = vunpack.c.l.b16 %v6912
    %v6952 = vunpack.c.h.b16 %v6912
    %v6953 = vunpack.c.l.b16 %v6913
    %v6954 = vunpack.c.h.b16 %v6913
    %v6955 = vunpack.c.l.b16 %v6914
    %v6956 = vunpack.c.h.b16 %v6914
    %v6957 = vunpack.c.l.b16 %v6915
    %v6958 = vunpack.c.h.b16 %v6915
    %v6959 = vunpack.c.l.b16 %v6916
    %v6960 = vunpack.c.h.b16 %v6916
    %v6961 = vunpack.c.l.b16 %v6917
    %v6962 = vunpack.c.h.b16 %v6917
    %v6963 = vunpack.c.l.b16 %v6918
    %v6964 = vunpack.c.h.b16 %v6918
    %v6965 = vunpack.c.l.b16 %v6919
    %v6966 = vunpack.c.h.b16 %v6919
    %v6967 = vunpack.c.l.b16 %v6920
    %v6968 = vunpack.c.h.b16 %v6920
    %v6969 = vpack.c.b16 %v6939, %v6937
    %v6970 = vpack.c.b16 %v6940, %v6938
    %v6971 = vpack.c.b16 %v6943, %v6941
    %v6972 = vpack.c.b16 %v6944, %v6942
    %v6973 = vpack.c.b16 %v6947, %v6945
    %v6974 = vpack.c.b16 %v6948, %v6946
    %v6975 = vpack.c.b16 %v6951, %v6949
    %v6976 = vpack.c.b16 %v6952, %v6950
    %v6977 = vpack.c.b16 %v6955, %v6953
    %v6978 = vpack.c.b16 %v6956, %v6954
    %v6979 = vpack.c.b16 %v6959, %v6957
    %v6980 = vpack.c.b16 %v6960, %v6958
    %v6981 = vpack.c.b16 %v6963, %v6961
    %v6982 = vpack.c.b16 %v6964, %v6962
    %v6983 = vpack.c.b16 %v6967, %v6965
    %v6984 = vpack.c.b16 %v6968, %v6966
    %7001 = vmatprep.subr.bf16.mxu0 %v6970
    %7002 = vmatpush1.bf16.msra.mxu0 %v6969
    %7003 = vmatprep.subr.bf16.mxu0 %v6972
    %7004 = vmatpush1.bf16.msra.mxu0 %v6971
    %7005 = vmatprep.subr.bf16.mxu0 %v6974
    %7006 = vmatpush1.bf16.msra.mxu0 %v6973
    %7007 = vmatprep.subr.bf16.mxu0 %v6976
    %7008 = vmatpush1.bf16.msra.mxu0 %v6975
    %7009 = vmatprep.subr.bf16.mxu0 %v6978
    %7010 = vmatpush1.bf16.msra.mxu0 %v6977
    %7011 = vmatprep.subr.bf16.mxu0 %v6980
    %7012 = vmatpush1.bf16.msra.mxu0 %v6979
    %7013 = vmatprep.subr.bf16.mxu0 %v6982
    %7014 = vmatpush1.bf16.msra.mxu0 %v6981
    %7015 = vmatprep.subr.bf16.mxu0 %v6984
    %7016 = vmatpush1.bf16.msra.mxu0 %v6983
    %7017 = vmatprep.subr.bf16.mxu0 0
    %7018 = vmatpush1.bf16.msra.mxu0 0
    %7019 = vmatprep.subr.bf16.mxu0 0
    %7020 = vmatpush1.bf16.msra.mxu0 0
    %7021 = vmatprep.subr.bf16.mxu0 0
    %7022 = vmatpush1.bf16.msra.mxu0 0
    %7023 = vmatprep.subr.bf16.mxu0 0
    %7024 = vmatpush1.bf16.msra.mxu0 0
    %7025 = vmatprep.subr.bf16.mxu0 0
    %7026 = vmatpush1.bf16.msra.mxu0 0
    %7027 = vmatprep.subr.bf16.mxu0 0
    %7028 = vmatpush1.bf16.msra.mxu0 0
    %7029 = vmatprep.subr.bf16.mxu0 0
    %7030 = vmatpush1.bf16.msra.mxu0 0
    %7031 = vmatprep.subr.bf16.mxu0 0
    %7032 = vmatpush1.bf16.msra.mxu0 0
    %7033 = vmatprep.mubr.bf16.mxu0 0
    %7034 = vmatmul.mubr.bf16.gmra.mrb[0].mxu0 %v6903
    %v7035 = vpop.f32.mrb[0].mxu0
    %v7036 = vadd.f32 0.0, %v7035
    %v7037 = vpop.f32.mrb[0].mxu0
    %v7038 = vadd.f32 0.0, %v7037
    %v7039 = vpop.f32.mrb[0].mxu0
    %v7040 = vadd.f32 0.0, %v7039
    %v7041 = vpop.f32.mrb[0].mxu0
    %v7042 = vadd.f32 0.0, %v7041
    %7043 = vdwg.mxu0
    %v7044 = vadd.f32 %v6754, %v7036
    %v7045 = vadd.f32 %v6755, %v7038
    %v7046 = vadd.f32 %v6756, %v7040
    %v7047 = vadd.f32 %v6757, %v7042
    %v7048 = vld [vmem:[#allocation3 + $0xe8] sm:$0xff]
    %s7049 = scalar_lea.vmem [#allocation12], 3712
    %v7050 = vld [vmem:[%s7049] sm:$0xff]
    %v7051 = vld [vmem:[%s7049 + $0x8] sm:$0xff]
    %v7052 = vld [vmem:[%s7049 + $0x10] sm:$0xff]
    %v7053 = vld [vmem:[%s7049 + $0x18] sm:$0xff]
    %v7054 = vld [vmem:[%s7049 + $0x20] sm:$0xff]
    %v7055 = vld [vmem:[%s7049 + $0x28] sm:$0xff]
    %v7056 = vld [vmem:[%s7049 + $0x30] sm:$0xff]
    %v7057 = vld [vmem:[%s7049 + $0x38] sm:$0xff]
    %v7058 = vld [vmem:[%s7049 + $0x40] sm:$0xff]
    %v7059 = vld [vmem:[%s7049 + $0x48] sm:$0xff]
    %v7060 = vld [vmem:[%s7049 + $0x50] sm:$0xff]
    %v7061 = vld [vmem:[%s7049 + $0x58] sm:$0xff]
    %v7062 = vld [vmem:[%s7049 + $0x60] sm:$0xff]
    %v7063 = vld [vmem:[%s7049 + $0x68] sm:$0xff]
    %v7064 = vld [vmem:[%s7049 + $0x70] sm:$0xff]
    %v7065 = vld [vmem:[%s7049 + $0x78] sm:$0xff]
    %v7082 = vunpack.c.l.b16 %v7050
    %v7083 = vunpack.c.h.b16 %v7050
    %v7084 = vunpack.c.l.b16 %v7051
    %v7085 = vunpack.c.h.b16 %v7051
    %v7086 = vunpack.c.l.b16 %v7052
    %v7087 = vunpack.c.h.b16 %v7052
    %v7088 = vunpack.c.l.b16 %v7053
    %v7089 = vunpack.c.h.b16 %v7053
    %v7090 = vunpack.c.l.b16 %v7054
    %v7091 = vunpack.c.h.b16 %v7054
    %v7092 = vunpack.c.l.b16 %v7055
    %v7093 = vunpack.c.h.b16 %v7055
    %v7094 = vunpack.c.l.b16 %v7056
    %v7095 = vunpack.c.h.b16 %v7056
    %v7096 = vunpack.c.l.b16 %v7057
    %v7097 = vunpack.c.h.b16 %v7057
    %v7098 = vunpack.c.l.b16 %v7058
    %v7099 = vunpack.c.h.b16 %v7058
    %v7100 = vunpack.c.l.b16 %v7059
    %v7101 = vunpack.c.h.b16 %v7059
    %v7102 = vunpack.c.l.b16 %v7060
    %v7103 = vunpack.c.h.b16 %v7060
    %v7104 = vunpack.c.l.b16 %v7061
    %v7105 = vunpack.c.h.b16 %v7061
    %v7106 = vunpack.c.l.b16 %v7062
    %v7107 = vunpack.c.h.b16 %v7062
    %v7108 = vunpack.c.l.b16 %v7063
    %v7109 = vunpack.c.h.b16 %v7063
    %v7110 = vunpack.c.l.b16 %v7064
    %v7111 = vunpack.c.h.b16 %v7064
    %v7112 = vunpack.c.l.b16 %v7065
    %v7113 = vunpack.c.h.b16 %v7065
    %v7114 = vpack.c.b16 %v7084, %v7082
    %v7115 = vpack.c.b16 %v7085, %v7083
    %v7116 = vpack.c.b16 %v7088, %v7086
    %v7117 = vpack.c.b16 %v7089, %v7087
    %v7118 = vpack.c.b16 %v7092, %v7090
    %v7119 = vpack.c.b16 %v7093, %v7091
    %v7120 = vpack.c.b16 %v7096, %v7094
    %v7121 = vpack.c.b16 %v7097, %v7095
    %v7122 = vpack.c.b16 %v7100, %v7098
    %v7123 = vpack.c.b16 %v7101, %v7099
    %v7124 = vpack.c.b16 %v7104, %v7102
    %v7125 = vpack.c.b16 %v7105, %v7103
    %v7126 = vpack.c.b16 %v7108, %v7106
    %v7127 = vpack.c.b16 %v7109, %v7107
    %v7128 = vpack.c.b16 %v7112, %v7110
    %v7129 = vpack.c.b16 %v7113, %v7111
    %7146 = vmatprep.subr.bf16.mxu0 %v7115
    %7147 = vmatpush1.bf16.msra.mxu0 %v7114
    %7148 = vmatprep.subr.bf16.mxu0 %v7117
    %7149 = vmatpush1.bf16.msra.mxu0 %v7116
    %7150 = vmatprep.subr.bf16.mxu0 %v7119
    %7151 = vmatpush1.bf16.msra.mxu0 %v7118
    %7152 = vmatprep.subr.bf16.mxu0 %v7121
    %7153 = vmatpush1.bf16.msra.mxu0 %v7120
    %7154 = vmatprep.subr.bf16.mxu0 %v7123
    %7155 = vmatpush1.bf16.msra.mxu0 %v7122
    %7156 = vmatprep.subr.bf16.mxu0 %v7125
    %7157 = vmatpush1.bf16.msra.mxu0 %v7124
    %7158 = vmatprep.subr.bf16.mxu0 %v7127
    %7159 = vmatpush1.bf16.msra.mxu0 %v7126
    %7160 = vmatprep.subr.bf16.mxu0 %v7129
    %7161 = vmatpush1.bf16.msra.mxu0 %v7128
    %7162 = vmatprep.subr.bf16.mxu0 0
    %7163 = vmatpush1.bf16.msra.mxu0 0
    %7164 = vmatprep.subr.bf16.mxu0 0
    %7165 = vmatpush1.bf16.msra.mxu0 0
    %7166 = vmatprep.subr.bf16.mxu0 0
    %7167 = vmatpush1.bf16.msra.mxu0 0
    %7168 = vmatprep.subr.bf16.mxu0 0
    %7169 = vmatpush1.bf16.msra.mxu0 0
    %7170 = vmatprep.subr.bf16.mxu0 0
    %7171 = vmatpush1.bf16.msra.mxu0 0
    %7172 = vmatprep.subr.bf16.mxu0 0
    %7173 = vmatpush1.bf16.msra.mxu0 0
    %7174 = vmatprep.subr.bf16.mxu0 0
    %7175 = vmatpush1.bf16.msra.mxu0 0
    %7176 = vmatprep.subr.bf16.mxu0 0
    %7177 = vmatpush1.bf16.msra.mxu0 0
    %7178 = vmatprep.mubr.bf16.mxu0 0
    %7179 = vmatmul.mubr.bf16.gmra.mrb[0].mxu0 %v7048
    %v7180 = vpop.f32.mrb[0].mxu0
    %v7181 = vadd.f32 0.0, %v7180
    %v7182 = vpop.f32.mrb[0].mxu0
    %v7183 = vadd.f32 0.0, %v7182
    %v7184 = vpop.f32.mrb[0].mxu0
    %v7185 = vadd.f32 0.0, %v7184
    %v7186 = vpop.f32.mrb[0].mxu0
    %v7187 = vadd.f32 0.0, %v7186
    %7188 = vdwg.mxu0
    %v7189 = vadd.f32 %v6899, %v7181
    %v7190 = vadd.f32 %v6900, %v7183
    %v7191 = vadd.f32 %v6901, %v7185
    %v7192 = vadd.f32 %v6902, %v7187
    %v7193 = vadd.f32 %v7044, %v7189
    %v7194 = vadd.f32 %v7045, %v7190
    %v7195 = vadd.f32 %v7046, %v7191
    %v7196 = vadd.f32 %v7047, %v7192
    %v7197 = vld [vmem:[#allocation13] sm:$0x3]
    %v7199 = vlaneseq
    %v7200 = vshrl.u32 %v7199, 7
    %v7201 = vsub.s32 0, %v7200
    %v7202 = vrot.slane %v7197, %v7201
    %v7203 = vlaneseq
    %v7204 = vshrl.u32 %v7203, 7
    %v7205 = vsub.s32 1, %v7204
    %v7206 = vrot.slane %v7197, %v7205
    %v7209 = vadd.f32 %v7193, %v7202
    %v7210 = vadd.f32 %v7194, %v7206
    %v7211 = vadd.f32 %v7195, %v7202
    %v7212 = vadd.f32 %v7196, %v7206
    %v7213 = vmax.f32 %v7209, 0.0
    %v7214 = vmax.f32 %v7210, 0.0
    %v7215 = vmax.f32 %v7211, 0.0
    %v7216 = vmax.f32 %v7212, 0.0
    %v7217 = vpack.c.bf16 %v7215, %v7213
    %v7218 = vpack.c.bf16 %v7216, %v7214
    %v7219 = vld [vmem:[#allocation15] sm:$0xf]
    %v7220 = vld [vmem:[#allocation15 + $0x4] sm:$0xf]
    %v7221 = vld [vmem:[#allocation15 + $0x8] sm:$0xf]
    %v7222 = vld [vmem:[#allocation15 + $0xc] sm:$0xf]
    %v7223 = vld [vmem:[#allocation15 + $0x10] sm:$0xf]
    %v7224 = vld [vmem:[#allocation15 + $0x14] sm:$0xf]
    %v7225 = vld [vmem:[#allocation15 + $0x18] sm:$0xf]
    %v7226 = vld [vmem:[#allocation15 + $0x1c] sm:$0xf]
    %v7227 = vld [vmem:[#allocation15 + $0x20] sm:$0xf]
    %v7228 = vld [vmem:[#allocation15 + $0x24] sm:$0xf]
    %v7229 = vld [vmem:[#allocation15 + $0x28] sm:$0xf]
    %v7230 = vld [vmem:[#allocation15 + $0x2c] sm:$0xf]
    %v7231 = vld [vmem:[#allocation15 + $0x30] sm:$0xf]
    %v7232 = vld [vmem:[#allocation15 + $0x34] sm:$0xf]
    %v7233 = vld [vmem:[#allocation15 + $0x38] sm:$0xf]
    %v7234 = vld [vmem:[#allocation15 + $0x3c] sm:$0xf]
    %v7235 = vld [vmem:[#allocation15 + $0x40] sm:$0xf]
    %v7236 = vld [vmem:[#allocation15 + $0x44] sm:$0xf]
    %v7237 = vld [vmem:[#allocation15 + $0x48] sm:$0xf]
    %v7238 = vld [vmem:[#allocation15 + $0x4c] sm:$0xf]
    %v7239 = vld [vmem:[#allocation15 + $0x50] sm:$0xf]
    %v7240 = vld [vmem:[#allocation15 + $0x54] sm:$0xf]
    %v7241 = vld [vmem:[#allocation15 + $0x58] sm:$0xf]
    %v7242 = vld [vmem:[#allocation15 + $0x5c] sm:$0xf]
    %v7243 = vld [vmem:[#allocation15 + $0x60] sm:$0xf]
    %v7244 = vld [vmem:[#allocation15 + $0x64] sm:$0xf]
    %v7245 = vld [vmem:[#allocation15 + $0x68] sm:$0xf]
    %v7246 = vld [vmem:[#allocation15 + $0x6c] sm:$0xf]
    %v7247 = vld [vmem:[#allocation15 + $0x70] sm:$0xf]
    %v7248 = vld [vmem:[#allocation15 + $0x74] sm:$0xf]
    %v7249 = vld [vmem:[#allocation15 + $0x78] sm:$0xf]
    %v7250 = vld [vmem:[#allocation15 + $0x7c] sm:$0xf]
    %v7251 = vld [vmem:[#allocation16] sm:$0x1]
    %v7253 = vlaneseq
    %v7254 = vshrl.u32 %v7253, 7
    %v7255 = vsub.s32 0, %v7254
    %v7256 = vrot.slane %v7251, %v7255
    %v7290 = vunpack.c.l.b16 %v7219
    %v7291 = vunpack.c.l.b16 %v7220
    %v7292 = vunpack.c.l.b16 %v7221
    %v7293 = vunpack.c.l.b16 %v7222
    %v7294 = vunpack.c.l.b16 %v7223
    %v7295 = vunpack.c.l.b16 %v7224
    %v7296 = vunpack.c.l.b16 %v7225
    %v7297 = vunpack.c.l.b16 %v7226
    %v7298 = vunpack.c.l.b16 %v7227
    %v7299 = vunpack.c.l.b16 %v7228
    %v7300 = vunpack.c.l.b16 %v7229
    %v7301 = vunpack.c.l.b16 %v7230
    %v7302 = vunpack.c.l.b16 %v7231
    %v7303 = vunpack.c.l.b16 %v7232
    %v7304 = vunpack.c.l.b16 %v7233
    %v7305 = vunpack.c.l.b16 %v7234
    %v7306 = vunpack.c.l.b16 %v7235
    %v7307 = vunpack.c.l.b16 %v7236
    %v7308 = vunpack.c.l.b16 %v7237
    %v7309 = vunpack.c.l.b16 %v7238
    %v7310 = vunpack.c.l.b16 %v7239
    %v7311 = vunpack.c.l.b16 %v7240
    %v7312 = vunpack.c.l.b16 %v7241
    %v7313 = vunpack.c.l.b16 %v7242
    %v7314 = vunpack.c.l.b16 %v7243
    %v7315 = vunpack.c.l.b16 %v7244
    %v7316 = vunpack.c.l.b16 %v7245
    %v7317 = vunpack.c.l.b16 %v7246
    %v7318 = vunpack.c.l.b16 %v7247
    %v7319 = vunpack.c.l.b16 %v7248
    %v7320 = vunpack.c.l.b16 %v7249
    %v7321 = vunpack.c.l.b16 %v7250
    %v7322 = vpack.c.b16 %v7291, %v7290
    %v7323 = vpack.c.b16 %v7293, %v7292
    %v7324 = vpack.c.b16 %v7295, %v7294
    %v7325 = vpack.c.b16 %v7297, %v7296
    %v7326 = vpack.c.b16 %v7299, %v7298
    %v7327 = vpack.c.b16 %v7301, %v7300
    %v7328 = vpack.c.b16 %v7303, %v7302
    %v7329 = vpack.c.b16 %v7305, %v7304
    %v7330 = vpack.c.b16 %v7307, %v7306
    %v7331 = vpack.c.b16 %v7309, %v7308
    %v7332 = vpack.c.b16 %v7311, %v7310
    %v7333 = vpack.c.b16 %v7313, %v7312
    %v7334 = vpack.c.b16 %v7315, %v7314
    %v7335 = vpack.c.b16 %v7317, %v7316
    %v7336 = vpack.c.b16 %v7319, %v7318
    %v7337 = vpack.c.b16 %v7321, %v7320
    %7354 = vmatprep.subr.bf16.mxu0 0
    %7355 = vmatpush1.bf16.msra.mxu0 %v7322
    %7356 = vmatprep.subr.bf16.mxu0 0
    %7357 = vmatpush1.bf16.msra.mxu0 %v7323
    %7358 = vmatprep.subr.bf16.mxu0 0
    %7359 = vmatpush1.bf16.msra.mxu0 %v7324
    %7360 = vmatprep.subr.bf16.mxu0 0
    %7361 = vmatpush1.bf16.msra.mxu0 %v7325
    %7362 = vmatprep.subr.bf16.mxu0 0
    %7363 = vmatpush1.bf16.msra.mxu0 %v7326
    %7364 = vmatprep.subr.bf16.mxu0 0
    %7365 = vmatpush1.bf16.msra.mxu0 %v7327
    %7366 = vmatprep.subr.bf16.mxu0 0
    %7367 = vmatpush1.bf16.msra.mxu0 %v7328
    %7368 = vmatprep.subr.bf16.mxu0 0
    %7369 = vmatpush1.bf16.msra.mxu0 %v7329
    %7370 = vmatprep.subr.bf16.mxu0 0
    %7371 = vmatpush1.bf16.msra.mxu0 %v7330
    %7372 = vmatprep.subr.bf16.mxu0 0
    %7373 = vmatpush1.bf16.msra.mxu0 %v7331
    %7374 = vmatprep.subr.bf16.mxu0 0
    %7375 = vmatpush1.bf16.msra.mxu0 %v7332
    %7376 = vmatprep.subr.bf16.mxu0 0
    %7377 = vmatpush1.bf16.msra.mxu0 %v7333
    %7378 = vmatprep.subr.bf16.mxu0 0
    %7379 = vmatpush1.bf16.msra.mxu0 %v7334
    %7380 = vmatprep.subr.bf16.mxu0 0
    %7381 = vmatpush1.bf16.msra.mxu0 %v7335
    %7382 = vmatprep.subr.bf16.mxu0 0
    %7383 = vmatpush1.bf16.msra.mxu0 %v7336
    %7384 = vmatprep.subr.bf16.mxu0 0
    %7385 = vmatpush1.bf16.msra.mxu0 %v7337
    %7386 = vmatprep.mubr.bf16.mxu0 %v7218
    %7387 = vmatmul.mubr.bf16.gmra.mrb[0].mxu0 %v7217
    %v7388 = vpop.f32.mrb[0].mxu0
    %v7389 = vadd.f32 %v7256, %v7388
    %v7390 = vpop.f32.mrb[0].mxu0
    %v7391 = vpop.f32.mrb[0].mxu0
    %v7392 = vadd.f32 %v7256, %v7391
    %v7393 = vpop.f32.mrb[0].mxu0
    %7394 = vdwg.mxu0
    %7395 = vst [vmem:[#allocation18] sm:$0xff] %v7389
    %7396 = vst [vmem:[#allocation18 + $0x8] sm:$0xff] %v7392
    // Predicated region
    $region70: #{tpu_custom_call.1} parent=1 // pred_check
      _
    $region71: #{tpu_custom_call.1} parent=1 // pred_check_branch
      %7398 = sbr.rel (0) target = $region73
    $region72: #{tpu_custom_call.1} parent=1 // pred_region
      %s7400 = ssub.s32 256, 256
      %7401 = vsyncadd [#allocation6], %s7400
      %s7402 = sshll.u32 [#allocation18], 4
      %s7403 = int_to_ptr.vmem [resolvable:$true] %s7402
      %7408 = dma.vmem_to_hbm [thread:$0]  %s7403, 256, %s9, [#allocation6], 128, 128, 8
    $region73: #{tpu_custom_call.1} parent=1 // pred_fallthru
      _
    // Predicated region
    $region74: #{tpu_custom_call.1} parent=1 // pred_check
      _
    $region75: #{tpu_custom_call.1} parent=1 // pred_check_branch
      %7410 = sbr.rel (0) target = $region77
    $region76: #{tpu_custom_call.1} parent=1 // pred_region
      %7411 = dma.done [#allocation6], 256
    $region77: #{tpu_custom_call.1} parent=1 // pred_fallthru
      _
    %7412 = vsyncpa [#allocation5], 1
    %7413 = vsyncpa [#allocation8], 1
    %7414 = vsyncpa [#allocation11], 1
    %7415 = vsyncpa [#allocation14], 1
    %7416 = vsyncpa [#allocation17], 1
    %7417 = vsyncpa [#allocation6], 1

</llo_original>
